<compile_context>
chip_gen: v5e
topology: v5e:2x2
jax: 0.10.0
libtpu: 0.0.40
codegen_flags: <defaults>
</compile_context>

<pallas_src>
import functools
import math

import jax
import jax.numpy as jnp
from jax import lax
from jax.experimental import pallas as pl
from jax.experimental.pallas import tpu as pltpu


# ----------------------------- fused Pallas kernel -----------------------------

def _ssb_kernel(x_ref, w1_ref, b1_ref, w2_ref, b2_ref,
                w3_ref, b3_ref, w4_ref, b4_ref,
                wd1t_ref, bd1t_ref, wd2_ref, bd2_ref,
                o_ref,
                xpad_ref, hpad_ref, h_ref, c2_ref, y1_ref,
                *, H, W, Wp, col_off, res_scale):
    """Whole SSB block for one batch element.

    x_ref   : (H, W, C)    input image (NHWC slice).
    w1/w2   : (9, C, C)    3x3 conv taps in (dh*3+dw, Cin, Cout) order.
    w3/w4   : (C, C)       1x1 convs.     wd1t: (Cr, C), bd1t: (Cr, 1), wd2: (Cr, C).
    o_ref   : (H*W, C)     output (row-major spatial, compact).
    xpad/hpad : ((H+3)*Wp, C) zero-padded row-flattened conv inputs (VMEM scratch).
    h_ref/c2_ref : (H*Wp, C)  conv outputs in the Wp-pitch flat layout.
    y1_ref  : (H*W, C)     spa output, compact layout.
    Padded layout: image row y lives at flat rows (y+1)*Wp + col_off .. + W; the
    left/right/top/bottom borders and the slack columns stay zero.
    """
    M = H * Wp

    # ---- zero the padded scratches once per step: borders / slack stay zero ----
    xpad_ref[...] = jnp.zeros_like(xpad_ref)
    hpad_ref[...] = jnp.zeros_like(hpad_ref)

    # ---- scatter x into the zero-padded flat buffer (all stores 8-aligned) ----
    for y in range(H):
        xpad_ref[pl.ds((y + 1) * Wp + col_off, W), :] = x_ref[y]

    def conv3x3(src_ref, w_ref, b_ref):
        # out[m] = sum_{dh,dw} src[m + dh*Wp + (col_off-1) + dw] @ w[dh*3+dw]
        acc = None
        for dh in range(3):
            for dw in range(3):
                off = dh * Wp + (col_off - 1) + dw          # static Python int
                tap = jnp.dot(src_ref[pl.ds(off, M), :], w_ref[dh * 3 + dw],
                              preferred_element_type=jnp.float32)
                acc = tap if acc is None else acc + tap
        return acc + b_ref[...]

    # ---- spa: conv3x3 -> relu -> conv3x3 -> *res_scale + x ----
    h_ref[...] = jnp.maximum(conv3x3(xpad_ref, w1_ref, b1_ref), 0.0)
    for y in range(H):  # scatter the valid columns of h into its padded buffer
        hpad_ref[pl.ds((y + 1) * Wp + col_off, W), :] = h_ref[pl.ds(y * Wp, W), :]
    c2_ref[...] = conv3x3(hpad_ref, w2_ref, b2_ref)
    for y in range(H):  # residual add + compaction to (H*W, C)
        y1_ref[pl.ds(y * W, W), :] = x_ref[y] + res_scale * c2_ref[pl.ds(y * Wp, W), :]

    # ---- spc: 1x1 convs + CALayer (channel attention) ----
    y1 = y1_ref[...]                                                       # (HW, C)
    t = jnp.dot(y1, w3_ref[...], preferred_element_type=jnp.float32) + b3_ref[...]
    t = jnp.maximum(t, 0.0)
    t = jnp.dot(t, w4_ref[...], preferred_element_type=jnp.float32) + b4_ref[...]

    # Global average pool is exact: t is in the compact (H*W, C) layout.
    pooled = jnp.mean(t, axis=0, keepdims=True)                            # (1, C)
    # Squeeze-excite on VPU/XLU (Cr is tiny -> avoid MXU relayouts):
    #   z_j = relu(sum_c pooled_c * wd1[c, j] + bd1_j)        (wd1 passed transposed)
    z = jnp.sum(pooled * wd1t_ref[...], axis=1, keepdims=True) + bd1t_ref[...]   # (Cr, 1)
    z = jnp.maximum(z, 0.0)
    #   s_c = sigmoid(sum_j z_j * wd2[j, c] + bd2_c)
    s = jax.nn.sigmoid(jnp.sum(z * wd2_ref[...], axis=0, keepdims=True) + bd2_ref[...])  # (1, C)

    o_ref[...] = (y1 + res_scale * (t * s)).astype(o_ref.dtype)


# ----------------------------- JAX wrapper -----------------------------

def ssb_forward(x, p, res_scale):
    N, H, W, C = x.shape
    Cr = p["wd1"].shape[1]
    HW = H * W

    # Padded row pitch: 8 zero columns of left pad (aligned stores) + W data columns
    # + >=1 zero column of right pad, rounded up to a multiple of 8 sublanes.
    col_off = 8
    Wp = ((col_off + W + 1 + 7) // 8) * 8

    # Squeeze-excite weights in the VPU-friendly layout (free wrapper-side prep).
    wd1t = jnp.transpose(p["wd1"])          # (Cr, C)
    bd1t = p["bd1"].reshape(Cr, 1)          # (Cr, 1)

    flops = 2 * N * HW * C * (9 * C + 9 * C + C + C)
    bytes_accessed = 4 * (2 * N * HW * C + 2 * 9 * C * C + 2 * C * C
                          + 2 * C * Cr + 4 * C + 2 * Cr)
    cost = pl.CostEstimate(flops=flops, transcendentals=N * C,
                           bytes_accessed=bytes_accessed)

    kernel = functools.partial(_ssb_kernel, H=H, W=W, Wp=Wp, col_off=col_off,
                               res_scale=res_scale)

    def full(*shape):
        return pl.BlockSpec(shape, lambda n, _s=len(shape): (0,) * _s)

    out = pl.pallas_call(
        kernel,
        out_shape=jax.ShapeDtypeStruct((N, HW, C), jnp.float32),
        grid=(N,),
        in_specs=[
            pl.BlockSpec((None, H, W, C), lambda n: (n, 0, 0, 0)),   # x
            full(9, C, C), full(1, C),                               # w1, b1
            full(9, C, C), full(1, C),                               # w2, b2
            full(C, C), full(1, C),                                  # w3, b3
            full(C, C), full(1, C),                                  # w4, b4
            full(Cr, C), full(Cr, 1),                                # wd1^T, bd1^T
            full(Cr, C), full(1, C),                                 # wd2, bd2
        ],
        out_specs=pl.BlockSpec((None, HW, C), lambda n: (n, 0, 0)),
        scratch_shapes=[
            pltpu.VMEM(((H + 3) * Wp, C), jnp.float32),   # zero-padded x
            pltpu.VMEM(((H + 3) * Wp, C), jnp.float32),   # zero-padded h
            pltpu.VMEM((H * Wp, C), jnp.float32),         # h   (conv1 output, Wp pitch)
            pltpu.VMEM((H * Wp, C), jnp.float32),         # conv2 output, Wp pitch
            pltpu.VMEM((HW, C), jnp.float32),             # y1  (compact)
        ],
        compiler_params=pltpu.CompilerParams(
            dimension_semantics=("parallel",)),           # batch shards across TCs on v7x
        cost_estimate=cost,
    )(x, p["w1"], p["b1"], p["w2"], p["b2"],
      p["w3"], p["b3"], p["w4"], p["b4"],
      wd1t, bd1t, p["wd2"], p["bd2"])

    return out.reshape(N, H, W, C)


# ----------------------------- params & reference -----------------------------

def init_params(key, C, reduction=16):
    ks = jax.random.split(key, 10)
    Cr = max(C // reduction, 1)
    s3, s1, sr = 1.0 / math.sqrt(9 * C), 1.0 / math.sqrt(C), 1.0 / math.sqrt(Cr)
    # Weights stored as (kh*kw, Cin, Cout) / (Cin, Cout): transpose of PyTorch's
    # (Cout, Cin, kh, kw); synthetic deterministic init, so only layout matters.
    return dict(
        w1=jax.random.normal(ks[0], (9, C, C), jnp.float32) * s3,
        b1=jax.random.normal(ks[1], (1, C), jnp.float32) * 0.01,
        w2=jax.random.normal(ks[2], (9, C, C), jnp.float32) * s3,
        b2=jax.random.normal(ks[3], (1, C), jnp.float32) * 0.01,
        w3=jax.random.normal(ks[4], (C, C), jnp.float32) * s1,
        b3=jax.random.normal(ks[5], (1, C), jnp.float32) * 0.01,
        w4=jax.random.normal(ks[6], (C, C), jnp.float32) * s1,
        b4=jax.random.normal(ks[7], (1, C), jnp.float32) * 0.01,
        wd1=jax.random.normal(ks[8], (C, Cr), jnp.float32) * s1,
        bd1=jnp.zeros((1, Cr), jnp.float32),
        wd2=jax.random.normal(ks[9], (Cr, C), jnp.float32) * sr,
        bd2=jnp.zeros((1, C), jnp.float32),
    )


def ssb_reference(x, p, res_scale):
    """Pure-JAX reference matching the PyTorch SSB forward (NHWC)."""
    C = x.shape[-1]

    def conv3(v, w9, b):
        w = w9.reshape(3, 3, C, C)  # HWIO
        out = lax.conv_general_dilated(v, w, (1, 1), "SAME",
                                       dimension_numbers=("NHWC", "HWIO", "NHWC"))
        return out + b.reshape(1, 1, 1, -1)

    h = jax.nn.relu(conv3(x, p["w1"], p["b1"]))
    y1 = x + res_scale * conv3(h, p["w2"], p["b2"])
    t = jax.nn.relu(jnp.einsum("nhwc,cd->nhwd", y1, p["w3"]) + p["b3"].reshape(1, 1, 1, -1))
    t = jnp.einsum("nhwc,cd->nhwd", t, p["w4"]) + p["b4"].reshape(1, 1, 1, -1)
    pooled = jnp.mean(t, axis=(1, 2), keepdims=True)
    z = jax.nn.relu(jnp.einsum("nhwc,cd->nhwd", pooled, p["wd1"]) + p["bd1"].reshape(1, 1, 1, -1))
    s = jax.nn.sigmoid(jnp.einsum("nhwc,cd->nhwd", z, p["wd2"]) + p["bd2"].reshape(1, 1, 1, -1))
    return y1 + res_scale * (t * s)


# ----------------------------------- main -----------------------------------

if __name__ == "__main__":
    key = jax.random.PRNGKey(0)
    kx, kp = jax.random.split(key)

    N, H, W, C = 2, 16, 16, 32   # n_feats=32, kernel_size=3, act=ReLU, res_scale=0.1
    res_scale = 0.1

    x = jax.random.normal(kx, (N, H, W, C), jnp.float32)
    params = init_params(kp, C)

    out = jax.block_until_ready(ssb_forward(x, params, res_scale))
    ref = ssb_reference(x, params, res_scale)

    assert out.shape == (N, H, W, C)
    max_err = float(jnp.max(jnp.abs(out - ref)))
    assert jnp.allclose(out, ref, atol=1e-4, rtol=1e-4), f"max_err={max_err}"

    print("KERNEL_OK")
</pallas_src>

<mosaic_0001>
module attributes {stable_mosaic.version = 11 : i64} {
  func.func @_ssb_kernel(%arg0: i32, %arg1: memref<1x16x16x32xf32, #tpu.memory_space<vmem>>, %arg2: memref<9x32x32xf32, #tpu.memory_space<vmem>>, %arg3: memref<1x32xf32, #tpu.memory_space<vmem>>, %arg4: memref<9x32x32xf32, #tpu.memory_space<vmem>>, %arg5: memref<1x32xf32, #tpu.memory_space<vmem>>, %arg6: memref<32x32xf32, #tpu.memory_space<vmem>>, %arg7: memref<1x32xf32, #tpu.memory_space<vmem>>, %arg8: memref<32x32xf32, #tpu.memory_space<vmem>>, %arg9: memref<1x32xf32, #tpu.memory_space<vmem>>, %arg10: memref<2x32xf32, #tpu.memory_space<vmem>>, %arg11: memref<2x1xf32, #tpu.memory_space<vmem>>, %arg12: memref<2x32xf32, #tpu.memory_space<vmem>>, %arg13: memref<1x32xf32, #tpu.memory_space<vmem>>, %arg14: memref<1x256x32xf32, #tpu.memory_space<vmem>>, %arg15: memref<608x32xf32, #tpu.memory_space<vmem>>, %arg16: memref<608x32xf32, #tpu.memory_space<vmem>>, %arg17: memref<512x32xf32, #tpu.memory_space<vmem>>, %arg18: memref<512x32xf32, #tpu.memory_space<vmem>>, %arg19: memref<256x32xf32, #tpu.memory_space<vmem>>) attributes {dimension_semantics = [#tpu.dimension_semantics<parallel>], iteration_bounds = array<i64: 2>, scalar_prefetch = 0 : i64, scratch_operands = 5 : i64, tpu.core_type = #tpu.core_type<tc>, window_params = [{transform_indices = @transform_0, window_bounds = array<i64: 1, 16, 16, 32>}, {pipeline_mode = #tpu.pipeline_mode<synchronous>, transform_indices = @transform_1, window_bounds = array<i64: 9, 32, 32>}, {pipeline_mode = #tpu.pipeline_mode<synchronous>, transform_indices = @transform_2, window_bounds = array<i64: 1, 32>}, {pipeline_mode = #tpu.pipeline_mode<synchronous>, transform_indices = @transform_3, window_bounds = array<i64: 9, 32, 32>}, {pipeline_mode = #tpu.pipeline_mode<synchronous>, transform_indices = @transform_4, window_bounds = array<i64: 1, 32>}, {pipeline_mode = #tpu.pipeline_mode<synchronous>, transform_indices = @transform_5, window_bounds = array<i64: 32, 32>}, {pipeline_mode = #tpu.pipeline_mode<synchronous>, transform_indices = @transform_6, window_bounds = array<i64: 1, 32>}, {pipeline_mode = #tpu.pipeline_mode<synchronous>, transform_indices = @transform_7, window_bounds = array<i64: 32, 32>}, {pipeline_mode = #tpu.pipeline_mode<synchronous>, transform_indices = @transform_8, window_bounds = array<i64: 1, 32>}, {pipeline_mode = #tpu.pipeline_mode<synchronous>, transform_indices = @transform_9, window_bounds = array<i64: 2, 32>}, {pipeline_mode = #tpu.pipeline_mode<synchronous>, transform_indices = @transform_10, window_bounds = array<i64: 2, 1>}, {pipeline_mode = #tpu.pipeline_mode<synchronous>, transform_indices = @transform_11, window_bounds = array<i64: 2, 32>}, {pipeline_mode = #tpu.pipeline_mode<synchronous>, transform_indices = @transform_12, window_bounds = array<i64: 1, 32>}, {transform_indices = @transform_13, window_bounds = array<i64: 1, 256, 32>}]} {
    %cst = arith.constant 0.000000e+00 : f32
    %0 = vector.broadcast %cst : f32 to vector<608x32xf32>
    %c0 = arith.constant 0 : index
    %c0_0 = arith.constant 0 : index
    %1 = vector.load %arg15[%c0, %c0_0] : memref<608x32xf32, #tpu.memory_space<vmem>>, vector<608x32xf32>
    tpu.vector_store %arg15[%c0, %c0_0], %0 {strides = array<i32>} : memref<608x32xf32, #tpu.memory_space<vmem>>, vector<608x32xf32>,
    %cst_1 = arith.constant 0.000000e+00 : f32
    %2 = vector.broadcast %cst_1 : f32 to vector<608x32xf32>
    %c0_2 = arith.constant 0 : index
    %c0_3 = arith.constant 0 : index
    %3 = vector.load %arg16[%c0_2, %c0_3] : memref<608x32xf32, #tpu.memory_space<vmem>>, vector<608x32xf32>
    tpu.vector_store %arg16[%c0_2, %c0_3], %2 {strides = array<i32>} : memref<608x32xf32, #tpu.memory_space<vmem>>, vector<608x32xf32>,
    %c0_4 = arith.constant 0 : index
    %c0_5 = arith.constant 0 : index
    %c0_6 = arith.constant 0 : index
    %c0_7 = arith.constant 0 : index
    %4 = vector.load %arg1[%c0_4, %c0_5, %c0_6, %c0_7] : memref<1x16x16x32xf32, #tpu.memory_space<vmem>>, vector<1x1x16x32xf32>
    %5 = vector.shape_cast %4 : vector<1x1x16x32xf32> to vector<16x32xf32>
    %c40 = arith.constant 40 : index
    %c0_8 = arith.constant 0 : index
    %6 = vector.load %arg15[%c40, %c0_8] : memref<608x32xf32, #tpu.memory_space<vmem>>, vector<16x32xf32>
    tpu.vector_store %arg15[%c40, %c0_8], %5 {strides = array<i32>} : memref<608x32xf32, #tpu.memory_space<vmem>>, vector<16x32xf32>,
    %c0_9 = arith.constant 0 : index
    %c1 = arith.constant 1 : index
    %c0_10 = arith.constant 0 : index
    %c0_11 = arith.constant 0 : index
    %7 = vector.load %arg1[%c0_9, %c1, %c0_10, %c0_11] : memref<1x16x16x32xf32, #tpu.memory_space<vmem>>, vector<1x1x16x32xf32>
    %8 = vector.shape_cast %7 : vector<1x1x16x32xf32> to vector<16x32xf32>
    %c72 = arith.constant 72 : index
    %c0_12 = arith.constant 0 : index
    %9 = vector.load %arg15[%c72, %c0_12] : memref<608x32xf32, #tpu.memory_space<vmem>>, vector<16x32xf32>
    tpu.vector_store %arg15[%c72, %c0_12], %8 {strides = array<i32>} : memref<608x32xf32, #tpu.memory_space<vmem>>, vector<16x32xf32>,
    %c0_13 = arith.constant 0 : index
    %c2 = arith.constant 2 : index
    %c0_14 = arith.constant 0 : index
    %c0_15 = arith.constant 0 : index
    %10 = vector.load %arg1[%c0_13, %c2, %c0_14, %c0_15] : memref<1x16x16x32xf32, #tpu.memory_space<vmem>>, vector<1x1x16x32xf32>
    %11 = vector.shape_cast %10 : vector<1x1x16x32xf32> to vector<16x32xf32>
    %c104 = arith.constant 104 : index
    %c0_16 = arith.constant 0 : index
    %12 = vector.load %arg15[%c104, %c0_16] : memref<608x32xf32, #tpu.memory_space<vmem>>, vector<16x32xf32>
    tpu.vector_store %arg15[%c104, %c0_16], %11 {strides = array<i32>} : memref<608x32xf32, #tpu.memory_space<vmem>>, vector<16x32xf32>,
    %c0_17 = arith.constant 0 : index
    %c3 = arith.constant 3 : index
    %c0_18 = arith.constant 0 : index
    %c0_19 = arith.constant 0 : index
    %13 = vector.load %arg1[%c0_17, %c3, %c0_18, %c0_19] : memref<1x16x16x32xf32, #tpu.memory_space<vmem>>, vector<1x1x16x32xf32>
    %14 = vector.shape_cast %13 : vector<1x1x16x32xf32> to vector<16x32xf32>
    %c136 = arith.constant 136 : index
    %c0_20 = arith.constant 0 : index
    %15 = vector.load %arg15[%c136, %c0_20] : memref<608x32xf32, #tpu.memory_space<vmem>>, vector<16x32xf32>
    tpu.vector_store %arg15[%c136, %c0_20], %14 {strides = array<i32>} : memref<608x32xf32, #tpu.memory_space<vmem>>, vector<16x32xf32>,
    %c0_21 = arith.constant 0 : index
    %c4 = arith.constant 4 : index
    %c0_22 = arith.constant 0 : index
    %c0_23 = arith.constant 0 : index
    %16 = vector.load %arg1[%c0_21, %c4, %c0_22, %c0_23] : memref<1x16x16x32xf32, #tpu.memory_space<vmem>>, vector<1x1x16x32xf32>
    %17 = vector.shape_cast %16 : vector<1x1x16x32xf32> to vector<16x32xf32>
    %c168 = arith.constant 168 : index
    %c0_24 = arith.constant 0 : index
    %18 = vector.load %arg15[%c168, %c0_24] : memref<608x32xf32, #tpu.memory_space<vmem>>, vector<16x32xf32>
    tpu.vector_store %arg15[%c168, %c0_24], %17 {strides = array<i32>} : memref<608x32xf32, #tpu.memory_space<vmem>>, vector<16x32xf32>,
    %c0_25 = arith.constant 0 : index
    %c5 = arith.constant 5 : index
    %c0_26 = arith.constant 0 : index
    %c0_27 = arith.constant 0 : index
    %19 = vector.load %arg1[%c0_25, %c5, %c0_26, %c0_27] : memref<1x16x16x32xf32, #tpu.memory_space<vmem>>, vector<1x1x16x32xf32>
    %20 = vector.shape_cast %19 : vector<1x1x16x32xf32> to vector<16x32xf32>
    %c200 = arith.constant 200 : index
    %c0_28 = arith.constant 0 : index
    %21 = vector.load %arg15[%c200, %c0_28] : memref<608x32xf32, #tpu.memory_space<vmem>>, vector<16x32xf32>
    tpu.vector_store %arg15[%c200, %c0_28], %20 {strides = array<i32>} : memref<608x32xf32, #tpu.memory_space<vmem>>, vector<16x32xf32>,
    %c0_29 = arith.constant 0 : index
    %c6 = arith.constant 6 : index
    %c0_30 = arith.constant 0 : index
    %c0_31 = arith.constant 0 : index
    %22 = vector.load %arg1[%c0_29, %c6, %c0_30, %c0_31] : memref<1x16x16x32xf32, #tpu.memory_space<vmem>>, vector<1x1x16x32xf32>
    %23 = vector.shape_cast %22 : vector<1x1x16x32xf32> to vector<16x32xf32>
    %c232 = arith.constant 232 : index
    %c0_32 = arith.constant 0 : index
    %24 = vector.load %arg15[%c232, %c0_32] : memref<608x32xf32, #tpu.memory_space<vmem>>, vector<16x32xf32>
    tpu.vector_store %arg15[%c232, %c0_32], %23 {strides = array<i32>} : memref<608x32xf32, #tpu.memory_space<vmem>>, vector<16x32xf32>,
    %c0_33 = arith.constant 0 : index
    %c7 = arith.constant 7 : index
    %c0_34 = arith.constant 0 : index
    %c0_35 = arith.constant 0 : index
    %25 = vector.load %arg1[%c0_33, %c7, %c0_34, %c0_35] : memref<1x16x16x32xf32, #tpu.memory_space<vmem>>, vector<1x1x16x32xf32>
    %26 = vector.shape_cast %25 : vector<1x1x16x32xf32> to vector<16x32xf32>
    %c264 = arith.constant 264 : index
    %c0_36 = arith.constant 0 : index
    %27 = vector.load %arg15[%c264, %c0_36] : memref<608x32xf32, #tpu.memory_space<vmem>>, vector<16x32xf32>
    tpu.vector_store %arg15[%c264, %c0_36], %26 {strides = array<i32>} : memref<608x32xf32, #tpu.memory_space<vmem>>, vector<16x32xf32>,
    %c0_37 = arith.constant 0 : index
    %c8 = arith.constant 8 : index
    %c0_38 = arith.constant 0 : index
    %c0_39 = arith.constant 0 : index
    %28 = vector.load %arg1[%c0_37, %c8, %c0_38, %c0_39] : memref<1x16x16x32xf32, #tpu.memory_space<vmem>>, vector<1x1x16x32xf32>
    %29 = vector.shape_cast %28 : vector<1x1x16x32xf32> to vector<16x32xf32>
    %c296 = arith.constant 296 : index
    %c0_40 = arith.constant 0 : index
    %30 = vector.load %arg15[%c296, %c0_40] : memref<608x32xf32, #tpu.memory_space<vmem>>, vector<16x32xf32>
    tpu.vector_store %arg15[%c296, %c0_40], %29 {strides = array<i32>} : memref<608x32xf32, #tpu.memory_space<vmem>>, vector<16x32xf32>,
    %c0_41 = arith.constant 0 : index
    %c9 = arith.constant 9 : index
    %c0_42 = arith.constant 0 : index
    %c0_43 = arith.constant 0 : index
    %31 = vector.load %arg1[%c0_41, %c9, %c0_42, %c0_43] : memref<1x16x16x32xf32, #tpu.memory_space<vmem>>, vector<1x1x16x32xf32>
    %32 = vector.shape_cast %31 : vector<1x1x16x32xf32> to vector<16x32xf32>
    %c328 = arith.constant 328 : index
    %c0_44 = arith.constant 0 : index
    %33 = vector.load %arg15[%c328, %c0_44] : memref<608x32xf32, #tpu.memory_space<vmem>>, vector<16x32xf32>
    tpu.vector_store %arg15[%c328, %c0_44], %32 {strides = array<i32>} : memref<608x32xf32, #tpu.memory_space<vmem>>, vector<16x32xf32>,
    %c0_45 = arith.constant 0 : index
    %c10 = arith.constant 10 : index
    %c0_46 = arith.constant 0 : index
    %c0_47 = arith.constant 0 : index
    %34 = vector.load %arg1[%c0_45, %c10, %c0_46, %c0_47] : memref<1x16x16x32xf32, #tpu.memory_space<vmem>>, vector<1x1x16x32xf32>
    %35 = vector.shape_cast %34 : vector<1x1x16x32xf32> to vector<16x32xf32>
    %c360 = arith.constant 360 : index
    %c0_48 = arith.constant 0 : index
    %36 = vector.load %arg15[%c360, %c0_48] : memref<608x32xf32, #tpu.memory_space<vmem>>, vector<16x32xf32>
    tpu.vector_store %arg15[%c360, %c0_48], %35 {strides = array<i32>} : memref<608x32xf32, #tpu.memory_space<vmem>>, vector<16x32xf32>,
    %c0_49 = arith.constant 0 : index
    %c11 = arith.constant 11 : index
    %c0_50 = arith.constant 0 : index
    %c0_51 = arith.constant 0 : index
    %37 = vector.load %arg1[%c0_49, %c11, %c0_50, %c0_51] : memref<1x16x16x32xf32, #tpu.memory_space<vmem>>, vector<1x1x16x32xf32>
    %38 = vector.shape_cast %37 : vector<1x1x16x32xf32> to vector<16x32xf32>
    %c392 = arith.constant 392 : index
    %c0_52 = arith.constant 0 : index
    %39 = vector.load %arg15[%c392, %c0_52] : memref<608x32xf32, #tpu.memory_space<vmem>>, vector<16x32xf32>
    tpu.vector_store %arg15[%c392, %c0_52], %38 {strides = array<i32>} : memref<608x32xf32, #tpu.memory_space<vmem>>, vector<16x32xf32>,
    %c0_53 = arith.constant 0 : index
    %c12 = arith.constant 12 : index
    %c0_54 = arith.constant 0 : index
    %c0_55 = arith.constant 0 : index
    %40 = vector.load %arg1[%c0_53, %c12, %c0_54, %c0_55] : memref<1x16x16x32xf32, #tpu.memory_space<vmem>>, vector<1x1x16x32xf32>
    %41 = vector.shape_cast %40 : vector<1x1x16x32xf32> to vector<16x32xf32>
    %c424 = arith.constant 424 : index
    %c0_56 = arith.constant 0 : index
    %42 = vector.load %arg15[%c424, %c0_56] : memref<608x32xf32, #tpu.memory_space<vmem>>, vector<16x32xf32>
    tpu.vector_store %arg15[%c424, %c0_56], %41 {strides = array<i32>} : memref<608x32xf32, #tpu.memory_space<vmem>>, vector<16x32xf32>,
    %c0_57 = arith.constant 0 : index
    %c13 = arith.constant 13 : index
    %c0_58 = arith.constant 0 : index
    %c0_59 = arith.constant 0 : index
    %43 = vector.load %arg1[%c0_57, %c13, %c0_58, %c0_59] : memref<1x16x16x32xf32, #tpu.memory_space<vmem>>, vector<1x1x16x32xf32>
    %44 = vector.shape_cast %43 : vector<1x1x16x32xf32> to vector<16x32xf32>
    %c456 = arith.constant 456 : index
    %c0_60 = arith.constant 0 : index
    %45 = vector.load %arg15[%c456, %c0_60] : memref<608x32xf32, #tpu.memory_space<vmem>>, vector<16x32xf32>
    tpu.vector_store %arg15[%c456, %c0_60], %44 {strides = array<i32>} : memref<608x32xf32, #tpu.memory_space<vmem>>, vector<16x32xf32>,
    %c0_61 = arith.constant 0 : index
    %c14 = arith.constant 14 : index
    %c0_62 = arith.constant 0 : index
    %c0_63 = arith.constant 0 : index
    %46 = vector.load %arg1[%c0_61, %c14, %c0_62, %c0_63] : memref<1x16x16x32xf32, #tpu.memory_space<vmem>>, vector<1x1x16x32xf32>
    %47 = vector.shape_cast %46 : vector<1x1x16x32xf32> to vector<16x32xf32>
    %c488 = arith.constant 488 : index
    %c0_64 = arith.constant 0 : index
    %48 = vector.load %arg15[%c488, %c0_64] : memref<608x32xf32, #tpu.memory_space<vmem>>, vector<16x32xf32>
    tpu.vector_store %arg15[%c488, %c0_64], %47 {strides = array<i32>} : memref<608x32xf32, #tpu.memory_space<vmem>>, vector<16x32xf32>,
    %c0_65 = arith.constant 0 : index
    %c15 = arith.constant 15 : index
    %c0_66 = arith.constant 0 : index
    %c0_67 = arith.constant 0 : index
    %49 = vector.load %arg1[%c0_65, %c15, %c0_66, %c0_67] : memref<1x16x16x32xf32, #tpu.memory_space<vmem>>, vector<1x1x16x32xf32>
    %50 = vector.shape_cast %49 : vector<1x1x16x32xf32> to vector<16x32xf32>
    %c520 = arith.constant 520 : index
    %c0_68 = arith.constant 0 : index
    %51 = vector.load %arg15[%c520, %c0_68] : memref<608x32xf32, #tpu.memory_space<vmem>>, vector<16x32xf32>
    tpu.vector_store %arg15[%c520, %c0_68], %50 {strides = array<i32>} : memref<608x32xf32, #tpu.memory_space<vmem>>, vector<16x32xf32>,
    %c7_69 = arith.constant 7 : index
    %c0_70 = arith.constant 0 : index
    %52 = vector.load %arg15[%c7_69, %c0_70] : memref<608x32xf32, #tpu.memory_space<vmem>>, vector<512x32xf32>
    %c0_71 = arith.constant 0 : index
    %c0_72 = arith.constant 0 : index
    %c0_73 = arith.constant 0 : index
    %53 = vector.load %arg2[%c0_71, %c0_72, %c0_73] : memref<9x32x32xf32, #tpu.memory_space<vmem>>, vector<1x32x32xf32>
    %54 = vector.shape_cast %53 : vector<1x32x32xf32> to vector<32x32xf32>
    %cst_74 = arith.constant dense<0.000000e+00> : vector<512x32xf32>
    %55 = tpu.matmul %52, %54, %cst_74 {dimension_numbers = #tpu.dot_dimension_numbers<[1], [0], [0], [1], [0, 0, 1, 1], [], []>} : vector<512x32xf32>, vector<32x32xf32>, vector<512x32xf32> -> vector<512x32xf32>
    %c8_75 = arith.constant 8 : index
    %c0_76 = arith.constant 0 : index
    %56 = vector.load %arg15[%c8_75, %c0_76] : memref<608x32xf32, #tpu.memory_space<vmem>>, vector<512x32xf32>
    %c1_77 = arith.constant 1 : index
    %c0_78 = arith.constant 0 : index
    %c0_79 = arith.constant 0 : index
    %57 = vector.load %arg2[%c1_77, %c0_78, %c0_79] : memref<9x32x32xf32, #tpu.memory_space<vmem>>, vector<1x32x32xf32>
    %58 = vector.shape_cast %57 : vector<1x32x32xf32> to vector<32x32xf32>
    %cst_80 = arith.constant dense<0.000000e+00> : vector<512x32xf32>
    %59 = tpu.matmul %56, %58, %cst_80 {dimension_numbers = #tpu.dot_dimension_numbers<[1], [0], [0], [1], [0, 0, 1, 1], [], []>} : vector<512x32xf32>, vector<32x32xf32>, vector<512x32xf32> -> vector<512x32xf32>
    %60 = arith.addf %55, %59 : vector<512x32xf32>
    %c9_81 = arith.constant 9 : index
    %c0_82 = arith.constant 0 : index
    %61 = vector.load %arg15[%c9_81, %c0_82] : memref<608x32xf32, #tpu.memory_space<vmem>>, vector<512x32xf32>
    %c2_83 = arith.constant 2 : index
    %c0_84 = arith.constant 0 : index
    %c0_85 = arith.constant 0 : index
    %62 = vector.load %arg2[%c2_83, %c0_84, %c0_85] : memref<9x32x32xf32, #tpu.memory_space<vmem>>, vector<1x32x32xf32>
    %63 = vector.shape_cast %62 : vector<1x32x32xf32> to vector<32x32xf32>
    %cst_86 = arith.constant dense<0.000000e+00> : vector<512x32xf32>
    %64 = tpu.matmul %61, %63, %cst_86 {dimension_numbers = #tpu.dot_dimension_numbers<[1], [0], [0], [1], [0, 0, 1, 1], [], []>} : vector<512x32xf32>, vector<32x32xf32>, vector<512x32xf32> -> vector<512x32xf32>
    %65 = arith.addf %60, %64 : vector<512x32xf32>
    %c39 = arith.constant 39 : index
    %c0_87 = arith.constant 0 : index
    %66 = vector.load %arg15[%c39, %c0_87] : memref<608x32xf32, #tpu.memory_space<vmem>>, vector<512x32xf32>
    %c3_88 = arith.constant 3 : index
    %c0_89 = arith.constant 0 : index
    %c0_90 = arith.constant 0 : index
    %67 = vector.load %arg2[%c3_88, %c0_89, %c0_90] : memref<9x32x32xf32, #tpu.memory_space<vmem>>, vector<1x32x32xf32>
    %68 = vector.shape_cast %67 : vector<1x32x32xf32> to vector<32x32xf32>
    %cst_91 = arith.constant dense<0.000000e+00> : vector<512x32xf32>
    %69 = tpu.matmul %66, %68, %cst_91 {dimension_numbers = #tpu.dot_dimension_numbers<[1], [0], [0], [1], [0, 0, 1, 1], [], []>} : vector<512x32xf32>, vector<32x32xf32>, vector<512x32xf32> -> vector<512x32xf32>
    %70 = arith.addf %65, %69 : vector<512x32xf32>
    %c40_92 = arith.constant 40 : index
    %c0_93 = arith.constant 0 : index
    %71 = vector.load %arg15[%c40_92, %c0_93] : memref<608x32xf32, #tpu.memory_space<vmem>>, vector<512x32xf32>
    %c4_94 = arith.constant 4 : index
    %c0_95 = arith.constant 0 : index
    %c0_96 = arith.constant 0 : index
    %72 = vector.load %arg2[%c4_94, %c0_95, %c0_96] : memref<9x32x32xf32, #tpu.memory_space<vmem>>, vector<1x32x32xf32>
    %73 = vector.shape_cast %72 : vector<1x32x32xf32> to vector<32x32xf32>
    %cst_97 = arith.constant dense<0.000000e+00> : vector<512x32xf32>
    %74 = tpu.matmul %71, %73, %cst_97 {dimension_numbers = #tpu.dot_dimension_numbers<[1], [0], [0], [1], [0, 0, 1, 1], [], []>} : vector<512x32xf32>, vector<32x32xf32>, vector<512x32xf32> -> vector<512x32xf32>
    %75 = arith.addf %70, %74 : vector<512x32xf32>
    %c41 = arith.constant 41 : index
    %c0_98 = arith.constant 0 : index
    %76 = vector.load %arg15[%c41, %c0_98] : memref<608x32xf32, #tpu.memory_space<vmem>>, vector<512x32xf32>
    %c5_99 = arith.constant 5 : index
    %c0_100 = arith.constant 0 : index
    %c0_101 = arith.constant 0 : index
    %77 = vector.load %arg2[%c5_99, %c0_100, %c0_101] : memref<9x32x32xf32, #tpu.memory_space<vmem>>, vector<1x32x32xf32>
    %78 = vector.shape_cast %77 : vector<1x32x32xf32> to vector<32x32xf32>
    %cst_102 = arith.constant dense<0.000000e+00> : vector<512x32xf32>
    %79 = tpu.matmul %76, %78, %cst_102 {dimension_numbers = #tpu.dot_dimension_numbers<[1], [0], [0], [1], [0, 0, 1, 1], [], []>} : vector<512x32xf32>, vector<32x32xf32>, vector<512x32xf32> -> vector<512x32xf32>
    %80 = arith.addf %75, %79 : vector<512x32xf32>
    %c71 = arith.constant 71 : index
    %c0_103 = arith.constant 0 : index
    %81 = vector.load %arg15[%c71, %c0_103] : memref<608x32xf32, #tpu.memory_space<vmem>>, vector<512x32xf32>
    %c6_104 = arith.constant 6 : index
    %c0_105 = arith.constant 0 : index
    %c0_106 = arith.constant 0 : index
    %82 = vector.load %arg2[%c6_104, %c0_105, %c0_106] : memref<9x32x32xf32, #tpu.memory_space<vmem>>, vector<1x32x32xf32>
    %83 = vector.shape_cast %82 : vector<1x32x32xf32> to vector<32x32xf32>
    %cst_107 = arith.constant dense<0.000000e+00> : vector<512x32xf32>
    %84 = tpu.matmul %81, %83, %cst_107 {dimension_numbers = #tpu.dot_dimension_numbers<[1], [0], [0], [1], [0, 0, 1, 1], [], []>} : vector<512x32xf32>, vector<32x32xf32>, vector<512x32xf32> -> vector<512x32xf32>
    %85 = arith.addf %80, %84 : vector<512x32xf32>
    %c72_108 = arith.constant 72 : index
    %c0_109 = arith.constant 0 : index
    %86 = vector.load %arg15[%c72_108, %c0_109] : memref<608x32xf32, #tpu.memory_space<vmem>>, vector<512x32xf32>
    %c7_110 = arith.constant 7 : index
    %c0_111 = arith.constant 0 : index
    %c0_112 = arith.constant 0 : index
    %87 = vector.load %arg2[%c7_110, %c0_111, %c0_112] : memref<9x32x32xf32, #tpu.memory_space<vmem>>, vector<1x32x32xf32>
    %88 = vector.shape_cast %87 : vector<1x32x32xf32> to vector<32x32xf32>
    %cst_113 = arith.constant dense<0.000000e+00> : vector<512x32xf32>
    %89 = tpu.matmul %86, %88, %cst_113 {dimension_numbers = #tpu.dot_dimension_numbers<[1], [0], [0], [1], [0, 0, 1, 1], [], []>} : vector<512x32xf32>, vector<32x32xf32>, vector<512x32xf32> -> vector<512x32xf32>
    %90 = arith.addf %85, %89 : vector<512x32xf32>
    %c73 = arith.constant 73 : index
    %c0_114 = arith.constant 0 : index
    %91 = vector.load %arg15[%c73, %c0_114] : memref<608x32xf32, #tpu.memory_space<vmem>>, vector<512x32xf32>
    %c8_115 = arith.constant 8 : index
    %c0_116 = arith.constant 0 : index
    %c0_117 = arith.constant 0 : index
    %92 = vector.load %arg2[%c8_115, %c0_116, %c0_117] : memref<9x32x32xf32, #tpu.memory_space<vmem>>, vector<1x32x32xf32>
    %93 = vector.shape_cast %92 : vector<1x32x32xf32> to vector<32x32xf32>
    %cst_118 = arith.constant dense<0.000000e+00> : vector<512x32xf32>
    %94 = tpu.matmul %91, %93, %cst_118 {dimension_numbers = #tpu.dot_dimension_numbers<[1], [0], [0], [1], [0, 0, 1, 1], [], []>} : vector<512x32xf32>, vector<32x32xf32>, vector<512x32xf32> -> vector<512x32xf32>
    %95 = arith.addf %90, %94 : vector<512x32xf32>
    %c0_119 = arith.constant 0 : index
    %c0_120 = arith.constant 0 : index
    %96 = vector.load %arg3[%c0_119, %c0_120] : memref<1x32xf32, #tpu.memory_space<vmem>>, vector<1x32xf32>
    %97 = vector.broadcast %96 : vector<1x32xf32> to vector<512x32xf32>
    %98 = arith.addf %95, %97 : vector<512x32xf32>
    %cst_121 = arith.constant 0.000000e+00 : f32
    %99 = vector.broadcast %cst_121 : f32 to vector<512x32xf32>
    %100 = arith.maximumf %98, %99 : vector<512x32xf32>
    %c0_122 = arith.constant 0 : index
    %c0_123 = arith.constant 0 : index
    %101 = vector.load %arg17[%c0_122, %c0_123] : memref<512x32xf32, #tpu.memory_space<vmem>>, vector<512x32xf32>
    tpu.vector_store %arg17[%c0_122, %c0_123], %100 {strides = array<i32>} : memref<512x32xf32, #tpu.memory_space<vmem>>, vector<512x32xf32>,
    %c0_124 = arith.constant 0 : index
    %c0_125 = arith.constant 0 : index
    %102 = vector.load %arg17[%c0_124, %c0_125] : memref<512x32xf32, #tpu.memory_space<vmem>>, vector<16x32xf32>
    %c40_126 = arith.constant 40 : index
    %c0_127 = arith.constant 0 : index
    %103 = vector.load %arg16[%c40_126, %c0_127] : memref<608x32xf32, #tpu.memory_space<vmem>>, vector<16x32xf32>
    tpu.vector_store %arg16[%c40_126, %c0_127], %102 {strides = array<i32>} : memref<608x32xf32, #tpu.memory_space<vmem>>, vector<16x32xf32>,
    %c32 = arith.constant 32 : index
    %c0_128 = arith.constant 0 : index
    %104 = vector.load %arg17[%c32, %c0_128] : memref<512x32xf32, #tpu.memory_space<vmem>>, vector<16x32xf32>
    %c72_129 = arith.constant 72 : index
    %c0_130 = arith.constant 0 : index
    %105 = vector.load %arg16[%c72_129, %c0_130] : memref<608x32xf32, #tpu.memory_space<vmem>>, vector<16x32xf32>
    tpu.vector_store %arg16[%c72_129, %c0_130], %104 {strides = array<i32>} : memref<608x32xf32, #tpu.memory_space<vmem>>, vector<16x32xf32>,
    %c64 = arith.constant 64 : index
    %c0_131 = arith.constant 0 : index
    %106 = vector.load %arg17[%c64, %c0_131] : memref<512x32xf32, #tpu.memory_space<vmem>>, vector<16x32xf32>
    %c104_132 = arith.constant 104 : index
    %c0_133 = arith.constant 0 : index
    %107 = vector.load %arg16[%c104_132, %c0_133] : memref<608x32xf32, #tpu.memory_space<vmem>>, vector<16x32xf32>
    tpu.vector_store %arg16[%c104_132, %c0_133], %106 {strides = array<i32>} : memref<608x32xf32, #tpu.memory_space<vmem>>, vector<16x32xf32>,
    %c96 = arith.constant 96 : index
    %c0_134 = arith.constant 0 : index
    %108 = vector.load %arg17[%c96, %c0_134] : memref<512x32xf32, #tpu.memory_space<vmem>>, vector<16x32xf32>
    %c136_135 = arith.constant 136 : index
    %c0_136 = arith.constant 0 : index
    %109 = vector.load %arg16[%c136_135, %c0_136] : memref<608x32xf32, #tpu.memory_space<vmem>>, vector<16x32xf32>
    tpu.vector_store %arg16[%c136_135, %c0_136], %108 {strides = array<i32>} : memref<608x32xf32, #tpu.memory_space<vmem>>, vector<16x32xf32>,
    %c128 = arith.constant 128 : index
    %c0_137 = arith.constant 0 : index
    %110 = vector.load %arg17[%c128, %c0_137] : memref<512x32xf32, #tpu.memory_space<vmem>>, vector<16x32xf32>
    %c168_138 = arith.constant 168 : index
    %c0_139 = arith.constant 0 : index
    %111 = vector.load %arg16[%c168_138, %c0_139] : memref<608x32xf32, #tpu.memory_space<vmem>>, vector<16x32xf32>
    tpu.vector_store %arg16[%c168_138, %c0_139], %110 {strides = array<i32>} : memref<608x32xf32, #tpu.memory_space<vmem>>, vector<16x32xf32>,
    %c160 = arith.constant 160 : index
    %c0_140 = arith.constant 0 : index
    %112 = vector.load %arg17[%c160, %c0_140] : memref<512x32xf32, #tpu.memory_space<vmem>>, vector<16x32xf32>
    %c200_141 = arith.constant 200 : index
    %c0_142 = arith.constant 0 : index
    %113 = vector.load %arg16[%c200_141, %c0_142] : memref<608x32xf32, #tpu.memory_space<vmem>>, vector<16x32xf32>
    tpu.vector_store %arg16[%c200_141, %c0_142], %112 {strides = array<i32>} : memref<608x32xf32, #tpu.memory_space<vmem>>, vector<16x32xf32>,
    %c192 = arith.constant 192 : index
    %c0_143 = arith.constant 0 : index
    %114 = vector.load %arg17[%c192, %c0_143] : memref<512x32xf32, #tpu.memory_space<vmem>>, vector<16x32xf32>
    %c232_144 = arith.constant 232 : index
    %c0_145 = arith.constant 0 : index
    %115 = vector.load %arg16[%c232_144, %c0_145] : memref<608x32xf32, #tpu.memory_space<vmem>>, vector<16x32xf32>
    tpu.vector_store %arg16[%c232_144, %c0_145], %114 {strides = array<i32>} : memref<608x32xf32, #tpu.memory_space<vmem>>, vector<16x32xf32>,
    %c224 = arith.constant 224 : index
    %c0_146 = arith.constant 0 : index
    %116 = vector.load %arg17[%c224, %c0_146] : memref<512x32xf32, #tpu.memory_space<vmem>>, vector<16x32xf32>
    %c264_147 = arith.constant 264 : index
    %c0_148 = arith.constant 0 : index
    %117 = vector.load %arg16[%c264_147, %c0_148] : memref<608x32xf32, #tpu.memory_space<vmem>>, vector<16x32xf32>
    tpu.vector_store %arg16[%c264_147, %c0_148], %116 {strides = array<i32>} : memref<608x32xf32, #tpu.memory_space<vmem>>, vector<16x32xf32>,
    %c256 = arith.constant 256 : index
    %c0_149 = arith.constant 0 : index
    %118 = vector.load %arg17[%c256, %c0_149] : memref<512x32xf32, #tpu.memory_space<vmem>>, vector<16x32xf32>
    %c296_150 = arith.constant 296 : index
    %c0_151 = arith.constant 0 : index
    %119 = vector.load %arg16[%c296_150, %c0_151] : memref<608x32xf32, #tpu.memory_space<vmem>>, vector<16x32xf32>
    tpu.vector_store %arg16[%c296_150, %c0_151], %118 {strides = array<i32>} : memref<608x32xf32, #tpu.memory_space<vmem>>, vector<16x32xf32>,
    %c288 = arith.constant 288 : index
    %c0_152 = arith.constant 0 : index
    %120 = vector.load %arg17[%c288, %c0_152] : memref<512x32xf32, #tpu.memory_space<vmem>>, vector<16x32xf32>
    %c328_153 = arith.constant 328 : index
    %c0_154 = arith.constant 0 : index
    %121 = vector.load %arg16[%c328_153, %c0_154] : memref<608x32xf32, #tpu.memory_space<vmem>>, vector<16x32xf32>
    tpu.vector_store %arg16[%c328_153, %c0_154], %120 {strides = array<i32>} : memref<608x32xf32, #tpu.memory_space<vmem>>, vector<16x32xf32>,
    %c320 = arith.constant 320 : index
    %c0_155 = arith.constant 0 : index
    %122 = vector.load %arg17[%c320, %c0_155] : memref<512x32xf32, #tpu.memory_space<vmem>>, vector<16x32xf32>
    %c360_156 = arith.constant 360 : index
    %c0_157 = arith.constant 0 : index
    %123 = vector.load %arg16[%c360_156, %c0_157] : memref<608x32xf32, #tpu.memory_space<vmem>>, vector<16x32xf32>
    tpu.vector_store %arg16[%c360_156, %c0_157], %122 {strides = array<i32>} : memref<608x32xf32, #tpu.memory_space<vmem>>, vector<16x32xf32>,
    %c352 = arith.constant 352 : index
    %c0_158 = arith.constant 0 : index
    %124 = vector.load %arg17[%c352, %c0_158] : memref<512x32xf32, #tpu.memory_space<vmem>>, vector<16x32xf32>
    %c392_159 = arith.constant 392 : index
    %c0_160 = arith.constant 0 : index
    %125 = vector.load %arg16[%c392_159, %c0_160] : memref<608x32xf32, #tpu.memory_space<vmem>>, vector<16x32xf32>
    tpu.vector_store %arg16[%c392_159, %c0_160], %124 {strides = array<i32>} : memref<608x32xf32, #tpu.memory_space<vmem>>, vector<16x32xf32>,
    %c384 = arith.constant 384 : index
    %c0_161 = arith.constant 0 : index
    %126 = vector.load %arg17[%c384, %c0_161] : memref<512x32xf32, #tpu.memory_space<vmem>>, vector<16x32xf32>
    %c424_162 = arith.constant 424 : index
    %c0_163 = arith.constant 0 : index
    %127 = vector.load %arg16[%c424_162, %c0_163] : memref<608x32xf32, #tpu.memory_space<vmem>>, vector<16x32xf32>
    tpu.vector_store %arg16[%c424_162, %c0_163], %126 {strides = array<i32>} : memref<608x32xf32, #tpu.memory_space<vmem>>, vector<16x32xf32>,
    %c416 = arith.constant 416 : index
    %c0_164 = arith.constant 0 : index
    %128 = vector.load %arg17[%c416, %c0_164] : memref<512x32xf32, #tpu.memory_space<vmem>>, vector<16x32xf32>
    %c456_165 = arith.constant 456 : index
    %c0_166 = arith.constant 0 : index
    %129 = vector.load %arg16[%c456_165, %c0_166] : memref<608x32xf32, #tpu.memory_space<vmem>>, vector<16x32xf32>
    tpu.vector_store %arg16[%c456_165, %c0_166], %128 {strides = array<i32>} : memref<608x32xf32, #tpu.memory_space<vmem>>, vector<16x32xf32>,
    %c448 = arith.constant 448 : index
    %c0_167 = arith.constant 0 : index
    %130 = vector.load %arg17[%c448, %c0_167] : memref<512x32xf32, #tpu.memory_space<vmem>>, vector<16x32xf32>
    %c488_168 = arith.constant 488 : index
    %c0_169 = arith.constant 0 : index
    %131 = vector.load %arg16[%c488_168, %c0_169] : memref<608x32xf32, #tpu.memory_space<vmem>>, vector<16x32xf32>
    tpu.vector_store %arg16[%c488_168, %c0_169], %130 {strides = array<i32>} : memref<608x32xf32, #tpu.memory_space<vmem>>, vector<16x32xf32>,
    %c480 = arith.constant 480 : index
    %c0_170 = arith.constant 0 : index
    %132 = vector.load %arg17[%c480, %c0_170] : memref<512x32xf32, #tpu.memory_space<vmem>>, vector<16x32xf32>
    %c520_171 = arith.constant 520 : index
    %c0_172 = arith.constant 0 : index
    %133 = vector.load %arg16[%c520_171, %c0_172] : memref<608x32xf32, #tpu.memory_space<vmem>>, vector<16x32xf32>
    tpu.vector_store %arg16[%c520_171, %c0_172], %132 {strides = array<i32>} : memref<608x32xf32, #tpu.memory_space<vmem>>, vector<16x32xf32>,
    %c7_173 = arith.constant 7 : index
    %c0_174 = arith.constant 0 : index
    %134 = vector.load %arg16[%c7_173, %c0_174] : memref<608x32xf32, #tpu.memory_space<vmem>>, vector<512x32xf32>
    %c0_175 = arith.constant 0 : index
    %c0_176 = arith.constant 0 : index
    %c0_177 = arith.constant 0 : index
    %135 = vector.load %arg4[%c0_175, %c0_176, %c0_177] : memref<9x32x32xf32, #tpu.memory_space<vmem>>, vector<1x32x32xf32>
    %136 = vector.shape_cast %135 : vector<1x32x32xf32> to vector<32x32xf32>
    %cst_178 = arith.constant dense<0.000000e+00> : vector<512x32xf32>
    %137 = tpu.matmul %134, %136, %cst_178 {dimension_numbers = #tpu.dot_dimension_numbers<[1], [0], [0], [1], [0, 0, 1, 1], [], []>} : vector<512x32xf32>, vector<32x32xf32>, vector<512x32xf32> -> vector<512x32xf32>
    %c8_179 = arith.constant 8 : index
    %c0_180 = arith.constant 0 : index
    %138 = vector.load %arg16[%c8_179, %c0_180] : memref<608x32xf32, #tpu.memory_space<vmem>>, vector<512x32xf32>
    %c1_181 = arith.constant 1 : index
    %c0_182 = arith.constant 0 : index
    %c0_183 = arith.constant 0 : index
    %139 = vector.load %arg4[%c1_181, %c0_182, %c0_183] : memref<9x32x32xf32, #tpu.memory_space<vmem>>, vector<1x32x32xf32>
    %140 = vector.shape_cast %139 : vector<1x32x32xf32> to vector<32x32xf32>
    %cst_184 = arith.constant dense<0.000000e+00> : vector<512x32xf32>
    %141 = tpu.matmul %138, %140, %cst_184 {dimension_numbers = #tpu.dot_dimension_numbers<[1], [0], [0], [1], [0, 0, 1, 1], [], []>} : vector<512x32xf32>, vector<32x32xf32>, vector<512x32xf32> -> vector<512x32xf32>
    %142 = arith.addf %137, %141 : vector<512x32xf32>
    %c9_185 = arith.constant 9 : index
    %c0_186 = arith.constant 0 : index
    %143 = vector.load %arg16[%c9_185, %c0_186] : memref<608x32xf32, #tpu.memory_space<vmem>>, vector<512x32xf32>
    %c2_187 = arith.constant 2 : index
    %c0_188 = arith.constant 0 : index
    %c0_189 = arith.constant 0 : index
    %144 = vector.load %arg4[%c2_187, %c0_188, %c0_189] : memref<9x32x32xf32, #tpu.memory_space<vmem>>, vector<1x32x32xf32>
    %145 = vector.shape_cast %144 : vector<1x32x32xf32> to vector<32x32xf32>
    %cst_190 = arith.constant dense<0.000000e+00> : vector<512x32xf32>
    %146 = tpu.matmul %143, %145, %cst_190 {dimension_numbers = #tpu.dot_dimension_numbers<[1], [0], [0], [1], [0, 0, 1, 1], [], []>} : vector<512x32xf32>, vector<32x32xf32>, vector<512x32xf32> -> vector<512x32xf32>
    %147 = arith.addf %142, %146 : vector<512x32xf32>
    %c39_191 = arith.constant 39 : index
    %c0_192 = arith.constant 0 : index
    %148 = vector.load %arg16[%c39_191, %c0_192] : memref<608x32xf32, #tpu.memory_space<vmem>>, vector<512x32xf32>
    %c3_193 = arith.constant 3 : index
    %c0_194 = arith.constant 0 : index
    %c0_195 = arith.constant 0 : index
    %149 = vector.load %arg4[%c3_193, %c0_194, %c0_195] : memref<9x32x32xf32, #tpu.memory_space<vmem>>, vector<1x32x32xf32>
    %150 = vector.shape_cast %149 : vector<1x32x32xf32> to vector<32x32xf32>
    %cst_196 = arith.constant dense<0.000000e+00> : vector<512x32xf32>
    %151 = tpu.matmul %148, %150, %cst_196 {dimension_numbers = #tpu.dot_dimension_numbers<[1], [0], [0], [1], [0, 0, 1, 1], [], []>} : vector<512x32xf32>, vector<32x32xf32>, vector<512x32xf32> -> vector<512x32xf32>
    %152 = arith.addf %147, %151 : vector<512x32xf32>
    %c40_197 = arith.constant 40 : index
    %c0_198 = arith.constant 0 : index
    %153 = vector.load %arg16[%c40_197, %c0_198] : memref<608x32xf32, #tpu.memory_space<vmem>>, vector<512x32xf32>
    %c4_199 = arith.constant 4 : index
    %c0_200 = arith.constant 0 : index
    %c0_201 = arith.constant 0 : index
    %154 = vector.load %arg4[%c4_199, %c0_200, %c0_201] : memref<9x32x32xf32, #tpu.memory_space<vmem>>, vector<1x32x32xf32>
    %155 = vector.shape_cast %154 : vector<1x32x32xf32> to vector<32x32xf32>
    %cst_202 = arith.constant dense<0.000000e+00> : vector<512x32xf32>
    %156 = tpu.matmul %153, %155, %cst_202 {dimension_numbers = #tpu.dot_dimension_numbers<[1], [0], [0], [1], [0, 0, 1, 1], [], []>} : vector<512x32xf32>, vector<32x32xf32>, vector<512x32xf32> -> vector<512x32xf32>
    %157 = arith.addf %152, %156 : vector<512x32xf32>
    %c41_203 = arith.constant 41 : index
    %c0_204 = arith.constant 0 : index
    %158 = vector.load %arg16[%c41_203, %c0_204] : memref<608x32xf32, #tpu.memory_space<vmem>>, vector<512x32xf32>
    %c5_205 = arith.constant 5 : index
    %c0_206 = arith.constant 0 : index
    %c0_207 = arith.constant 0 : index
    %159 = vector.load %arg4[%c5_205, %c0_206, %c0_207] : memref<9x32x32xf32, #tpu.memory_space<vmem>>, vector<1x32x32xf32>
    %160 = vector.shape_cast %159 : vector<1x32x32xf32> to vector<32x32xf32>
    %cst_208 = arith.constant dense<0.000000e+00> : vector<512x32xf32>
    %161 = tpu.matmul %158, %160, %cst_208 {dimension_numbers = #tpu.dot_dimension_numbers<[1], [0], [0], [1], [0, 0, 1, 1], [], []>} : vector<512x32xf32>, vector<32x32xf32>, vector<512x32xf32> -> vector<512x32xf32>
    %162 = arith.addf %157, %161 : vector<512x32xf32>
    %c71_209 = arith.constant 71 : index
    %c0_210 = arith.constant 0 : index
    %163 = vector.load %arg16[%c71_209, %c0_210] : memref<608x32xf32, #tpu.memory_space<vmem>>, vector<512x32xf32>
    %c6_211 = arith.constant 6 : index
    %c0_212 = arith.constant 0 : index
    %c0_213 = arith.constant 0 : index
    %164 = vector.load %arg4[%c6_211, %c0_212, %c0_213] : memref<9x32x32xf32, #tpu.memory_space<vmem>>, vector<1x32x32xf32>
    %165 = vector.shape_cast %164 : vector<1x32x32xf32> to vector<32x32xf32>
    %cst_214 = arith.constant dense<0.000000e+00> : vector<512x32xf32>
    %166 = tpu.matmul %163, %165, %cst_214 {dimension_numbers = #tpu.dot_dimension_numbers<[1], [0], [0], [1], [0, 0, 1, 1], [], []>} : vector<512x32xf32>, vector<32x32xf32>, vector<512x32xf32> -> vector<512x32xf32>
    %167 = arith.addf %162, %166 : vector<512x32xf32>
    %c72_215 = arith.constant 72 : index
    %c0_216 = arith.constant 0 : index
    %168 = vector.load %arg16[%c72_215, %c0_216] : memref<608x32xf32, #tpu.memory_space<vmem>>, vector<512x32xf32>
    %c7_217 = arith.constant 7 : index
    %c0_218 = arith.constant 0 : index
    %c0_219 = arith.constant 0 : index
    %169 = vector.load %arg4[%c7_217, %c0_218, %c0_219] : memref<9x32x32xf32, #tpu.memory_space<vmem>>, vector<1x32x32xf32>
    %170 = vector.shape_cast %169 : vector<1x32x32xf32> to vector<32x32xf32>
    %cst_220 = arith.constant dense<0.000000e+00> : vector<512x32xf32>
    %171 = tpu.matmul %168, %170, %cst_220 {dimension_numbers = #tpu.dot_dimension_numbers<[1], [0], [0], [1], [0, 0, 1, 1], [], []>} : vector<512x32xf32>, vector<32x32xf32>, vector<512x32xf32> -> vector<512x32xf32>
    %172 = arith.addf %167, %171 : vector<512x32xf32>
    %c73_221 = arith.constant 73 : index
    %c0_222 = arith.constant 0 : index
    %173 = vector.load %arg16[%c73_221, %c0_222] : memref<608x32xf32, #tpu.memory_space<vmem>>, vector<512x32xf32>
    %c8_223 = arith.constant 8 : index
    %c0_224 = arith.constant 0 : index
    %c0_225 = arith.constant 0 : index
    %174 = vector.load %arg4[%c8_223, %c0_224, %c0_225] : memref<9x32x32xf32, #tpu.memory_space<vmem>>, vector<1x32x32xf32>
    %175 = vector.shape_cast %174 : vector<1x32x32xf32> to vector<32x32xf32>
    %cst_226 = arith.constant dense<0.000000e+00> : vector<512x32xf32>
    %176 = tpu.matmul %173, %175, %cst_226 {dimension_numbers = #tpu.dot_dimension_numbers<[1], [0], [0], [1], [0, 0, 1, 1], [], []>} : vector<512x32xf32>, vector<32x32xf32>, vector<512x32xf32> -> vector<512x32xf32>
    %177 = arith.addf %172, %176 : vector<512x32xf32>
    %c0_227 = arith.constant 0 : index
    %c0_228 = arith.constant 0 : index
    %178 = vector.load %arg5[%c0_227, %c0_228] : memref<1x32xf32, #tpu.memory_space<vmem>>, vector<1x32xf32>
    %179 = vector.broadcast %178 : vector<1x32xf32> to vector<512x32xf32>
    %180 = arith.addf %177, %179 : vector<512x32xf32>
    %c0_229 = arith.constant 0 : index
    %c0_230 = arith.constant 0 : index
    %181 = vector.load %arg18[%c0_229, %c0_230] : memref<512x32xf32, #tpu.memory_space<vmem>>, vector<512x32xf32>
    tpu.vector_store %arg18[%c0_229, %c0_230], %180 {strides = array<i32>} : memref<512x32xf32, #tpu.memory_space<vmem>>, vector<512x32xf32>,
    %c0_231 = arith.constant 0 : index
    %c0_232 = arith.constant 0 : index
    %c0_233 = arith.constant 0 : index
    %c0_234 = arith.constant 0 : index
    %182 = vector.load %arg1[%c0_231, %c0_232, %c0_233, %c0_234] : memref<1x16x16x32xf32, #tpu.memory_space<vmem>>, vector<1x1x16x32xf32>
    %183 = vector.shape_cast %182 : vector<1x1x16x32xf32> to vector<16x32xf32>
    %c0_235 = arith.constant 0 : index
    %c0_236 = arith.constant 0 : index
    %184 = vector.load %arg18[%c0_235, %c0_236] : memref<512x32xf32, #tpu.memory_space<vmem>>, vector<16x32xf32>
    %cst_237 = arith.constant 1.000000e-01 : f32
    %185 = vector.broadcast %cst_237 : f32 to vector<16x32xf32>
    %186 = arith.mulf %185, %184 : vector<16x32xf32>
    %187 = arith.addf %183, %186 : vector<16x32xf32>
    %c0_238 = arith.constant 0 : index
    %c0_239 = arith.constant 0 : index
    %188 = vector.load %arg19[%c0_238, %c0_239] : memref<256x32xf32, #tpu.memory_space<vmem>>, vector<16x32xf32>
    tpu.vector_store %arg19[%c0_238, %c0_239], %187 {strides = array<i32>} : memref<256x32xf32, #tpu.memory_space<vmem>>, vector<16x32xf32>,
    %c0_240 = arith.constant 0 : index
    %c1_241 = arith.constant 1 : index
    %c0_242 = arith.constant 0 : index
    %c0_243 = arith.constant 0 : index
    %189 = vector.load %arg1[%c0_240, %c1_241, %c0_242, %c0_243] : memref<1x16x16x32xf32, #tpu.memory_space<vmem>>, vector<1x1x16x32xf32>
    %190 = vector.shape_cast %189 : vector<1x1x16x32xf32> to vector<16x32xf32>
    %c32_244 = arith.constant 32 : index
    %c0_245 = arith.constant 0 : index
    %191 = vector.load %arg18[%c32_244, %c0_245] : memref<512x32xf32, #tpu.memory_space<vmem>>, vector<16x32xf32>
    %cst_246 = arith.constant 1.000000e-01 : f32
    %192 = vector.broadcast %cst_246 : f32 to vector<16x32xf32>
    %193 = arith.mulf %192, %191 : vector<16x32xf32>
    %194 = arith.addf %190, %193 : vector<16x32xf32>
    %c16 = arith.constant 16 : index
    %c0_247 = arith.constant 0 : index
    %195 = vector.load %arg19[%c16, %c0_247] : memref<256x32xf32, #tpu.memory_space<vmem>>, vector<16x32xf32>
    tpu.vector_store %arg19[%c16, %c0_247], %194 {strides = array<i32>} : memref<256x32xf32, #tpu.memory_space<vmem>>, vector<16x32xf32>,
    %c0_248 = arith.constant 0 : index
    %c2_249 = arith.constant 2 : index
    %c0_250 = arith.constant 0 : index
    %c0_251 = arith.constant 0 : index
    %196 = vector.load %arg1[%c0_248, %c2_249, %c0_250, %c0_251] : memref<1x16x16x32xf32, #tpu.memory_space<vmem>>, vector<1x1x16x32xf32>
    %197 = vector.shape_cast %196 : vector<1x1x16x32xf32> to vector<16x32xf32>
    %c64_252 = arith.constant 64 : index
    %c0_253 = arith.constant 0 : index
    %198 = vector.load %arg18[%c64_252, %c0_253] : memref<512x32xf32, #tpu.memory_space<vmem>>, vector<16x32xf32>
    %cst_254 = arith.constant 1.000000e-01 : f32
    %199 = vector.broadcast %cst_254 : f32 to vector<16x32xf32>
    %200 = arith.mulf %199, %198 : vector<16x32xf32>
    %201 = arith.addf %197, %200 : vector<16x32xf32>
    %c32_255 = arith.constant 32 : index
    %c0_256 = arith.constant 0 : index
    %202 = vector.load %arg19[%c32_255, %c0_256] : memref<256x32xf32, #tpu.memory_space<vmem>>, vector<16x32xf32>
    tpu.vector_store %arg19[%c32_255, %c0_256], %201 {strides = array<i32>} : memref<256x32xf32, #tpu.memory_space<vmem>>, vector<16x32xf32>,
    %c0_257 = arith.constant 0 : index
    %c3_258 = arith.constant 3 : index
    %c0_259 = arith.constant 0 : index
    %c0_260 = arith.constant 0 : index
    %203 = vector.load %arg1[%c0_257, %c3_258, %c0_259, %c0_260] : memref<1x16x16x32xf32, #tpu.memory_space<vmem>>, vector<1x1x16x32xf32>
    %204 = vector.shape_cast %203 : vector<1x1x16x32xf32> to vector<16x32xf32>
    %c96_261 = arith.constant 96 : index
    %c0_262 = arith.constant 0 : index
    %205 = vector.load %arg18[%c96_261, %c0_262] : memref<512x32xf32, #tpu.memory_space<vmem>>, vector<16x32xf32>
    %cst_263 = arith.constant 1.000000e-01 : f32
    %206 = vector.broadcast %cst_263 : f32 to vector<16x32xf32>
    %207 = arith.mulf %206, %205 : vector<16x32xf32>
    %208 = arith.addf %204, %207 : vector<16x32xf32>
    %c48 = arith.constant 48 : index
    %c0_264 = arith.constant 0 : index
    %209 = vector.load %arg19[%c48, %c0_264] : memref<256x32xf32, #tpu.memory_space<vmem>>, vector<16x32xf32>
    tpu.vector_store %arg19[%c48, %c0_264], %208 {strides = array<i32>} : memref<256x32xf32, #tpu.memory_space<vmem>>, vector<16x32xf32>,
    %c0_265 = arith.constant 0 : index
    %c4_266 = arith.constant 4 : index
    %c0_267 = arith.constant 0 : index
    %c0_268 = arith.constant 0 : index
    %210 = vector.load %arg1[%c0_265, %c4_266, %c0_267, %c0_268] : memref<1x16x16x32xf32, #tpu.memory_space<vmem>>, vector<1x1x16x32xf32>
    %211 = vector.shape_cast %210 : vector<1x1x16x32xf32> to vector<16x32xf32>
    %c128_269 = arith.constant 128 : index
    %c0_270 = arith.constant 0 : index
    %212 = vector.load %arg18[%c128_269, %c0_270] : memref<512x32xf32, #tpu.memory_space<vmem>>, vector<16x32xf32>
    %cst_271 = arith.constant 1.000000e-01 : f32
    %213 = vector.broadcast %cst_271 : f32 to vector<16x32xf32>
    %214 = arith.mulf %213, %212 : vector<16x32xf32>
    %215 = arith.addf %211, %214 : vector<16x32xf32>
    %c64_272 = arith.constant 64 : index
    %c0_273 = arith.constant 0 : index
    %216 = vector.load %arg19[%c64_272, %c0_273] : memref<256x32xf32, #tpu.memory_space<vmem>>, vector<16x32xf32>
    tpu.vector_store %arg19[%c64_272, %c0_273], %215 {strides = array<i32>} : memref<256x32xf32, #tpu.memory_space<vmem>>, vector<16x32xf32>,
    %c0_274 = arith.constant 0 : index
    %c5_275 = arith.constant 5 : index
    %c0_276 = arith.constant 0 : index
    %c0_277 = arith.constant 0 : index
    %217 = vector.load %arg1[%c0_274, %c5_275, %c0_276, %c0_277] : memref<1x16x16x32xf32, #tpu.memory_space<vmem>>, vector<1x1x16x32xf32>
    %218 = vector.shape_cast %217 : vector<1x1x16x32xf32> to vector<16x32xf32>
    %c160_278 = arith.constant 160 : index
    %c0_279 = arith.constant 0 : index
    %219 = vector.load %arg18[%c160_278, %c0_279] : memref<512x32xf32, #tpu.memory_space<vmem>>, vector<16x32xf32>
    %cst_280 = arith.constant 1.000000e-01 : f32
    %220 = vector.broadcast %cst_280 : f32 to vector<16x32xf32>
    %221 = arith.mulf %220, %219 : vector<16x32xf32>
    %222 = arith.addf %218, %221 : vector<16x32xf32>
    %c80 = arith.constant 80 : index
    %c0_281 = arith.constant 0 : index
    %223 = vector.load %arg19[%c80, %c0_281] : memref<256x32xf32, #tpu.memory_space<vmem>>, vector<16x32xf32>
    tpu.vector_store %arg19[%c80, %c0_281], %222 {strides = array<i32>} : memref<256x32xf32, #tpu.memory_space<vmem>>, vector<16x32xf32>,
    %c0_282 = arith.constant 0 : index
    %c6_283 = arith.constant 6 : index
    %c0_284 = arith.constant 0 : index
    %c0_285 = arith.constant 0 : index
    %224 = vector.load %arg1[%c0_282, %c6_283, %c0_284, %c0_285] : memref<1x16x16x32xf32, #tpu.memory_space<vmem>>, vector<1x1x16x32xf32>
    %225 = vector.shape_cast %224 : vector<1x1x16x32xf32> to vector<16x32xf32>
    %c192_286 = arith.constant 192 : index
    %c0_287 = arith.constant 0 : index
    %226 = vector.load %arg18[%c192_286, %c0_287] : memref<512x32xf32, #tpu.memory_space<vmem>>, vector<16x32xf32>
    %cst_288 = arith.constant 1.000000e-01 : f32
    %227 = vector.broadcast %cst_288 : f32 to vector<16x32xf32>
    %228 = arith.mulf %227, %226 : vector<16x32xf32>
    %229 = arith.addf %225, %228 : vector<16x32xf32>
    %c96_289 = arith.constant 96 : index
    %c0_290 = arith.constant 0 : index
    %230 = vector.load %arg19[%c96_289, %c0_290] : memref<256x32xf32, #tpu.memory_space<vmem>>, vector<16x32xf32>
    tpu.vector_store %arg19[%c96_289, %c0_290], %229 {strides = array<i32>} : memref<256x32xf32, #tpu.memory_space<vmem>>, vector<16x32xf32>,
    %c0_291 = arith.constant 0 : index
    %c7_292 = arith.constant 7 : index
    %c0_293 = arith.constant 0 : index
    %c0_294 = arith.constant 0 : index
    %231 = vector.load %arg1[%c0_291, %c7_292, %c0_293, %c0_294] : memref<1x16x16x32xf32, #tpu.memory_space<vmem>>, vector<1x1x16x32xf32>
    %232 = vector.shape_cast %231 : vector<1x1x16x32xf32> to vector<16x32xf32>
    %c224_295 = arith.constant 224 : index
    %c0_296 = arith.constant 0 : index
    %233 = vector.load %arg18[%c224_295, %c0_296] : memref<512x32xf32, #tpu.memory_space<vmem>>, vector<16x32xf32>
    %cst_297 = arith.constant 1.000000e-01 : f32
    %234 = vector.broadcast %cst_297 : f32 to vector<16x32xf32>
    %235 = arith.mulf %234, %233 : vector<16x32xf32>
    %236 = arith.addf %232, %235 : vector<16x32xf32>
    %c112 = arith.constant 112 : index
    %c0_298 = arith.constant 0 : index
    %237 = vector.load %arg19[%c112, %c0_298] : memref<256x32xf32, #tpu.memory_space<vmem>>, vector<16x32xf32>
    tpu.vector_store %arg19[%c112, %c0_298], %236 {strides = array<i32>} : memref<256x32xf32, #tpu.memory_space<vmem>>, vector<16x32xf32>,
    %c0_299 = arith.constant 0 : index
    %c8_300 = arith.constant 8 : index
    %c0_301 = arith.constant 0 : index
    %c0_302 = arith.constant 0 : index
    %238 = vector.load %arg1[%c0_299, %c8_300, %c0_301, %c0_302] : memref<1x16x16x32xf32, #tpu.memory_space<vmem>>, vector<1x1x16x32xf32>
    %239 = vector.shape_cast %238 : vector<1x1x16x32xf32> to vector<16x32xf32>
    %c256_303 = arith.constant 256 : index
    %c0_304 = arith.constant 0 : index
    %240 = vector.load %arg18[%c256_303, %c0_304] : memref<512x32xf32, #tpu.memory_space<vmem>>, vector<16x32xf32>
    %cst_305 = arith.constant 1.000000e-01 : f32
    %241 = vector.broadcast %cst_305 : f32 to vector<16x32xf32>
    %242 = arith.mulf %241, %240 : vector<16x32xf32>
    %243 = arith.addf %239, %242 : vector<16x32xf32>
    %c128_306 = arith.constant 128 : index
    %c0_307 = arith.constant 0 : index
    %244 = vector.load %arg19[%c128_306, %c0_307] : memref<256x32xf32, #tpu.memory_space<vmem>>, vector<16x32xf32>
    tpu.vector_store %arg19[%c128_306, %c0_307], %243 {strides = array<i32>} : memref<256x32xf32, #tpu.memory_space<vmem>>, vector<16x32xf32>,
    %c0_308 = arith.constant 0 : index
    %c9_309 = arith.constant 9 : index
    %c0_310 = arith.constant 0 : index
    %c0_311 = arith.constant 0 : index
    %245 = vector.load %arg1[%c0_308, %c9_309, %c0_310, %c0_311] : memref<1x16x16x32xf32, #tpu.memory_space<vmem>>, vector<1x1x16x32xf32>
    %246 = vector.shape_cast %245 : vector<1x1x16x32xf32> to vector<16x32xf32>
    %c288_312 = arith.constant 288 : index
    %c0_313 = arith.constant 0 : index
    %247 = vector.load %arg18[%c288_312, %c0_313] : memref<512x32xf32, #tpu.memory_space<vmem>>, vector<16x32xf32>
    %cst_314 = arith.constant 1.000000e-01 : f32
    %248 = vector.broadcast %cst_314 : f32 to vector<16x32xf32>
    %249 = arith.mulf %248, %247 : vector<16x32xf32>
    %250 = arith.addf %246, %249 : vector<16x32xf32>
    %c144 = arith.constant 144 : index
    %c0_315 = arith.constant 0 : index
    %251 = vector.load %arg19[%c144, %c0_315] : memref<256x32xf32, #tpu.memory_space<vmem>>, vector<16x32xf32>
    tpu.vector_store %arg19[%c144, %c0_315], %250 {strides = array<i32>} : memref<256x32xf32, #tpu.memory_space<vmem>>, vector<16x32xf32>,
    %c0_316 = arith.constant 0 : index
    %c10_317 = arith.constant 10 : index
    %c0_318 = arith.constant 0 : index
    %c0_319 = arith.constant 0 : index
    %252 = vector.load %arg1[%c0_316, %c10_317, %c0_318, %c0_319] : memref<1x16x16x32xf32, #tpu.memory_space<vmem>>, vector<1x1x16x32xf32>
    %253 = vector.shape_cast %252 : vector<1x1x16x32xf32> to vector<16x32xf32>
    %c320_320 = arith.constant 320 : index
    %c0_321 = arith.constant 0 : index
    %254 = vector.load %arg18[%c320_320, %c0_321] : memref<512x32xf32, #tpu.memory_space<vmem>>, vector<16x32xf32>
    %cst_322 = arith.constant 1.000000e-01 : f32
    %255 = vector.broadcast %cst_322 : f32 to vector<16x32xf32>
    %256 = arith.mulf %255, %254 : vector<16x32xf32>
    %257 = arith.addf %253, %256 : vector<16x32xf32>
    %c160_323 = arith.constant 160 : index
    %c0_324 = arith.constant 0 : index
    %258 = vector.load %arg19[%c160_323, %c0_324] : memref<256x32xf32, #tpu.memory_space<vmem>>, vector<16x32xf32>
    tpu.vector_store %arg19[%c160_323, %c0_324], %257 {strides = array<i32>} : memref<256x32xf32, #tpu.memory_space<vmem>>, vector<16x32xf32>,
    %c0_325 = arith.constant 0 : index
    %c11_326 = arith.constant 11 : index
    %c0_327 = arith.constant 0 : index
    %c0_328 = arith.constant 0 : index
    %259 = vector.load %arg1[%c0_325, %c11_326, %c0_327, %c0_328] : memref<1x16x16x32xf32, #tpu.memory_space<vmem>>, vector<1x1x16x32xf32>
    %260 = vector.shape_cast %259 : vector<1x1x16x32xf32> to vector<16x32xf32>
    %c352_329 = arith.constant 352 : index
    %c0_330 = arith.constant 0 : index
    %261 = vector.load %arg18[%c352_329, %c0_330] : memref<512x32xf32, #tpu.memory_space<vmem>>, vector<16x32xf32>
    %cst_331 = arith.constant 1.000000e-01 : f32
    %262 = vector.broadcast %cst_331 : f32 to vector<16x32xf32>
    %263 = arith.mulf %262, %261 : vector<16x32xf32>
    %264 = arith.addf %260, %263 : vector<16x32xf32>
    %c176 = arith.constant 176 : index
    %c0_332 = arith.constant 0 : index
    %265 = vector.load %arg19[%c176, %c0_332] : memref<256x32xf32, #tpu.memory_space<vmem>>, vector<16x32xf32>
    tpu.vector_store %arg19[%c176, %c0_332], %264 {strides = array<i32>} : memref<256x32xf32, #tpu.memory_space<vmem>>, vector<16x32xf32>,
    %c0_333 = arith.constant 0 : index
    %c12_334 = arith.constant 12 : index
    %c0_335 = arith.constant 0 : index
    %c0_336 = arith.constant 0 : index
    %266 = vector.load %arg1[%c0_333, %c12_334, %c0_335, %c0_336] : memref<1x16x16x32xf32, #tpu.memory_space<vmem>>, vector<1x1x16x32xf32>
    %267 = vector.shape_cast %266 : vector<1x1x16x32xf32> to vector<16x32xf32>
    %c384_337 = arith.constant 384 : index
    %c0_338 = arith.constant 0 : index
    %268 = vector.load %arg18[%c384_337, %c0_338] : memref<512x32xf32, #tpu.memory_space<vmem>>, vector<16x32xf32>
    %cst_339 = arith.constant 1.000000e-01 : f32
    %269 = vector.broadcast %cst_339 : f32 to vector<16x32xf32>
    %270 = arith.mulf %269, %268 : vector<16x32xf32>
    %271 = arith.addf %267, %270 : vector<16x32xf32>
    %c192_340 = arith.constant 192 : index
    %c0_341 = arith.constant 0 : index
    %272 = vector.load %arg19[%c192_340, %c0_341] : memref<256x32xf32, #tpu.memory_space<vmem>>, vector<16x32xf32>
    tpu.vector_store %arg19[%c192_340, %c0_341], %271 {strides = array<i32>} : memref<256x32xf32, #tpu.memory_space<vmem>>, vector<16x32xf32>,
    %c0_342 = arith.constant 0 : index
    %c13_343 = arith.constant 13 : index
    %c0_344 = arith.constant 0 : index
    %c0_345 = arith.constant 0 : index
    %273 = vector.load %arg1[%c0_342, %c13_343, %c0_344, %c0_345] : memref<1x16x16x32xf32, #tpu.memory_space<vmem>>, vector<1x1x16x32xf32>
    %274 = vector.shape_cast %273 : vector<1x1x16x32xf32> to vector<16x32xf32>
    %c416_346 = arith.constant 416 : index
    %c0_347 = arith.constant 0 : index
    %275 = vector.load %arg18[%c416_346, %c0_347] : memref<512x32xf32, #tpu.memory_space<vmem>>, vector<16x32xf32>
    %cst_348 = arith.constant 1.000000e-01 : f32
    %276 = vector.broadcast %cst_348 : f32 to vector<16x32xf32>
    %277 = arith.mulf %276, %275 : vector<16x32xf32>
    %278 = arith.addf %274, %277 : vector<16x32xf32>
    %c208 = arith.constant 208 : index
    %c0_349 = arith.constant 0 : index
    %279 = vector.load %arg19[%c208, %c0_349] : memref<256x32xf32, #tpu.memory_space<vmem>>, vector<16x32xf32>
    tpu.vector_store %arg19[%c208, %c0_349], %278 {strides = array<i32>} : memref<256x32xf32, #tpu.memory_space<vmem>>, vector<16x32xf32>,
    %c0_350 = arith.constant 0 : index
    %c14_351 = arith.constant 14 : index
    %c0_352 = arith.constant 0 : index
    %c0_353 = arith.constant 0 : index
    %280 = vector.load %arg1[%c0_350, %c14_351, %c0_352, %c0_353] : memref<1x16x16x32xf32, #tpu.memory_space<vmem>>, vector<1x1x16x32xf32>
    %281 = vector.shape_cast %280 : vector<1x1x16x32xf32> to vector<16x32xf32>
    %c448_354 = arith.constant 448 : index
    %c0_355 = arith.constant 0 : index
    %282 = vector.load %arg18[%c448_354, %c0_355] : memref<512x32xf32, #tpu.memory_space<vmem>>, vector<16x32xf32>
    %cst_356 = arith.constant 1.000000e-01 : f32
    %283 = vector.broadcast %cst_356 : f32 to vector<16x32xf32>
    %284 = arith.mulf %283, %282 : vector<16x32xf32>
    %285 = arith.addf %281, %284 : vector<16x32xf32>
    %c224_357 = arith.constant 224 : index
    %c0_358 = arith.constant 0 : index
    %286 = vector.load %arg19[%c224_357, %c0_358] : memref<256x32xf32, #tpu.memory_space<vmem>>, vector<16x32xf32>
    tpu.vector_store %arg19[%c224_357, %c0_358], %285 {strides = array<i32>} : memref<256x32xf32, #tpu.memory_space<vmem>>, vector<16x32xf32>,
    %c0_359 = arith.constant 0 : index
    %c15_360 = arith.constant 15 : index
    %c0_361 = arith.constant 0 : index
    %c0_362 = arith.constant 0 : index
    %287 = vector.load %arg1[%c0_359, %c15_360, %c0_361, %c0_362] : memref<1x16x16x32xf32, #tpu.memory_space<vmem>>, vector<1x1x16x32xf32>
    %288 = vector.shape_cast %287 : vector<1x1x16x32xf32> to vector<16x32xf32>
    %c480_363 = arith.constant 480 : index
    %c0_364 = arith.constant 0 : index
    %289 = vector.load %arg18[%c480_363, %c0_364] : memref<512x32xf32, #tpu.memory_space<vmem>>, vector<16x32xf32>
    %cst_365 = arith.constant 1.000000e-01 : f32
    %290 = vector.broadcast %cst_365 : f32 to vector<16x32xf32>
    %291 = arith.mulf %290, %289 : vector<16x32xf32>
    %292 = arith.addf %288, %291 : vector<16x32xf32>
    %c240 = arith.constant 240 : index
    %c0_366 = arith.constant 0 : index
    %293 = vector.load %arg19[%c240, %c0_366] : memref<256x32xf32, #tpu.memory_space<vmem>>, vector<16x32xf32>
    tpu.vector_store %arg19[%c240, %c0_366], %292 {strides = array<i32>} : memref<256x32xf32, #tpu.memory_space<vmem>>, vector<16x32xf32>,
    %c0_367 = arith.constant 0 : index
    %c0_368 = arith.constant 0 : index
    %294 = vector.load %arg19[%c0_367, %c0_368] : memref<256x32xf32, #tpu.memory_space<vmem>>, vector<256x32xf32>
    %c0_369 = arith.constant 0 : index
    %c0_370 = arith.constant 0 : index
    %295 = vector.load %arg6[%c0_369, %c0_370] : memref<32x32xf32, #tpu.memory_space<vmem>>, vector<32x32xf32>
    %cst_371 = arith.constant dense<0.000000e+00> : vector<256x32xf32>
    %296 = tpu.matmul %294, %295, %cst_371 {dimension_numbers = #tpu.dot_dimension_numbers<[1], [0], [0], [1], [0, 0, 1, 1], [], []>} : vector<256x32xf32>, vector<32x32xf32>, vector<256x32xf32> -> vector<256x32xf32>
    %c0_372 = arith.constant 0 : index
    %c0_373 = arith.constant 0 : index
    %297 = vector.load %arg7[%c0_372, %c0_373] : memref<1x32xf32, #tpu.memory_space<vmem>>, vector<1x32xf32>
    %298 = vector.broadcast %297 : vector<1x32xf32> to vector<256x32xf32>
    %299 = arith.addf %296, %298 : vector<256x32xf32>
    %cst_374 = arith.constant 0.000000e+00 : f32
    %300 = vector.broadcast %cst_374 : f32 to vector<256x32xf32>
    %301 = arith.maximumf %299, %300 : vector<256x32xf32>
    %c0_375 = arith.constant 0 : index
    %c0_376 = arith.constant 0 : index
    %302 = vector.load %arg8[%c0_375, %c0_376] : memref<32x32xf32, #tpu.memory_space<vmem>>, vector<32x32xf32>
    %cst_377 = arith.constant dense<0.000000e+00> : vector<256x32xf32>
    %303 = tpu.matmul %301, %302, %cst_377 {dimension_numbers = #tpu.dot_dimension_numbers<[1], [0], [0], [1], [0, 0, 1, 1], [], []>} : vector<256x32xf32>, vector<32x32xf32>, vector<256x32xf32> -> vector<256x32xf32>
    %c0_378 = arith.constant 0 : index
    %c0_379 = arith.constant 0 : index
    %304 = vector.load %arg9[%c0_378, %c0_379] : memref<1x32xf32, #tpu.memory_space<vmem>>, vector<1x32xf32>
    %305 = vector.broadcast %304 : vector<1x32xf32> to vector<256x32xf32>
    %306 = arith.addf %303, %305 : vector<256x32xf32>
    %cst_380 = arith.constant dense<0.000000e+00> : vector<32xf32>
    %307 = vector.multi_reduction <add>, %306, %cst_380 [0] : vector<256x32xf32> to vector<32xf32>
    %308 = vector.shape_cast %307 : vector<32xf32> to vector<1x32xf32>
    %cst_381 = arith.constant 2.560000e+02 : f32
    %309 = vector.broadcast %cst_381 : f32 to vector<1x32xf32>
    %310 = arith.divf %308, %309 : vector<1x32xf32>
    %c0_382 = arith.constant 0 : index
    %c0_383 = arith.constant 0 : index
    %311 = vector.load %arg10[%c0_382, %c0_383] : memref<2x32xf32, #tpu.memory_space<vmem>>, vector<2x32xf32>
    %312 = vector.broadcast %310 : vector<1x32xf32> to vector<2x32xf32>
    %313 = arith.mulf %312, %311 : vector<2x32xf32>
    %cst_384 = arith.constant dense<0.000000e+00> : vector<2xf32>
    %314 = vector.multi_reduction <add>, %313, %cst_384 [1] : vector<2x32xf32> to vector<2xf32>
    %315 = vector.shape_cast %314 : vector<2xf32> to vector<2x1xf32>
    %c0_385 = arith.constant 0 : index
    %c0_386 = arith.constant 0 : index
    %316 = vector.load %arg11[%c0_385, %c0_386] : memref<2x1xf32, #tpu.memory_space<vmem>>, vector<2x1xf32>
    %317 = arith.addf %315, %316 : vector<2x1xf32>
    %cst_387 = arith.constant 0.000000e+00 : f32
    %318 = vector.broadcast %cst_387 : f32 to vector<2x1xf32>
    %319 = arith.maximumf %317, %318 : vector<2x1xf32>
    %c0_388 = arith.constant 0 : index
    %c0_389 = arith.constant 0 : index
    %320 = vector.load %arg12[%c0_388, %c0_389] : memref<2x32xf32, #tpu.memory_space<vmem>>, vector<2x32xf32>
    %321 = vector.broadcast %319 : vector<2x1xf32> to vector<2x32xf32>
    %322 = arith.mulf %321, %320 : vector<2x32xf32>
    %cst_390 = arith.constant dense<0.000000e+00> : vector<32xf32>
    %323 = vector.multi_reduction <add>, %322, %cst_390 [0] : vector<2x32xf32> to vector<32xf32>
    %324 = vector.shape_cast %323 : vector<32xf32> to vector<1x32xf32>
    %c0_391 = arith.constant 0 : index
    %c0_392 = arith.constant 0 : index
    %325 = vector.load %arg13[%c0_391, %c0_392] : memref<1x32xf32, #tpu.memory_space<vmem>>, vector<1x32xf32>
    %326 = arith.addf %324, %325 : vector<1x32xf32>
    %327 = arith.negf %326 : vector<1x32xf32>
    %328 = math.exp %327 : vector<1x32xf32>
    %cst_393 = arith.constant 1.000000e+00 : f32
    %329 = vector.broadcast %cst_393 : f32 to vector<1x32xf32>
    %330 = arith.addf %329, %328 : vector<1x32xf32>
    %331 = arith.divf %329, %330 : vector<1x32xf32>
    %332 = vector.broadcast %331 : vector<1x32xf32> to vector<256x32xf32>
    %333 = arith.mulf %306, %332 : vector<256x32xf32>
    %cst_394 = arith.constant 1.000000e-01 : f32
    %334 = vector.broadcast %cst_394 : f32 to vector<256x32xf32>
    %335 = arith.mulf %334, %333 : vector<256x32xf32>
    %336 = arith.addf %294, %335 : vector<256x32xf32>
    %c0_395 = arith.constant 0 : index
    %c0_396 = arith.constant 0 : index
    %c0_397 = arith.constant 0 : index
    %337 = vector.load %arg14[%c0_395, %c0_396, %c0_397] : memref<1x256x32xf32, #tpu.memory_space<vmem>>, vector<1x256x32xf32>
    %338 = vector.shape_cast %337 : vector<1x256x32xf32> to vector<256x32xf32>
    %339 = vector.shape_cast %336 : vector<256x32xf32> to vector<1x256x32xf32>
    tpu.vector_store %arg14[%c0_395, %c0_396, %c0_397], %339 {strides = array<i32>} : memref<1x256x32xf32, #tpu.memory_space<vmem>>, vector<1x256x32xf32>,
    return
  }
  func.func @transform_0(%arg0: i32) -> (i32, i32, i32, i32) {
    %c0_i32 = arith.constant 0 : i32
    %c0_i32_0 = arith.constant 0 : i32
    %c0_i32_1 = arith.constant 0 : i32
    %c0_i32_2 = arith.constant 0 : i32
    return %arg0, %c0_i32, %c0_i32_0, %c0_i32_1 : i32, i32, i32, i32
  }
  func.func @transform_1(%arg0: i32) -> (i32, i32, i32) {
    %c0_i32 = arith.constant 0 : i32
    %c0_i32_0 = arith.constant 0 : i32
    %c0_i32_1 = arith.constant 0 : i32
    %c0_i32_2 = arith.constant 0 : i32
    return %c0_i32, %c0_i32_0, %c0_i32_1 : i32, i32, i32
  }
  func.func @transform_2(%arg0: i32) -> (i32, i32) {
    %c0_i32 = arith.constant 0 : i32
    %c0_i32_0 = arith.constant 0 : i32
    %c0_i32_1 = arith.constant 0 : i32
    return %c0_i32, %c0_i32_0 : i32, i32
  }
  func.func @transform_3(%arg0: i32) -> (i32, i32, i32) {
    %c0_i32 = arith.constant 0 : i32
    %c0_i32_0 = arith.constant 0 : i32
    %c0_i32_1 = arith.constant 0 : i32
    %c0_i32_2 = arith.constant 0 : i32
    return %c0_i32, %c0_i32_0, %c0_i32_1 : i32, i32, i32
  }
  func.func @transform_4(%arg0: i32) -> (i32, i32) {
    %c0_i32 = arith.constant 0 : i32
    %c0_i32_0 = arith.constant 0 : i32
    %c0_i32_1 = arith.constant 0 : i32
    return %c0_i32, %c0_i32_0 : i32, i32
  }
  func.func @transform_5(%arg0: i32) -> (i32, i32) {
    %c0_i32 = arith.constant 0 : i32
    %c0_i32_0 = arith.constant 0 : i32
    %c0_i32_1 = arith.constant 0 : i32
    return %c0_i32, %c0_i32_0 : i32, i32
  }
  func.func @transform_6(%arg0: i32) -> (i32, i32) {
    %c0_i32 = arith.constant 0 : i32
    %c0_i32_0 = arith.constant 0 : i32
    %c0_i32_1 = arith.constant 0 : i32
    return %c0_i32, %c0_i32_0 : i32, i32
  }
  func.func @transform_7(%arg0: i32) -> (i32, i32) {
    %c0_i32 = arith.constant 0 : i32
    %c0_i32_0 = arith.constant 0 : i32
    %c0_i32_1 = arith.constant 0 : i32
    return %c0_i32, %c0_i32_0 : i32, i32
  }
  func.func @transform_8(%arg0: i32) -> (i32, i32) {
    %c0_i32 = arith.constant 0 : i32
    %c0_i32_0 = arith.constant 0 : i32
    %c0_i32_1 = arith.constant 0 : i32
    return %c0_i32, %c0_i32_0 : i32, i32
  }
  func.func @transform_9(%arg0: i32) -> (i32, i32) {
    %c0_i32 = arith.constant 0 : i32
    %c0_i32_0 = arith.constant 0 : i32
    %c0_i32_1 = arith.constant 0 : i32
    return %c0_i32, %c0_i32_0 : i32, i32
  }
  func.func @transform_10(%arg0: i32) -> (i32, i32) {
    %c0_i32 = arith.constant 0 : i32
    %c0_i32_0 = arith.constant 0 : i32
    %c0_i32_1 = arith.constant 0 : i32
    return %c0_i32, %c0_i32_0 : i32, i32
  }
  func.func @transform_11(%arg0: i32) -> (i32, i32) {
    %c0_i32 = arith.constant 0 : i32
    %c0_i32_0 = arith.constant 0 : i32
    %c0_i32_1 = arith.constant 0 : i32
    return %c0_i32, %c0_i32_0 : i32, i32
  }
  func.func @transform_12(%arg0: i32) -> (i32, i32) {
    %c0_i32 = arith.constant 0 : i32
    %c0_i32_0 = arith.constant 0 : i32
    %c0_i32_1 = arith.constant 0 : i32
    return %c0_i32, %c0_i32_0 : i32, i32
  }
  func.func @transform_13(%arg0: i32) -> (i32, i32, i32) {
    %c0_i32 = arith.constant 0 : i32
    %c0_i32_0 = arith.constant 0 : i32
    %c0_i32_1 = arith.constant 0 : i32
    return %arg0, %c0_i32, %c0_i32_0 : i32, i32, i32
  }
}

</mosaic_0001>

<llo_original>
// kernel: tpu_custom_call.1
$region0: #{tpu_custom_call.1}
  #allocation0 [shape = 'u32[]', space=smem, size = 0x4, offset = 0x4, fixed_abs, tag = 'smem constant byte address 0x4 - core index']
  #allocation1 [shape = 'u32[72,128]{1,0:T(1,128)}', space=vmem, size = 0x9000, scoped, tag = 'internal scratch']
  #allocation2 [shape = 'f32[608,32]{1,0:T(8,128)}', space=vmem, size = 0x4c000, scoped, tag = 'scratch operand']
  #allocation3 [shape = 'f32[608,32]{1,0:T(8,128)}', space=vmem, size = 0x4c000, scoped, tag = 'scratch operand']
  #allocation4 [shape = 'f32[512,32]{1,0:T(8,128)}', space=vmem, size = 0x40000, scoped, tag = 'scratch operand']
  #allocation5 [shape = 'f32[512,32]{1,0:T(8,128)}', space=vmem, size = 0x40000, scoped, tag = 'scratch operand']
  #allocation6 [shape = 'f32[256,32]{1,0:T(8,128)}', space=vmem, size = 0x20000, scoped, tag = 'scratch operand']
  %s0 = inlined_call_operand.hbm [shape: f32[2,16,16,32], index: 0, kind: input, shape index: {}]
  %s1 = inlined_call_operand.hbm [shape: f32[9,32,32], index: 1, kind: input, shape index: {}]
  %s2 = inlined_call_operand.hbm [shape: f32[1,32], index: 2, kind: input, shape index: {}]
  %s3 = inlined_call_operand.hbm [shape: f32[9,32,32], index: 3, kind: input, shape index: {}]
  %s4 = inlined_call_operand.vmem [shape: f32[1,32], index: 4, kind: input, shape index: {}]
  %s5 = inlined_call_operand.hbm [shape: f32[32,32], index: 5, kind: input, shape index: {}]
  %s6 = inlined_call_operand.vmem [shape: f32[1,32], index: 6, kind: input, shape index: {}]
  %s7 = inlined_call_operand.hbm [shape: f32[32,32], index: 7, kind: input, shape index: {}]
  %s8 = inlined_call_operand.vmem [shape: f32[1,32], index: 8, kind: input, shape index: {}]
  %s9 = inlined_call_operand.vmem [shape: f32[2,32], index: 9, kind: input, shape index: {}]
  %s10 = inlined_call_operand.vmem [shape: f32[2,1], index: 10, kind: input, shape index: {}]
  %s11 = inlined_call_operand.vmem [shape: f32[2,32], index: 11, kind: input, shape index: {}]
  %s12 = inlined_call_operand.vmem [shape: f32[1,32], index: 12, kind: input, shape index: {}]
  %s13 = inlined_call_operand.vmem [shape: f32[2,256,32], index: 13, kind: output, shape index: {}]
  %s14 = sld [smem:[#allocation0]]
  $region109: #{tpu_custom_call.1} parent=0
    _
  %s16 = ssub.s32 1, %s14
  %s17 = scalar_select 0, %s16, %s14
  $region1: #{tpu_custom_call.1} parent=0
    #allocation7 [shape = 'u8[262144]{0}', space=vmem, size = 0x40000, scoped, tag = 'input window, operand 0']
    #allocation8 [shape = 's32[2]{0}', space=sflag, size = 0x8, scoped, tag = 'scoped memory for tpu_custom_call.1']
    #allocation9 [shape = 'u8[147456]{0}', space=vmem, size = 0x24000, scoped, tag = 'input window, operand 1, single buffered']
    #allocation10 [shape = 's32[1]{0}', space=sflag, size = 0x4, scoped, tag = 'scoped memory for tpu_custom_call.1']
    #allocation11 [shape = 'u8[512]{0}', space=vmem, size = 0x400, scoped, tag = 'input window, operand 2, single buffered']
    #allocation12 [shape = 'u8[147456]{0}', space=vmem, size = 0x24000, scoped, tag = 'input window, operand 3, single buffered']
    #allocation13 [shape = 's32[1]{0}', space=sflag, size = 0x4, scoped, tag = 'scoped memory for tpu_custom_call.1']
    #allocation14 [shape = 'u8[16384]{0}', space=vmem, size = 0x4000, scoped, tag = 'input window, operand 5, single buffered']
    #allocation15 [shape = 'u8[16384]{0}', space=vmem, size = 0x4000, scoped, tag = 'input window, operand 7, single buffered']
    #allocation16 [shape = 's32[1]{0}', space=sflag, size = 0x4, scoped, tag = 'scoped memory for tpu_custom_call.1']
    %18 = vsyncpa [#allocation8], 0
    %s19 = scalar_lea.sflag [#allocation8], 1
    %20 = vsyncpa %s19, 0
    %21 = vsyncpa [#allocation10], 0
    %22 = vsyncpa [#allocation13], 0
    %23 = vsyncpa [#allocation16], 0
    loop: start=0, step=1, limit=4
    $region2: #{tpu_custom_call.1} parent=1 // loop_pre_header
      _
    $region3: #{tpu_custom_call.1} parent=1 // loop_header
      %s25 = sphi 0, %s29
      %p26 = scmp.ge.s32.totalorder %s25, 4
      %s35 = sphi 0, %s37
      %s38 = sphi 0, %s35
      %s39 = sphi 0, %s38
      %s55 = sphi 0, %s39
      %s59 = sphi 0, %s59
      %s61 = sphi 0, %s59
      %s62 = sphi 0, %s61
      %s76 = sphi 0, %s62
      %s80 = sphi 0, %s80
      %s82 = sphi 0, %s80
      %s83 = sphi 0, %s82
      %s97 = sphi 0, %s83
      %s101 = sphi 0, %s101
      %s103 = sphi 0, %s101
      %s104 = sphi 0, %s103
      %s118 = sphi 0, %s104
      %s122 = sphi 0, %s122
      %s124 = sphi 0, %s122
      %s125 = sphi 0, %s124
      %s139 = sphi 0, %s125
      %s143 = sphi 0, %s143
      %s145 = sphi 0, %s143
      %s146 = sphi 0, %s145
      %s160 = sphi 0, %s146
      %s164 = sphi 0, %s164
      %s166 = sphi 0, %s164
      %s167 = sphi 0, %s166
      %s181 = sphi 0, %s167
      %s185 = sphi 0, %s185
      %s187 = sphi 0, %s185
      %s188 = sphi 0, %s187
      %s202 = sphi 0, %s188
      %s206 = sphi 0, %s206
      %s208 = sphi 0, %s206
      %s209 = sphi 0, %s208
      %s223 = sphi 0, %s209
      %s227 = sphi 0, %s227
      %s229 = sphi 0, %s227
      %s230 = sphi 0, %s229
      %s244 = sphi 0, %s230
      %s248 = sphi 0, %s248
      %s250 = sphi 0, %s248
      %s251 = sphi 0, %s250
      %s265 = sphi 0, %s251
      %s269 = sphi 0, %s269
      %s271 = sphi 0, %s269
      %s272 = sphi 0, %s271
      %s286 = sphi 0, %s272
      %s290 = sphi 0, %s290
      %s292 = sphi 0, %s290
      %s293 = sphi 0, %s292
      %s307 = sphi 0, %s293
      %s313 = sphi 0, %s315
      %s316 = sphi 0, %s313
      %s317 = sphi 0, %s316
      %s333 = sphi 0, %s317
    $region4: #{tpu_custom_call.1} parent=1 // loop_header_branch
      %28 = sbr.rel (%p26) target = $region8
    $region5: #{tpu_custom_call.1} parent=1 // loop_body
      %s30 = ssub.s32 %s25, 1
      %s31 = ssub.s32 %s25, 2
      %s32 = sadd.s32 %s25, 1
      %s33 = ssub.s32 %s25, %s32
      %p34 = scmp.eq.s32.totalorder %s33, 0
      %s36 = sadd.s32 %s35, 1
      %s37 = scalar_select %p34, %s35, %s36
      %p40 = pneg %p34
      %p41 = scmp.eq.s32.totalorder %s25, 1
      %p42 = por %p40, %p41
      %p43 = scmp.ne.s32.totalorder %s35, %s38
      %p44 = scmp.eq.s32.totalorder %s25, 0
      %p45 = por %p43, %p44
      %p46 = scmp.ne.s32.totalorder %s35, %s38
      %p47 = scmp.eq.s32.totalorder %s30, 1
      %p48 = por %p46, %p47
      %p49 = scmp.ne.s32.totalorder %s38, %s39
      %p50 = scmp.eq.s32.totalorder %s30, 0
      %p51 = por %p49, %p50
      %p52 = scmp.ne.s32.totalorder %s38, %s39
      %p53 = scmp.eq.s32.totalorder %s31, 1
      %p54 = por %p52, %p53
      %p56 = scmp.ne.s32.totalorder %s39, %s55
      %p57 = scmp.eq.s32.totalorder %s31, 0
      %p58 = por %p56, %p57
      %s60 = sadd.s32 %s59, 1
      %p63 = scmp.eq.s32.totalorder %s25, 1
      %p64 = scmp.ne.s32.totalorder %s59, %s61
      %p65 = scmp.eq.s32.totalorder %s25, 0
      %p66 = por %p64, %p65
      %p67 = scmp.ne.s32.totalorder %s59, %s61
      %p68 = scmp.eq.s32.totalorder %s30, 1
      %p69 = por %p67, %p68
      %p70 = scmp.ne.s32.totalorder %s61, %s62
      %p71 = scmp.eq.s32.totalorder %s30, 0
      %p72 = por %p70, %p71
      %p73 = scmp.ne.s32.totalorder %s61, %s62
      %p74 = scmp.eq.s32.totalorder %s31, 1
      %p75 = por %p73, %p74
      %p77 = scmp.ne.s32.totalorder %s62, %s76
      %p78 = scmp.eq.s32.totalorder %s31, 0
      %p79 = por %p77, %p78
      %s81 = sadd.s32 %s80, 1
      %p84 = scmp.eq.s32.totalorder %s25, 1
      %p85 = scmp.ne.s32.totalorder %s80, %s82
      %p86 = scmp.eq.s32.totalorder %s25, 0
      %p87 = por %p85, %p86
      %p88 = scmp.ne.s32.totalorder %s80, %s82
      %p89 = scmp.eq.s32.totalorder %s30, 1
      %p90 = por %p88, %p89
      %p91 = scmp.ne.s32.totalorder %s82, %s83
      %p92 = scmp.eq.s32.totalorder %s30, 0
      %p93 = por %p91, %p92
      %p94 = scmp.ne.s32.totalorder %s82, %s83
      %p95 = scmp.eq.s32.totalorder %s31, 1
      %p96 = por %p94, %p95
      %p98 = scmp.ne.s32.totalorder %s83, %s97
      %p99 = scmp.eq.s32.totalorder %s31, 0
      %p100 = por %p98, %p99
      %s102 = sadd.s32 %s101, 1
      %p105 = scmp.eq.s32.totalorder %s25, 1
      %p106 = scmp.ne.s32.totalorder %s101, %s103
      %p107 = scmp.eq.s32.totalorder %s25, 0
      %p108 = por %p106, %p107
      %p109 = scmp.ne.s32.totalorder %s101, %s103
      %p110 = scmp.eq.s32.totalorder %s30, 1
      %p111 = por %p109, %p110
      %p112 = scmp.ne.s32.totalorder %s103, %s104
      %p113 = scmp.eq.s32.totalorder %s30, 0
      %p114 = por %p112, %p113
      %p115 = scmp.ne.s32.totalorder %s103, %s104
      %p116 = scmp.eq.s32.totalorder %s31, 1
      %p117 = por %p115, %p116
      %p119 = scmp.ne.s32.totalorder %s104, %s118
      %p120 = scmp.eq.s32.totalorder %s31, 0
      %p121 = por %p119, %p120
      %s123 = sadd.s32 %s122, 1
      %p126 = scmp.eq.s32.totalorder %s25, 1
      %p127 = scmp.ne.s32.totalorder %s122, %s124
      %p128 = scmp.eq.s32.totalorder %s25, 0
      %p129 = por %p127, %p128
      %p130 = scmp.ne.s32.totalorder %s122, %s124
      %p131 = scmp.eq.s32.totalorder %s30, 1
      %p132 = por %p130, %p131
      %p133 = scmp.ne.s32.totalorder %s124, %s125
      %p134 = scmp.eq.s32.totalorder %s30, 0
      %p135 = por %p133, %p134
      %p136 = scmp.ne.s32.totalorder %s124, %s125
      %p137 = scmp.eq.s32.totalorder %s31, 1
      %p138 = por %p136, %p137
      %p140 = scmp.ne.s32.totalorder %s125, %s139
      %p141 = scmp.eq.s32.totalorder %s31, 0
      %p142 = por %p140, %p141
      %s144 = sadd.s32 %s143, 1
      %p147 = scmp.eq.s32.totalorder %s25, 1
      %p148 = scmp.ne.s32.totalorder %s143, %s145
      %p149 = scmp.eq.s32.totalorder %s25, 0
      %p150 = por %p148, %p149
      %p151 = scmp.ne.s32.totalorder %s143, %s145
      %p152 = scmp.eq.s32.totalorder %s30, 1
      %p153 = por %p151, %p152
      %p154 = scmp.ne.s32.totalorder %s145, %s146
      %p155 = scmp.eq.s32.totalorder %s30, 0
      %p156 = por %p154, %p155
      %p157 = scmp.ne.s32.totalorder %s145, %s146
      %p158 = scmp.eq.s32.totalorder %s31, 1
      %p159 = por %p157, %p158
      %p161 = scmp.ne.s32.totalorder %s146, %s160
      %p162 = scmp.eq.s32.totalorder %s31, 0
      %p163 = por %p161, %p162
      %s165 = sadd.s32 %s164, 1
      %p168 = scmp.eq.s32.totalorder %s25, 1
      %p169 = scmp.ne.s32.totalorder %s164, %s166
      %p170 = scmp.eq.s32.totalorder %s25, 0
      %p171 = por %p169, %p170
      %p172 = scmp.ne.s32.totalorder %s164, %s166
      %p173 = scmp.eq.s32.totalorder %s30, 1
      %p174 = por %p172, %p173
      %p175 = scmp.ne.s32.totalorder %s166, %s167
      %p176 = scmp.eq.s32.totalorder %s30, 0
      %p177 = por %p175, %p176
      %p178 = scmp.ne.s32.totalorder %s166, %s167
      %p179 = scmp.eq.s32.totalorder %s31, 1
      %p180 = por %p178, %p179
      %p182 = scmp.ne.s32.totalorder %s167, %s181
      %p183 = scmp.eq.s32.totalorder %s31, 0
      %p184 = por %p182, %p183
      %s186 = sadd.s32 %s185, 1
      %p189 = scmp.eq.s32.totalorder %s25, 1
      %p190 = scmp.ne.s32.totalorder %s185, %s187
      %p191 = scmp.eq.s32.totalorder %s25, 0
      %p192 = por %p190, %p191
      %p193 = scmp.ne.s32.totalorder %s185, %s187
      %p194 = scmp.eq.s32.totalorder %s30, 1
      %p195 = por %p193, %p194
      %p196 = scmp.ne.s32.totalorder %s187, %s188
      %p197 = scmp.eq.s32.totalorder %s30, 0
      %p198 = por %p196, %p197
      %p199 = scmp.ne.s32.totalorder %s187, %s188
      %p200 = scmp.eq.s32.totalorder %s31, 1
      %p201 = por %p199, %p200
      %p203 = scmp.ne.s32.totalorder %s188, %s202
      %p204 = scmp.eq.s32.totalorder %s31, 0
      %p205 = por %p203, %p204
      %s207 = sadd.s32 %s206, 1
      %p210 = scmp.eq.s32.totalorder %s25, 1
      %p211 = scmp.ne.s32.totalorder %s206, %s208
      %p212 = scmp.eq.s32.totalorder %s25, 0
      %p213 = por %p211, %p212
      %p214 = scmp.ne.s32.totalorder %s206, %s208
      %p215 = scmp.eq.s32.totalorder %s30, 1
      %p216 = por %p214, %p215
      %p217 = scmp.ne.s32.totalorder %s208, %s209
      %p218 = scmp.eq.s32.totalorder %s30, 0
      %p219 = por %p217, %p218
      %p220 = scmp.ne.s32.totalorder %s208, %s209
      %p221 = scmp.eq.s32.totalorder %s31, 1
      %p222 = por %p220, %p221
      %p224 = scmp.ne.s32.totalorder %s209, %s223
      %p225 = scmp.eq.s32.totalorder %s31, 0
      %p226 = por %p224, %p225
      %s228 = sadd.s32 %s227, 1
      %p231 = scmp.eq.s32.totalorder %s25, 1
      %p232 = scmp.ne.s32.totalorder %s227, %s229
      %p233 = scmp.eq.s32.totalorder %s25, 0
      %p234 = por %p232, %p233
      %p235 = scmp.ne.s32.totalorder %s227, %s229
      %p236 = scmp.eq.s32.totalorder %s30, 1
      %p237 = por %p235, %p236
      %p238 = scmp.ne.s32.totalorder %s229, %s230
      %p239 = scmp.eq.s32.totalorder %s30, 0
      %p240 = por %p238, %p239
      %p241 = scmp.ne.s32.totalorder %s229, %s230
      %p242 = scmp.eq.s32.totalorder %s31, 1
      %p243 = por %p241, %p242
      %p245 = scmp.ne.s32.totalorder %s230, %s244
      %p246 = scmp.eq.s32.totalorder %s31, 0
      %p247 = por %p245, %p246
      %s249 = sadd.s32 %s248, 1
      %p252 = scmp.eq.s32.totalorder %s25, 1
      %p253 = scmp.ne.s32.totalorder %s248, %s250
      %p254 = scmp.eq.s32.totalorder %s25, 0
      %p255 = por %p253, %p254
      %p256 = scmp.ne.s32.totalorder %s248, %s250
      %p257 = scmp.eq.s32.totalorder %s30, 1
      %p258 = por %p256, %p257
      %p259 = scmp.ne.s32.totalorder %s250, %s251
      %p260 = scmp.eq.s32.totalorder %s30, 0
      %p261 = por %p259, %p260
      %p262 = scmp.ne.s32.totalorder %s250, %s251
      %p263 = scmp.eq.s32.totalorder %s31, 1
      %p264 = por %p262, %p263
      %p266 = scmp.ne.s32.totalorder %s251, %s265
      %p267 = scmp.eq.s32.totalorder %s31, 0
      %p268 = por %p266, %p267
      %s270 = sadd.s32 %s269, 1
      %p273 = scmp.eq.s32.totalorder %s25, 1
      %p274 = scmp.ne.s32.totalorder %s269, %s271
      %p275 = scmp.eq.s32.totalorder %s25, 0
      %p276 = por %p274, %p275
      %p277 = scmp.ne.s32.totalorder %s269, %s271
      %p278 = scmp.eq.s32.totalorder %s30, 1
      %p279 = por %p277, %p278
      %p280 = scmp.ne.s32.totalorder %s271, %s272
      %p281 = scmp.eq.s32.totalorder %s30, 0
      %p282 = por %p280, %p281
      %p283 = scmp.ne.s32.totalorder %s271, %s272
      %p284 = scmp.eq.s32.totalorder %s31, 1
      %p285 = por %p283, %p284
      %p287 = scmp.ne.s32.totalorder %s272, %s286
      %p288 = scmp.eq.s32.totalorder %s31, 0
      %p289 = por %p287, %p288
      %s291 = sadd.s32 %s290, 1
      %p294 = scmp.eq.s32.totalorder %s25, 1
      %p295 = scmp.ne.s32.totalorder %s290, %s292
      %p296 = scmp.eq.s32.totalorder %s25, 0
      %p297 = por %p295, %p296
      %p298 = scmp.ne.s32.totalorder %s290, %s292
      %p299 = scmp.eq.s32.totalorder %s30, 1
      %p300 = por %p298, %p299
      %p301 = scmp.ne.s32.totalorder %s292, %s293
      %p302 = scmp.eq.s32.totalorder %s30, 0
      %p303 = por %p301, %p302
      %p304 = scmp.ne.s32.totalorder %s292, %s293
      %p305 = scmp.eq.s32.totalorder %s31, 1
      %p306 = por %p304, %p305
      %p308 = scmp.ne.s32.totalorder %s293, %s307
      %p309 = scmp.eq.s32.totalorder %s31, 0
      %p310 = por %p308, %p309
      %s311 = ssub.s32 %s25, %s32
      %p312 = scmp.eq.s32.totalorder %s311, 0
      %s314 = sadd.s32 %s313, 1
      %s315 = scalar_select %p312, %s313, %s314
      %p318 = pneg %p312
      %p319 = scmp.eq.s32.totalorder %s25, 1
      %p320 = por %p318, %p319
      %p321 = scmp.ne.s32.totalorder %s313, %s316
      %p322 = scmp.eq.s32.totalorder %s25, 0
      %p323 = por %p321, %p322
      %p324 = scmp.ne.s32.totalorder %s313, %s316
      %p325 = scmp.eq.s32.totalorder %s30, 1
      %p326 = por %p324, %p325
      %p327 = scmp.ne.s32.totalorder %s316, %s317
      %p328 = scmp.eq.s32.totalorder %s30, 0
      %p329 = por %p327, %p328
      %p330 = scmp.ne.s32.totalorder %s316, %s317
      %p331 = scmp.eq.s32.totalorder %s31, 1
      %p332 = por %p330, %p331
      %p334 = scmp.ne.s32.totalorder %s317, %s333
      %p335 = scmp.eq.s32.totalorder %s31, 0
      %p336 = por %p334, %p335
      %p337 = scmp.le.s32.totalorder 1, %s25
      %p338 = scmp.lt.s32.totalorder %s25, 3
      %p339 = pnand %p337, %p338
      %p340 = pneg %p339
      // Predicated region
      $region9: #{tpu_custom_call.1} parent=5 // pred_check
        _
      $region10: #{tpu_custom_call.1} parent=5 // pred_check_branch
        %342 = sbr.rel (%p339) target = $region12
      $region11: #{tpu_custom_call.1} parent=5 // pred_region
        %s343 = ssub.s32 %s25, 1
        // Predicated region
        $region13: #{tpu_custom_call.1} parent=11 // pred_check
          %p344 = pneg %p72
        $region14: #{tpu_custom_call.1} parent=11 // pred_check_branch
          %346 = sbr.rel (%p344) target = $region16
        $region15: #{tpu_custom_call.1} parent=11 // pred_region
          %348 = vsyncadd [#allocation10], 0
          %s349 = sshll.u32 %s1, 4
          %s350 = int_to_ptr.hbm [resolvable:$true] %s349
          %s351 = sshll.u32 [#allocation9], 4
          %s352 = int_to_ptr.vmem [resolvable:$true] %s351
          %357 = dma.hbm_to_vmem [thread:$0]  %s350, 4608, %s352, [#allocation10], 128, 128, 8
        $region16: #{tpu_custom_call.1} parent=11 // pred_fallthru
          _
        // Predicated region
        $region17: #{tpu_custom_call.1} parent=11 // pred_check
          %p358 = pneg %p93
        $region18: #{tpu_custom_call.1} parent=11 // pred_check_branch
          %360 = sbr.rel (%p358) target = $region20
        $region19: #{tpu_custom_call.1} parent=11 // pred_region
          %362 = vsyncadd [#allocation10], 0
          %s364 = sshll.u32 %s2, 4
          %s365 = int_to_ptr.hbm [resolvable:$true] %s364
          %s366 = sshll.u32 [#allocation11], 4
          %s367 = int_to_ptr.vmem [resolvable:$true] %s366
          %369 = dma.hbm_to_vmem [thread:$0]  %s365, 16, %s367, [#allocation10]
        $region20: #{tpu_custom_call.1} parent=11 // pred_fallthru
          _
        // Predicated region
        $region21: #{tpu_custom_call.1} parent=11 // pred_check
          %p370 = pneg %p114
        $region22: #{tpu_custom_call.1} parent=11 // pred_check_branch
          %372 = sbr.rel (%p370) target = $region24
        $region23: #{tpu_custom_call.1} parent=11 // pred_region
          %374 = vsyncadd [#allocation13], 0
          %s375 = sshll.u32 %s3, 4
          %s376 = int_to_ptr.hbm [resolvable:$true] %s375
          %s377 = sshll.u32 [#allocation12], 4
          %s378 = int_to_ptr.vmem [resolvable:$true] %s377
          %383 = dma.hbm_to_vmem [thread:$0]  %s376, 4608, %s378, [#allocation13], 128, 128, 8
        $region24: #{tpu_custom_call.1} parent=11 // pred_fallthru
          _
        // Predicated region
        $region25: #{tpu_custom_call.1} parent=11 // pred_check
          %p384 = pneg %p135
        $region26: #{tpu_custom_call.1} parent=11 // pred_check_branch
          %386 = sbr.rel (%p384) target = $region28
        $region27: #{tpu_custom_call.1} parent=11 // pred_region
          _
        $region28: #{tpu_custom_call.1} parent=11 // pred_fallthru
          _
        // Predicated region
        $region29: #{tpu_custom_call.1} parent=11 // pred_check
          %p387 = pneg %p156
        $region30: #{tpu_custom_call.1} parent=11 // pred_check_branch
          %389 = sbr.rel (%p387) target = $region32
        $region31: #{tpu_custom_call.1} parent=11 // pred_region
          %391 = vsyncadd [#allocation13], 0
          %s392 = sshll.u32 %s5, 4
          %s393 = int_to_ptr.hbm [resolvable:$true] %s392
          %s394 = sshll.u32 [#allocation14], 4
          %s395 = int_to_ptr.vmem [resolvable:$true] %s394
          %400 = dma.hbm_to_vmem [thread:$0]  %s393, 512, %s395, [#allocation13], 128, 128, 8
        $region32: #{tpu_custom_call.1} parent=11 // pred_fallthru
          _
        // Predicated region
        $region33: #{tpu_custom_call.1} parent=11 // pred_check
          %p401 = pneg %p177
        $region34: #{tpu_custom_call.1} parent=11 // pred_check_branch
          %403 = sbr.rel (%p401) target = $region36
        $region35: #{tpu_custom_call.1} parent=11 // pred_region
          _
        $region36: #{tpu_custom_call.1} parent=11 // pred_fallthru
          _
        // Predicated region
        $region37: #{tpu_custom_call.1} parent=11 // pred_check
          %p404 = pneg %p198
        $region38: #{tpu_custom_call.1} parent=11 // pred_check_branch
          %406 = sbr.rel (%p404) target = $region40
        $region39: #{tpu_custom_call.1} parent=11 // pred_region
          %408 = vsyncadd [#allocation16], 0
          %s409 = sshll.u32 %s7, 4
          %s410 = int_to_ptr.hbm [resolvable:$true] %s409
          %s411 = sshll.u32 [#allocation15], 4
          %s412 = int_to_ptr.vmem [resolvable:$true] %s411
          %417 = dma.hbm_to_vmem [thread:$0]  %s410, 512, %s412, [#allocation16], 128, 128, 8
        $region40: #{tpu_custom_call.1} parent=11 // pred_fallthru
          _
        // Predicated region
        $region41: #{tpu_custom_call.1} parent=11 // pred_check
          %p418 = pneg %p219
        $region42: #{tpu_custom_call.1} parent=11 // pred_check_branch
          %420 = sbr.rel (%p418) target = $region44
        $region43: #{tpu_custom_call.1} parent=11 // pred_region
          _
        $region44: #{tpu_custom_call.1} parent=11 // pred_fallthru
          _
        // Predicated region
        $region45: #{tpu_custom_call.1} parent=11 // pred_check
          %p421 = pneg %p240
        $region46: #{tpu_custom_call.1} parent=11 // pred_check_branch
          %423 = sbr.rel (%p421) target = $region48
        $region47: #{tpu_custom_call.1} parent=11 // pred_region
          _
        $region48: #{tpu_custom_call.1} parent=11 // pred_fallthru
          _
        // Predicated region
        $region49: #{tpu_custom_call.1} parent=11 // pred_check
          %p424 = pneg %p261
        $region50: #{tpu_custom_call.1} parent=11 // pred_check_branch
          %426 = sbr.rel (%p424) target = $region52
        $region51: #{tpu_custom_call.1} parent=11 // pred_region
          _
        $region52: #{tpu_custom_call.1} parent=11 // pred_fallthru
          _
        // Predicated region
        $region53: #{tpu_custom_call.1} parent=11 // pred_check
          %p427 = pneg %p282
        $region54: #{tpu_custom_call.1} parent=11 // pred_check_branch
          %429 = sbr.rel (%p427) target = $region56
        $region55: #{tpu_custom_call.1} parent=11 // pred_region
          _
        $region56: #{tpu_custom_call.1} parent=11 // pred_fallthru
          _
        // Predicated region
        $region57: #{tpu_custom_call.1} parent=11 // pred_check
          %p430 = pneg %p303
        $region58: #{tpu_custom_call.1} parent=11 // pred_check_branch
          %432 = sbr.rel (%p430) target = $region60
        $region59: #{tpu_custom_call.1} parent=11 // pred_region
          _
        $region60: #{tpu_custom_call.1} parent=11 // pred_fallthru
          _
      $region12: #{tpu_custom_call.1} parent=5 // pred_fallthru
        _
      %p433 = scmp.lt.s32.totalorder %s25, 2
      // Predicated region
      $region61: #{tpu_custom_call.1} parent=5 // pred_check
        %p434 = pneg %p433
      $region62: #{tpu_custom_call.1} parent=5 // pred_check_branch
        %436 = sbr.rel (%p434) target = $region64
      $region63: #{tpu_custom_call.1} parent=5 // pred_region
        // Predicated region
        $region65: #{tpu_custom_call.1} parent=63 // pred_check
          %p437 = pneg %p45
        $region66: #{tpu_custom_call.1} parent=63 // pred_check_branch
          %439 = sbr.rel (%p437) target = $region68
        $region67: #{tpu_custom_call.1} parent=63 // pred_region
          %s440 = sand.u32 %s35, 1
          %s441 = scalar_lea.sflag [#allocation8], %s440
          %s442 = sand.u32 %s35, 1
          %s443 = smul.addr %s442, 256
          %s444 = scalar_lea.vmem [#allocation7], %s443
          %446 = vsyncadd %s441, 0
          %s447 = smul.addr %s25, 32
          %s448 = smul.addr %s447, 8
          %s449 = scalar_lea.hbm %s0, %s448
          %s450 = sshll.u32 %s449, 4
          %s451 = int_to_ptr.hbm [resolvable:$true] %s450
          %s452 = sshll.u32 %s444, 4
          %s453 = int_to_ptr.vmem [resolvable:$true] %s452
          %458 = dma.hbm_to_vmem [thread:$0]  %s451, 4096, %s453, %s441, 128, 128, 8
        $region68: #{tpu_custom_call.1} parent=63 // pred_fallthru
          _
      $region64: #{tpu_custom_call.1} parent=5 // pred_fallthru
        _
      %p459 = scmp.le.s32.totalorder 1, %s25
      %p460 = scmp.lt.s32.totalorder %s25, 3
      %p461 = pnand %p459, %p460
      %p462 = pneg %p461
      // Predicated region
      $region69: #{tpu_custom_call.1} parent=5 // pred_check
        _
      $region70: #{tpu_custom_call.1} parent=5 // pred_check_branch
        %464 = sbr.rel (%p461) target = $region72
      $region71: #{tpu_custom_call.1} parent=5 // pred_region
        %s465 = ssub.s32 %s25, 1
        %s466 = sand.u32 %s38, 1
        %s467 = scalar_lea.sflag [#allocation8], %s466
        %s468 = sand.u32 %s38, 1
        %s469 = smul.addr %s468, 256
        %s470 = scalar_lea.vmem [#allocation7], %s469
        // Predicated region
        $region73: #{tpu_custom_call.1} parent=71 // pred_check
          %p471 = pneg %p51
        $region74: #{tpu_custom_call.1} parent=71 // pred_check_branch
          %473 = sbr.rel (%p471) target = $region76
        $region75: #{tpu_custom_call.1} parent=71 // pred_region
          %475 = dma.done %s467, 4096
        $region76: #{tpu_custom_call.1} parent=71 // pred_fallthru
          _
        // Predicated region
        $region77: #{tpu_custom_call.1} parent=71 // pred_check
          %p476 = pneg %p72
        $region78: #{tpu_custom_call.1} parent=71 // pred_check_branch
          %478 = sbr.rel (%p476) target = $region80
        $region79: #{tpu_custom_call.1} parent=71 // pred_region
          %480 = dma.done [#allocation10], 4608
        $region80: #{tpu_custom_call.1} parent=71 // pred_fallthru
          _
        // Predicated region
        $region81: #{tpu_custom_call.1} parent=71 // pred_check
          %p481 = pneg %p93
        $region82: #{tpu_custom_call.1} parent=71 // pred_check_branch
          %483 = sbr.rel (%p481) target = $region84
        $region83: #{tpu_custom_call.1} parent=71 // pred_region
          %485 = dma.done [#allocation10], 16
        $region84: #{tpu_custom_call.1} parent=71 // pred_fallthru
          _
        // Predicated region
        $region85: #{tpu_custom_call.1} parent=71 // pred_check
          %p486 = pneg %p114
        $region86: #{tpu_custom_call.1} parent=71 // pred_check_branch
          %488 = sbr.rel (%p486) target = $region88
        $region87: #{tpu_custom_call.1} parent=71 // pred_region
          %490 = dma.done [#allocation13], 4608
        $region88: #{tpu_custom_call.1} parent=71 // pred_fallthru
          _
        // Predicated region
        $region89: #{tpu_custom_call.1} parent=71 // pred_check
          %p491 = pneg %p156
        $region90: #{tpu_custom_call.1} parent=71 // pred_check_branch
          %493 = sbr.rel (%p491) target = $region92
        $region91: #{tpu_custom_call.1} parent=71 // pred_region
          %495 = dma.done [#allocation13], 512
        $region92: #{tpu_custom_call.1} parent=71 // pred_fallthru
          _
        // Predicated region
        $region93: #{tpu_custom_call.1} parent=71 // pred_check
          %p496 = pneg %p198
        $region94: #{tpu_custom_call.1} parent=71 // pred_check_branch
          %498 = sbr.rel (%p496) target = $region96
        $region95: #{tpu_custom_call.1} parent=71 // pred_region
          %500 = dma.done [#allocation16], 512
        $region96: #{tpu_custom_call.1} parent=71 // pred_fallthru
          _
        %s501 = sand.u32 %s38, 1
        %s502 = scalar_lea.sflag [#allocation8], %s501
        %s503 = sand.u32 %s38, 1
        %s504 = smul.addr %s503, 256
        %s505 = scalar_lea.vmem [#allocation7], %s504
        %p506 = pneg %p51
        %p507 = pneg %p48
        %p508 = pneg %p72
        %p509 = pneg %p69
        %p510 = pneg %p93
        %p511 = pneg %p90
        %p512 = pneg %p114
        %p513 = pneg %p111
        %p514 = pneg %p135
        %p515 = pneg %p132
        %p516 = pneg %p156
        %p517 = pneg %p153
        %p518 = pneg %p177
        %p519 = pneg %p174
        %p520 = pneg %p198
        %p521 = pneg %p195
        %p522 = pneg %p219
        %p523 = pneg %p216
        %p524 = pneg %p240
        %p525 = pneg %p237
        %p526 = pneg %p261
        %p527 = pneg %p258
        %p528 = pneg %p282
        %p529 = pneg %p279
        %p530 = pneg %p303
        %p531 = pneg %p300
        %p532 = pneg %p329
        %p533 = pneg %p326
        %p534 = scmp.lt.s32.totalorder %s30, 1
        %s535 = scalar_select %p534, %s30, 1
        %s536 = smul.addr %s535, 32
        %s537 = smul.addr %s536, 8
        %s538 = scalar_lea.vmem %s13, %s537
        %p539 = scmp.lt.s32.totalorder %s30, 1
        %s540 = scalar_select %p539, %s30, 1
        %s541 = smul.addr %s540, 32
        %s542 = smul.addr %s541, 8
        %s543 = scalar_lea.vmem %s13, %s542
        %vm544 = vcmask 261120
        %545 = vst.msk [vmem:[#allocation2] sm:$0xff] %vm544, 0.0
        %546 = vst.msk [vmem:[#allocation2 + $0x8] sm:$0xff] %vm544, 0.0
        %547 = vst.msk [vmem:[#allocation2 + $0x10] sm:$0xff] %vm544, 0.0
        %548 = vst.msk [vmem:[#allocation2 + $0x18] sm:$0xff] %vm544, 0.0
        %549 = vst.msk [vmem:[#allocation2 + $0x20] sm:$0xff] %vm544, 0.0
        %550 = vst.msk [vmem:[#allocation2 + $0x28] sm:$0xff] %vm544, 0.0
        %551 = vst.msk [vmem:[#allocation2 + $0x30] sm:$0xff] %vm544, 0.0
        %552 = vst.msk [vmem:[#allocation2 + $0x38] sm:$0xff] %vm544, 0.0
        %553 = vst.msk [vmem:[#allocation2 + $0x40] sm:$0xff] %vm544, 0.0
        %554 = vst.msk [vmem:[#allocation2 + $0x48] sm:$0xff] %vm544, 0.0
        %555 = vst.msk [vmem:[#allocation2 + $0x50] sm:$0xff] %vm544, 0.0
        %556 = vst.msk [vmem:[#allocation2 + $0x58] sm:$0xff] %vm544, 0.0
        %557 = vst.msk [vmem:[#allocation2 + $0x60] sm:$0xff] %vm544, 0.0
        %558 = vst.msk [vmem:[#allocation2 + $0x68] sm:$0xff] %vm544, 0.0
        %559 = vst.msk [vmem:[#allocation2 + $0x70] sm:$0xff] %vm544, 0.0
        %560 = vst.msk [vmem:[#allocation2 + $0x78] sm:$0xff] %vm544, 0.0
        %561 = vst.msk [vmem:[#allocation2 + $0x80] sm:$0xff] %vm544, 0.0
        %562 = vst.msk [vmem:[#allocation2 + $0x88] sm:$0xff] %vm544, 0.0
        %563 = vst.msk [vmem:[#allocation2 + $0x90] sm:$0xff] %vm544, 0.0
        %564 = vst.msk [vmem:[#allocation2 + $0x98] sm:$0xff] %vm544, 0.0
        %565 = vst.msk [vmem:[#allocation2 + $0xa0] sm:$0xff] %vm544, 0.0
        %566 = vst.msk [vmem:[#allocation2 + $0xa8] sm:$0xff] %vm544, 0.0
        %567 = vst.msk [vmem:[#allocation2 + $0xb0] sm:$0xff] %vm544, 0.0
        %568 = vst.msk [vmem:[#allocation2 + $0xb8] sm:$0xff] %vm544, 0.0
        %569 = vst.msk [vmem:[#allocation2 + $0xc0] sm:$0xff] %vm544, 0.0
        %570 = vst.msk [vmem:[#allocation2 + $0xc8] sm:$0xff] %vm544, 0.0
        %571 = vst.msk [vmem:[#allocation2 + $0xd0] sm:$0xff] %vm544, 0.0
        %572 = vst.msk [vmem:[#allocation2 + $0xd8] sm:$0xff] %vm544, 0.0
        %573 = vst.msk [vmem:[#allocation2 + $0xe0] sm:$0xff] %vm544, 0.0
        %574 = vst.msk [vmem:[#allocation2 + $0xe8] sm:$0xff] %vm544, 0.0
        %575 = vst.msk [vmem:[#allocation2 + $0xf0] sm:$0xff] %vm544, 0.0
        %576 = vst.msk [vmem:[#allocation2 + $0xf8] sm:$0xff] %vm544, 0.0
        %577 = vst.msk [vmem:[#allocation2 + $0x100] sm:$0xff] %vm544, 0.0
        %578 = vst.msk [vmem:[#allocation2 + $0x108] sm:$0xff] %vm544, 0.0
        %579 = vst.msk [vmem:[#allocation2 + $0x110] sm:$0xff] %vm544, 0.0
        %580 = vst.msk [vmem:[#allocation2 + $0x118] sm:$0xff] %vm544, 0.0
        %581 = vst.msk [vmem:[#allocation2 + $0x120] sm:$0xff] %vm544, 0.0
        %582 = vst.msk [vmem:[#allocation2 + $0x128] sm:$0xff] %vm544, 0.0
        %583 = vst.msk [vmem:[#allocation2 + $0x130] sm:$0xff] %vm544, 0.0
        %584 = vst.msk [vmem:[#allocation2 + $0x138] sm:$0xff] %vm544, 0.0
        %585 = vst.msk [vmem:[#allocation2 + $0x140] sm:$0xff] %vm544, 0.0
        %586 = vst.msk [vmem:[#allocation2 + $0x148] sm:$0xff] %vm544, 0.0
        %587 = vst.msk [vmem:[#allocation2 + $0x150] sm:$0xff] %vm544, 0.0
        %588 = vst.msk [vmem:[#allocation2 + $0x158] sm:$0xff] %vm544, 0.0
        %589 = vst.msk [vmem:[#allocation2 + $0x160] sm:$0xff] %vm544, 0.0
        %590 = vst.msk [vmem:[#allocation2 + $0x168] sm:$0xff] %vm544, 0.0
        %591 = vst.msk [vmem:[#allocation2 + $0x170] sm:$0xff] %vm544, 0.0
        %592 = vst.msk [vmem:[#allocation2 + $0x178] sm:$0xff] %vm544, 0.0
        %593 = vst.msk [vmem:[#allocation2 + $0x180] sm:$0xff] %vm544, 0.0
        %594 = vst.msk [vmem:[#allocation2 + $0x188] sm:$0xff] %vm544, 0.0
        %595 = vst.msk [vmem:[#allocation2 + $0x190] sm:$0xff] %vm544, 0.0
        %596 = vst.msk [vmem:[#allocation2 + $0x198] sm:$0xff] %vm544, 0.0
        %597 = vst.msk [vmem:[#allocation2 + $0x1a0] sm:$0xff] %vm544, 0.0
        %598 = vst.msk [vmem:[#allocation2 + $0x1a8] sm:$0xff] %vm544, 0.0
        %599 = vst.msk [vmem:[#allocation2 + $0x1b0] sm:$0xff] %vm544, 0.0
        %600 = vst.msk [vmem:[#allocation2 + $0x1b8] sm:$0xff] %vm544, 0.0
        %601 = vst.msk [vmem:[#allocation2 + $0x1c0] sm:$0xff] %vm544, 0.0
        %602 = vst.msk [vmem:[#allocation2 + $0x1c8] sm:$0xff] %vm544, 0.0
        %603 = vst.msk [vmem:[#allocation2 + $0x1d0] sm:$0xff] %vm544, 0.0
        %604 = vst.msk [vmem:[#allocation2 + $0x1d8] sm:$0xff] %vm544, 0.0
        %605 = vst.msk [vmem:[#allocation2 + $0x1e0] sm:$0xff] %vm544, 0.0
        %606 = vst.msk [vmem:[#allocation2 + $0x1e8] sm:$0xff] %vm544, 0.0
        %607 = vst.msk [vmem:[#allocation2 + $0x1f0] sm:$0xff] %vm544, 0.0
        %608 = vst.msk [vmem:[#allocation2 + $0x1f8] sm:$0xff] %vm544, 0.0
        %609 = vst.msk [vmem:[#allocation2 + $0x200] sm:$0xff] %vm544, 0.0
        %610 = vst.msk [vmem:[#allocation2 + $0x208] sm:$0xff] %vm544, 0.0
        %611 = vst.msk [vmem:[#allocation2 + $0x210] sm:$0xff] %vm544, 0.0
        %612 = vst.msk [vmem:[#allocation2 + $0x218] sm:$0xff] %vm544, 0.0
        %613 = vst.msk [vmem:[#allocation2 + $0x220] sm:$0xff] %vm544, 0.0
        %614 = vst.msk [vmem:[#allocation2 + $0x228] sm:$0xff] %vm544, 0.0
        %615 = vst.msk [vmem:[#allocation2 + $0x230] sm:$0xff] %vm544, 0.0
        %616 = vst.msk [vmem:[#allocation2 + $0x238] sm:$0xff] %vm544, 0.0
        %617 = vst.msk [vmem:[#allocation2 + $0x240] sm:$0xff] %vm544, 0.0
        %618 = vst.msk [vmem:[#allocation2 + $0x248] sm:$0xff] %vm544, 0.0
        %619 = vst.msk [vmem:[#allocation2 + $0x250] sm:$0xff] %vm544, 0.0
        %620 = vst.msk [vmem:[#allocation2 + $0x258] sm:$0xff] %vm544, 0.0
        %621 = vst.msk [vmem:[#allocation3] sm:$0xff] %vm544, 0.0
        %622 = vst.msk [vmem:[#allocation3 + $0x8] sm:$0xff] %vm544, 0.0
        %623 = vst.msk [vmem:[#allocation3 + $0x10] sm:$0xff] %vm544, 0.0
        %624 = vst.msk [vmem:[#allocation3 + $0x18] sm:$0xff] %vm544, 0.0
        %625 = vst.msk [vmem:[#allocation3 + $0x20] sm:$0xff] %vm544, 0.0
        %626 = vst.msk [vmem:[#allocation3 + $0x28] sm:$0xff] %vm544, 0.0
        %627 = vst.msk [vmem:[#allocation3 + $0x30] sm:$0xff] %vm544, 0.0
        %628 = vst.msk [vmem:[#allocation3 + $0x38] sm:$0xff] %vm544, 0.0
        %629 = vst.msk [vmem:[#allocation3 + $0x40] sm:$0xff] %vm544, 0.0
        %630 = vst.msk [vmem:[#allocation3 + $0x48] sm:$0xff] %vm544, 0.0
        %631 = vst.msk [vmem:[#allocation3 + $0x50] sm:$0xff] %vm544, 0.0
        %632 = vst.msk [vmem:[#allocation3 + $0x58] sm:$0xff] %vm544, 0.0
        %633 = vst.msk [vmem:[#allocation3 + $0x60] sm:$0xff] %vm544, 0.0
        %634 = vst.msk [vmem:[#allocation3 + $0x68] sm:$0xff] %vm544, 0.0
        %635 = vst.msk [vmem:[#allocation3 + $0x70] sm:$0xff] %vm544, 0.0
        %636 = vst.msk [vmem:[#allocation3 + $0x78] sm:$0xff] %vm544, 0.0
        %637 = vst.msk [vmem:[#allocation3 + $0x80] sm:$0xff] %vm544, 0.0
        %638 = vst.msk [vmem:[#allocation3 + $0x88] sm:$0xff] %vm544, 0.0
        %639 = vst.msk [vmem:[#allocation3 + $0x90] sm:$0xff] %vm544, 0.0
        %640 = vst.msk [vmem:[#allocation3 + $0x98] sm:$0xff] %vm544, 0.0
        %641 = vst.msk [vmem:[#allocation3 + $0xa0] sm:$0xff] %vm544, 0.0
        %642 = vst.msk [vmem:[#allocation3 + $0xa8] sm:$0xff] %vm544, 0.0
        %643 = vst.msk [vmem:[#allocation3 + $0xb0] sm:$0xff] %vm544, 0.0
        %644 = vst.msk [vmem:[#allocation3 + $0xb8] sm:$0xff] %vm544, 0.0
        %645 = vst.msk [vmem:[#allocation3 + $0xc0] sm:$0xff] %vm544, 0.0
        %646 = vst.msk [vmem:[#allocation3 + $0xc8] sm:$0xff] %vm544, 0.0
        %647 = vst.msk [vmem:[#allocation3 + $0xd0] sm:$0xff] %vm544, 0.0
        %648 = vst.msk [vmem:[#allocation3 + $0xd8] sm:$0xff] %vm544, 0.0
        %649 = vst.msk [vmem:[#allocation3 + $0xe0] sm:$0xff] %vm544, 0.0
        %650 = vst.msk [vmem:[#allocation3 + $0xe8] sm:$0xff] %vm544, 0.0
        %651 = vst.msk [vmem:[#allocation3 + $0xf0] sm:$0xff] %vm544, 0.0
        %652 = vst.msk [vmem:[#allocation3 + $0xf8] sm:$0xff] %vm544, 0.0
        %653 = vst.msk [vmem:[#allocation3 + $0x100] sm:$0xff] %vm544, 0.0
        %654 = vst.msk [vmem:[#allocation3 + $0x108] sm:$0xff] %vm544, 0.0
        %655 = vst.msk [vmem:[#allocation3 + $0x110] sm:$0xff] %vm544, 0.0
        %656 = vst.msk [vmem:[#allocation3 + $0x118] sm:$0xff] %vm544, 0.0
        %657 = vst.msk [vmem:[#allocation3 + $0x120] sm:$0xff] %vm544, 0.0
        %658 = vst.msk [vmem:[#allocation3 + $0x128] sm:$0xff] %vm544, 0.0
        %659 = vst.msk [vmem:[#allocation3 + $0x130] sm:$0xff] %vm544, 0.0
        %660 = vst.msk [vmem:[#allocation3 + $0x138] sm:$0xff] %vm544, 0.0
        %661 = vst.msk [vmem:[#allocation3 + $0x140] sm:$0xff] %vm544, 0.0
        %662 = vst.msk [vmem:[#allocation3 + $0x148] sm:$0xff] %vm544, 0.0
        %663 = vst.msk [vmem:[#allocation3 + $0x150] sm:$0xff] %vm544, 0.0
        %664 = vst.msk [vmem:[#allocation3 + $0x158] sm:$0xff] %vm544, 0.0
        %665 = vst.msk [vmem:[#allocation3 + $0x160] sm:$0xff] %vm544, 0.0
        %666 = vst.msk [vmem:[#allocation3 + $0x168] sm:$0xff] %vm544, 0.0
        %667 = vst.msk [vmem:[#allocation3 + $0x170] sm:$0xff] %vm544, 0.0
        %668 = vst.msk [vmem:[#allocation3 + $0x178] sm:$0xff] %vm544, 0.0
        %669 = vst.msk [vmem:[#allocation3 + $0x180] sm:$0xff] %vm544, 0.0
        %670 = vst.msk [vmem:[#allocation3 + $0x188] sm:$0xff] %vm544, 0.0
        %671 = vst.msk [vmem:[#allocation3 + $0x190] sm:$0xff] %vm544, 0.0
        %672 = vst.msk [vmem:[#allocation3 + $0x198] sm:$0xff] %vm544, 0.0
        %673 = vst.msk [vmem:[#allocation3 + $0x1a0] sm:$0xff] %vm544, 0.0
        %674 = vst.msk [vmem:[#allocation3 + $0x1a8] sm:$0xff] %vm544, 0.0
        %675 = vst.msk [vmem:[#allocation3 + $0x1b0] sm:$0xff] %vm544, 0.0
        %676 = vst.msk [vmem:[#allocation3 + $0x1b8] sm:$0xff] %vm544, 0.0
        %677 = vst.msk [vmem:[#allocation3 + $0x1c0] sm:$0xff] %vm544, 0.0
        %678 = vst.msk [vmem:[#allocation3 + $0x1c8] sm:$0xff] %vm544, 0.0
        %679 = vst.msk [vmem:[#allocation3 + $0x1d0] sm:$0xff] %vm544, 0.0
        %680 = vst.msk [vmem:[#allocation3 + $0x1d8] sm:$0xff] %vm544, 0.0
        %681 = vst.msk [vmem:[#allocation3 + $0x1e0] sm:$0xff] %vm544, 0.0
        %682 = vst.msk [vmem:[#allocation3 + $0x1e8] sm:$0xff] %vm544, 0.0
        %683 = vst.msk [vmem:[#allocation3 + $0x1f0] sm:$0xff] %vm544, 0.0
        %684 = vst.msk [vmem:[#allocation3 + $0x1f8] sm:$0xff] %vm544, 0.0
        %685 = vst.msk [vmem:[#allocation3 + $0x200] sm:$0xff] %vm544, 0.0
        %686 = vst.msk [vmem:[#allocation3 + $0x208] sm:$0xff] %vm544, 0.0
        %687 = vst.msk [vmem:[#allocation3 + $0x210] sm:$0xff] %vm544, 0.0
        %688 = vst.msk [vmem:[#allocation3 + $0x218] sm:$0xff] %vm544, 0.0
        %689 = vst.msk [vmem:[#allocation3 + $0x220] sm:$0xff] %vm544, 0.0
        %690 = vst.msk [vmem:[#allocation3 + $0x228] sm:$0xff] %vm544, 0.0
        %691 = vst.msk [vmem:[#allocation3 + $0x230] sm:$0xff] %vm544, 0.0
        %692 = vst.msk [vmem:[#allocation3 + $0x238] sm:$0xff] %vm544, 0.0
        %693 = vst.msk [vmem:[#allocation3 + $0x240] sm:$0xff] %vm544, 0.0
        %694 = vst.msk [vmem:[#allocation3 + $0x248] sm:$0xff] %vm544, 0.0
        %695 = vst.msk [vmem:[#allocation3 + $0x250] sm:$0xff] %vm544, 0.0
        %696 = vst.msk [vmem:[#allocation3 + $0x258] sm:$0xff] %vm544, 0.0
        %v697 = vld [vmem:[%s470] sm:$0xff]
        %v698 = vld [vmem:[%s470 + $0x8] sm:$0xff]
        %699 = vst.msk [vmem:[#allocation2 + $0x28] sm:$0xff] %vm544, %v697
        %700 = vst.msk [vmem:[#allocation2 + $0x30] sm:$0xff] %vm544, %v698
        %s701 = scalar_lea.vmem %s470, 16 [#allocation7]
        %v702 = vld [vmem:[%s701] sm:$0xff]
        %v703 = vld [vmem:[%s701 + $0x8] sm:$0xff]
        %704 = vst.msk [vmem:[#allocation2 + $0x48] sm:$0xff] %vm544, %v702
        %705 = vst.msk [vmem:[#allocation2 + $0x50] sm:$0xff] %vm544, %v703
        %s706 = scalar_lea.vmem %s470, 32 [#allocation7]
        %v707 = vld [vmem:[%s706] sm:$0xff]
        %v708 = vld [vmem:[%s706 + $0x8] sm:$0xff]
        %709 = vst.msk [vmem:[#allocation2 + $0x68] sm:$0xff] %vm544, %v707
        %710 = vst.msk [vmem:[#allocation2 + $0x70] sm:$0xff] %vm544, %v708
        %s711 = scalar_lea.vmem %s470, 48 [#allocation7]
        %v712 = vld [vmem:[%s711] sm:$0xff]
        %v713 = vld [vmem:[%s711 + $0x8] sm:$0xff]
        %714 = vst.msk [vmem:[#allocation2 + $0x88] sm:$0xff] %vm544, %v712
        %715 = vst.msk [vmem:[#allocation2 + $0x90] sm:$0xff] %vm544, %v713
        %s716 = scalar_lea.vmem %s470, 64 [#allocation7]
        %v717 = vld [vmem:[%s716] sm:$0xff]
        %v718 = vld [vmem:[%s716 + $0x8] sm:$0xff]
        %719 = vst.msk [vmem:[#allocation2 + $0xa8] sm:$0xff] %vm544, %v717
        %720 = vst.msk [vmem:[#allocation2 + $0xb0] sm:$0xff] %vm544, %v718
        %s721 = scalar_lea.vmem %s470, 80 [#allocation7]
        %v722 = vld [vmem:[%s721] sm:$0xff]
        %v723 = vld [vmem:[%s721 + $0x8] sm:$0xff]
        %724 = vst.msk [vmem:[#allocation2 + $0xc8] sm:$0xff] %vm544, %v722
        %725 = vst.msk [vmem:[#allocation2 + $0xd0] sm:$0xff] %vm544, %v723
        %s726 = scalar_lea.vmem %s470, 96 [#allocation7]
        %v727 = vld [vmem:[%s726] sm:$0xff]
        %v728 = vld [vmem:[%s726 + $0x8] sm:$0xff]
        %729 = vst.msk [vmem:[#allocation2 + $0xe8] sm:$0xff] %vm544, %v727
        %730 = vst.msk [vmem:[#allocation2 + $0xf0] sm:$0xff] %vm544, %v728
        %s731 = scalar_lea.vmem %s470, 112 [#allocation7]
        %v732 = vld [vmem:[%s731] sm:$0xff]
        %v733 = vld [vmem:[%s731 + $0x8] sm:$0xff]
        %734 = vst.msk [vmem:[#allocation2 + $0x108] sm:$0xff] %vm544, %v732
        %735 = vst.msk [vmem:[#allocation2 + $0x110] sm:$0xff] %vm544, %v733
        %s736 = scalar_lea.vmem %s470, 128 [#allocation7]
        %v737 = vld [vmem:[%s736] sm:$0xff]
        %v738 = vld [vmem:[%s736 + $0x8] sm:$0xff]
        %739 = vst.msk [vmem:[#allocation2 + $0x128] sm:$0xff] %vm544, %v737
        %740 = vst.msk [vmem:[#allocation2 + $0x130] sm:$0xff] %vm544, %v738
        %s741 = scalar_lea.vmem %s470, 144 [#allocation7]
        %v742 = vld [vmem:[%s741] sm:$0xff]
        %v743 = vld [vmem:[%s741 + $0x8] sm:$0xff]
        %744 = vst.msk [vmem:[#allocation2 + $0x148] sm:$0xff] %vm544, %v742
        %745 = vst.msk [vmem:[#allocation2 + $0x150] sm:$0xff] %vm544, %v743
        %s746 = scalar_lea.vmem %s470, 160 [#allocation7]
        %v747 = vld [vmem:[%s746] sm:$0xff]
        %v748 = vld [vmem:[%s746 + $0x8] sm:$0xff]
        %749 = vst.msk [vmem:[#allocation2 + $0x168] sm:$0xff] %vm544, %v747
        %750 = vst.msk [vmem:[#allocation2 + $0x170] sm:$0xff] %vm544, %v748
        %s751 = scalar_lea.vmem %s470, 176 [#allocation7]
        %v752 = vld [vmem:[%s751] sm:$0xff]
        %v753 = vld [vmem:[%s751 + $0x8] sm:$0xff]
        %754 = vst.msk [vmem:[#allocation2 + $0x188] sm:$0xff] %vm544, %v752
        %755 = vst.msk [vmem:[#allocation2 + $0x190] sm:$0xff] %vm544, %v753
        %s756 = scalar_lea.vmem %s470, 192 [#allocation7]
        %v757 = vld [vmem:[%s756] sm:$0xff]
        %v758 = vld [vmem:[%s756 + $0x8] sm:$0xff]
        %759 = vst.msk [vmem:[#allocation2 + $0x1a8] sm:$0xff] %vm544, %v757
        %760 = vst.msk [vmem:[#allocation2 + $0x1b0] sm:$0xff] %vm544, %v758
        %s761 = scalar_lea.vmem %s470, 208 [#allocation7]
        %v762 = vld [vmem:[%s761] sm:$0xff]
        %v763 = vld [vmem:[%s761 + $0x8] sm:$0xff]
        %764 = vst.msk [vmem:[#allocation2 + $0x1c8] sm:$0xff] %vm544, %v762
        %765 = vst.msk [vmem:[#allocation2 + $0x1d0] sm:$0xff] %vm544, %v763
        %s766 = scalar_lea.vmem %s470, 224 [#allocation7]
        %v767 = vld [vmem:[%s766] sm:$0xff]
        %v768 = vld [vmem:[%s766 + $0x8] sm:$0xff]
        %769 = vst.msk [vmem:[#allocation2 + $0x1e8] sm:$0xff] %vm544, %v767
        %770 = vst.msk [vmem:[#allocation2 + $0x1f0] sm:$0xff] %vm544, %v768
        %s771 = scalar_lea.vmem %s470, 240 [#allocation7]
        %v772 = vld [vmem:[%s771] sm:$0xff]
        %v773 = vld [vmem:[%s771 + $0x8] sm:$0xff]
        %774 = vst.msk [vmem:[#allocation2 + $0x208] sm:$0xff] %vm544, %v772
        %775 = vst.msk [vmem:[#allocation2 + $0x210] sm:$0xff] %vm544, %v773
        %v776 = vld [vmem:[#allocation2 + $0x7] sm:$0xff]
        %v777 = vld [vmem:[#allocation2 + $0xf] sm:$0xff]
        %v778 = vld [vmem:[#allocation2 + $0x17] sm:$0xff]
        %v779 = vld [vmem:[#allocation2 + $0x1f] sm:$0xff]
        %v780 = vld [vmem:[#allocation2 + $0x27] sm:$0xff]
        %v781 = vld [vmem:[#allocation2 + $0x2f] sm:$0xff]
        %v782 = vld [vmem:[#allocation2 + $0x37] sm:$0xff]
        %v783 = vld [vmem:[#allocation2 + $0x3f] sm:$0xff]
        %v784 = vld [vmem:[#allocation2 + $0x47] sm:$0xff]
        %v785 = vld [vmem:[#allocation2 + $0x4f] sm:$0xff]
        %v786 = vld [vmem:[#allocation2 + $0x57] sm:$0xff]
        %v787 = vld [vmem:[#allocation2 + $0x5f] sm:$0xff]
        %v788 = vld [vmem:[#allocation2 + $0x67] sm:$0xff]
        %v789 = vld [vmem:[#allocation2 + $0x6f] sm:$0xff]
        %v790 = vld [vmem:[#allocation2 + $0x77] sm:$0xff]
        %v791 = vld [vmem:[#allocation2 + $0x7f] sm:$0xff]
        %v792 = vld [vmem:[#allocation2 + $0x87] sm:$0xff]
        %v793 = vld [vmem:[#allocation2 + $0x8f] sm:$0xff]
        %v794 = vld [vmem:[#allocation2 + $0x97] sm:$0xff]
        %v795 = vld [vmem:[#allocation2 + $0x9f] sm:$0xff]
        %v796 = vld [vmem:[#allocation2 + $0xa7] sm:$0xff]
        %v797 = vld [vmem:[#allocation2 + $0xaf] sm:$0xff]
        %v798 = vld [vmem:[#allocation2 + $0xb7] sm:$0xff]
        %v799 = vld [vmem:[#allocation2 + $0xbf] sm:$0xff]
        %v800 = vld [vmem:[#allocation2 + $0xc7] sm:$0xff]
        %v801 = vld [vmem:[#allocation2 + $0xcf] sm:$0xff]
        %v802 = vld [vmem:[#allocation2 + $0xd7] sm:$0xff]
        %v803 = vld [vmem:[#allocation2 + $0xdf] sm:$0xff]
        %v804 = vld [vmem:[#allocation2 + $0xe7] sm:$0xff]
        %v805 = vld [vmem:[#allocation2 + $0xef] sm:$0xff]
        %v806 = vld [vmem:[#allocation2 + $0xf7] sm:$0xff]
        %v807 = vld [vmem:[#allocation2 + $0xff] sm:$0xff]
        %v808 = vld [vmem:[#allocation2 + $0x107] sm:$0xff]
        %v809 = vld [vmem:[#allocation2 + $0x10f] sm:$0xff]
        %v810 = vld [vmem:[#allocation2 + $0x117] sm:$0xff]
        %v811 = vld [vmem:[#allocation2 + $0x11f] sm:$0xff]
        %v812 = vld [vmem:[#allocation2 + $0x127] sm:$0xff]
        %v813 = vld [vmem:[#allocation2 + $0x12f] sm:$0xff]
        %v814 = vld [vmem:[#allocation2 + $0x137] sm:$0xff]
        %v815 = vld [vmem:[#allocation2 + $0x13f] sm:$0xff]
        %v816 = vld [vmem:[#allocation2 + $0x147] sm:$0xff]
        %v817 = vld [vmem:[#allocation2 + $0x14f] sm:$0xff]
        %v818 = vld [vmem:[#allocation2 + $0x157] sm:$0xff]
        %v819 = vld [vmem:[#allocation2 + $0x15f] sm:$0xff]
        %v820 = vld [vmem:[#allocation2 + $0x167] sm:$0xff]
        %v821 = vld [vmem:[#allocation2 + $0x16f] sm:$0xff]
        %v822 = vld [vmem:[#allocation2 + $0x177] sm:$0xff]
        %v823 = vld [vmem:[#allocation2 + $0x17f] sm:$0xff]
        %v824 = vld [vmem:[#allocation2 + $0x187] sm:$0xff]
        %v825 = vld [vmem:[#allocation2 + $0x18f] sm:$0xff]
        %v826 = vld [vmem:[#allocation2 + $0x197] sm:$0xff]
        %v827 = vld [vmem:[#allocation2 + $0x19f] sm:$0xff]
        %v828 = vld [vmem:[#allocation2 + $0x1a7] sm:$0xff]
        %v829 = vld [vmem:[#allocation2 + $0x1af] sm:$0xff]
        %v830 = vld [vmem:[#allocation2 + $0x1b7] sm:$0xff]
        %v831 = vld [vmem:[#allocation2 + $0x1bf] sm:$0xff]
        %v832 = vld [vmem:[#allocation2 + $0x1c7] sm:$0xff]
        %v833 = vld [vmem:[#allocation2 + $0x1cf] sm:$0xff]
        %v834 = vld [vmem:[#allocation2 + $0x1d7] sm:$0xff]
        %v835 = vld [vmem:[#allocation2 + $0x1df] sm:$0xff]
        %v836 = vld [vmem:[#allocation2 + $0x1e7] sm:$0xff]
        %v837 = vld [vmem:[#allocation2 + $0x1ef] sm:$0xff]
        %v838 = vld [vmem:[#allocation2 + $0x1f7] sm:$0xff]
        %v839 = vld [vmem:[#allocation2 + $0x1ff] sm:$0xff]
        %v840 = vld [vmem:[#allocation9] sm:$0xff]
        %v841 = vld [vmem:[#allocation9 + $0x8] sm:$0xff]
        %v842 = vld [vmem:[#allocation9 + $0x10] sm:$0xff]
        %v843 = vld [vmem:[#allocation9 + $0x18] sm:$0xff]
        %v844 = vld [vmem:[#allocation2 + $0x8] sm:$0xff]
        %v845 = vld [vmem:[#allocation2 + $0x10] sm:$0xff]
        %v846 = vld [vmem:[#allocation2 + $0x18] sm:$0xff]
        %v847 = vld [vmem:[#allocation2 + $0x20] sm:$0xff]
        %v848 = vld [vmem:[#allocation2 + $0x28] sm:$0xff]
        %v849 = vld [vmem:[#allocation2 + $0x30] sm:$0xff]
        %v850 = vld [vmem:[#allocation2 + $0x38] sm:$0xff]
        %v851 = vld [vmem:[#allocation2 + $0x40] sm:$0xff]
        %v852 = vld [vmem:[#allocation2 + $0x48] sm:$0xff]
        %v853 = vld [vmem:[#allocation2 + $0x50] sm:$0xff]
        %v854 = vld [vmem:[#allocation2 + $0x58] sm:$0xff]
        %v855 = vld [vmem:[#allocation2 + $0x60] sm:$0xff]
        %v856 = vld [vmem:[#allocation2 + $0x68] sm:$0xff]
        %v857 = vld [vmem:[#allocation2 + $0x70] sm:$0xff]
        %v858 = vld [vmem:[#allocation2 + $0x78] sm:$0xff]
        %v859 = vld [vmem:[#allocation2 + $0x80] sm:$0xff]
        %v860 = vld [vmem:[#allocation2 + $0x88] sm:$0xff]
        %v861 = vld [vmem:[#allocation2 + $0x90] sm:$0xff]
        %v862 = vld [vmem:[#allocation2 + $0x98] sm:$0xff]
        %v863 = vld [vmem:[#allocation2 + $0xa0] sm:$0xff]
        %v864 = vld [vmem:[#allocation2 + $0xa8] sm:$0xff]
        %v865 = vld [vmem:[#allocation2 + $0xb0] sm:$0xff]
        %v866 = vld [vmem:[#allocation2 + $0xb8] sm:$0xff]
        %v867 = vld [vmem:[#allocation2 + $0xc0] sm:$0xff]
        %v868 = vld [vmem:[#allocation2 + $0xc8] sm:$0xff]
        %v869 = vld [vmem:[#allocation2 + $0xd0] sm:$0xff]
        %v870 = vld [vmem:[#allocation2 + $0xd8] sm:$0xff]
        %v871 = vld [vmem:[#allocation2 + $0xe0] sm:$0xff]
        %v872 = vld [vmem:[#allocation2 + $0xe8] sm:$0xff]
        %v873 = vld [vmem:[#allocation2 + $0xf0] sm:$0xff]
        %v874 = vld [vmem:[#allocation2 + $0xf8] sm:$0xff]
        %v875 = vld [vmem:[#allocation2 + $0x100] sm:$0xff]
        %v876 = vld [vmem:[#allocation2 + $0x108] sm:$0xff]
        %v877 = vld [vmem:[#allocation2 + $0x110] sm:$0xff]
        %v878 = vld [vmem:[#allocation2 + $0x118] sm:$0xff]
        %v879 = vld [vmem:[#allocation2 + $0x120] sm:$0xff]
        %v880 = vld [vmem:[#allocation2 + $0x128] sm:$0xff]
        %v881 = vld [vmem:[#allocation2 + $0x130] sm:$0xff]
        %v882 = vld [vmem:[#allocation2 + $0x138] sm:$0xff]
        %v883 = vld [vmem:[#allocation2 + $0x140] sm:$0xff]
        %v884 = vld [vmem:[#allocation2 + $0x148] sm:$0xff]
        %v885 = vld [vmem:[#allocation2 + $0x150] sm:$0xff]
        %v886 = vld [vmem:[#allocation2 + $0x158] sm:$0xff]
        %v887 = vld [vmem:[#allocation2 + $0x160] sm:$0xff]
        %v888 = vld [vmem:[#allocation2 + $0x168] sm:$0xff]
        %v889 = vld [vmem:[#allocation2 + $0x170] sm:$0xff]
        %v890 = vld [vmem:[#allocation2 + $0x178] sm:$0xff]
        %v891 = vld [vmem:[#allocation2 + $0x180] sm:$0xff]
        %v892 = vld [vmem:[#allocation2 + $0x188] sm:$0xff]
        %v893 = vld [vmem:[#allocation2 + $0x190] sm:$0xff]
        %v894 = vld [vmem:[#allocation2 + $0x198] sm:$0xff]
        %v895 = vld [vmem:[#allocation2 + $0x1a0] sm:$0xff]
        %v896 = vld [vmem:[#allocation2 + $0x1a8] sm:$0xff]
        %v897 = vld [vmem:[#allocation2 + $0x1b0] sm:$0xff]
        %v898 = vld [vmem:[#allocation2 + $0x1b8] sm:$0xff]
        %v899 = vld [vmem:[#allocation2 + $0x1c0] sm:$0xff]
        %v900 = vld [vmem:[#allocation2 + $0x1c8] sm:$0xff]
        %v901 = vld [vmem:[#allocation2 + $0x1d0] sm:$0xff]
        %v902 = vld [vmem:[#allocation2 + $0x1d8] sm:$0xff]
        %v903 = vld [vmem:[#allocation2 + $0x1e0] sm:$0xff]
        %v904 = vld [vmem:[#allocation2 + $0x1e8] sm:$0xff]
        %v905 = vld [vmem:[#allocation2 + $0x1f0] sm:$0xff]
        %v906 = vld [vmem:[#allocation2 + $0x1f8] sm:$0xff]
        %v907 = vld [vmem:[#allocation2 + $0x200] sm:$0xff]
        %s908 = scalar_lea.vmem [#allocation9], 32
        %v909 = vld [vmem:[%s908] sm:$0xff]
        %v910 = vld [vmem:[%s908 + $0x8] sm:$0xff]
        %v911 = vld [vmem:[%s908 + $0x10] sm:$0xff]
        %v912 = vld [vmem:[%s908 + $0x18] sm:$0xff]
        %v914 = vsel %vm544, %v844, 0
        %v917 = vsel %vm544, %v845, 0
        %v920 = vsel %vm544, %v846, 0
        %v923 = vsel %vm544, %v847, 0
        %v926 = vsel %vm544, %v848, 0
        %v929 = vsel %vm544, %v849, 0
        %v932 = vsel %vm544, %v850, 0
        %v935 = vsel %vm544, %v851, 0
        %v938 = vsel %vm544, %v852, 0
        %v941 = vsel %vm544, %v853, 0
        %v944 = vsel %vm544, %v854, 0
        %v947 = vsel %vm544, %v855, 0
        %v950 = vsel %vm544, %v856, 0
        %v953 = vsel %vm544, %v857, 0
        %v956 = vsel %vm544, %v858, 0
        %v959 = vsel %vm544, %v859, 0
        %v962 = vsel %vm544, %v860, 0
        %v965 = vsel %vm544, %v861, 0
        %v968 = vsel %vm544, %v862, 0
        %v971 = vsel %vm544, %v863, 0
        %v974 = vsel %vm544, %v864, 0
        %v977 = vsel %vm544, %v865, 0
        %v980 = vsel %vm544, %v866, 0
        %v983 = vsel %vm544, %v867, 0
        %v986 = vsel %vm544, %v868, 0
        %v989 = vsel %vm544, %v869, 0
        %v992 = vsel %vm544, %v870, 0
        %v995 = vsel %vm544, %v871, 0
        %v998 = vsel %vm544, %v872, 0
        %v1001 = vsel %vm544, %v873, 0
        %v1004 = vsel %vm544, %v874, 0
        %v1007 = vsel %vm544, %v875, 0
        %v1010 = vsel %vm544, %v876, 0
        %v1013 = vsel %vm544, %v877, 0
        %v1016 = vsel %vm544, %v878, 0
        %v1019 = vsel %vm544, %v879, 0
        %v1022 = vsel %vm544, %v880, 0
        %v1025 = vsel %vm544, %v881, 0
        %v1028 = vsel %vm544, %v882, 0
        %v1031 = vsel %vm544, %v883, 0
        %v1034 = vsel %vm544, %v884, 0
        %v1037 = vsel %vm544, %v885, 0
        %v1040 = vsel %vm544, %v886, 0
        %v1043 = vsel %vm544, %v887, 0
        %v1046 = vsel %vm544, %v888, 0
        %v1049 = vsel %vm544, %v889, 0
        %v1052 = vsel %vm544, %v890, 0
        %v1055 = vsel %vm544, %v891, 0
        %v1058 = vsel %vm544, %v892, 0
        %v1061 = vsel %vm544, %v893, 0
        %v1064 = vsel %vm544, %v894, 0
        %v1067 = vsel %vm544, %v895, 0
        %v1070 = vsel %vm544, %v896, 0
        %v1073 = vsel %vm544, %v897, 0
        %v1076 = vsel %vm544, %v898, 0
        %v1079 = vsel %vm544, %v899, 0
        %v1082 = vsel %vm544, %v900, 0
        %v1085 = vsel %vm544, %v901, 0
        %v1088 = vsel %vm544, %v902, 0
        %v1091 = vsel %vm544, %v903, 0
        %v1094 = vsel %vm544, %v904, 0
        %v1097 = vsel %vm544, %v905, 0
        %v1100 = vsel %vm544, %v906, 0
        %v1103 = vsel %vm544, %v907, 0
        %1105 = vmatpush.msra.mxu0 0.0
        %1106 = vmatpush.msra.mxu0 0.0
        %1107 = vmatpush.msra.mxu0 0.0
        %1108 = vmatpush.msra.mxu0 0.0
        %1109 = vmatpush.msra.mxu0 0.0
        %1110 = vmatpush.msra.mxu0 0.0
        %1111 = vmatpush.msra.mxu0 0.0
        %1112 = vmatpush.msra.mxu0 0.0
        %1113 = vmatpush.msra.mxu0 0.0
        %1114 = vmatpush.msra.mxu0 0.0
        %1115 = vmatpush.msra.mxu0 0.0
        %1116 = vmatpush.msra.mxu0 0.0
        %1117 = vmatpush.msra.mxu0 %v912
        %1118 = vmatpush.msra.mxu0 %v911
        %1119 = vmatpush.msra.mxu0 %v910
        %1120 = vmatpush.msra.mxu0 %v909
        %1121 = vmatmul.f32.gmra.mxu0 %v914
        %v1122 = vpop.f32.mrf.mxu0
        %v1123 = vadd.f32 0.0, %v1122
        %1124 = vmatmul.f32.gmra.mxu0 %v917
        %v1125 = vpop.f32.mrf.mxu0
        %v1126 = vadd.f32 0.0, %v1125
        %1127 = vmatmul.f32.gmra.mxu0 %v920
        %v1128 = vpop.f32.mrf.mxu0
        %v1129 = vadd.f32 0.0, %v1128
        %1130 = vmatmul.f32.gmra.mxu0 %v923
        %v1131 = vpop.f32.mrf.mxu0
        %v1132 = vadd.f32 0.0, %v1131
        %1133 = vmatmul.f32.gmra.mxu0 %v926
        %v1134 = vpop.f32.mrf.mxu0
        %v1135 = vadd.f32 0.0, %v1134
        %1136 = vmatmul.f32.gmra.mxu0 %v929
        %v1137 = vpop.f32.mrf.mxu0
        %v1138 = vadd.f32 0.0, %v1137
        %1139 = vmatmul.f32.gmra.mxu0 %v932
        %v1140 = vpop.f32.mrf.mxu0
        %v1141 = vadd.f32 0.0, %v1140
        %1142 = vmatmul.f32.gmra.mxu0 %v935
        %v1143 = vpop.f32.mrf.mxu0
        %v1144 = vadd.f32 0.0, %v1143
        %1145 = vmatmul.f32.gmra.mxu0 %v938
        %v1146 = vpop.f32.mrf.mxu0
        %v1147 = vadd.f32 0.0, %v1146
        %1148 = vmatmul.f32.gmra.mxu0 %v941
        %v1149 = vpop.f32.mrf.mxu0
        %v1150 = vadd.f32 0.0, %v1149
        %1151 = vmatmul.f32.gmra.mxu0 %v944
        %v1152 = vpop.f32.mrf.mxu0
        %v1153 = vadd.f32 0.0, %v1152
        %1154 = vmatmul.f32.gmra.mxu0 %v947
        %v1155 = vpop.f32.mrf.mxu0
        %v1156 = vadd.f32 0.0, %v1155
        %1157 = vmatmul.f32.gmra.mxu0 %v950
        %v1158 = vpop.f32.mrf.mxu0
        %v1159 = vadd.f32 0.0, %v1158
        %1160 = vmatmul.f32.gmra.mxu0 %v953
        %v1161 = vpop.f32.mrf.mxu0
        %v1162 = vadd.f32 0.0, %v1161
        %1163 = vmatmul.f32.gmra.mxu0 %v956
        %v1164 = vpop.f32.mrf.mxu0
        %v1165 = vadd.f32 0.0, %v1164
        %1166 = vmatmul.f32.gmra.mxu0 %v959
        %v1167 = vpop.f32.mrf.mxu0
        %v1168 = vadd.f32 0.0, %v1167
        %1169 = vmatmul.f32.gmra.mxu0 %v962
        %v1170 = vpop.f32.mrf.mxu0
        %v1171 = vadd.f32 0.0, %v1170
        %1172 = vmatmul.f32.gmra.mxu0 %v965
        %v1173 = vpop.f32.mrf.mxu0
        %v1174 = vadd.f32 0.0, %v1173
        %1175 = vmatmul.f32.gmra.mxu0 %v968
        %v1176 = vpop.f32.mrf.mxu0
        %v1177 = vadd.f32 0.0, %v1176
        %1178 = vmatmul.f32.gmra.mxu0 %v971
        %v1179 = vpop.f32.mrf.mxu0
        %v1180 = vadd.f32 0.0, %v1179
        %1181 = vmatmul.f32.gmra.mxu0 %v974
        %v1182 = vpop.f32.mrf.mxu0
        %v1183 = vadd.f32 0.0, %v1182
        %1184 = vmatmul.f32.gmra.mxu0 %v977
        %v1185 = vpop.f32.mrf.mxu0
        %v1186 = vadd.f32 0.0, %v1185
        %1187 = vmatmul.f32.gmra.mxu0 %v980
        %v1188 = vpop.f32.mrf.mxu0
        %v1189 = vadd.f32 0.0, %v1188
        %1190 = vmatmul.f32.gmra.mxu0 %v983
        %v1191 = vpop.f32.mrf.mxu0
        %v1192 = vadd.f32 0.0, %v1191
        %1193 = vmatmul.f32.gmra.mxu0 %v986
        %v1194 = vpop.f32.mrf.mxu0
        %v1195 = vadd.f32 0.0, %v1194
        %1196 = vmatmul.f32.gmra.mxu0 %v989
        %v1197 = vpop.f32.mrf.mxu0
        %v1198 = vadd.f32 0.0, %v1197
        %1199 = vmatmul.f32.gmra.mxu0 %v992
        %v1200 = vpop.f32.mrf.mxu0
        %v1201 = vadd.f32 0.0, %v1200
        %1202 = vmatmul.f32.gmra.mxu0 %v995
        %v1203 = vpop.f32.mrf.mxu0
        %v1204 = vadd.f32 0.0, %v1203
        %1205 = vmatmul.f32.gmra.mxu0 %v998
        %v1206 = vpop.f32.mrf.mxu0
        %v1207 = vadd.f32 0.0, %v1206
        %1208 = vmatmul.f32.gmra.mxu0 %v1001
        %v1209 = vpop.f32.mrf.mxu0
        %v1210 = vadd.f32 0.0, %v1209
        %1211 = vmatmul.f32.gmra.mxu0 %v1004
        %v1212 = vpop.f32.mrf.mxu0
        %v1213 = vadd.f32 0.0, %v1212
        %1214 = vmatmul.f32.gmra.mxu0 %v1007
        %v1215 = vpop.f32.mrf.mxu0
        %v1216 = vadd.f32 0.0, %v1215
        %1217 = vmatmul.f32.gmra.mxu0 %v1010
        %v1218 = vpop.f32.mrf.mxu0
        %v1219 = vadd.f32 0.0, %v1218
        %1220 = vmatmul.f32.gmra.mxu0 %v1013
        %v1221 = vpop.f32.mrf.mxu0
        %v1222 = vadd.f32 0.0, %v1221
        %1223 = vmatmul.f32.gmra.mxu0 %v1016
        %v1224 = vpop.f32.mrf.mxu0
        %v1225 = vadd.f32 0.0, %v1224
        %1226 = vmatmul.f32.gmra.mxu0 %v1019
        %v1227 = vpop.f32.mrf.mxu0
        %v1228 = vadd.f32 0.0, %v1227
        %1229 = vmatmul.f32.gmra.mxu0 %v1022
        %v1230 = vpop.f32.mrf.mxu0
        %v1231 = vadd.f32 0.0, %v1230
        %1232 = vmatmul.f32.gmra.mxu0 %v1025
        %v1233 = vpop.f32.mrf.mxu0
        %v1234 = vadd.f32 0.0, %v1233
        %1235 = vmatmul.f32.gmra.mxu0 %v1028
        %v1236 = vpop.f32.mrf.mxu0
        %v1237 = vadd.f32 0.0, %v1236
        %1238 = vmatmul.f32.gmra.mxu0 %v1031
        %v1239 = vpop.f32.mrf.mxu0
        %v1240 = vadd.f32 0.0, %v1239
        %1241 = vmatmul.f32.gmra.mxu0 %v1034
        %v1242 = vpop.f32.mrf.mxu0
        %v1243 = vadd.f32 0.0, %v1242
        %1244 = vmatmul.f32.gmra.mxu0 %v1037
        %v1245 = vpop.f32.mrf.mxu0
        %v1246 = vadd.f32 0.0, %v1245
        %1247 = vmatmul.f32.gmra.mxu0 %v1040
        %v1248 = vpop.f32.mrf.mxu0
        %v1249 = vadd.f32 0.0, %v1248
        %1250 = vmatmul.f32.gmra.mxu0 %v1043
        %v1251 = vpop.f32.mrf.mxu0
        %v1252 = vadd.f32 0.0, %v1251
        %1253 = vmatmul.f32.gmra.mxu0 %v1046
        %v1254 = vpop.f32.mrf.mxu0
        %v1255 = vadd.f32 0.0, %v1254
        %1256 = vmatmul.f32.gmra.mxu0 %v1049
        %v1257 = vpop.f32.mrf.mxu0
        %v1258 = vadd.f32 0.0, %v1257
        %1259 = vmatmul.f32.gmra.mxu0 %v1052
        %v1260 = vpop.f32.mrf.mxu0
        %v1261 = vadd.f32 0.0, %v1260
        %1262 = vmatmul.f32.gmra.mxu0 %v1055
        %v1263 = vpop.f32.mrf.mxu0
        %v1264 = vadd.f32 0.0, %v1263
        %1265 = vmatmul.f32.gmra.mxu0 %v1058
        %v1266 = vpop.f32.mrf.mxu0
        %v1267 = vadd.f32 0.0, %v1266
        %1268 = vmatmul.f32.gmra.mxu0 %v1061
        %v1269 = vpop.f32.mrf.mxu0
        %v1270 = vadd.f32 0.0, %v1269
        %1271 = vmatmul.f32.gmra.mxu0 %v1064
        %v1272 = vpop.f32.mrf.mxu0
        %v1273 = vadd.f32 0.0, %v1272
        %1274 = vmatmul.f32.gmra.mxu0 %v1067
        %v1275 = vpop.f32.mrf.mxu0
        %v1276 = vadd.f32 0.0, %v1275
        %1277 = vmatmul.f32.gmra.mxu0 %v1070
        %v1278 = vpop.f32.mrf.mxu0
        %v1279 = vadd.f32 0.0, %v1278
        %1280 = vmatmul.f32.gmra.mxu0 %v1073
        %v1281 = vpop.f32.mrf.mxu0
        %v1282 = vadd.f32 0.0, %v1281
        %1283 = vmatmul.f32.gmra.mxu0 %v1076
        %v1284 = vpop.f32.mrf.mxu0
        %v1285 = vadd.f32 0.0, %v1284
        %1286 = vmatmul.f32.gmra.mxu0 %v1079
        %v1287 = vpop.f32.mrf.mxu0
        %v1288 = vadd.f32 0.0, %v1287
        %1289 = vmatmul.f32.gmra.mxu0 %v1082
        %v1290 = vpop.f32.mrf.mxu0
        %v1291 = vadd.f32 0.0, %v1290
        %1292 = vmatmul.f32.gmra.mxu0 %v1085
        %v1293 = vpop.f32.mrf.mxu0
        %v1294 = vadd.f32 0.0, %v1293
        %1295 = vmatmul.f32.gmra.mxu0 %v1088
        %v1296 = vpop.f32.mrf.mxu0
        %v1297 = vadd.f32 0.0, %v1296
        %1298 = vmatmul.f32.gmra.mxu0 %v1091
        %v1299 = vpop.f32.mrf.mxu0
        %v1300 = vadd.f32 0.0, %v1299
        %1301 = vmatmul.f32.gmra.mxu0 %v1094
        %v1302 = vpop.f32.mrf.mxu0
        %v1303 = vadd.f32 0.0, %v1302
        %1304 = vmatmul.f32.gmra.mxu0 %v1097
        %v1305 = vpop.f32.mrf.mxu0
        %v1306 = vadd.f32 0.0, %v1305
        %1307 = vmatmul.f32.gmra.mxu0 %v1100
        %v1308 = vpop.f32.mrf.mxu0
        %v1309 = vadd.f32 0.0, %v1308
        %1310 = vmatmul.f32.gmra.mxu0 %v1103
        %v1311 = vpop.f32.mrf.mxu0
        %v1312 = vadd.f32 0.0, %v1311
        %1313 = vdwg.mxu0
        %v1315 = vsel %vm544, %v776, 0
        %v1318 = vsel %vm544, %v777, 0
        %v1321 = vsel %vm544, %v778, 0
        %v1324 = vsel %vm544, %v779, 0
        %v1327 = vsel %vm544, %v780, 0
        %v1330 = vsel %vm544, %v781, 0
        %v1333 = vsel %vm544, %v782, 0
        %v1336 = vsel %vm544, %v783, 0
        %v1339 = vsel %vm544, %v784, 0
        %v1342 = vsel %vm544, %v785, 0
        %v1345 = vsel %vm544, %v786, 0
        %v1348 = vsel %vm544, %v787, 0
        %v1351 = vsel %vm544, %v788, 0
        %v1354 = vsel %vm544, %v789, 0
        %v1357 = vsel %vm544, %v790, 0
        %v1360 = vsel %vm544, %v791, 0
        %v1363 = vsel %vm544, %v792, 0
        %v1366 = vsel %vm544, %v793, 0
        %v1369 = vsel %vm544, %v794, 0
        %v1372 = vsel %vm544, %v795, 0
        %v1375 = vsel %vm544, %v796, 0
        %v1378 = vsel %vm544, %v797, 0
        %v1381 = vsel %vm544, %v798, 0
        %v1384 = vsel %vm544, %v799, 0
        %v1387 = vsel %vm544, %v800, 0
        %v1390 = vsel %vm544, %v801, 0
        %v1393 = vsel %vm544, %v802, 0
        %v1396 = vsel %vm544, %v803, 0
        %v1399 = vsel %vm544, %v804, 0
        %v1402 = vsel %vm544, %v805, 0
        %v1405 = vsel %vm544, %v806, 0
        %v1408 = vsel %vm544, %v807, 0
        %v1411 = vsel %vm544, %v808, 0
        %v1414 = vsel %vm544, %v809, 0
        %v1417 = vsel %vm544, %v810, 0
        %v1420 = vsel %vm544, %v811, 0
        %v1423 = vsel %vm544, %v812, 0
        %v1426 = vsel %vm544, %v813, 0
        %v1429 = vsel %vm544, %v814, 0
        %v1432 = vsel %vm544, %v815, 0
        %v1435 = vsel %vm544, %v816, 0
        %v1438 = vsel %vm544, %v817, 0
        %v1441 = vsel %vm544, %v818, 0
        %v1444 = vsel %vm544, %v819, 0
        %v1447 = vsel %vm544, %v820, 0
        %v1450 = vsel %vm544, %v821, 0
        %v1453 = vsel %vm544, %v822, 0
        %v1456 = vsel %vm544, %v823, 0
        %v1459 = vsel %vm544, %v824, 0
        %v1462 = vsel %vm544, %v825, 0
        %v1465 = vsel %vm544, %v826, 0
        %v1468 = vsel %vm544, %v827, 0
        %v1471 = vsel %vm544, %v828, 0
        %v1474 = vsel %vm544, %v829, 0
        %v1477 = vsel %vm544, %v830, 0
        %v1480 = vsel %vm544, %v831, 0
        %v1483 = vsel %vm544, %v832, 0
        %v1486 = vsel %vm544, %v833, 0
        %v1489 = vsel %vm544, %v834, 0
        %v1492 = vsel %vm544, %v835, 0
        %v1495 = vsel %vm544, %v836, 0
        %v1498 = vsel %vm544, %v837, 0
        %v1501 = vsel %vm544, %v838, 0
        %v1504 = vsel %vm544, %v839, 0
        %1506 = vmatpush.msra.mxu0 0.0
        %1507 = vmatpush.msra.mxu0 0.0
        %1508 = vmatpush.msra.mxu0 0.0
        %1509 = vmatpush.msra.mxu0 0.0
        %1510 = vmatpush.msra.mxu0 0.0
        %1511 = vmatpush.msra.mxu0 0.0
        %1512 = vmatpush.msra.mxu0 0.0
        %1513 = vmatpush.msra.mxu0 0.0
        %1514 = vmatpush.msra.mxu0 0.0
        %1515 = vmatpush.msra.mxu0 0.0
        %1516 = vmatpush.msra.mxu0 0.0
        %1517 = vmatpush.msra.mxu0 0.0
        %1518 = vmatpush.msra.mxu0 %v843
        %1519 = vmatpush.msra.mxu0 %v842
        %1520 = vmatpush.msra.mxu0 %v841
        %1521 = vmatpush.msra.mxu0 %v840
        %1522 = vmatmul.f32.gmra.mxu0 %v1315
        %v1523 = vpop.f32.mrf.mxu0
        %v1524 = vadd.f32 %v1123, %v1523
        %1525 = vmatmul.f32.gmra.mxu0 %v1318
        %v1526 = vpop.f32.mrf.mxu0
        %v1527 = vadd.f32 %v1126, %v1526
        %1528 = vmatmul.f32.gmra.mxu0 %v1321
        %v1529 = vpop.f32.mrf.mxu0
        %v1530 = vadd.f32 %v1129, %v1529
        %1531 = vmatmul.f32.gmra.mxu0 %v1324
        %v1532 = vpop.f32.mrf.mxu0
        %v1533 = vadd.f32 %v1132, %v1532
        %1534 = vmatmul.f32.gmra.mxu0 %v1327
        %v1535 = vpop.f32.mrf.mxu0
        %v1536 = vadd.f32 %v1135, %v1535
        %1537 = vmatmul.f32.gmra.mxu0 %v1330
        %v1538 = vpop.f32.mrf.mxu0
        %v1539 = vadd.f32 %v1138, %v1538
        %1540 = vmatmul.f32.gmra.mxu0 %v1333
        %v1541 = vpop.f32.mrf.mxu0
        %v1542 = vadd.f32 %v1141, %v1541
        %1543 = vmatmul.f32.gmra.mxu0 %v1336
        %v1544 = vpop.f32.mrf.mxu0
        %v1545 = vadd.f32 %v1144, %v1544
        %1546 = vmatmul.f32.gmra.mxu0 %v1339
        %v1547 = vpop.f32.mrf.mxu0
        %v1548 = vadd.f32 %v1147, %v1547
        %1549 = vmatmul.f32.gmra.mxu0 %v1342
        %v1550 = vpop.f32.mrf.mxu0
        %v1551 = vadd.f32 %v1150, %v1550
        %1552 = vmatmul.f32.gmra.mxu0 %v1345
        %v1553 = vpop.f32.mrf.mxu0
        %v1554 = vadd.f32 %v1153, %v1553
        %1555 = vmatmul.f32.gmra.mxu0 %v1348
        %v1556 = vpop.f32.mrf.mxu0
        %v1557 = vadd.f32 %v1156, %v1556
        %1558 = vmatmul.f32.gmra.mxu0 %v1351
        %v1559 = vpop.f32.mrf.mxu0
        %v1560 = vadd.f32 %v1159, %v1559
        %1561 = vmatmul.f32.gmra.mxu0 %v1354
        %v1562 = vpop.f32.mrf.mxu0
        %v1563 = vadd.f32 %v1162, %v1562
        %1564 = vmatmul.f32.gmra.mxu0 %v1357
        %v1565 = vpop.f32.mrf.mxu0
        %v1566 = vadd.f32 %v1165, %v1565
        %1567 = vmatmul.f32.gmra.mxu0 %v1360
        %v1568 = vpop.f32.mrf.mxu0
        %v1569 = vadd.f32 %v1168, %v1568
        %1570 = vmatmul.f32.gmra.mxu0 %v1363
        %v1571 = vpop.f32.mrf.mxu0
        %v1572 = vadd.f32 %v1171, %v1571
        %1573 = vmatmul.f32.gmra.mxu0 %v1366
        %v1574 = vpop.f32.mrf.mxu0
        %v1575 = vadd.f32 %v1174, %v1574
        %1576 = vmatmul.f32.gmra.mxu0 %v1369
        %v1577 = vpop.f32.mrf.mxu0
        %v1578 = vadd.f32 %v1177, %v1577
        %1579 = vmatmul.f32.gmra.mxu0 %v1372
        %v1580 = vpop.f32.mrf.mxu0
        %v1581 = vadd.f32 %v1180, %v1580
        %1582 = vmatmul.f32.gmra.mxu0 %v1375
        %v1583 = vpop.f32.mrf.mxu0
        %v1584 = vadd.f32 %v1183, %v1583
        %1585 = vmatmul.f32.gmra.mxu0 %v1378
        %v1586 = vpop.f32.mrf.mxu0
        %v1587 = vadd.f32 %v1186, %v1586
        %1588 = vmatmul.f32.gmra.mxu0 %v1381
        %v1589 = vpop.f32.mrf.mxu0
        %v1590 = vadd.f32 %v1189, %v1589
        %1591 = vmatmul.f32.gmra.mxu0 %v1384
        %v1592 = vpop.f32.mrf.mxu0
        %v1593 = vadd.f32 %v1192, %v1592
        %1594 = vmatmul.f32.gmra.mxu0 %v1387
        %v1595 = vpop.f32.mrf.mxu0
        %v1596 = vadd.f32 %v1195, %v1595
        %1597 = vmatmul.f32.gmra.mxu0 %v1390
        %v1598 = vpop.f32.mrf.mxu0
        %v1599 = vadd.f32 %v1198, %v1598
        %1600 = vmatmul.f32.gmra.mxu0 %v1393
        %v1601 = vpop.f32.mrf.mxu0
        %v1602 = vadd.f32 %v1201, %v1601
        %1603 = vmatmul.f32.gmra.mxu0 %v1396
        %v1604 = vpop.f32.mrf.mxu0
        %v1605 = vadd.f32 %v1204, %v1604
        %1606 = vmatmul.f32.gmra.mxu0 %v1399
        %v1607 = vpop.f32.mrf.mxu0
        %v1608 = vadd.f32 %v1207, %v1607
        %1609 = vmatmul.f32.gmra.mxu0 %v1402
        %v1610 = vpop.f32.mrf.mxu0
        %v1611 = vadd.f32 %v1210, %v1610
        %1612 = vmatmul.f32.gmra.mxu0 %v1405
        %v1613 = vpop.f32.mrf.mxu0
        %v1614 = vadd.f32 %v1213, %v1613
        %1615 = vmatmul.f32.gmra.mxu0 %v1408
        %v1616 = vpop.f32.mrf.mxu0
        %v1617 = vadd.f32 %v1216, %v1616
        %1618 = vmatmul.f32.gmra.mxu0 %v1411
        %v1619 = vpop.f32.mrf.mxu0
        %v1620 = vadd.f32 %v1219, %v1619
        %1621 = vmatmul.f32.gmra.mxu0 %v1414
        %v1622 = vpop.f32.mrf.mxu0
        %v1623 = vadd.f32 %v1222, %v1622
        %1624 = vmatmul.f32.gmra.mxu0 %v1417
        %v1625 = vpop.f32.mrf.mxu0
        %v1626 = vadd.f32 %v1225, %v1625
        %1627 = vmatmul.f32.gmra.mxu0 %v1420
        %v1628 = vpop.f32.mrf.mxu0
        %v1629 = vadd.f32 %v1228, %v1628
        %1630 = vmatmul.f32.gmra.mxu0 %v1423
        %v1631 = vpop.f32.mrf.mxu0
        %v1632 = vadd.f32 %v1231, %v1631
        %1633 = vmatmul.f32.gmra.mxu0 %v1426
        %v1634 = vpop.f32.mrf.mxu0
        %v1635 = vadd.f32 %v1234, %v1634
        %1636 = vmatmul.f32.gmra.mxu0 %v1429
        %v1637 = vpop.f32.mrf.mxu0
        %v1638 = vadd.f32 %v1237, %v1637
        %1639 = vmatmul.f32.gmra.mxu0 %v1432
        %v1640 = vpop.f32.mrf.mxu0
        %v1641 = vadd.f32 %v1240, %v1640
        %1642 = vmatmul.f32.gmra.mxu0 %v1435
        %v1643 = vpop.f32.mrf.mxu0
        %v1644 = vadd.f32 %v1243, %v1643
        %1645 = vmatmul.f32.gmra.mxu0 %v1438
        %v1646 = vpop.f32.mrf.mxu0
        %v1647 = vadd.f32 %v1246, %v1646
        %1648 = vmatmul.f32.gmra.mxu0 %v1441
        %v1649 = vpop.f32.mrf.mxu0
        %v1650 = vadd.f32 %v1249, %v1649
        %1651 = vmatmul.f32.gmra.mxu0 %v1444
        %v1652 = vpop.f32.mrf.mxu0
        %v1653 = vadd.f32 %v1252, %v1652
        %1654 = vmatmul.f32.gmra.mxu0 %v1447
        %v1655 = vpop.f32.mrf.mxu0
        %v1656 = vadd.f32 %v1255, %v1655
        %1657 = vmatmul.f32.gmra.mxu0 %v1450
        %v1658 = vpop.f32.mrf.mxu0
        %v1659 = vadd.f32 %v1258, %v1658
        %1660 = vmatmul.f32.gmra.mxu0 %v1453
        %v1661 = vpop.f32.mrf.mxu0
        %v1662 = vadd.f32 %v1261, %v1661
        %1663 = vmatmul.f32.gmra.mxu0 %v1456
        %v1664 = vpop.f32.mrf.mxu0
        %v1665 = vadd.f32 %v1264, %v1664
        %1666 = vmatmul.f32.gmra.mxu0 %v1459
        %v1667 = vpop.f32.mrf.mxu0
        %v1668 = vadd.f32 %v1267, %v1667
        %1669 = vmatmul.f32.gmra.mxu0 %v1462
        %v1670 = vpop.f32.mrf.mxu0
        %v1671 = vadd.f32 %v1270, %v1670
        %1672 = vmatmul.f32.gmra.mxu0 %v1465
        %v1673 = vpop.f32.mrf.mxu0
        %v1674 = vadd.f32 %v1273, %v1673
        %1675 = vmatmul.f32.gmra.mxu0 %v1468
        %v1676 = vpop.f32.mrf.mxu0
        %v1677 = vadd.f32 %v1276, %v1676
        %1678 = vmatmul.f32.gmra.mxu0 %v1471
        %v1679 = vpop.f32.mrf.mxu0
        %v1680 = vadd.f32 %v1279, %v1679
        %1681 = vmatmul.f32.gmra.mxu0 %v1474
        %v1682 = vpop.f32.mrf.mxu0
        %v1683 = vadd.f32 %v1282, %v1682
        %1684 = vmatmul.f32.gmra.mxu0 %v1477
        %v1685 = vpop.f32.mrf.mxu0
        %v1686 = vadd.f32 %v1285, %v1685
        %1687 = vmatmul.f32.gmra.mxu0 %v1480
        %v1688 = vpop.f32.mrf.mxu0
        %v1689 = vadd.f32 %v1288, %v1688
        %1690 = vmatmul.f32.gmra.mxu0 %v1483
        %v1691 = vpop.f32.mrf.mxu0
        %v1692 = vadd.f32 %v1291, %v1691
        %1693 = vmatmul.f32.gmra.mxu0 %v1486
        %v1694 = vpop.f32.mrf.mxu0
        %v1695 = vadd.f32 %v1294, %v1694
        %1696 = vmatmul.f32.gmra.mxu0 %v1489
        %v1697 = vpop.f32.mrf.mxu0
        %v1698 = vadd.f32 %v1297, %v1697
        %1699 = vmatmul.f32.gmra.mxu0 %v1492
        %v1700 = vpop.f32.mrf.mxu0
        %v1701 = vadd.f32 %v1300, %v1700
        %1702 = vmatmul.f32.gmra.mxu0 %v1495
        %v1703 = vpop.f32.mrf.mxu0
        %v1704 = vadd.f32 %v1303, %v1703
        %1705 = vmatmul.f32.gmra.mxu0 %v1498
        %v1706 = vpop.f32.mrf.mxu0
        %v1707 = vadd.f32 %v1306, %v1706
        %1708 = vmatmul.f32.gmra.mxu0 %v1501
        %v1709 = vpop.f32.mrf.mxu0
        %v1710 = vadd.f32 %v1309, %v1709
        %1711 = vmatmul.f32.gmra.mxu0 %v1504
        %v1712 = vpop.f32.mrf.mxu0
        %v1713 = vadd.f32 %v1312, %v1712
        %1714 = vdwg.mxu0
        %v1715 = vld [vmem:[#allocation2 + $0x9] sm:$0xff]
        %v1716 = vld [vmem:[#allocation2 + $0x11] sm:$0xff]
        %v1717 = vld [vmem:[#allocation2 + $0x19] sm:$0xff]
        %v1718 = vld [vmem:[#allocation2 + $0x21] sm:$0xff]
        %v1719 = vld [vmem:[#allocation2 + $0x29] sm:$0xff]
        %v1720 = vld [vmem:[#allocation2 + $0x31] sm:$0xff]
        %v1721 = vld [vmem:[#allocation2 + $0x39] sm:$0xff]
        %v1722 = vld [vmem:[#allocation2 + $0x41] sm:$0xff]
        %v1723 = vld [vmem:[#allocation2 + $0x49] sm:$0xff]
        %v1724 = vld [vmem:[#allocation2 + $0x51] sm:$0xff]
        %v1725 = vld [vmem:[#allocation2 + $0x59] sm:$0xff]
        %v1726 = vld [vmem:[#allocation2 + $0x61] sm:$0xff]
        %v1727 = vld [vmem:[#allocation2 + $0x69] sm:$0xff]
        %v1728 = vld [vmem:[#allocation2 + $0x71] sm:$0xff]
        %v1729 = vld [vmem:[#allocation2 + $0x79] sm:$0xff]
        %v1730 = vld [vmem:[#allocation2 + $0x81] sm:$0xff]
        %v1731 = vld [vmem:[#allocation2 + $0x89] sm:$0xff]
        %v1732 = vld [vmem:[#allocation2 + $0x91] sm:$0xff]
        %v1733 = vld [vmem:[#allocation2 + $0x99] sm:$0xff]
        %v1734 = vld [vmem:[#allocation2 + $0xa1] sm:$0xff]
        %v1735 = vld [vmem:[#allocation2 + $0xa9] sm:$0xff]
        %v1736 = vld [vmem:[#allocation2 + $0xb1] sm:$0xff]
        %v1737 = vld [vmem:[#allocation2 + $0xb9] sm:$0xff]
        %v1738 = vld [vmem:[#allocation2 + $0xc1] sm:$0xff]
        %v1739 = vld [vmem:[#allocation2 + $0xc9] sm:$0xff]
        %v1740 = vld [vmem:[#allocation2 + $0xd1] sm:$0xff]
        %v1741 = vld [vmem:[#allocation2 + $0xd9] sm:$0xff]
        %v1742 = vld [vmem:[#allocation2 + $0xe1] sm:$0xff]
        %v1743 = vld [vmem:[#allocation2 + $0xe9] sm:$0xff]
        %v1744 = vld [vmem:[#allocation2 + $0xf1] sm:$0xff]
        %v1745 = vld [vmem:[#allocation2 + $0xf9] sm:$0xff]
        %v1746 = vld [vmem:[#allocation2 + $0x101] sm:$0xff]
        %v1747 = vld [vmem:[#allocation2 + $0x109] sm:$0xff]
        %v1748 = vld [vmem:[#allocation2 + $0x111] sm:$0xff]
        %v1749 = vld [vmem:[#allocation2 + $0x119] sm:$0xff]
        %v1750 = vld [vmem:[#allocation2 + $0x121] sm:$0xff]
        %v1751 = vld [vmem:[#allocation2 + $0x129] sm:$0xff]
        %v1752 = vld [vmem:[#allocation2 + $0x131] sm:$0xff]
        %v1753 = vld [vmem:[#allocation2 + $0x139] sm:$0xff]
        %v1754 = vld [vmem:[#allocation2 + $0x141] sm:$0xff]
        %v1755 = vld [vmem:[#allocation2 + $0x149] sm:$0xff]
        %v1756 = vld [vmem:[#allocation2 + $0x151] sm:$0xff]
        %v1757 = vld [vmem:[#allocation2 + $0x159] sm:$0xff]
        %v1758 = vld [vmem:[#allocation2 + $0x161] sm:$0xff]
        %v1759 = vld [vmem:[#allocation2 + $0x169] sm:$0xff]
        %v1760 = vld [vmem:[#allocation2 + $0x171] sm:$0xff]
        %v1761 = vld [vmem:[#allocation2 + $0x179] sm:$0xff]
        %v1762 = vld [vmem:[#allocation2 + $0x181] sm:$0xff]
        %v1763 = vld [vmem:[#allocation2 + $0x189] sm:$0xff]
        %v1764 = vld [vmem:[#allocation2 + $0x191] sm:$0xff]
        %v1765 = vld [vmem:[#allocation2 + $0x199] sm:$0xff]
        %v1766 = vld [vmem:[#allocation2 + $0x1a1] sm:$0xff]
        %v1767 = vld [vmem:[#allocation2 + $0x1a9] sm:$0xff]
        %v1768 = vld [vmem:[#allocation2 + $0x1b1] sm:$0xff]
        %v1769 = vld [vmem:[#allocation2 + $0x1b9] sm:$0xff]
        %v1770 = vld [vmem:[#allocation2 + $0x1c1] sm:$0xff]
        %v1771 = vld [vmem:[#allocation2 + $0x1c9] sm:$0xff]
        %v1772 = vld [vmem:[#allocation2 + $0x1d1] sm:$0xff]
        %v1773 = vld [vmem:[#allocation2 + $0x1d9] sm:$0xff]
        %v1774 = vld [vmem:[#allocation2 + $0x1e1] sm:$0xff]
        %v1775 = vld [vmem:[#allocation2 + $0x1e9] sm:$0xff]
        %v1776 = vld [vmem:[#allocation2 + $0x1f1] sm:$0xff]
        %v1777 = vld [vmem:[#allocation2 + $0x1f9] sm:$0xff]
        %v1778 = vld [vmem:[#allocation2 + $0x201] sm:$0xff]
        %s1779 = scalar_lea.vmem [#allocation9], 64
        %v1780 = vld [vmem:[%s1779] sm:$0xff]
        %v1781 = vld [vmem:[%s1779 + $0x8] sm:$0xff]
        %v1782 = vld [vmem:[%s1779 + $0x10] sm:$0xff]
        %v1783 = vld [vmem:[%s1779 + $0x18] sm:$0xff]
        %v1785 = vsel %vm544, %v1715, 0
        %v1788 = vsel %vm544, %v1716, 0
        %v1791 = vsel %vm544, %v1717, 0
        %v1794 = vsel %vm544, %v1718, 0
        %v1797 = vsel %vm544, %v1719, 0
        %v1800 = vsel %vm544, %v1720, 0
        %v1803 = vsel %vm544, %v1721, 0
        %v1806 = vsel %vm544, %v1722, 0
        %v1809 = vsel %vm544, %v1723, 0
        %v1812 = vsel %vm544, %v1724, 0
        %v1815 = vsel %vm544, %v1725, 0
        %v1818 = vsel %vm544, %v1726, 0
        %v1821 = vsel %vm544, %v1727, 0
        %v1824 = vsel %vm544, %v1728, 0
        %v1827 = vsel %vm544, %v1729, 0
        %v1830 = vsel %vm544, %v1730, 0
        %v1833 = vsel %vm544, %v1731, 0
        %v1836 = vsel %vm544, %v1732, 0
        %v1839 = vsel %vm544, %v1733, 0
        %v1842 = vsel %vm544, %v1734, 0
        %v1845 = vsel %vm544, %v1735, 0
        %v1848 = vsel %vm544, %v1736, 0
        %v1851 = vsel %vm544, %v1737, 0
        %v1854 = vsel %vm544, %v1738, 0
        %v1857 = vsel %vm544, %v1739, 0
        %v1860 = vsel %vm544, %v1740, 0
        %v1863 = vsel %vm544, %v1741, 0
        %v1866 = vsel %vm544, %v1742, 0
        %v1869 = vsel %vm544, %v1743, 0
        %v1872 = vsel %vm544, %v1744, 0
        %v1875 = vsel %vm544, %v1745, 0
        %v1878 = vsel %vm544, %v1746, 0
        %v1881 = vsel %vm544, %v1747, 0
        %v1884 = vsel %vm544, %v1748, 0
        %v1887 = vsel %vm544, %v1749, 0
        %v1890 = vsel %vm544, %v1750, 0
        %v1893 = vsel %vm544, %v1751, 0
        %v1896 = vsel %vm544, %v1752, 0
        %v1899 = vsel %vm544, %v1753, 0
        %v1902 = vsel %vm544, %v1754, 0
        %v1905 = vsel %vm544, %v1755, 0
        %v1908 = vsel %vm544, %v1756, 0
        %v1911 = vsel %vm544, %v1757, 0
        %v1914 = vsel %vm544, %v1758, 0
        %v1917 = vsel %vm544, %v1759, 0
        %v1920 = vsel %vm544, %v1760, 0
        %v1923 = vsel %vm544, %v1761, 0
        %v1926 = vsel %vm544, %v1762, 0
        %v1929 = vsel %vm544, %v1763, 0
        %v1932 = vsel %vm544, %v1764, 0
        %v1935 = vsel %vm544, %v1765, 0
        %v1938 = vsel %vm544, %v1766, 0
        %v1941 = vsel %vm544, %v1767, 0
        %v1944 = vsel %vm544, %v1768, 0
        %v1947 = vsel %vm544, %v1769, 0
        %v1950 = vsel %vm544, %v1770, 0
        %v1953 = vsel %vm544, %v1771, 0
        %v1956 = vsel %vm544, %v1772, 0
        %v1959 = vsel %vm544, %v1773, 0
        %v1962 = vsel %vm544, %v1774, 0
        %v1965 = vsel %vm544, %v1775, 0
        %v1968 = vsel %vm544, %v1776, 0
        %v1971 = vsel %vm544, %v1777, 0
        %v1974 = vsel %vm544, %v1778, 0
        %1976 = vmatpush.msra.mxu0 0.0
        %1977 = vmatpush.msra.mxu0 0.0
        %1978 = vmatpush.msra.mxu0 0.0
        %1979 = vmatpush.msra.mxu0 0.0
        %1980 = vmatpush.msra.mxu0 0.0
        %1981 = vmatpush.msra.mxu0 0.0
        %1982 = vmatpush.msra.mxu0 0.0
        %1983 = vmatpush.msra.mxu0 0.0
        %1984 = vmatpush.msra.mxu0 0.0
        %1985 = vmatpush.msra.mxu0 0.0
        %1986 = vmatpush.msra.mxu0 0.0
        %1987 = vmatpush.msra.mxu0 0.0
        %1988 = vmatpush.msra.mxu0 %v1783
        %1989 = vmatpush.msra.mxu0 %v1782
        %1990 = vmatpush.msra.mxu0 %v1781
        %1991 = vmatpush.msra.mxu0 %v1780
        %1992 = vmatmul.f32.gmra.mxu0 %v1785
        %v1993 = vpop.f32.mrf.mxu0
        %v1994 = vadd.f32 0.0, %v1993
        %1995 = vmatmul.f32.gmra.mxu0 %v1788
        %v1996 = vpop.f32.mrf.mxu0
        %v1997 = vadd.f32 0.0, %v1996
        %1998 = vmatmul.f32.gmra.mxu0 %v1791
        %v1999 = vpop.f32.mrf.mxu0
        %v2000 = vadd.f32 0.0, %v1999
        %2001 = vmatmul.f32.gmra.mxu0 %v1794
        %v2002 = vpop.f32.mrf.mxu0
        %v2003 = vadd.f32 0.0, %v2002
        %2004 = vmatmul.f32.gmra.mxu0 %v1797
        %v2005 = vpop.f32.mrf.mxu0
        %v2006 = vadd.f32 0.0, %v2005
        %2007 = vmatmul.f32.gmra.mxu0 %v1800
        %v2008 = vpop.f32.mrf.mxu0
        %v2009 = vadd.f32 0.0, %v2008
        %2010 = vmatmul.f32.gmra.mxu0 %v1803
        %v2011 = vpop.f32.mrf.mxu0
        %v2012 = vadd.f32 0.0, %v2011
        %2013 = vmatmul.f32.gmra.mxu0 %v1806
        %v2014 = vpop.f32.mrf.mxu0
        %v2015 = vadd.f32 0.0, %v2014
        %2016 = vmatmul.f32.gmra.mxu0 %v1809
        %v2017 = vpop.f32.mrf.mxu0
        %v2018 = vadd.f32 0.0, %v2017
        %2019 = vmatmul.f32.gmra.mxu0 %v1812
        %v2020 = vpop.f32.mrf.mxu0
        %v2021 = vadd.f32 0.0, %v2020
        %2022 = vmatmul.f32.gmra.mxu0 %v1815
        %v2023 = vpop.f32.mrf.mxu0
        %v2024 = vadd.f32 0.0, %v2023
        %2025 = vmatmul.f32.gmra.mxu0 %v1818
        %v2026 = vpop.f32.mrf.mxu0
        %v2027 = vadd.f32 0.0, %v2026
        %2028 = vmatmul.f32.gmra.mxu0 %v1821
        %v2029 = vpop.f32.mrf.mxu0
        %v2030 = vadd.f32 0.0, %v2029
        %2031 = vmatmul.f32.gmra.mxu0 %v1824
        %v2032 = vpop.f32.mrf.mxu0
        %v2033 = vadd.f32 0.0, %v2032
        %2034 = vmatmul.f32.gmra.mxu0 %v1827
        %v2035 = vpop.f32.mrf.mxu0
        %v2036 = vadd.f32 0.0, %v2035
        %2037 = vmatmul.f32.gmra.mxu0 %v1830
        %v2038 = vpop.f32.mrf.mxu0
        %v2039 = vadd.f32 0.0, %v2038
        %2040 = vmatmul.f32.gmra.mxu0 %v1833
        %v2041 = vpop.f32.mrf.mxu0
        %v2042 = vadd.f32 0.0, %v2041
        %2043 = vmatmul.f32.gmra.mxu0 %v1836
        %v2044 = vpop.f32.mrf.mxu0
        %v2045 = vadd.f32 0.0, %v2044
        %2046 = vmatmul.f32.gmra.mxu0 %v1839
        %v2047 = vpop.f32.mrf.mxu0
        %v2048 = vadd.f32 0.0, %v2047
        %2049 = vmatmul.f32.gmra.mxu0 %v1842
        %v2050 = vpop.f32.mrf.mxu0
        %v2051 = vadd.f32 0.0, %v2050
        %2052 = vmatmul.f32.gmra.mxu0 %v1845
        %v2053 = vpop.f32.mrf.mxu0
        %v2054 = vadd.f32 0.0, %v2053
        %2055 = vmatmul.f32.gmra.mxu0 %v1848
        %v2056 = vpop.f32.mrf.mxu0
        %v2057 = vadd.f32 0.0, %v2056
        %2058 = vmatmul.f32.gmra.mxu0 %v1851
        %v2059 = vpop.f32.mrf.mxu0
        %v2060 = vadd.f32 0.0, %v2059
        %2061 = vmatmul.f32.gmra.mxu0 %v1854
        %v2062 = vpop.f32.mrf.mxu0
        %v2063 = vadd.f32 0.0, %v2062
        %2064 = vmatmul.f32.gmra.mxu0 %v1857
        %v2065 = vpop.f32.mrf.mxu0
        %v2066 = vadd.f32 0.0, %v2065
        %2067 = vmatmul.f32.gmra.mxu0 %v1860
        %v2068 = vpop.f32.mrf.mxu0
        %v2069 = vadd.f32 0.0, %v2068
        %2070 = vmatmul.f32.gmra.mxu0 %v1863
        %v2071 = vpop.f32.mrf.mxu0
        %v2072 = vadd.f32 0.0, %v2071
        %2073 = vmatmul.f32.gmra.mxu0 %v1866
        %v2074 = vpop.f32.mrf.mxu0
        %v2075 = vadd.f32 0.0, %v2074
        %2076 = vmatmul.f32.gmra.mxu0 %v1869
        %v2077 = vpop.f32.mrf.mxu0
        %v2078 = vadd.f32 0.0, %v2077
        %2079 = vmatmul.f32.gmra.mxu0 %v1872
        %v2080 = vpop.f32.mrf.mxu0
        %v2081 = vadd.f32 0.0, %v2080
        %2082 = vmatmul.f32.gmra.mxu0 %v1875
        %v2083 = vpop.f32.mrf.mxu0
        %v2084 = vadd.f32 0.0, %v2083
        %2085 = vmatmul.f32.gmra.mxu0 %v1878
        %v2086 = vpop.f32.mrf.mxu0
        %v2087 = vadd.f32 0.0, %v2086
        %2088 = vmatmul.f32.gmra.mxu0 %v1881
        %v2089 = vpop.f32.mrf.mxu0
        %v2090 = vadd.f32 0.0, %v2089
        %2091 = vmatmul.f32.gmra.mxu0 %v1884
        %v2092 = vpop.f32.mrf.mxu0
        %v2093 = vadd.f32 0.0, %v2092
        %2094 = vmatmul.f32.gmra.mxu0 %v1887
        %v2095 = vpop.f32.mrf.mxu0
        %v2096 = vadd.f32 0.0, %v2095
        %2097 = vmatmul.f32.gmra.mxu0 %v1890
        %v2098 = vpop.f32.mrf.mxu0
        %v2099 = vadd.f32 0.0, %v2098
        %2100 = vmatmul.f32.gmra.mxu0 %v1893
        %v2101 = vpop.f32.mrf.mxu0
        %v2102 = vadd.f32 0.0, %v2101
        %2103 = vmatmul.f32.gmra.mxu0 %v1896
        %v2104 = vpop.f32.mrf.mxu0
        %v2105 = vadd.f32 0.0, %v2104
        %2106 = vmatmul.f32.gmra.mxu0 %v1899
        %v2107 = vpop.f32.mrf.mxu0
        %v2108 = vadd.f32 0.0, %v2107
        %2109 = vmatmul.f32.gmra.mxu0 %v1902
        %v2110 = vpop.f32.mrf.mxu0
        %v2111 = vadd.f32 0.0, %v2110
        %2112 = vmatmul.f32.gmra.mxu0 %v1905
        %v2113 = vpop.f32.mrf.mxu0
        %v2114 = vadd.f32 0.0, %v2113
        %2115 = vmatmul.f32.gmra.mxu0 %v1908
        %v2116 = vpop.f32.mrf.mxu0
        %v2117 = vadd.f32 0.0, %v2116
        %2118 = vmatmul.f32.gmra.mxu0 %v1911
        %v2119 = vpop.f32.mrf.mxu0
        %v2120 = vadd.f32 0.0, %v2119
        %2121 = vmatmul.f32.gmra.mxu0 %v1914
        %v2122 = vpop.f32.mrf.mxu0
        %v2123 = vadd.f32 0.0, %v2122
        %2124 = vmatmul.f32.gmra.mxu0 %v1917
        %v2125 = vpop.f32.mrf.mxu0
        %v2126 = vadd.f32 0.0, %v2125
        %2127 = vmatmul.f32.gmra.mxu0 %v1920
        %v2128 = vpop.f32.mrf.mxu0
        %v2129 = vadd.f32 0.0, %v2128
        %2130 = vmatmul.f32.gmra.mxu0 %v1923
        %v2131 = vpop.f32.mrf.mxu0
        %v2132 = vadd.f32 0.0, %v2131
        %2133 = vmatmul.f32.gmra.mxu0 %v1926
        %v2134 = vpop.f32.mrf.mxu0
        %v2135 = vadd.f32 0.0, %v2134
        %2136 = vmatmul.f32.gmra.mxu0 %v1929
        %v2137 = vpop.f32.mrf.mxu0
        %v2138 = vadd.f32 0.0, %v2137
        %2139 = vmatmul.f32.gmra.mxu0 %v1932
        %v2140 = vpop.f32.mrf.mxu0
        %v2141 = vadd.f32 0.0, %v2140
        %2142 = vmatmul.f32.gmra.mxu0 %v1935
        %v2143 = vpop.f32.mrf.mxu0
        %v2144 = vadd.f32 0.0, %v2143
        %2145 = vmatmul.f32.gmra.mxu0 %v1938
        %v2146 = vpop.f32.mrf.mxu0
        %v2147 = vadd.f32 0.0, %v2146
        %2148 = vmatmul.f32.gmra.mxu0 %v1941
        %v2149 = vpop.f32.mrf.mxu0
        %v2150 = vadd.f32 0.0, %v2149
        %2151 = vmatmul.f32.gmra.mxu0 %v1944
        %v2152 = vpop.f32.mrf.mxu0
        %v2153 = vadd.f32 0.0, %v2152
        %2154 = vmatmul.f32.gmra.mxu0 %v1947
        %v2155 = vpop.f32.mrf.mxu0
        %v2156 = vadd.f32 0.0, %v2155
        %2157 = vmatmul.f32.gmra.mxu0 %v1950
        %v2158 = vpop.f32.mrf.mxu0
        %v2159 = vadd.f32 0.0, %v2158
        %2160 = vmatmul.f32.gmra.mxu0 %v1953
        %v2161 = vpop.f32.mrf.mxu0
        %v2162 = vadd.f32 0.0, %v2161
        %2163 = vmatmul.f32.gmra.mxu0 %v1956
        %v2164 = vpop.f32.mrf.mxu0
        %v2165 = vadd.f32 0.0, %v2164
        %2166 = vmatmul.f32.gmra.mxu0 %v1959
        %v2167 = vpop.f32.mrf.mxu0
        %v2168 = vadd.f32 0.0, %v2167
        %2169 = vmatmul.f32.gmra.mxu0 %v1962
        %v2170 = vpop.f32.mrf.mxu0
        %v2171 = vadd.f32 0.0, %v2170
        %2172 = vmatmul.f32.gmra.mxu0 %v1965
        %v2173 = vpop.f32.mrf.mxu0
        %v2174 = vadd.f32 0.0, %v2173
        %2175 = vmatmul.f32.gmra.mxu0 %v1968
        %v2176 = vpop.f32.mrf.mxu0
        %v2177 = vadd.f32 0.0, %v2176
        %2178 = vmatmul.f32.gmra.mxu0 %v1971
        %v2179 = vpop.f32.mrf.mxu0
        %v2180 = vadd.f32 0.0, %v2179
        %2181 = vmatmul.f32.gmra.mxu0 %v1974
        %v2182 = vpop.f32.mrf.mxu0
        %v2183 = vadd.f32 0.0, %v2182
        %2184 = vdwg.mxu0
        %v2185 = vadd.f32 %v1524, %v1994
        %v2186 = vadd.f32 %v1527, %v1997
        %v2187 = vadd.f32 %v1530, %v2000
        %v2188 = vadd.f32 %v1533, %v2003
        %v2189 = vadd.f32 %v1536, %v2006
        %v2190 = vadd.f32 %v1539, %v2009
        %v2191 = vadd.f32 %v1542, %v2012
        %v2192 = vadd.f32 %v1545, %v2015
        %v2193 = vadd.f32 %v1548, %v2018
        %v2194 = vadd.f32 %v1551, %v2021
        %v2195 = vadd.f32 %v1554, %v2024
        %v2196 = vadd.f32 %v1557, %v2027
        %v2197 = vadd.f32 %v1560, %v2030
        %v2198 = vadd.f32 %v1563, %v2033
        %v2199 = vadd.f32 %v1566, %v2036
        %v2200 = vadd.f32 %v1569, %v2039
        %v2201 = vadd.f32 %v1572, %v2042
        %v2202 = vadd.f32 %v1575, %v2045
        %v2203 = vadd.f32 %v1578, %v2048
        %v2204 = vadd.f32 %v1581, %v2051
        %v2205 = vadd.f32 %v1584, %v2054
        %v2206 = vadd.f32 %v1587, %v2057
        %v2207 = vadd.f32 %v1590, %v2060
        %v2208 = vadd.f32 %v1593, %v2063
        %v2209 = vadd.f32 %v1596, %v2066
        %v2210 = vadd.f32 %v1599, %v2069
        %v2211 = vadd.f32 %v1602, %v2072
        %v2212 = vadd.f32 %v1605, %v2075
        %v2213 = vadd.f32 %v1608, %v2078
        %v2214 = vadd.f32 %v1611, %v2081
        %v2215 = vadd.f32 %v1614, %v2084
        %v2216 = vadd.f32 %v1617, %v2087
        %v2217 = vadd.f32 %v1620, %v2090
        %v2218 = vadd.f32 %v1623, %v2093
        %v2219 = vadd.f32 %v1626, %v2096
        %v2220 = vadd.f32 %v1629, %v2099
        %v2221 = vadd.f32 %v1632, %v2102
        %v2222 = vadd.f32 %v1635, %v2105
        %v2223 = vadd.f32 %v1638, %v2108
        %v2224 = vadd.f32 %v1641, %v2111
        %v2225 = vadd.f32 %v1644, %v2114
        %v2226 = vadd.f32 %v1647, %v2117
        %v2227 = vadd.f32 %v1650, %v2120
        %v2228 = vadd.f32 %v1653, %v2123
        %v2229 = vadd.f32 %v1656, %v2126
        %v2230 = vadd.f32 %v1659, %v2129
        %v2231 = vadd.f32 %v1662, %v2132
        %v2232 = vadd.f32 %v1665, %v2135
        %v2233 = vadd.f32 %v1668, %v2138
        %v2234 = vadd.f32 %v1671, %v2141
        %v2235 = vadd.f32 %v1674, %v2144
        %v2236 = vadd.f32 %v1677, %v2147
        %v2237 = vadd.f32 %v1680, %v2150
        %v2238 = vadd.f32 %v1683, %v2153
        %v2239 = vadd.f32 %v1686, %v2156
        %v2240 = vadd.f32 %v1689, %v2159
        %v2241 = vadd.f32 %v1692, %v2162
        %v2242 = vadd.f32 %v1695, %v2165
        %v2243 = vadd.f32 %v1698, %v2168
        %v2244 = vadd.f32 %v1701, %v2171
        %v2245 = vadd.f32 %v1704, %v2174
        %v2246 = vadd.f32 %v1707, %v2177
        %v2247 = vadd.f32 %v1710, %v2180
        %v2248 = vadd.f32 %v1713, %v2183
        %v2249 = vld [vmem:[#allocation2 + $0x27] sm:$0xff]
        %v2250 = vld [vmem:[#allocation2 + $0x2f] sm:$0xff]
        %v2251 = vld [vmem:[#allocation2 + $0x37] sm:$0xff]
        %v2252 = vld [vmem:[#allocation2 + $0x3f] sm:$0xff]
        %v2253 = vld [vmem:[#allocation2 + $0x47] sm:$0xff]
        %v2254 = vld [vmem:[#allocation2 + $0x4f] sm:$0xff]
        %v2255 = vld [vmem:[#allocation2 + $0x57] sm:$0xff]
        %v2256 = vld [vmem:[#allocation2 + $0x5f] sm:$0xff]
        %v2257 = vld [vmem:[#allocation2 + $0x67] sm:$0xff]
        %v2258 = vld [vmem:[#allocation2 + $0x6f] sm:$0xff]
        %v2259 = vld [vmem:[#allocation2 + $0x77] sm:$0xff]
        %v2260 = vld [vmem:[#allocation2 + $0x7f] sm:$0xff]
        %v2261 = vld [vmem:[#allocation2 + $0x87] sm:$0xff]
        %v2262 = vld [vmem:[#allocation2 + $0x8f] sm:$0xff]
        %v2263 = vld [vmem:[#allocation2 + $0x97] sm:$0xff]
        %v2264 = vld [vmem:[#allocation2 + $0x9f] sm:$0xff]
        %v2265 = vld [vmem:[#allocation2 + $0xa7] sm:$0xff]
        %v2266 = vld [vmem:[#allocation2 + $0xaf] sm:$0xff]
        %v2267 = vld [vmem:[#allocation2 + $0xb7] sm:$0xff]
        %v2268 = vld [vmem:[#allocation2 + $0xbf] sm:$0xff]
        %v2269 = vld [vmem:[#allocation2 + $0xc7] sm:$0xff]
        %v2270 = vld [vmem:[#allocation2 + $0xcf] sm:$0xff]
        %v2271 = vld [vmem:[#allocation2 + $0xd7] sm:$0xff]
        %v2272 = vld [vmem:[#allocation2 + $0xdf] sm:$0xff]
        %v2273 = vld [vmem:[#allocation2 + $0xe7] sm:$0xff]
        %v2274 = vld [vmem:[#allocation2 + $0xef] sm:$0xff]
        %v2275 = vld [vmem:[#allocation2 + $0xf7] sm:$0xff]
        %v2276 = vld [vmem:[#allocation2 + $0xff] sm:$0xff]
        %v2277 = vld [vmem:[#allocation2 + $0x107] sm:$0xff]
        %v2278 = vld [vmem:[#allocation2 + $0x10f] sm:$0xff]
        %v2279 = vld [vmem:[#allocation2 + $0x117] sm:$0xff]
        %v2280 = vld [vmem:[#allocation2 + $0x11f] sm:$0xff]
        %v2281 = vld [vmem:[#allocation2 + $0x127] sm:$0xff]
        %v2282 = vld [vmem:[#allocation2 + $0x12f] sm:$0xff]
        %v2283 = vld [vmem:[#allocation2 + $0x137] sm:$0xff]
        %v2284 = vld [vmem:[#allocation2 + $0x13f] sm:$0xff]
        %v2285 = vld [vmem:[#allocation2 + $0x147] sm:$0xff]
        %v2286 = vld [vmem:[#allocation2 + $0x14f] sm:$0xff]
        %v2287 = vld [vmem:[#allocation2 + $0x157] sm:$0xff]
        %v2288 = vld [vmem:[#allocation2 + $0x15f] sm:$0xff]
        %v2289 = vld [vmem:[#allocation2 + $0x167] sm:$0xff]
        %v2290 = vld [vmem:[#allocation2 + $0x16f] sm:$0xff]
        %v2291 = vld [vmem:[#allocation2 + $0x177] sm:$0xff]
        %v2292 = vld [vmem:[#allocation2 + $0x17f] sm:$0xff]
        %v2293 = vld [vmem:[#allocation2 + $0x187] sm:$0xff]
        %v2294 = vld [vmem:[#allocation2 + $0x18f] sm:$0xff]
        %v2295 = vld [vmem:[#allocation2 + $0x197] sm:$0xff]
        %v2296 = vld [vmem:[#allocation2 + $0x19f] sm:$0xff]
        %v2297 = vld [vmem:[#allocation2 + $0x1a7] sm:$0xff]
        %v2298 = vld [vmem:[#allocation2 + $0x1af] sm:$0xff]
        %v2299 = vld [vmem:[#allocation2 + $0x1b7] sm:$0xff]
        %v2300 = vld [vmem:[#allocation2 + $0x1bf] sm:$0xff]
        %v2301 = vld [vmem:[#allocation2 + $0x1c7] sm:$0xff]
        %v2302 = vld [vmem:[#allocation2 + $0x1cf] sm:$0xff]
        %v2303 = vld [vmem:[#allocation2 + $0x1d7] sm:$0xff]
        %v2304 = vld [vmem:[#allocation2 + $0x1df] sm:$0xff]
        %v2305 = vld [vmem:[#allocation2 + $0x1e7] sm:$0xff]
        %v2306 = vld [vmem:[#allocation2 + $0x1ef] sm:$0xff]
        %v2307 = vld [vmem:[#allocation2 + $0x1f7] sm:$0xff]
        %v2308 = vld [vmem:[#allocation2 + $0x1ff] sm:$0xff]
        %v2309 = vld [vmem:[#allocation2 + $0x207] sm:$0xff]
        %v2310 = vld [vmem:[#allocation2 + $0x20f] sm:$0xff]
        %v2311 = vld [vmem:[#allocation2 + $0x217] sm:$0xff]
        %v2312 = vld [vmem:[#allocation2 + $0x21f] sm:$0xff]
        %s2313 = scalar_lea.vmem [#allocation9], 96
        %v2314 = vld [vmem:[%s2313] sm:$0xff]
        %v2315 = vld [vmem:[%s2313 + $0x8] sm:$0xff]
        %v2316 = vld [vmem:[%s2313 + $0x10] sm:$0xff]
        %v2317 = vld [vmem:[%s2313 + $0x18] sm:$0xff]
        %v2319 = vsel %vm544, %v2249, 0
        %v2322 = vsel %vm544, %v2250, 0
        %v2325 = vsel %vm544, %v2251, 0
        %v2328 = vsel %vm544, %v2252, 0
        %v2331 = vsel %vm544, %v2253, 0
        %v2334 = vsel %vm544, %v2254, 0
        %v2337 = vsel %vm544, %v2255, 0
        %v2340 = vsel %vm544, %v2256, 0
        %v2343 = vsel %vm544, %v2257, 0
        %v2346 = vsel %vm544, %v2258, 0
        %v2349 = vsel %vm544, %v2259, 0
        %v2352 = vsel %vm544, %v2260, 0
        %v2355 = vsel %vm544, %v2261, 0
        %v2358 = vsel %vm544, %v2262, 0
        %v2361 = vsel %vm544, %v2263, 0
        %v2364 = vsel %vm544, %v2264, 0
        %v2367 = vsel %vm544, %v2265, 0
        %v2370 = vsel %vm544, %v2266, 0
        %v2373 = vsel %vm544, %v2267, 0
        %v2376 = vsel %vm544, %v2268, 0
        %v2379 = vsel %vm544, %v2269, 0
        %v2382 = vsel %vm544, %v2270, 0
        %v2385 = vsel %vm544, %v2271, 0
        %v2388 = vsel %vm544, %v2272, 0
        %v2391 = vsel %vm544, %v2273, 0
        %v2394 = vsel %vm544, %v2274, 0
        %v2397 = vsel %vm544, %v2275, 0
        %v2400 = vsel %vm544, %v2276, 0
        %v2403 = vsel %vm544, %v2277, 0
        %v2406 = vsel %vm544, %v2278, 0
        %v2409 = vsel %vm544, %v2279, 0
        %v2412 = vsel %vm544, %v2280, 0
        %v2415 = vsel %vm544, %v2281, 0
        %v2418 = vsel %vm544, %v2282, 0
        %v2421 = vsel %vm544, %v2283, 0
        %v2424 = vsel %vm544, %v2284, 0
        %v2427 = vsel %vm544, %v2285, 0
        %v2430 = vsel %vm544, %v2286, 0
        %v2433 = vsel %vm544, %v2287, 0
        %v2436 = vsel %vm544, %v2288, 0
        %v2439 = vsel %vm544, %v2289, 0
        %v2442 = vsel %vm544, %v2290, 0
        %v2445 = vsel %vm544, %v2291, 0
        %v2448 = vsel %vm544, %v2292, 0
        %v2451 = vsel %vm544, %v2293, 0
        %v2454 = vsel %vm544, %v2294, 0
        %v2457 = vsel %vm544, %v2295, 0
        %v2460 = vsel %vm544, %v2296, 0
        %v2463 = vsel %vm544, %v2297, 0
        %v2466 = vsel %vm544, %v2298, 0
        %v2469 = vsel %vm544, %v2299, 0
        %v2472 = vsel %vm544, %v2300, 0
        %v2475 = vsel %vm544, %v2301, 0
        %v2478 = vsel %vm544, %v2302, 0
        %v2481 = vsel %vm544, %v2303, 0
        %v2484 = vsel %vm544, %v2304, 0
        %v2487 = vsel %vm544, %v2305, 0
        %v2490 = vsel %vm544, %v2306, 0
        %v2493 = vsel %vm544, %v2307, 0
        %v2496 = vsel %vm544, %v2308, 0
        %v2499 = vsel %vm544, %v2309, 0
        %v2502 = vsel %vm544, %v2310, 0
        %v2505 = vsel %vm544, %v2311, 0
        %v2508 = vsel %vm544, %v2312, 0
        %2510 = vmatpush.msra.mxu0 0.0
        %2511 = vmatpush.msra.mxu0 0.0
        %2512 = vmatpush.msra.mxu0 0.0
        %2513 = vmatpush.msra.mxu0 0.0
        %2514 = vmatpush.msra.mxu0 0.0
        %2515 = vmatpush.msra.mxu0 0.0
        %2516 = vmatpush.msra.mxu0 0.0
        %2517 = vmatpush.msra.mxu0 0.0
        %2518 = vmatpush.msra.mxu0 0.0
        %2519 = vmatpush.msra.mxu0 0.0
        %2520 = vmatpush.msra.mxu0 0.0
        %2521 = vmatpush.msra.mxu0 0.0
        %2522 = vmatpush.msra.mxu0 %v2317
        %2523 = vmatpush.msra.mxu0 %v2316
        %2524 = vmatpush.msra.mxu0 %v2315
        %2525 = vmatpush.msra.mxu0 %v2314
        %2526 = vmatmul.f32.gmra.mxu0 %v2319
        %v2527 = vpop.f32.mrf.mxu0
        %v2528 = vadd.f32 0.0, %v2527
        %2529 = vmatmul.f32.gmra.mxu0 %v2322
        %v2530 = vpop.f32.mrf.mxu0
        %v2531 = vadd.f32 0.0, %v2530
        %2532 = vmatmul.f32.gmra.mxu0 %v2325
        %v2533 = vpop.f32.mrf.mxu0
        %v2534 = vadd.f32 0.0, %v2533
        %2535 = vmatmul.f32.gmra.mxu0 %v2328
        %v2536 = vpop.f32.mrf.mxu0
        %v2537 = vadd.f32 0.0, %v2536
        %2538 = vmatmul.f32.gmra.mxu0 %v2331
        %v2539 = vpop.f32.mrf.mxu0
        %v2540 = vadd.f32 0.0, %v2539
        %2541 = vmatmul.f32.gmra.mxu0 %v2334
        %v2542 = vpop.f32.mrf.mxu0
        %v2543 = vadd.f32 0.0, %v2542
        %2544 = vmatmul.f32.gmra.mxu0 %v2337
        %v2545 = vpop.f32.mrf.mxu0
        %v2546 = vadd.f32 0.0, %v2545
        %2547 = vmatmul.f32.gmra.mxu0 %v2340
        %v2548 = vpop.f32.mrf.mxu0
        %v2549 = vadd.f32 0.0, %v2548
        %2550 = vmatmul.f32.gmra.mxu0 %v2343
        %v2551 = vpop.f32.mrf.mxu0
        %v2552 = vadd.f32 0.0, %v2551
        %2553 = vmatmul.f32.gmra.mxu0 %v2346
        %v2554 = vpop.f32.mrf.mxu0
        %v2555 = vadd.f32 0.0, %v2554
        %2556 = vmatmul.f32.gmra.mxu0 %v2349
        %v2557 = vpop.f32.mrf.mxu0
        %v2558 = vadd.f32 0.0, %v2557
        %2559 = vmatmul.f32.gmra.mxu0 %v2352
        %v2560 = vpop.f32.mrf.mxu0
        %v2561 = vadd.f32 0.0, %v2560
        %2562 = vmatmul.f32.gmra.mxu0 %v2355
        %v2563 = vpop.f32.mrf.mxu0
        %v2564 = vadd.f32 0.0, %v2563
        %2565 = vmatmul.f32.gmra.mxu0 %v2358
        %v2566 = vpop.f32.mrf.mxu0
        %v2567 = vadd.f32 0.0, %v2566
        %2568 = vmatmul.f32.gmra.mxu0 %v2361
        %v2569 = vpop.f32.mrf.mxu0
        %v2570 = vadd.f32 0.0, %v2569
        %2571 = vmatmul.f32.gmra.mxu0 %v2364
        %v2572 = vpop.f32.mrf.mxu0
        %v2573 = vadd.f32 0.0, %v2572
        %2574 = vmatmul.f32.gmra.mxu0 %v2367
        %v2575 = vpop.f32.mrf.mxu0
        %v2576 = vadd.f32 0.0, %v2575
        %2577 = vmatmul.f32.gmra.mxu0 %v2370
        %v2578 = vpop.f32.mrf.mxu0
        %v2579 = vadd.f32 0.0, %v2578
        %2580 = vmatmul.f32.gmra.mxu0 %v2373
        %v2581 = vpop.f32.mrf.mxu0
        %v2582 = vadd.f32 0.0, %v2581
        %2583 = vmatmul.f32.gmra.mxu0 %v2376
        %v2584 = vpop.f32.mrf.mxu0
        %v2585 = vadd.f32 0.0, %v2584
        %2586 = vmatmul.f32.gmra.mxu0 %v2379
        %v2587 = vpop.f32.mrf.mxu0
        %v2588 = vadd.f32 0.0, %v2587
        %2589 = vmatmul.f32.gmra.mxu0 %v2382
        %v2590 = vpop.f32.mrf.mxu0
        %v2591 = vadd.f32 0.0, %v2590
        %2592 = vmatmul.f32.gmra.mxu0 %v2385
        %v2593 = vpop.f32.mrf.mxu0
        %v2594 = vadd.f32 0.0, %v2593
        %2595 = vmatmul.f32.gmra.mxu0 %v2388
        %v2596 = vpop.f32.mrf.mxu0
        %v2597 = vadd.f32 0.0, %v2596
        %2598 = vmatmul.f32.gmra.mxu0 %v2391
        %v2599 = vpop.f32.mrf.mxu0
        %v2600 = vadd.f32 0.0, %v2599
        %2601 = vmatmul.f32.gmra.mxu0 %v2394
        %v2602 = vpop.f32.mrf.mxu0
        %v2603 = vadd.f32 0.0, %v2602
        %2604 = vmatmul.f32.gmra.mxu0 %v2397
        %v2605 = vpop.f32.mrf.mxu0
        %v2606 = vadd.f32 0.0, %v2605
        %2607 = vmatmul.f32.gmra.mxu0 %v2400
        %v2608 = vpop.f32.mrf.mxu0
        %v2609 = vadd.f32 0.0, %v2608
        %2610 = vmatmul.f32.gmra.mxu0 %v2403
        %v2611 = vpop.f32.mrf.mxu0
        %v2612 = vadd.f32 0.0, %v2611
        %2613 = vmatmul.f32.gmra.mxu0 %v2406
        %v2614 = vpop.f32.mrf.mxu0
        %v2615 = vadd.f32 0.0, %v2614
        %2616 = vmatmul.f32.gmra.mxu0 %v2409
        %v2617 = vpop.f32.mrf.mxu0
        %v2618 = vadd.f32 0.0, %v2617
        %2619 = vmatmul.f32.gmra.mxu0 %v2412
        %v2620 = vpop.f32.mrf.mxu0
        %v2621 = vadd.f32 0.0, %v2620
        %2622 = vmatmul.f32.gmra.mxu0 %v2415
        %v2623 = vpop.f32.mrf.mxu0
        %v2624 = vadd.f32 0.0, %v2623
        %2625 = vmatmul.f32.gmra.mxu0 %v2418
        %v2626 = vpop.f32.mrf.mxu0
        %v2627 = vadd.f32 0.0, %v2626
        %2628 = vmatmul.f32.gmra.mxu0 %v2421
        %v2629 = vpop.f32.mrf.mxu0
        %v2630 = vadd.f32 0.0, %v2629
        %2631 = vmatmul.f32.gmra.mxu0 %v2424
        %v2632 = vpop.f32.mrf.mxu0
        %v2633 = vadd.f32 0.0, %v2632
        %2634 = vmatmul.f32.gmra.mxu0 %v2427
        %v2635 = vpop.f32.mrf.mxu0
        %v2636 = vadd.f32 0.0, %v2635
        %2637 = vmatmul.f32.gmra.mxu0 %v2430
        %v2638 = vpop.f32.mrf.mxu0
        %v2639 = vadd.f32 0.0, %v2638
        %2640 = vmatmul.f32.gmra.mxu0 %v2433
        %v2641 = vpop.f32.mrf.mxu0
        %v2642 = vadd.f32 0.0, %v2641
        %2643 = vmatmul.f32.gmra.mxu0 %v2436
        %v2644 = vpop.f32.mrf.mxu0
        %v2645 = vadd.f32 0.0, %v2644
        %2646 = vmatmul.f32.gmra.mxu0 %v2439
        %v2647 = vpop.f32.mrf.mxu0
        %v2648 = vadd.f32 0.0, %v2647
        %2649 = vmatmul.f32.gmra.mxu0 %v2442
        %v2650 = vpop.f32.mrf.mxu0
        %v2651 = vadd.f32 0.0, %v2650
        %2652 = vmatmul.f32.gmra.mxu0 %v2445
        %v2653 = vpop.f32.mrf.mxu0
        %v2654 = vadd.f32 0.0, %v2653
        %2655 = vmatmul.f32.gmra.mxu0 %v2448
        %v2656 = vpop.f32.mrf.mxu0
        %v2657 = vadd.f32 0.0, %v2656
        %2658 = vmatmul.f32.gmra.mxu0 %v2451
        %v2659 = vpop.f32.mrf.mxu0
        %v2660 = vadd.f32 0.0, %v2659
        %2661 = vmatmul.f32.gmra.mxu0 %v2454
        %v2662 = vpop.f32.mrf.mxu0
        %v2663 = vadd.f32 0.0, %v2662
        %2664 = vmatmul.f32.gmra.mxu0 %v2457
        %v2665 = vpop.f32.mrf.mxu0
        %v2666 = vadd.f32 0.0, %v2665
        %2667 = vmatmul.f32.gmra.mxu0 %v2460
        %v2668 = vpop.f32.mrf.mxu0
        %v2669 = vadd.f32 0.0, %v2668
        %2670 = vmatmul.f32.gmra.mxu0 %v2463
        %v2671 = vpop.f32.mrf.mxu0
        %v2672 = vadd.f32 0.0, %v2671
        %2673 = vmatmul.f32.gmra.mxu0 %v2466
        %v2674 = vpop.f32.mrf.mxu0
        %v2675 = vadd.f32 0.0, %v2674
        %2676 = vmatmul.f32.gmra.mxu0 %v2469
        %v2677 = vpop.f32.mrf.mxu0
        %v2678 = vadd.f32 0.0, %v2677
        %2679 = vmatmul.f32.gmra.mxu0 %v2472
        %v2680 = vpop.f32.mrf.mxu0
        %v2681 = vadd.f32 0.0, %v2680
        %2682 = vmatmul.f32.gmra.mxu0 %v2475
        %v2683 = vpop.f32.mrf.mxu0
        %v2684 = vadd.f32 0.0, %v2683
        %2685 = vmatmul.f32.gmra.mxu0 %v2478
        %v2686 = vpop.f32.mrf.mxu0
        %v2687 = vadd.f32 0.0, %v2686
        %2688 = vmatmul.f32.gmra.mxu0 %v2481
        %v2689 = vpop.f32.mrf.mxu0
        %v2690 = vadd.f32 0.0, %v2689
        %2691 = vmatmul.f32.gmra.mxu0 %v2484
        %v2692 = vpop.f32.mrf.mxu0
        %v2693 = vadd.f32 0.0, %v2692
        %2694 = vmatmul.f32.gmra.mxu0 %v2487
        %v2695 = vpop.f32.mrf.mxu0
        %v2696 = vadd.f32 0.0, %v2695
        %2697 = vmatmul.f32.gmra.mxu0 %v2490
        %v2698 = vpop.f32.mrf.mxu0
        %v2699 = vadd.f32 0.0, %v2698
        %2700 = vmatmul.f32.gmra.mxu0 %v2493
        %v2701 = vpop.f32.mrf.mxu0
        %v2702 = vadd.f32 0.0, %v2701
        %2703 = vmatmul.f32.gmra.mxu0 %v2496
        %v2704 = vpop.f32.mrf.mxu0
        %v2705 = vadd.f32 0.0, %v2704
        %2706 = vmatmul.f32.gmra.mxu0 %v2499
        %v2707 = vpop.f32.mrf.mxu0
        %v2708 = vadd.f32 0.0, %v2707
        %2709 = vmatmul.f32.gmra.mxu0 %v2502
        %v2710 = vpop.f32.mrf.mxu0
        %v2711 = vadd.f32 0.0, %v2710
        %2712 = vmatmul.f32.gmra.mxu0 %v2505
        %v2713 = vpop.f32.mrf.mxu0
        %v2714 = vadd.f32 0.0, %v2713
        %2715 = vmatmul.f32.gmra.mxu0 %v2508
        %v2716 = vpop.f32.mrf.mxu0
        %v2717 = vadd.f32 0.0, %v2716
        %2718 = vdwg.mxu0
        %v2719 = vadd.f32 %v2185, %v2528
        %v2720 = vadd.f32 %v2186, %v2531
        %v2721 = vadd.f32 %v2187, %v2534
        %v2722 = vadd.f32 %v2188, %v2537
        %v2723 = vadd.f32 %v2189, %v2540
        %v2724 = vadd.f32 %v2190, %v2543
        %v2725 = vadd.f32 %v2191, %v2546
        %v2726 = vadd.f32 %v2192, %v2549
        %v2727 = vadd.f32 %v2193, %v2552
        %v2728 = vadd.f32 %v2194, %v2555
        %v2729 = vadd.f32 %v2195, %v2558
        %v2730 = vadd.f32 %v2196, %v2561
        %v2731 = vadd.f32 %v2197, %v2564
        %v2732 = vadd.f32 %v2198, %v2567
        %v2733 = vadd.f32 %v2199, %v2570
        %v2734 = vadd.f32 %v2200, %v2573
        %v2735 = vadd.f32 %v2201, %v2576
        %v2736 = vadd.f32 %v2202, %v2579
        %v2737 = vadd.f32 %v2203, %v2582
        %v2738 = vadd.f32 %v2204, %v2585
        %v2739 = vadd.f32 %v2205, %v2588
        %v2740 = vadd.f32 %v2206, %v2591
        %v2741 = vadd.f32 %v2207, %v2594
        %v2742 = vadd.f32 %v2208, %v2597
        %v2743 = vadd.f32 %v2209, %v2600
        %v2744 = vadd.f32 %v2210, %v2603
        %v2745 = vadd.f32 %v2211, %v2606
        %v2746 = vadd.f32 %v2212, %v2609
        %v2747 = vadd.f32 %v2213, %v2612
        %v2748 = vadd.f32 %v2214, %v2615
        %v2749 = vadd.f32 %v2215, %v2618
        %v2750 = vadd.f32 %v2216, %v2621
        %v2751 = vadd.f32 %v2217, %v2624
        %v2752 = vadd.f32 %v2218, %v2627
        %v2753 = vadd.f32 %v2219, %v2630
        %v2754 = vadd.f32 %v2220, %v2633
        %v2755 = vadd.f32 %v2221, %v2636
        %v2756 = vadd.f32 %v2222, %v2639
        %v2757 = vadd.f32 %v2223, %v2642
        %v2758 = vadd.f32 %v2224, %v2645
        %v2759 = vadd.f32 %v2225, %v2648
        %v2760 = vadd.f32 %v2226, %v2651
        %v2761 = vadd.f32 %v2227, %v2654
        %v2762 = vadd.f32 %v2228, %v2657
        %v2763 = vadd.f32 %v2229, %v2660
        %v2764 = vadd.f32 %v2230, %v2663
        %v2765 = vadd.f32 %v2231, %v2666
        %v2766 = vadd.f32 %v2232, %v2669
        %v2767 = vadd.f32 %v2233, %v2672
        %v2768 = vadd.f32 %v2234, %v2675
        %v2769 = vadd.f32 %v2235, %v2678
        %v2770 = vadd.f32 %v2236, %v2681
        %v2771 = vadd.f32 %v2237, %v2684
        %v2772 = vadd.f32 %v2238, %v2687
        %v2773 = vadd.f32 %v2239, %v2690
        %v2774 = vadd.f32 %v2240, %v2693
        %v2775 = vadd.f32 %v2241, %v2696
        %v2776 = vadd.f32 %v2242, %v2699
        %v2777 = vadd.f32 %v2243, %v2702
        %v2778 = vadd.f32 %v2244, %v2705
        %v2779 = vadd.f32 %v2245, %v2708
        %v2780 = vadd.f32 %v2246, %v2711
        %v2781 = vadd.f32 %v2247, %v2714
        %v2782 = vadd.f32 %v2248, %v2717
        %v2783 = vld [vmem:[#allocation2 + $0x28] sm:$0xff]
        %v2784 = vld [vmem:[#allocation2 + $0x30] sm:$0xff]
        %v2785 = vld [vmem:[#allocation2 + $0x38] sm:$0xff]
        %v2786 = vld [vmem:[#allocation2 + $0x40] sm:$0xff]
        %v2787 = vld [vmem:[#allocation2 + $0x48] sm:$0xff]
        %v2788 = vld [vmem:[#allocation2 + $0x50] sm:$0xff]
        %v2789 = vld [vmem:[#allocation2 + $0x58] sm:$0xff]
        %v2790 = vld [vmem:[#allocation2 + $0x60] sm:$0xff]
        %v2791 = vld [vmem:[#allocation2 + $0x68] sm:$0xff]
        %v2792 = vld [vmem:[#allocation2 + $0x70] sm:$0xff]
        %v2793 = vld [vmem:[#allocation2 + $0x78] sm:$0xff]
        %v2794 = vld [vmem:[#allocation2 + $0x80] sm:$0xff]
        %v2795 = vld [vmem:[#allocation2 + $0x88] sm:$0xff]
        %v2796 = vld [vmem:[#allocation2 + $0x90] sm:$0xff]
        %v2797 = vld [vmem:[#allocation2 + $0x98] sm:$0xff]
        %v2798 = vld [vmem:[#allocation2 + $0xa0] sm:$0xff]
        %v2799 = vld [vmem:[#allocation2 + $0xa8] sm:$0xff]
        %v2800 = vld [vmem:[#allocation2 + $0xb0] sm:$0xff]
        %v2801 = vld [vmem:[#allocation2 + $0xb8] sm:$0xff]
        %v2802 = vld [vmem:[#allocation2 + $0xc0] sm:$0xff]
        %v2803 = vld [vmem:[#allocation2 + $0xc8] sm:$0xff]
        %v2804 = vld [vmem:[#allocation2 + $0xd0] sm:$0xff]
        %v2805 = vld [vmem:[#allocation2 + $0xd8] sm:$0xff]
        %v2806 = vld [vmem:[#allocation2 + $0xe0] sm:$0xff]
        %v2807 = vld [vmem:[#allocation2 + $0xe8] sm:$0xff]
        %v2808 = vld [vmem:[#allocation2 + $0xf0] sm:$0xff]
        %v2809 = vld [vmem:[#allocation2 + $0xf8] sm:$0xff]
        %v2810 = vld [vmem:[#allocation2 + $0x100] sm:$0xff]
        %v2811 = vld [vmem:[#allocation2 + $0x108] sm:$0xff]
        %v2812 = vld [vmem:[#allocation2 + $0x110] sm:$0xff]
        %v2813 = vld [vmem:[#allocation2 + $0x118] sm:$0xff]
        %v2814 = vld [vmem:[#allocation2 + $0x120] sm:$0xff]
        %v2815 = vld [vmem:[#allocation2 + $0x128] sm:$0xff]
        %v2816 = vld [vmem:[#allocation2 + $0x130] sm:$0xff]
        %v2817 = vld [vmem:[#allocation2 + $0x138] sm:$0xff]
        %v2818 = vld [vmem:[#allocation2 + $0x140] sm:$0xff]
        %v2819 = vld [vmem:[#allocation2 + $0x148] sm:$0xff]
        %v2820 = vld [vmem:[#allocation2 + $0x150] sm:$0xff]
        %v2821 = vld [vmem:[#allocation2 + $0x158] sm:$0xff]
        %v2822 = vld [vmem:[#allocation2 + $0x160] sm:$0xff]
        %v2823 = vld [vmem:[#allocation2 + $0x168] sm:$0xff]
        %v2824 = vld [vmem:[#allocation2 + $0x170] sm:$0xff]
        %v2825 = vld [vmem:[#allocation2 + $0x178] sm:$0xff]
        %v2826 = vld [vmem:[#allocation2 + $0x180] sm:$0xff]
        %v2827 = vld [vmem:[#allocation2 + $0x188] sm:$0xff]
        %v2828 = vld [vmem:[#allocation2 + $0x190] sm:$0xff]
        %v2829 = vld [vmem:[#allocation2 + $0x198] sm:$0xff]
        %v2830 = vld [vmem:[#allocation2 + $0x1a0] sm:$0xff]
        %v2831 = vld [vmem:[#allocation2 + $0x1a8] sm:$0xff]
        %v2832 = vld [vmem:[#allocation2 + $0x1b0] sm:$0xff]
        %v2833 = vld [vmem:[#allocation2 + $0x1b8] sm:$0xff]
        %v2834 = vld [vmem:[#allocation2 + $0x1c0] sm:$0xff]
        %v2835 = vld [vmem:[#allocation2 + $0x1c8] sm:$0xff]
        %v2836 = vld [vmem:[#allocation2 + $0x1d0] sm:$0xff]
        %v2837 = vld [vmem:[#allocation2 + $0x1d8] sm:$0xff]
        %v2838 = vld [vmem:[#allocation2 + $0x1e0] sm:$0xff]
        %v2839 = vld [vmem:[#allocation2 + $0x1e8] sm:$0xff]
        %v2840 = vld [vmem:[#allocation2 + $0x1f0] sm:$0xff]
        %v2841 = vld [vmem:[#allocation2 + $0x1f8] sm:$0xff]
        %v2842 = vld [vmem:[#allocation2 + $0x200] sm:$0xff]
        %v2843 = vld [vmem:[#allocation2 + $0x208] sm:$0xff]
        %v2844 = vld [vmem:[#allocation2 + $0x210] sm:$0xff]
        %v2845 = vld [vmem:[#allocation2 + $0x218] sm:$0xff]
        %v2846 = vld [vmem:[#allocation2 + $0x220] sm:$0xff]
        %s2847 = scalar_lea.vmem [#allocation9], 128
        %v2848 = vld [vmem:[%s2847] sm:$0xff]
        %v2849 = vld [vmem:[%s2847 + $0x8] sm:$0xff]
        %v2850 = vld [vmem:[%s2847 + $0x10] sm:$0xff]
        %v2851 = vld [vmem:[%s2847 + $0x18] sm:$0xff]
        %v2853 = vsel %vm544, %v2783, 0
        %v2856 = vsel %vm544, %v2784, 0
        %v2859 = vsel %vm544, %v2785, 0
        %v2862 = vsel %vm544, %v2786, 0
        %v2865 = vsel %vm544, %v2787, 0
        %v2868 = vsel %vm544, %v2788, 0
        %v2871 = vsel %vm544, %v2789, 0
        %v2874 = vsel %vm544, %v2790, 0
        %v2877 = vsel %vm544, %v2791, 0
        %v2880 = vsel %vm544, %v2792, 0
        %v2883 = vsel %vm544, %v2793, 0
        %v2886 = vsel %vm544, %v2794, 0
        %v2889 = vsel %vm544, %v2795, 0
        %v2892 = vsel %vm544, %v2796, 0
        %v2895 = vsel %vm544, %v2797, 0
        %v2898 = vsel %vm544, %v2798, 0
        %v2901 = vsel %vm544, %v2799, 0
        %v2904 = vsel %vm544, %v2800, 0
        %v2907 = vsel %vm544, %v2801, 0
        %v2910 = vsel %vm544, %v2802, 0
        %v2913 = vsel %vm544, %v2803, 0
        %v2916 = vsel %vm544, %v2804, 0
        %v2919 = vsel %vm544, %v2805, 0
        %v2922 = vsel %vm544, %v2806, 0
        %v2925 = vsel %vm544, %v2807, 0
        %v2928 = vsel %vm544, %v2808, 0
        %v2931 = vsel %vm544, %v2809, 0
        %v2934 = vsel %vm544, %v2810, 0
        %v2937 = vsel %vm544, %v2811, 0
        %v2940 = vsel %vm544, %v2812, 0
        %v2943 = vsel %vm544, %v2813, 0
        %v2946 = vsel %vm544, %v2814, 0
        %v2949 = vsel %vm544, %v2815, 0
        %v2952 = vsel %vm544, %v2816, 0
        %v2955 = vsel %vm544, %v2817, 0
        %v2958 = vsel %vm544, %v2818, 0
        %v2961 = vsel %vm544, %v2819, 0
        %v2964 = vsel %vm544, %v2820, 0
        %v2967 = vsel %vm544, %v2821, 0
        %v2970 = vsel %vm544, %v2822, 0
        %v2973 = vsel %vm544, %v2823, 0
        %v2976 = vsel %vm544, %v2824, 0
        %v2979 = vsel %vm544, %v2825, 0
        %v2982 = vsel %vm544, %v2826, 0
        %v2985 = vsel %vm544, %v2827, 0
        %v2988 = vsel %vm544, %v2828, 0
        %v2991 = vsel %vm544, %v2829, 0
        %v2994 = vsel %vm544, %v2830, 0
        %v2997 = vsel %vm544, %v2831, 0
        %v3000 = vsel %vm544, %v2832, 0
        %v3003 = vsel %vm544, %v2833, 0
        %v3006 = vsel %vm544, %v2834, 0
        %v3009 = vsel %vm544, %v2835, 0
        %v3012 = vsel %vm544, %v2836, 0
        %v3015 = vsel %vm544, %v2837, 0
        %v3018 = vsel %vm544, %v2838, 0
        %v3021 = vsel %vm544, %v2839, 0
        %v3024 = vsel %vm544, %v2840, 0
        %v3027 = vsel %vm544, %v2841, 0
        %v3030 = vsel %vm544, %v2842, 0
        %v3033 = vsel %vm544, %v2843, 0
        %v3036 = vsel %vm544, %v2844, 0
        %v3039 = vsel %vm544, %v2845, 0
        %v3042 = vsel %vm544, %v2846, 0
        %3044 = vmatpush.msra.mxu0 0.0
        %3045 = vmatpush.msra.mxu0 0.0
        %3046 = vmatpush.msra.mxu0 0.0
        %3047 = vmatpush.msra.mxu0 0.0
        %3048 = vmatpush.msra.mxu0 0.0
        %3049 = vmatpush.msra.mxu0 0.0
        %3050 = vmatpush.msra.mxu0 0.0
        %3051 = vmatpush.msra.mxu0 0.0
        %3052 = vmatpush.msra.mxu0 0.0
        %3053 = vmatpush.msra.mxu0 0.0
        %3054 = vmatpush.msra.mxu0 0.0
        %3055 = vmatpush.msra.mxu0 0.0
        %3056 = vmatpush.msra.mxu0 %v2851
        %3057 = vmatpush.msra.mxu0 %v2850
        %3058 = vmatpush.msra.mxu0 %v2849
        %3059 = vmatpush.msra.mxu0 %v2848
        %3060 = vmatmul.f32.gmra.mxu0 %v2853
        %v3061 = vpop.f32.mrf.mxu0
        %v3062 = vadd.f32 0.0, %v3061
        %3063 = vmatmul.f32.gmra.mxu0 %v2856
        %v3064 = vpop.f32.mrf.mxu0
        %v3065 = vadd.f32 0.0, %v3064
        %3066 = vmatmul.f32.gmra.mxu0 %v2859
        %v3067 = vpop.f32.mrf.mxu0
        %v3068 = vadd.f32 0.0, %v3067
        %3069 = vmatmul.f32.gmra.mxu0 %v2862
        %v3070 = vpop.f32.mrf.mxu0
        %v3071 = vadd.f32 0.0, %v3070
        %3072 = vmatmul.f32.gmra.mxu0 %v2865
        %v3073 = vpop.f32.mrf.mxu0
        %v3074 = vadd.f32 0.0, %v3073
        %3075 = vmatmul.f32.gmra.mxu0 %v2868
        %v3076 = vpop.f32.mrf.mxu0
        %v3077 = vadd.f32 0.0, %v3076
        %3078 = vmatmul.f32.gmra.mxu0 %v2871
        %v3079 = vpop.f32.mrf.mxu0
        %v3080 = vadd.f32 0.0, %v3079
        %3081 = vmatmul.f32.gmra.mxu0 %v2874
        %v3082 = vpop.f32.mrf.mxu0
        %v3083 = vadd.f32 0.0, %v3082
        %3084 = vmatmul.f32.gmra.mxu0 %v2877
        %v3085 = vpop.f32.mrf.mxu0
        %v3086 = vadd.f32 0.0, %v3085
        %3087 = vmatmul.f32.gmra.mxu0 %v2880
        %v3088 = vpop.f32.mrf.mxu0
        %v3089 = vadd.f32 0.0, %v3088
        %3090 = vmatmul.f32.gmra.mxu0 %v2883
        %v3091 = vpop.f32.mrf.mxu0
        %v3092 = vadd.f32 0.0, %v3091
        %3093 = vmatmul.f32.gmra.mxu0 %v2886
        %v3094 = vpop.f32.mrf.mxu0
        %v3095 = vadd.f32 0.0, %v3094
        %3096 = vmatmul.f32.gmra.mxu0 %v2889
        %v3097 = vpop.f32.mrf.mxu0
        %v3098 = vadd.f32 0.0, %v3097
        %3099 = vmatmul.f32.gmra.mxu0 %v2892
        %v3100 = vpop.f32.mrf.mxu0
        %v3101 = vadd.f32 0.0, %v3100
        %3102 = vmatmul.f32.gmra.mxu0 %v2895
        %v3103 = vpop.f32.mrf.mxu0
        %v3104 = vadd.f32 0.0, %v3103
        %3105 = vmatmul.f32.gmra.mxu0 %v2898
        %v3106 = vpop.f32.mrf.mxu0
        %v3107 = vadd.f32 0.0, %v3106
        %3108 = vmatmul.f32.gmra.mxu0 %v2901
        %v3109 = vpop.f32.mrf.mxu0
        %v3110 = vadd.f32 0.0, %v3109
        %3111 = vmatmul.f32.gmra.mxu0 %v2904
        %v3112 = vpop.f32.mrf.mxu0
        %v3113 = vadd.f32 0.0, %v3112
        %3114 = vmatmul.f32.gmra.mxu0 %v2907
        %v3115 = vpop.f32.mrf.mxu0
        %v3116 = vadd.f32 0.0, %v3115
        %3117 = vmatmul.f32.gmra.mxu0 %v2910
        %v3118 = vpop.f32.mrf.mxu0
        %v3119 = vadd.f32 0.0, %v3118
        %3120 = vmatmul.f32.gmra.mxu0 %v2913
        %v3121 = vpop.f32.mrf.mxu0
        %v3122 = vadd.f32 0.0, %v3121
        %3123 = vmatmul.f32.gmra.mxu0 %v2916
        %v3124 = vpop.f32.mrf.mxu0
        %v3125 = vadd.f32 0.0, %v3124
        %3126 = vmatmul.f32.gmra.mxu0 %v2919
        %v3127 = vpop.f32.mrf.mxu0
        %v3128 = vadd.f32 0.0, %v3127
        %3129 = vmatmul.f32.gmra.mxu0 %v2922
        %v3130 = vpop.f32.mrf.mxu0
        %v3131 = vadd.f32 0.0, %v3130
        %3132 = vmatmul.f32.gmra.mxu0 %v2925
        %v3133 = vpop.f32.mrf.mxu0
        %v3134 = vadd.f32 0.0, %v3133
        %3135 = vmatmul.f32.gmra.mxu0 %v2928
        %v3136 = vpop.f32.mrf.mxu0
        %v3137 = vadd.f32 0.0, %v3136
        %3138 = vmatmul.f32.gmra.mxu0 %v2931
        %v3139 = vpop.f32.mrf.mxu0
        %v3140 = vadd.f32 0.0, %v3139
        %3141 = vmatmul.f32.gmra.mxu0 %v2934
        %v3142 = vpop.f32.mrf.mxu0
        %v3143 = vadd.f32 0.0, %v3142
        %3144 = vmatmul.f32.gmra.mxu0 %v2937
        %v3145 = vpop.f32.mrf.mxu0
        %v3146 = vadd.f32 0.0, %v3145
        %3147 = vmatmul.f32.gmra.mxu0 %v2940
        %v3148 = vpop.f32.mrf.mxu0
        %v3149 = vadd.f32 0.0, %v3148
        %3150 = vmatmul.f32.gmra.mxu0 %v2943
        %v3151 = vpop.f32.mrf.mxu0
        %v3152 = vadd.f32 0.0, %v3151
        %3153 = vmatmul.f32.gmra.mxu0 %v2946
        %v3154 = vpop.f32.mrf.mxu0
        %v3155 = vadd.f32 0.0, %v3154
        %3156 = vmatmul.f32.gmra.mxu0 %v2949
        %v3157 = vpop.f32.mrf.mxu0
        %v3158 = vadd.f32 0.0, %v3157
        %3159 = vmatmul.f32.gmra.mxu0 %v2952
        %v3160 = vpop.f32.mrf.mxu0
        %v3161 = vadd.f32 0.0, %v3160
        %3162 = vmatmul.f32.gmra.mxu0 %v2955
        %v3163 = vpop.f32.mrf.mxu0
        %v3164 = vadd.f32 0.0, %v3163
        %3165 = vmatmul.f32.gmra.mxu0 %v2958
        %v3166 = vpop.f32.mrf.mxu0
        %v3167 = vadd.f32 0.0, %v3166
        %3168 = vmatmul.f32.gmra.mxu0 %v2961
        %v3169 = vpop.f32.mrf.mxu0
        %v3170 = vadd.f32 0.0, %v3169
        %3171 = vmatmul.f32.gmra.mxu0 %v2964
        %v3172 = vpop.f32.mrf.mxu0
        %v3173 = vadd.f32 0.0, %v3172
        %3174 = vmatmul.f32.gmra.mxu0 %v2967
        %v3175 = vpop.f32.mrf.mxu0
        %v3176 = vadd.f32 0.0, %v3175
        %3177 = vmatmul.f32.gmra.mxu0 %v2970
        %v3178 = vpop.f32.mrf.mxu0
        %v3179 = vadd.f32 0.0, %v3178
        %3180 = vmatmul.f32.gmra.mxu0 %v2973
        %v3181 = vpop.f32.mrf.mxu0
        %v3182 = vadd.f32 0.0, %v3181
        %3183 = vmatmul.f32.gmra.mxu0 %v2976
        %v3184 = vpop.f32.mrf.mxu0
        %v3185 = vadd.f32 0.0, %v3184
        %3186 = vmatmul.f32.gmra.mxu0 %v2979
        %v3187 = vpop.f32.mrf.mxu0
        %v3188 = vadd.f32 0.0, %v3187
        %3189 = vmatmul.f32.gmra.mxu0 %v2982
        %v3190 = vpop.f32.mrf.mxu0
        %v3191 = vadd.f32 0.0, %v3190
        %3192 = vmatmul.f32.gmra.mxu0 %v2985
        %v3193 = vpop.f32.mrf.mxu0
        %v3194 = vadd.f32 0.0, %v3193
        %3195 = vmatmul.f32.gmra.mxu0 %v2988
        %v3196 = vpop.f32.mrf.mxu0
        %v3197 = vadd.f32 0.0, %v3196
        %3198 = vmatmul.f32.gmra.mxu0 %v2991
        %v3199 = vpop.f32.mrf.mxu0
        %v3200 = vadd.f32 0.0, %v3199
        %3201 = vmatmul.f32.gmra.mxu0 %v2994
        %v3202 = vpop.f32.mrf.mxu0
        %v3203 = vadd.f32 0.0, %v3202
        %3204 = vmatmul.f32.gmra.mxu0 %v2997
        %v3205 = vpop.f32.mrf.mxu0
        %v3206 = vadd.f32 0.0, %v3205
        %3207 = vmatmul.f32.gmra.mxu0 %v3000
        %v3208 = vpop.f32.mrf.mxu0
        %v3209 = vadd.f32 0.0, %v3208
        %3210 = vmatmul.f32.gmra.mxu0 %v3003
        %v3211 = vpop.f32.mrf.mxu0
        %v3212 = vadd.f32 0.0, %v3211
        %3213 = vmatmul.f32.gmra.mxu0 %v3006
        %v3214 = vpop.f32.mrf.mxu0
        %v3215 = vadd.f32 0.0, %v3214
        %3216 = vmatmul.f32.gmra.mxu0 %v3009
        %v3217 = vpop.f32.mrf.mxu0
        %v3218 = vadd.f32 0.0, %v3217
        %3219 = vmatmul.f32.gmra.mxu0 %v3012
        %v3220 = vpop.f32.mrf.mxu0
        %v3221 = vadd.f32 0.0, %v3220
        %3222 = vmatmul.f32.gmra.mxu0 %v3015
        %v3223 = vpop.f32.mrf.mxu0
        %v3224 = vadd.f32 0.0, %v3223
        %3225 = vmatmul.f32.gmra.mxu0 %v3018
        %v3226 = vpop.f32.mrf.mxu0
        %v3227 = vadd.f32 0.0, %v3226
        %3228 = vmatmul.f32.gmra.mxu0 %v3021
        %v3229 = vpop.f32.mrf.mxu0
        %v3230 = vadd.f32 0.0, %v3229
        %3231 = vmatmul.f32.gmra.mxu0 %v3024
        %v3232 = vpop.f32.mrf.mxu0
        %v3233 = vadd.f32 0.0, %v3232
        %3234 = vmatmul.f32.gmra.mxu0 %v3027
        %v3235 = vpop.f32.mrf.mxu0
        %v3236 = vadd.f32 0.0, %v3235
        %3237 = vmatmul.f32.gmra.mxu0 %v3030
        %v3238 = vpop.f32.mrf.mxu0
        %v3239 = vadd.f32 0.0, %v3238
        %3240 = vmatmul.f32.gmra.mxu0 %v3033
        %v3241 = vpop.f32.mrf.mxu0
        %v3242 = vadd.f32 0.0, %v3241
        %3243 = vmatmul.f32.gmra.mxu0 %v3036
        %v3244 = vpop.f32.mrf.mxu0
        %v3245 = vadd.f32 0.0, %v3244
        %3246 = vmatmul.f32.gmra.mxu0 %v3039
        %v3247 = vpop.f32.mrf.mxu0
        %v3248 = vadd.f32 0.0, %v3247
        %3249 = vmatmul.f32.gmra.mxu0 %v3042
        %v3250 = vpop.f32.mrf.mxu0
        %v3251 = vadd.f32 0.0, %v3250
        %3252 = vdwg.mxu0
        %v3253 = vadd.f32 %v2719, %v3062
        %v3254 = vadd.f32 %v2720, %v3065
        %v3255 = vadd.f32 %v2721, %v3068
        %v3256 = vadd.f32 %v2722, %v3071
        %v3257 = vadd.f32 %v2723, %v3074
        %v3258 = vadd.f32 %v2724, %v3077
        %v3259 = vadd.f32 %v2725, %v3080
        %v3260 = vadd.f32 %v2726, %v3083
        %v3261 = vadd.f32 %v2727, %v3086
        %v3262 = vadd.f32 %v2728, %v3089
        %v3263 = vadd.f32 %v2729, %v3092
        %v3264 = vadd.f32 %v2730, %v3095
        %v3265 = vadd.f32 %v2731, %v3098
        %v3266 = vadd.f32 %v2732, %v3101
        %v3267 = vadd.f32 %v2733, %v3104
        %v3268 = vadd.f32 %v2734, %v3107
        %v3269 = vadd.f32 %v2735, %v3110
        %v3270 = vadd.f32 %v2736, %v3113
        %v3271 = vadd.f32 %v2737, %v3116
        %v3272 = vadd.f32 %v2738, %v3119
        %v3273 = vadd.f32 %v2739, %v3122
        %v3274 = vadd.f32 %v2740, %v3125
        %v3275 = vadd.f32 %v2741, %v3128
        %v3276 = vadd.f32 %v2742, %v3131
        %v3277 = vadd.f32 %v2743, %v3134
        %v3278 = vadd.f32 %v2744, %v3137
        %v3279 = vadd.f32 %v2745, %v3140
        %v3280 = vadd.f32 %v2746, %v3143
        %v3281 = vadd.f32 %v2747, %v3146
        %v3282 = vadd.f32 %v2748, %v3149
        %v3283 = vadd.f32 %v2749, %v3152
        %v3284 = vadd.f32 %v2750, %v3155
        %v3285 = vadd.f32 %v2751, %v3158
        %v3286 = vadd.f32 %v2752, %v3161
        %v3287 = vadd.f32 %v2753, %v3164
        %v3288 = vadd.f32 %v2754, %v3167
        %v3289 = vadd.f32 %v2755, %v3170
        %v3290 = vadd.f32 %v2756, %v3173
        %v3291 = vadd.f32 %v2757, %v3176
        %v3292 = vadd.f32 %v2758, %v3179
        %v3293 = vadd.f32 %v2759, %v3182
        %v3294 = vadd.f32 %v2760, %v3185
        %v3295 = vadd.f32 %v2761, %v3188
        %v3296 = vadd.f32 %v2762, %v3191
        %v3297 = vadd.f32 %v2763, %v3194
        %v3298 = vadd.f32 %v2764, %v3197
        %v3299 = vadd.f32 %v2765, %v3200
        %v3300 = vadd.f32 %v2766, %v3203
        %v3301 = vadd.f32 %v2767, %v3206
        %v3302 = vadd.f32 %v2768, %v3209
        %v3303 = vadd.f32 %v2769, %v3212
        %v3304 = vadd.f32 %v2770, %v3215
        %v3305 = vadd.f32 %v2771, %v3218
        %v3306 = vadd.f32 %v2772, %v3221
        %v3307 = vadd.f32 %v2773, %v3224
        %v3308 = vadd.f32 %v2774, %v3227
        %v3309 = vadd.f32 %v2775, %v3230
        %v3310 = vadd.f32 %v2776, %v3233
        %v3311 = vadd.f32 %v2777, %v3236
        %v3312 = vadd.f32 %v2778, %v3239
        %v3313 = vadd.f32 %v2779, %v3242
        %v3314 = vadd.f32 %v2780, %v3245
        %v3315 = vadd.f32 %v2781, %v3248
        %v3316 = vadd.f32 %v2782, %v3251
        %v3317 = vld [vmem:[#allocation2 + $0x29] sm:$0xff]
        %v3318 = vld [vmem:[#allocation2 + $0x31] sm:$0xff]
        %v3319 = vld [vmem:[#allocation2 + $0x39] sm:$0xff]
        %v3320 = vld [vmem:[#allocation2 + $0x41] sm:$0xff]
        %v3321 = vld [vmem:[#allocation2 + $0x49] sm:$0xff]
        %v3322 = vld [vmem:[#allocation2 + $0x51] sm:$0xff]
        %v3323 = vld [vmem:[#allocation2 + $0x59] sm:$0xff]
        %v3324 = vld [vmem:[#allocation2 + $0x61] sm:$0xff]
        %v3325 = vld [vmem:[#allocation2 + $0x69] sm:$0xff]
        %v3326 = vld [vmem:[#allocation2 + $0x71] sm:$0xff]
        %v3327 = vld [vmem:[#allocation2 + $0x79] sm:$0xff]
        %v3328 = vld [vmem:[#allocation2 + $0x81] sm:$0xff]
        %v3329 = vld [vmem:[#allocation2 + $0x89] sm:$0xff]
        %v3330 = vld [vmem:[#allocation2 + $0x91] sm:$0xff]
        %v3331 = vld [vmem:[#allocation2 + $0x99] sm:$0xff]
        %v3332 = vld [vmem:[#allocation2 + $0xa1] sm:$0xff]
        %v3333 = vld [vmem:[#allocation2 + $0xa9] sm:$0xff]
        %v3334 = vld [vmem:[#allocation2 + $0xb1] sm:$0xff]
        %v3335 = vld [vmem:[#allocation2 + $0xb9] sm:$0xff]
        %v3336 = vld [vmem:[#allocation2 + $0xc1] sm:$0xff]
        %v3337 = vld [vmem:[#allocation2 + $0xc9] sm:$0xff]
        %v3338 = vld [vmem:[#allocation2 + $0xd1] sm:$0xff]
        %v3339 = vld [vmem:[#allocation2 + $0xd9] sm:$0xff]
        %v3340 = vld [vmem:[#allocation2 + $0xe1] sm:$0xff]
        %v3341 = vld [vmem:[#allocation2 + $0xe9] sm:$0xff]
        %v3342 = vld [vmem:[#allocation2 + $0xf1] sm:$0xff]
        %v3343 = vld [vmem:[#allocation2 + $0xf9] sm:$0xff]
        %v3344 = vld [vmem:[#allocation2 + $0x101] sm:$0xff]
        %v3345 = vld [vmem:[#allocation2 + $0x109] sm:$0xff]
        %v3346 = vld [vmem:[#allocation2 + $0x111] sm:$0xff]
        %v3347 = vld [vmem:[#allocation2 + $0x119] sm:$0xff]
        %v3348 = vld [vmem:[#allocation2 + $0x121] sm:$0xff]
        %v3349 = vld [vmem:[#allocation2 + $0x129] sm:$0xff]
        %v3350 = vld [vmem:[#allocation2 + $0x131] sm:$0xff]
        %v3351 = vld [vmem:[#allocation2 + $0x139] sm:$0xff]
        %v3352 = vld [vmem:[#allocation2 + $0x141] sm:$0xff]
        %v3353 = vld [vmem:[#allocation2 + $0x149] sm:$0xff]
        %v3354 = vld [vmem:[#allocation2 + $0x151] sm:$0xff]
        %v3355 = vld [vmem:[#allocation2 + $0x159] sm:$0xff]
        %v3356 = vld [vmem:[#allocation2 + $0x161] sm:$0xff]
        %v3357 = vld [vmem:[#allocation2 + $0x169] sm:$0xff]
        %v3358 = vld [vmem:[#allocation2 + $0x171] sm:$0xff]
        %v3359 = vld [vmem:[#allocation2 + $0x179] sm:$0xff]
        %v3360 = vld [vmem:[#allocation2 + $0x181] sm:$0xff]
        %v3361 = vld [vmem:[#allocation2 + $0x189] sm:$0xff]
        %v3362 = vld [vmem:[#allocation2 + $0x191] sm:$0xff]
        %v3363 = vld [vmem:[#allocation2 + $0x199] sm:$0xff]
        %v3364 = vld [vmem:[#allocation2 + $0x1a1] sm:$0xff]
        %v3365 = vld [vmem:[#allocation2 + $0x1a9] sm:$0xff]
        %v3366 = vld [vmem:[#allocation2 + $0x1b1] sm:$0xff]
        %v3367 = vld [vmem:[#allocation2 + $0x1b9] sm:$0xff]
        %v3368 = vld [vmem:[#allocation2 + $0x1c1] sm:$0xff]
        %v3369 = vld [vmem:[#allocation2 + $0x1c9] sm:$0xff]
        %v3370 = vld [vmem:[#allocation2 + $0x1d1] sm:$0xff]
        %v3371 = vld [vmem:[#allocation2 + $0x1d9] sm:$0xff]
        %v3372 = vld [vmem:[#allocation2 + $0x1e1] sm:$0xff]
        %v3373 = vld [vmem:[#allocation2 + $0x1e9] sm:$0xff]
        %v3374 = vld [vmem:[#allocation2 + $0x1f1] sm:$0xff]
        %v3375 = vld [vmem:[#allocation2 + $0x1f9] sm:$0xff]
        %v3376 = vld [vmem:[#allocation2 + $0x201] sm:$0xff]
        %v3377 = vld [vmem:[#allocation2 + $0x209] sm:$0xff]
        %v3378 = vld [vmem:[#allocation2 + $0x211] sm:$0xff]
        %v3379 = vld [vmem:[#allocation2 + $0x219] sm:$0xff]
        %v3380 = vld [vmem:[#allocation2 + $0x221] sm:$0xff]
        %s3381 = scalar_lea.vmem [#allocation9], 160
        %v3382 = vld [vmem:[%s3381] sm:$0xff]
        %v3383 = vld [vmem:[%s3381 + $0x8] sm:$0xff]
        %v3384 = vld [vmem:[%s3381 + $0x10] sm:$0xff]
        %v3385 = vld [vmem:[%s3381 + $0x18] sm:$0xff]
        %v3387 = vsel %vm544, %v3317, 0
        %v3390 = vsel %vm544, %v3318, 0
        %v3393 = vsel %vm544, %v3319, 0
        %v3396 = vsel %vm544, %v3320, 0
        %v3399 = vsel %vm544, %v3321, 0
        %v3402 = vsel %vm544, %v3322, 0
        %v3405 = vsel %vm544, %v3323, 0
        %v3408 = vsel %vm544, %v3324, 0
        %v3411 = vsel %vm544, %v3325, 0
        %v3414 = vsel %vm544, %v3326, 0
        %v3417 = vsel %vm544, %v3327, 0
        %v3420 = vsel %vm544, %v3328, 0
        %v3423 = vsel %vm544, %v3329, 0
        %v3426 = vsel %vm544, %v3330, 0
        %v3429 = vsel %vm544, %v3331, 0
        %v3432 = vsel %vm544, %v3332, 0
        %v3435 = vsel %vm544, %v3333, 0
        %v3438 = vsel %vm544, %v3334, 0
        %v3441 = vsel %vm544, %v3335, 0
        %v3444 = vsel %vm544, %v3336, 0
        %v3447 = vsel %vm544, %v3337, 0
        %v3450 = vsel %vm544, %v3338, 0
        %v3453 = vsel %vm544, %v3339, 0
        %v3456 = vsel %vm544, %v3340, 0
        %v3459 = vsel %vm544, %v3341, 0
        %v3462 = vsel %vm544, %v3342, 0
        %v3465 = vsel %vm544, %v3343, 0
        %v3468 = vsel %vm544, %v3344, 0
        %v3471 = vsel %vm544, %v3345, 0
        %v3474 = vsel %vm544, %v3346, 0
        %v3477 = vsel %vm544, %v3347, 0
        %v3480 = vsel %vm544, %v3348, 0
        %v3483 = vsel %vm544, %v3349, 0
        %v3486 = vsel %vm544, %v3350, 0
        %v3489 = vsel %vm544, %v3351, 0
        %v3492 = vsel %vm544, %v3352, 0
        %v3495 = vsel %vm544, %v3353, 0
        %v3498 = vsel %vm544, %v3354, 0
        %v3501 = vsel %vm544, %v3355, 0
        %v3504 = vsel %vm544, %v3356, 0
        %v3507 = vsel %vm544, %v3357, 0
        %v3510 = vsel %vm544, %v3358, 0
        %v3513 = vsel %vm544, %v3359, 0
        %v3516 = vsel %vm544, %v3360, 0
        %v3519 = vsel %vm544, %v3361, 0
        %v3522 = vsel %vm544, %v3362, 0
        %v3525 = vsel %vm544, %v3363, 0
        %v3528 = vsel %vm544, %v3364, 0
        %v3531 = vsel %vm544, %v3365, 0
        %v3534 = vsel %vm544, %v3366, 0
        %v3537 = vsel %vm544, %v3367, 0
        %v3540 = vsel %vm544, %v3368, 0
        %v3543 = vsel %vm544, %v3369, 0
        %v3546 = vsel %vm544, %v3370, 0
        %v3549 = vsel %vm544, %v3371, 0
        %v3552 = vsel %vm544, %v3372, 0
        %v3555 = vsel %vm544, %v3373, 0
        %v3558 = vsel %vm544, %v3374, 0
        %v3561 = vsel %vm544, %v3375, 0
        %v3564 = vsel %vm544, %v3376, 0
        %v3567 = vsel %vm544, %v3377, 0
        %v3570 = vsel %vm544, %v3378, 0
        %v3573 = vsel %vm544, %v3379, 0
        %v3576 = vsel %vm544, %v3380, 0
        %3578 = vmatpush.msra.mxu0 0.0
        %3579 = vmatpush.msra.mxu0 0.0
        %3580 = vmatpush.msra.mxu0 0.0
        %3581 = vmatpush.msra.mxu0 0.0
        %3582 = vmatpush.msra.mxu0 0.0
        %3583 = vmatpush.msra.mxu0 0.0
        %3584 = vmatpush.msra.mxu0 0.0
        %3585 = vmatpush.msra.mxu0 0.0
        %3586 = vmatpush.msra.mxu0 0.0
        %3587 = vmatpush.msra.mxu0 0.0
        %3588 = vmatpush.msra.mxu0 0.0
        %3589 = vmatpush.msra.mxu0 0.0
        %3590 = vmatpush.msra.mxu0 %v3385
        %3591 = vmatpush.msra.mxu0 %v3384
        %3592 = vmatpush.msra.mxu0 %v3383
        %3593 = vmatpush.msra.mxu0 %v3382
        %3594 = vmatmul.f32.gmra.mxu0 %v3387
        %v3595 = vpop.f32.mrf.mxu0
        %v3596 = vadd.f32 0.0, %v3595
        %3597 = vmatmul.f32.gmra.mxu0 %v3390
        %v3598 = vpop.f32.mrf.mxu0
        %v3599 = vadd.f32 0.0, %v3598
        %3600 = vmatmul.f32.gmra.mxu0 %v3393
        %v3601 = vpop.f32.mrf.mxu0
        %v3602 = vadd.f32 0.0, %v3601
        %3603 = vmatmul.f32.gmra.mxu0 %v3396
        %v3604 = vpop.f32.mrf.mxu0
        %v3605 = vadd.f32 0.0, %v3604
        %3606 = vmatmul.f32.gmra.mxu0 %v3399
        %v3607 = vpop.f32.mrf.mxu0
        %v3608 = vadd.f32 0.0, %v3607
        %3609 = vmatmul.f32.gmra.mxu0 %v3402
        %v3610 = vpop.f32.mrf.mxu0
        %v3611 = vadd.f32 0.0, %v3610
        %3612 = vmatmul.f32.gmra.mxu0 %v3405
        %v3613 = vpop.f32.mrf.mxu0
        %v3614 = vadd.f32 0.0, %v3613
        %3615 = vmatmul.f32.gmra.mxu0 %v3408
        %v3616 = vpop.f32.mrf.mxu0
        %v3617 = vadd.f32 0.0, %v3616
        %3618 = vmatmul.f32.gmra.mxu0 %v3411
        %v3619 = vpop.f32.mrf.mxu0
        %v3620 = vadd.f32 0.0, %v3619
        %3621 = vmatmul.f32.gmra.mxu0 %v3414
        %v3622 = vpop.f32.mrf.mxu0
        %v3623 = vadd.f32 0.0, %v3622
        %3624 = vmatmul.f32.gmra.mxu0 %v3417
        %v3625 = vpop.f32.mrf.mxu0
        %v3626 = vadd.f32 0.0, %v3625
        %3627 = vmatmul.f32.gmra.mxu0 %v3420
        %v3628 = vpop.f32.mrf.mxu0
        %v3629 = vadd.f32 0.0, %v3628
        %3630 = vmatmul.f32.gmra.mxu0 %v3423
        %v3631 = vpop.f32.mrf.mxu0
        %v3632 = vadd.f32 0.0, %v3631
        %3633 = vmatmul.f32.gmra.mxu0 %v3426
        %v3634 = vpop.f32.mrf.mxu0
        %v3635 = vadd.f32 0.0, %v3634
        %3636 = vmatmul.f32.gmra.mxu0 %v3429
        %v3637 = vpop.f32.mrf.mxu0
        %v3638 = vadd.f32 0.0, %v3637
        %3639 = vmatmul.f32.gmra.mxu0 %v3432
        %v3640 = vpop.f32.mrf.mxu0
        %v3641 = vadd.f32 0.0, %v3640
        %3642 = vmatmul.f32.gmra.mxu0 %v3435
        %v3643 = vpop.f32.mrf.mxu0
        %v3644 = vadd.f32 0.0, %v3643
        %3645 = vmatmul.f32.gmra.mxu0 %v3438
        %v3646 = vpop.f32.mrf.mxu0
        %v3647 = vadd.f32 0.0, %v3646
        %3648 = vmatmul.f32.gmra.mxu0 %v3441
        %v3649 = vpop.f32.mrf.mxu0
        %v3650 = vadd.f32 0.0, %v3649
        %3651 = vmatmul.f32.gmra.mxu0 %v3444
        %v3652 = vpop.f32.mrf.mxu0
        %v3653 = vadd.f32 0.0, %v3652
        %3654 = vmatmul.f32.gmra.mxu0 %v3447
        %v3655 = vpop.f32.mrf.mxu0
        %v3656 = vadd.f32 0.0, %v3655
        %3657 = vmatmul.f32.gmra.mxu0 %v3450
        %v3658 = vpop.f32.mrf.mxu0
        %v3659 = vadd.f32 0.0, %v3658
        %3660 = vmatmul.f32.gmra.mxu0 %v3453
        %v3661 = vpop.f32.mrf.mxu0
        %v3662 = vadd.f32 0.0, %v3661
        %3663 = vmatmul.f32.gmra.mxu0 %v3456
        %v3664 = vpop.f32.mrf.mxu0
        %v3665 = vadd.f32 0.0, %v3664
        %3666 = vmatmul.f32.gmra.mxu0 %v3459
        %v3667 = vpop.f32.mrf.mxu0
        %v3668 = vadd.f32 0.0, %v3667
        %3669 = vmatmul.f32.gmra.mxu0 %v3462
        %v3670 = vpop.f32.mrf.mxu0
        %v3671 = vadd.f32 0.0, %v3670
        %3672 = vmatmul.f32.gmra.mxu0 %v3465
        %v3673 = vpop.f32.mrf.mxu0
        %v3674 = vadd.f32 0.0, %v3673
        %3675 = vmatmul.f32.gmra.mxu0 %v3468
        %v3676 = vpop.f32.mrf.mxu0
        %v3677 = vadd.f32 0.0, %v3676
        %3678 = vmatmul.f32.gmra.mxu0 %v3471
        %v3679 = vpop.f32.mrf.mxu0
        %v3680 = vadd.f32 0.0, %v3679
        %3681 = vmatmul.f32.gmra.mxu0 %v3474
        %v3682 = vpop.f32.mrf.mxu0
        %v3683 = vadd.f32 0.0, %v3682
        %3684 = vmatmul.f32.gmra.mxu0 %v3477
        %v3685 = vpop.f32.mrf.mxu0
        %v3686 = vadd.f32 0.0, %v3685
        %3687 = vmatmul.f32.gmra.mxu0 %v3480
        %v3688 = vpop.f32.mrf.mxu0
        %v3689 = vadd.f32 0.0, %v3688
        %3690 = vmatmul.f32.gmra.mxu0 %v3483
        %v3691 = vpop.f32.mrf.mxu0
        %v3692 = vadd.f32 0.0, %v3691
        %3693 = vmatmul.f32.gmra.mxu0 %v3486
        %v3694 = vpop.f32.mrf.mxu0
        %v3695 = vadd.f32 0.0, %v3694
        %3696 = vmatmul.f32.gmra.mxu0 %v3489
        %v3697 = vpop.f32.mrf.mxu0
        %v3698 = vadd.f32 0.0, %v3697
        %3699 = vmatmul.f32.gmra.mxu0 %v3492
        %v3700 = vpop.f32.mrf.mxu0
        %v3701 = vadd.f32 0.0, %v3700
        %3702 = vmatmul.f32.gmra.mxu0 %v3495
        %v3703 = vpop.f32.mrf.mxu0
        %v3704 = vadd.f32 0.0, %v3703
        %3705 = vmatmul.f32.gmra.mxu0 %v3498
        %v3706 = vpop.f32.mrf.mxu0
        %v3707 = vadd.f32 0.0, %v3706
        %3708 = vmatmul.f32.gmra.mxu0 %v3501
        %v3709 = vpop.f32.mrf.mxu0
        %v3710 = vadd.f32 0.0, %v3709
        %3711 = vmatmul.f32.gmra.mxu0 %v3504
        %v3712 = vpop.f32.mrf.mxu0
        %v3713 = vadd.f32 0.0, %v3712
        %3714 = vmatmul.f32.gmra.mxu0 %v3507
        %v3715 = vpop.f32.mrf.mxu0
        %v3716 = vadd.f32 0.0, %v3715
        %3717 = vmatmul.f32.gmra.mxu0 %v3510
        %v3718 = vpop.f32.mrf.mxu0
        %v3719 = vadd.f32 0.0, %v3718
        %3720 = vmatmul.f32.gmra.mxu0 %v3513
        %v3721 = vpop.f32.mrf.mxu0
        %v3722 = vadd.f32 0.0, %v3721
        %3723 = vmatmul.f32.gmra.mxu0 %v3516
        %v3724 = vpop.f32.mrf.mxu0
        %v3725 = vadd.f32 0.0, %v3724
        %3726 = vmatmul.f32.gmra.mxu0 %v3519
        %v3727 = vpop.f32.mrf.mxu0
        %v3728 = vadd.f32 0.0, %v3727
        %3729 = vmatmul.f32.gmra.mxu0 %v3522
        %v3730 = vpop.f32.mrf.mxu0
        %v3731 = vadd.f32 0.0, %v3730
        %3732 = vmatmul.f32.gmra.mxu0 %v3525
        %v3733 = vpop.f32.mrf.mxu0
        %v3734 = vadd.f32 0.0, %v3733
        %3735 = vmatmul.f32.gmra.mxu0 %v3528
        %v3736 = vpop.f32.mrf.mxu0
        %v3737 = vadd.f32 0.0, %v3736
        %3738 = vmatmul.f32.gmra.mxu0 %v3531
        %v3739 = vpop.f32.mrf.mxu0
        %v3740 = vadd.f32 0.0, %v3739
        %3741 = vmatmul.f32.gmra.mxu0 %v3534
        %v3742 = vpop.f32.mrf.mxu0
        %v3743 = vadd.f32 0.0, %v3742
        %3744 = vmatmul.f32.gmra.mxu0 %v3537
        %v3745 = vpop.f32.mrf.mxu0
        %v3746 = vadd.f32 0.0, %v3745
        %3747 = vmatmul.f32.gmra.mxu0 %v3540
        %v3748 = vpop.f32.mrf.mxu0
        %v3749 = vadd.f32 0.0, %v3748
        %3750 = vmatmul.f32.gmra.mxu0 %v3543
        %v3751 = vpop.f32.mrf.mxu0
        %v3752 = vadd.f32 0.0, %v3751
        %3753 = vmatmul.f32.gmra.mxu0 %v3546
        %v3754 = vpop.f32.mrf.mxu0
        %v3755 = vadd.f32 0.0, %v3754
        %3756 = vmatmul.f32.gmra.mxu0 %v3549
        %v3757 = vpop.f32.mrf.mxu0
        %v3758 = vadd.f32 0.0, %v3757
        %3759 = vmatmul.f32.gmra.mxu0 %v3552
        %v3760 = vpop.f32.mrf.mxu0
        %v3761 = vadd.f32 0.0, %v3760
        %3762 = vmatmul.f32.gmra.mxu0 %v3555
        %v3763 = vpop.f32.mrf.mxu0
        %v3764 = vadd.f32 0.0, %v3763
        %3765 = vmatmul.f32.gmra.mxu0 %v3558
        %v3766 = vpop.f32.mrf.mxu0
        %v3767 = vadd.f32 0.0, %v3766
        %3768 = vmatmul.f32.gmra.mxu0 %v3561
        %v3769 = vpop.f32.mrf.mxu0
        %v3770 = vadd.f32 0.0, %v3769
        %3771 = vmatmul.f32.gmra.mxu0 %v3564
        %v3772 = vpop.f32.mrf.mxu0
        %v3773 = vadd.f32 0.0, %v3772
        %3774 = vmatmul.f32.gmra.mxu0 %v3567
        %v3775 = vpop.f32.mrf.mxu0
        %v3776 = vadd.f32 0.0, %v3775
        %3777 = vmatmul.f32.gmra.mxu0 %v3570
        %v3778 = vpop.f32.mrf.mxu0
        %v3779 = vadd.f32 0.0, %v3778
        %3780 = vmatmul.f32.gmra.mxu0 %v3573
        %v3781 = vpop.f32.mrf.mxu0
        %v3782 = vadd.f32 0.0, %v3781
        %3783 = vmatmul.f32.gmra.mxu0 %v3576
        %v3784 = vpop.f32.mrf.mxu0
        %v3785 = vadd.f32 0.0, %v3784
        %3786 = vdwg.mxu0
        %v3787 = vadd.f32 %v3253, %v3596
        %v3788 = vadd.f32 %v3254, %v3599
        %v3789 = vadd.f32 %v3255, %v3602
        %v3790 = vadd.f32 %v3256, %v3605
        %v3791 = vadd.f32 %v3257, %v3608
        %v3792 = vadd.f32 %v3258, %v3611
        %v3793 = vadd.f32 %v3259, %v3614
        %v3794 = vadd.f32 %v3260, %v3617
        %v3795 = vadd.f32 %v3261, %v3620
        %v3796 = vadd.f32 %v3262, %v3623
        %v3797 = vadd.f32 %v3263, %v3626
        %v3798 = vadd.f32 %v3264, %v3629
        %v3799 = vadd.f32 %v3265, %v3632
        %v3800 = vadd.f32 %v3266, %v3635
        %v3801 = vadd.f32 %v3267, %v3638
        %v3802 = vadd.f32 %v3268, %v3641
        %v3803 = vadd.f32 %v3269, %v3644
        %v3804 = vadd.f32 %v3270, %v3647
        %v3805 = vadd.f32 %v3271, %v3650
        %v3806 = vadd.f32 %v3272, %v3653
        %v3807 = vadd.f32 %v3273, %v3656
        %v3808 = vadd.f32 %v3274, %v3659
        %v3809 = vadd.f32 %v3275, %v3662
        %v3810 = vadd.f32 %v3276, %v3665
        %v3811 = vadd.f32 %v3277, %v3668
        %v3812 = vadd.f32 %v3278, %v3671
        %v3813 = vadd.f32 %v3279, %v3674
        %v3814 = vadd.f32 %v3280, %v3677
        %v3815 = vadd.f32 %v3281, %v3680
        %v3816 = vadd.f32 %v3282, %v3683
        %v3817 = vadd.f32 %v3283, %v3686
        %v3818 = vadd.f32 %v3284, %v3689
        %v3819 = vadd.f32 %v3285, %v3692
        %v3820 = vadd.f32 %v3286, %v3695
        %v3821 = vadd.f32 %v3287, %v3698
        %v3822 = vadd.f32 %v3288, %v3701
        %v3823 = vadd.f32 %v3289, %v3704
        %v3824 = vadd.f32 %v3290, %v3707
        %v3825 = vadd.f32 %v3291, %v3710
        %v3826 = vadd.f32 %v3292, %v3713
        %v3827 = vadd.f32 %v3293, %v3716
        %v3828 = vadd.f32 %v3294, %v3719
        %v3829 = vadd.f32 %v3295, %v3722
        %v3830 = vadd.f32 %v3296, %v3725
        %v3831 = vadd.f32 %v3297, %v3728
        %v3832 = vadd.f32 %v3298, %v3731
        %v3833 = vadd.f32 %v3299, %v3734
        %v3834 = vadd.f32 %v3300, %v3737
        %v3835 = vadd.f32 %v3301, %v3740
        %v3836 = vadd.f32 %v3302, %v3743
        %v3837 = vadd.f32 %v3303, %v3746
        %v3838 = vadd.f32 %v3304, %v3749
        %v3839 = vadd.f32 %v3305, %v3752
        %v3840 = vadd.f32 %v3306, %v3755
        %v3841 = vadd.f32 %v3307, %v3758
        %v3842 = vadd.f32 %v3308, %v3761
        %v3843 = vadd.f32 %v3309, %v3764
        %v3844 = vadd.f32 %v3310, %v3767
        %v3845 = vadd.f32 %v3311, %v3770
        %v3846 = vadd.f32 %v3312, %v3773
        %v3847 = vadd.f32 %v3313, %v3776
        %v3848 = vadd.f32 %v3314, %v3779
        %v3849 = vadd.f32 %v3315, %v3782
        %v3850 = vadd.f32 %v3316, %v3785
        %v3851 = vld [vmem:[#allocation2 + $0x47] sm:$0xff]
        %v3852 = vld [vmem:[#allocation2 + $0x4f] sm:$0xff]
        %v3853 = vld [vmem:[#allocation2 + $0x57] sm:$0xff]
        %v3854 = vld [vmem:[#allocation2 + $0x5f] sm:$0xff]
        %v3855 = vld [vmem:[#allocation2 + $0x67] sm:$0xff]
        %v3856 = vld [vmem:[#allocation2 + $0x6f] sm:$0xff]
        %v3857 = vld [vmem:[#allocation2 + $0x77] sm:$0xff]
        %v3858 = vld [vmem:[#allocation2 + $0x7f] sm:$0xff]
        %v3859 = vld [vmem:[#allocation2 + $0x87] sm:$0xff]
        %v3860 = vld [vmem:[#allocation2 + $0x8f] sm:$0xff]
        %v3861 = vld [vmem:[#allocation2 + $0x97] sm:$0xff]
        %v3862 = vld [vmem:[#allocation2 + $0x9f] sm:$0xff]
        %v3863 = vld [vmem:[#allocation2 + $0xa7] sm:$0xff]
        %v3864 = vld [vmem:[#allocation2 + $0xaf] sm:$0xff]
        %v3865 = vld [vmem:[#allocation2 + $0xb7] sm:$0xff]
        %v3866 = vld [vmem:[#allocation2 + $0xbf] sm:$0xff]
        %v3867 = vld [vmem:[#allocation2 + $0xc7] sm:$0xff]
        %v3868 = vld [vmem:[#allocation2 + $0xcf] sm:$0xff]
        %v3869 = vld [vmem:[#allocation2 + $0xd7] sm:$0xff]
        %v3870 = vld [vmem:[#allocation2 + $0xdf] sm:$0xff]
        %v3871 = vld [vmem:[#allocation2 + $0xe7] sm:$0xff]
        %v3872 = vld [vmem:[#allocation2 + $0xef] sm:$0xff]
        %v3873 = vld [vmem:[#allocation2 + $0xf7] sm:$0xff]
        %v3874 = vld [vmem:[#allocation2 + $0xff] sm:$0xff]
        %v3875 = vld [vmem:[#allocation2 + $0x107] sm:$0xff]
        %v3876 = vld [vmem:[#allocation2 + $0x10f] sm:$0xff]
        %v3877 = vld [vmem:[#allocation2 + $0x117] sm:$0xff]
        %v3878 = vld [vmem:[#allocation2 + $0x11f] sm:$0xff]
        %v3879 = vld [vmem:[#allocation2 + $0x127] sm:$0xff]
        %v3880 = vld [vmem:[#allocation2 + $0x12f] sm:$0xff]
        %v3881 = vld [vmem:[#allocation2 + $0x137] sm:$0xff]
        %v3882 = vld [vmem:[#allocation2 + $0x13f] sm:$0xff]
        %v3883 = vld [vmem:[#allocation2 + $0x147] sm:$0xff]
        %v3884 = vld [vmem:[#allocation2 + $0x14f] sm:$0xff]
        %v3885 = vld [vmem:[#allocation2 + $0x157] sm:$0xff]
        %v3886 = vld [vmem:[#allocation2 + $0x15f] sm:$0xff]
        %v3887 = vld [vmem:[#allocation2 + $0x167] sm:$0xff]
        %v3888 = vld [vmem:[#allocation2 + $0x16f] sm:$0xff]
        %v3889 = vld [vmem:[#allocation2 + $0x177] sm:$0xff]
        %v3890 = vld [vmem:[#allocation2 + $0x17f] sm:$0xff]
        %v3891 = vld [vmem:[#allocation2 + $0x187] sm:$0xff]
        %v3892 = vld [vmem:[#allocation2 + $0x18f] sm:$0xff]
        %v3893 = vld [vmem:[#allocation2 + $0x197] sm:$0xff]
        %v3894 = vld [vmem:[#allocation2 + $0x19f] sm:$0xff]
        %v3895 = vld [vmem:[#allocation2 + $0x1a7] sm:$0xff]
        %v3896 = vld [vmem:[#allocation2 + $0x1af] sm:$0xff]
        %v3897 = vld [vmem:[#allocation2 + $0x1b7] sm:$0xff]
        %v3898 = vld [vmem:[#allocation2 + $0x1bf] sm:$0xff]
        %v3899 = vld [vmem:[#allocation2 + $0x1c7] sm:$0xff]
        %v3900 = vld [vmem:[#allocation2 + $0x1cf] sm:$0xff]
        %v3901 = vld [vmem:[#allocation2 + $0x1d7] sm:$0xff]
        %v3902 = vld [vmem:[#allocation2 + $0x1df] sm:$0xff]
        %v3903 = vld [vmem:[#allocation2 + $0x1e7] sm:$0xff]
        %v3904 = vld [vmem:[#allocation2 + $0x1ef] sm:$0xff]
        %v3905 = vld [vmem:[#allocation2 + $0x1f7] sm:$0xff]
        %v3906 = vld [vmem:[#allocation2 + $0x1ff] sm:$0xff]
        %v3907 = vld [vmem:[#allocation2 + $0x207] sm:$0xff]
        %v3908 = vld [vmem:[#allocation2 + $0x20f] sm:$0xff]
        %v3909 = vld [vmem:[#allocation2 + $0x217] sm:$0xff]
        %v3910 = vld [vmem:[#allocation2 + $0x21f] sm:$0xff]
        %v3911 = vld [vmem:[#allocation2 + $0x227] sm:$0xff]
        %v3912 = vld [vmem:[#allocation2 + $0x22f] sm:$0xff]
        %v3913 = vld [vmem:[#allocation2 + $0x237] sm:$0xff]
        %v3914 = vld [vmem:[#allocation2 + $0x23f] sm:$0xff]
        %s3915 = scalar_lea.vmem [#allocation9], 192
        %v3916 = vld [vmem:[%s3915] sm:$0xff]
        %v3917 = vld [vmem:[%s3915 + $0x8] sm:$0xff]
        %v3918 = vld [vmem:[%s3915 + $0x10] sm:$0xff]
        %v3919 = vld [vmem:[%s3915 + $0x18] sm:$0xff]
        %v3921 = vsel %vm544, %v3851, 0
        %v3924 = vsel %vm544, %v3852, 0
        %v3927 = vsel %vm544, %v3853, 0
        %v3930 = vsel %vm544, %v3854, 0
        %v3933 = vsel %vm544, %v3855, 0
        %v3936 = vsel %vm544, %v3856, 0
        %v3939 = vsel %vm544, %v3857, 0
        %v3942 = vsel %vm544, %v3858, 0
        %v3945 = vsel %vm544, %v3859, 0
        %v3948 = vsel %vm544, %v3860, 0
        %v3951 = vsel %vm544, %v3861, 0
        %v3954 = vsel %vm544, %v3862, 0
        %v3957 = vsel %vm544, %v3863, 0
        %v3960 = vsel %vm544, %v3864, 0
        %v3963 = vsel %vm544, %v3865, 0
        %v3966 = vsel %vm544, %v3866, 0
        %v3969 = vsel %vm544, %v3867, 0
        %v3972 = vsel %vm544, %v3868, 0
        %v3975 = vsel %vm544, %v3869, 0
        %v3978 = vsel %vm544, %v3870, 0
        %v3981 = vsel %vm544, %v3871, 0
        %v3984 = vsel %vm544, %v3872, 0
        %v3987 = vsel %vm544, %v3873, 0
        %v3990 = vsel %vm544, %v3874, 0
        %v3993 = vsel %vm544, %v3875, 0
        %v3996 = vsel %vm544, %v3876, 0
        %v3999 = vsel %vm544, %v3877, 0
        %v4002 = vsel %vm544, %v3878, 0
        %v4005 = vsel %vm544, %v3879, 0
        %v4008 = vsel %vm544, %v3880, 0
        %v4011 = vsel %vm544, %v3881, 0
        %v4014 = vsel %vm544, %v3882, 0
        %v4017 = vsel %vm544, %v3883, 0
        %v4020 = vsel %vm544, %v3884, 0
        %v4023 = vsel %vm544, %v3885, 0
        %v4026 = vsel %vm544, %v3886, 0
        %v4029 = vsel %vm544, %v3887, 0
        %v4032 = vsel %vm544, %v3888, 0
        %v4035 = vsel %vm544, %v3889, 0
        %v4038 = vsel %vm544, %v3890, 0
        %v4041 = vsel %vm544, %v3891, 0
        %v4044 = vsel %vm544, %v3892, 0
        %v4047 = vsel %vm544, %v3893, 0
        %v4050 = vsel %vm544, %v3894, 0
        %v4053 = vsel %vm544, %v3895, 0
        %v4056 = vsel %vm544, %v3896, 0
        %v4059 = vsel %vm544, %v3897, 0
        %v4062 = vsel %vm544, %v3898, 0
        %v4065 = vsel %vm544, %v3899, 0
        %v4068 = vsel %vm544, %v3900, 0
        %v4071 = vsel %vm544, %v3901, 0
        %v4074 = vsel %vm544, %v3902, 0
        %v4077 = vsel %vm544, %v3903, 0
        %v4080 = vsel %vm544, %v3904, 0
        %v4083 = vsel %vm544, %v3905, 0
        %v4086 = vsel %vm544, %v3906, 0
        %v4089 = vsel %vm544, %v3907, 0
        %v4092 = vsel %vm544, %v3908, 0
        %v4095 = vsel %vm544, %v3909, 0
        %v4098 = vsel %vm544, %v3910, 0
        %v4101 = vsel %vm544, %v3911, 0
        %v4104 = vsel %vm544, %v3912, 0
        %v4107 = vsel %vm544, %v3913, 0
        %v4110 = vsel %vm544, %v3914, 0
        %4112 = vmatpush.msra.mxu0 0.0
        %4113 = vmatpush.msra.mxu0 0.0
        %4114 = vmatpush.msra.mxu0 0.0
        %4115 = vmatpush.msra.mxu0 0.0
        %4116 = vmatpush.msra.mxu0 0.0
        %4117 = vmatpush.msra.mxu0 0.0
        %4118 = vmatpush.msra.mxu0 0.0
        %4119 = vmatpush.msra.mxu0 0.0
        %4120 = vmatpush.msra.mxu0 0.0
        %4121 = vmatpush.msra.mxu0 0.0
        %4122 = vmatpush.msra.mxu0 0.0
        %4123 = vmatpush.msra.mxu0 0.0
        %4124 = vmatpush.msra.mxu0 %v3919
        %4125 = vmatpush.msra.mxu0 %v3918
        %4126 = vmatpush.msra.mxu0 %v3917
        %4127 = vmatpush.msra.mxu0 %v3916
        %4128 = vmatmul.f32.gmra.mxu0 %v3921
        %v4129 = vpop.f32.mrf.mxu0
        %v4130 = vadd.f32 0.0, %v4129
        %4131 = vmatmul.f32.gmra.mxu0 %v3924
        %v4132 = vpop.f32.mrf.mxu0
        %v4133 = vadd.f32 0.0, %v4132
        %4134 = vmatmul.f32.gmra.mxu0 %v3927
        %v4135 = vpop.f32.mrf.mxu0
        %v4136 = vadd.f32 0.0, %v4135
        %4137 = vmatmul.f32.gmra.mxu0 %v3930
        %v4138 = vpop.f32.mrf.mxu0
        %v4139 = vadd.f32 0.0, %v4138
        %4140 = vmatmul.f32.gmra.mxu0 %v3933
        %v4141 = vpop.f32.mrf.mxu0
        %v4142 = vadd.f32 0.0, %v4141
        %4143 = vmatmul.f32.gmra.mxu0 %v3936
        %v4144 = vpop.f32.mrf.mxu0
        %v4145 = vadd.f32 0.0, %v4144
        %4146 = vmatmul.f32.gmra.mxu0 %v3939
        %v4147 = vpop.f32.mrf.mxu0
        %v4148 = vadd.f32 0.0, %v4147
        %4149 = vmatmul.f32.gmra.mxu0 %v3942
        %v4150 = vpop.f32.mrf.mxu0
        %v4151 = vadd.f32 0.0, %v4150
        %4152 = vmatmul.f32.gmra.mxu0 %v3945
        %v4153 = vpop.f32.mrf.mxu0
        %v4154 = vadd.f32 0.0, %v4153
        %4155 = vmatmul.f32.gmra.mxu0 %v3948
        %v4156 = vpop.f32.mrf.mxu0
        %v4157 = vadd.f32 0.0, %v4156
        %4158 = vmatmul.f32.gmra.mxu0 %v3951
        %v4159 = vpop.f32.mrf.mxu0
        %v4160 = vadd.f32 0.0, %v4159
        %4161 = vmatmul.f32.gmra.mxu0 %v3954
        %v4162 = vpop.f32.mrf.mxu0
        %v4163 = vadd.f32 0.0, %v4162
        %4164 = vmatmul.f32.gmra.mxu0 %v3957
        %v4165 = vpop.f32.mrf.mxu0
        %v4166 = vadd.f32 0.0, %v4165
        %4167 = vmatmul.f32.gmra.mxu0 %v3960
        %v4168 = vpop.f32.mrf.mxu0
        %v4169 = vadd.f32 0.0, %v4168
        %4170 = vmatmul.f32.gmra.mxu0 %v3963
        %v4171 = vpop.f32.mrf.mxu0
        %v4172 = vadd.f32 0.0, %v4171
        %4173 = vmatmul.f32.gmra.mxu0 %v3966
        %v4174 = vpop.f32.mrf.mxu0
        %v4175 = vadd.f32 0.0, %v4174
        %4176 = vmatmul.f32.gmra.mxu0 %v3969
        %v4177 = vpop.f32.mrf.mxu0
        %v4178 = vadd.f32 0.0, %v4177
        %4179 = vmatmul.f32.gmra.mxu0 %v3972
        %v4180 = vpop.f32.mrf.mxu0
        %v4181 = vadd.f32 0.0, %v4180
        %4182 = vmatmul.f32.gmra.mxu0 %v3975
        %v4183 = vpop.f32.mrf.mxu0
        %v4184 = vadd.f32 0.0, %v4183
        %4185 = vmatmul.f32.gmra.mxu0 %v3978
        %v4186 = vpop.f32.mrf.mxu0
        %v4187 = vadd.f32 0.0, %v4186
        %4188 = vmatmul.f32.gmra.mxu0 %v3981
        %v4189 = vpop.f32.mrf.mxu0
        %v4190 = vadd.f32 0.0, %v4189
        %4191 = vmatmul.f32.gmra.mxu0 %v3984
        %v4192 = vpop.f32.mrf.mxu0
        %v4193 = vadd.f32 0.0, %v4192
        %4194 = vmatmul.f32.gmra.mxu0 %v3987
        %v4195 = vpop.f32.mrf.mxu0
        %v4196 = vadd.f32 0.0, %v4195
        %4197 = vmatmul.f32.gmra.mxu0 %v3990
        %v4198 = vpop.f32.mrf.mxu0
        %v4199 = vadd.f32 0.0, %v4198
        %4200 = vmatmul.f32.gmra.mxu0 %v3993
        %v4201 = vpop.f32.mrf.mxu0
        %v4202 = vadd.f32 0.0, %v4201
        %4203 = vmatmul.f32.gmra.mxu0 %v3996
        %v4204 = vpop.f32.mrf.mxu0
        %v4205 = vadd.f32 0.0, %v4204
        %4206 = vmatmul.f32.gmra.mxu0 %v3999
        %v4207 = vpop.f32.mrf.mxu0
        %v4208 = vadd.f32 0.0, %v4207
        %4209 = vmatmul.f32.gmra.mxu0 %v4002
        %v4210 = vpop.f32.mrf.mxu0
        %v4211 = vadd.f32 0.0, %v4210
        %4212 = vmatmul.f32.gmra.mxu0 %v4005
        %v4213 = vpop.f32.mrf.mxu0
        %v4214 = vadd.f32 0.0, %v4213
        %4215 = vmatmul.f32.gmra.mxu0 %v4008
        %v4216 = vpop.f32.mrf.mxu0
        %v4217 = vadd.f32 0.0, %v4216
        %4218 = vmatmul.f32.gmra.mxu0 %v4011
        %v4219 = vpop.f32.mrf.mxu0
        %v4220 = vadd.f32 0.0, %v4219
        %4221 = vmatmul.f32.gmra.mxu0 %v4014
        %v4222 = vpop.f32.mrf.mxu0
        %v4223 = vadd.f32 0.0, %v4222
        %4224 = vmatmul.f32.gmra.mxu0 %v4017
        %v4225 = vpop.f32.mrf.mxu0
        %v4226 = vadd.f32 0.0, %v4225
        %4227 = vmatmul.f32.gmra.mxu0 %v4020
        %v4228 = vpop.f32.mrf.mxu0
        %v4229 = vadd.f32 0.0, %v4228
        %4230 = vmatmul.f32.gmra.mxu0 %v4023
        %v4231 = vpop.f32.mrf.mxu0
        %v4232 = vadd.f32 0.0, %v4231
        %4233 = vmatmul.f32.gmra.mxu0 %v4026
        %v4234 = vpop.f32.mrf.mxu0
        %v4235 = vadd.f32 0.0, %v4234
        %4236 = vmatmul.f32.gmra.mxu0 %v4029
        %v4237 = vpop.f32.mrf.mxu0
        %v4238 = vadd.f32 0.0, %v4237
        %4239 = vmatmul.f32.gmra.mxu0 %v4032
        %v4240 = vpop.f32.mrf.mxu0
        %v4241 = vadd.f32 0.0, %v4240
        %4242 = vmatmul.f32.gmra.mxu0 %v4035
        %v4243 = vpop.f32.mrf.mxu0
        %v4244 = vadd.f32 0.0, %v4243
        %4245 = vmatmul.f32.gmra.mxu0 %v4038
        %v4246 = vpop.f32.mrf.mxu0
        %v4247 = vadd.f32 0.0, %v4246
        %4248 = vmatmul.f32.gmra.mxu0 %v4041
        %v4249 = vpop.f32.mrf.mxu0
        %v4250 = vadd.f32 0.0, %v4249
        %4251 = vmatmul.f32.gmra.mxu0 %v4044
        %v4252 = vpop.f32.mrf.mxu0
        %v4253 = vadd.f32 0.0, %v4252
        %4254 = vmatmul.f32.gmra.mxu0 %v4047
        %v4255 = vpop.f32.mrf.mxu0
        %v4256 = vadd.f32 0.0, %v4255
        %4257 = vmatmul.f32.gmra.mxu0 %v4050
        %v4258 = vpop.f32.mrf.mxu0
        %v4259 = vadd.f32 0.0, %v4258
        %4260 = vmatmul.f32.gmra.mxu0 %v4053
        %v4261 = vpop.f32.mrf.mxu0
        %v4262 = vadd.f32 0.0, %v4261
        %4263 = vmatmul.f32.gmra.mxu0 %v4056
        %v4264 = vpop.f32.mrf.mxu0
        %v4265 = vadd.f32 0.0, %v4264
        %4266 = vmatmul.f32.gmra.mxu0 %v4059
        %v4267 = vpop.f32.mrf.mxu0
        %v4268 = vadd.f32 0.0, %v4267
        %4269 = vmatmul.f32.gmra.mxu0 %v4062
        %v4270 = vpop.f32.mrf.mxu0
        %v4271 = vadd.f32 0.0, %v4270
        %4272 = vmatmul.f32.gmra.mxu0 %v4065
        %v4273 = vpop.f32.mrf.mxu0
        %v4274 = vadd.f32 0.0, %v4273
        %4275 = vmatmul.f32.gmra.mxu0 %v4068
        %v4276 = vpop.f32.mrf.mxu0
        %v4277 = vadd.f32 0.0, %v4276
        %4278 = vmatmul.f32.gmra.mxu0 %v4071
        %v4279 = vpop.f32.mrf.mxu0
        %v4280 = vadd.f32 0.0, %v4279
        %4281 = vmatmul.f32.gmra.mxu0 %v4074
        %v4282 = vpop.f32.mrf.mxu0
        %v4283 = vadd.f32 0.0, %v4282
        %4284 = vmatmul.f32.gmra.mxu0 %v4077
        %v4285 = vpop.f32.mrf.mxu0
        %v4286 = vadd.f32 0.0, %v4285
        %4287 = vmatmul.f32.gmra.mxu0 %v4080
        %v4288 = vpop.f32.mrf.mxu0
        %v4289 = vadd.f32 0.0, %v4288
        %4290 = vmatmul.f32.gmra.mxu0 %v4083
        %v4291 = vpop.f32.mrf.mxu0
        %v4292 = vadd.f32 0.0, %v4291
        %4293 = vmatmul.f32.gmra.mxu0 %v4086
        %v4294 = vpop.f32.mrf.mxu0
        %v4295 = vadd.f32 0.0, %v4294
        %4296 = vmatmul.f32.gmra.mxu0 %v4089
        %v4297 = vpop.f32.mrf.mxu0
        %v4298 = vadd.f32 0.0, %v4297
        %4299 = vmatmul.f32.gmra.mxu0 %v4092
        %v4300 = vpop.f32.mrf.mxu0
        %v4301 = vadd.f32 0.0, %v4300
        %4302 = vmatmul.f32.gmra.mxu0 %v4095
        %v4303 = vpop.f32.mrf.mxu0
        %v4304 = vadd.f32 0.0, %v4303
        %4305 = vmatmul.f32.gmra.mxu0 %v4098
        %v4306 = vpop.f32.mrf.mxu0
        %v4307 = vadd.f32 0.0, %v4306
        %4308 = vmatmul.f32.gmra.mxu0 %v4101
        %v4309 = vpop.f32.mrf.mxu0
        %v4310 = vadd.f32 0.0, %v4309
        %4311 = vmatmul.f32.gmra.mxu0 %v4104
        %v4312 = vpop.f32.mrf.mxu0
        %v4313 = vadd.f32 0.0, %v4312
        %4314 = vmatmul.f32.gmra.mxu0 %v4107
        %v4315 = vpop.f32.mrf.mxu0
        %v4316 = vadd.f32 0.0, %v4315
        %4317 = vmatmul.f32.gmra.mxu0 %v4110
        %v4318 = vpop.f32.mrf.mxu0
        %v4319 = vadd.f32 0.0, %v4318
        %4320 = vdwg.mxu0
        %v4321 = vadd.f32 %v3787, %v4130
        %v4322 = vadd.f32 %v3788, %v4133
        %v4323 = vadd.f32 %v3789, %v4136
        %v4324 = vadd.f32 %v3790, %v4139
        %v4325 = vadd.f32 %v3791, %v4142
        %v4326 = vadd.f32 %v3792, %v4145
        %v4327 = vadd.f32 %v3793, %v4148
        %v4328 = vadd.f32 %v3794, %v4151
        %v4329 = vadd.f32 %v3795, %v4154
        %v4330 = vadd.f32 %v3796, %v4157
        %v4331 = vadd.f32 %v3797, %v4160
        %v4332 = vadd.f32 %v3798, %v4163
        %v4333 = vadd.f32 %v3799, %v4166
        %v4334 = vadd.f32 %v3800, %v4169
        %v4335 = vadd.f32 %v3801, %v4172
        %v4336 = vadd.f32 %v3802, %v4175
        %v4337 = vadd.f32 %v3803, %v4178
        %v4338 = vadd.f32 %v3804, %v4181
        %v4339 = vadd.f32 %v3805, %v4184
        %v4340 = vadd.f32 %v3806, %v4187
        %v4341 = vadd.f32 %v3807, %v4190
        %v4342 = vadd.f32 %v3808, %v4193
        %v4343 = vadd.f32 %v3809, %v4196
        %v4344 = vadd.f32 %v3810, %v4199
        %v4345 = vadd.f32 %v3811, %v4202
        %v4346 = vadd.f32 %v3812, %v4205
        %v4347 = vadd.f32 %v3813, %v4208
        %v4348 = vadd.f32 %v3814, %v4211
        %v4349 = vadd.f32 %v3815, %v4214
        %v4350 = vadd.f32 %v3816, %v4217
        %v4351 = vadd.f32 %v3817, %v4220
        %v4352 = vadd.f32 %v3818, %v4223
        %v4353 = vadd.f32 %v3819, %v4226
        %v4354 = vadd.f32 %v3820, %v4229
        %v4355 = vadd.f32 %v3821, %v4232
        %v4356 = vadd.f32 %v3822, %v4235
        %v4357 = vadd.f32 %v3823, %v4238
        %v4358 = vadd.f32 %v3824, %v4241
        %v4359 = vadd.f32 %v3825, %v4244
        %v4360 = vadd.f32 %v3826, %v4247
        %v4361 = vadd.f32 %v3827, %v4250
        %v4362 = vadd.f32 %v3828, %v4253
        %v4363 = vadd.f32 %v3829, %v4256
        %v4364 = vadd.f32 %v3830, %v4259
        %v4365 = vadd.f32 %v3831, %v4262
        %v4366 = vadd.f32 %v3832, %v4265
        %v4367 = vadd.f32 %v3833, %v4268
        %v4368 = vadd.f32 %v3834, %v4271
        %v4369 = vadd.f32 %v3835, %v4274
        %v4370 = vadd.f32 %v3836, %v4277
        %v4371 = vadd.f32 %v3837, %v4280
        %v4372 = vadd.f32 %v3838, %v4283
        %v4373 = vadd.f32 %v3839, %v4286
        %v4374 = vadd.f32 %v3840, %v4289
        %v4375 = vadd.f32 %v3841, %v4292
        %v4376 = vadd.f32 %v3842, %v4295
        %v4377 = vadd.f32 %v3843, %v4298
        %v4378 = vadd.f32 %v3844, %v4301
        %v4379 = vadd.f32 %v3845, %v4304
        %v4380 = vadd.f32 %v3846, %v4307
        %v4381 = vadd.f32 %v3847, %v4310
        %v4382 = vadd.f32 %v3848, %v4313
        %v4383 = vadd.f32 %v3849, %v4316
        %v4384 = vadd.f32 %v3850, %v4319
        %v4385 = vld [vmem:[#allocation2 + $0x48] sm:$0xff]
        %v4386 = vld [vmem:[#allocation2 + $0x50] sm:$0xff]
        %v4387 = vld [vmem:[#allocation2 + $0x58] sm:$0xff]
        %v4388 = vld [vmem:[#allocation2 + $0x60] sm:$0xff]
        %v4389 = vld [vmem:[#allocation2 + $0x68] sm:$0xff]
        %v4390 = vld [vmem:[#allocation2 + $0x70] sm:$0xff]
        %v4391 = vld [vmem:[#allocation2 + $0x78] sm:$0xff]
        %v4392 = vld [vmem:[#allocation2 + $0x80] sm:$0xff]
        %v4393 = vld [vmem:[#allocation2 + $0x88] sm:$0xff]
        %v4394 = vld [vmem:[#allocation2 + $0x90] sm:$0xff]
        %v4395 = vld [vmem:[#allocation2 + $0x98] sm:$0xff]
        %v4396 = vld [vmem:[#allocation2 + $0xa0] sm:$0xff]
        %v4397 = vld [vmem:[#allocation2 + $0xa8] sm:$0xff]
        %v4398 = vld [vmem:[#allocation2 + $0xb0] sm:$0xff]
        %v4399 = vld [vmem:[#allocation2 + $0xb8] sm:$0xff]
        %v4400 = vld [vmem:[#allocation2 + $0xc0] sm:$0xff]
        %v4401 = vld [vmem:[#allocation2 + $0xc8] sm:$0xff]
        %v4402 = vld [vmem:[#allocation2 + $0xd0] sm:$0xff]
        %v4403 = vld [vmem:[#allocation2 + $0xd8] sm:$0xff]
        %v4404 = vld [vmem:[#allocation2 + $0xe0] sm:$0xff]
        %v4405 = vld [vmem:[#allocation2 + $0xe8] sm:$0xff]
        %v4406 = vld [vmem:[#allocation2 + $0xf0] sm:$0xff]
        %v4407 = vld [vmem:[#allocation2 + $0xf8] sm:$0xff]
        %v4408 = vld [vmem:[#allocation2 + $0x100] sm:$0xff]
        %v4409 = vld [vmem:[#allocation2 + $0x108] sm:$0xff]
        %v4410 = vld [vmem:[#allocation2 + $0x110] sm:$0xff]
        %v4411 = vld [vmem:[#allocation2 + $0x118] sm:$0xff]
        %v4412 = vld [vmem:[#allocation2 + $0x120] sm:$0xff]
        %v4413 = vld [vmem:[#allocation2 + $0x128] sm:$0xff]
        %v4414 = vld [vmem:[#allocation2 + $0x130] sm:$0xff]
        %v4415 = vld [vmem:[#allocation2 + $0x138] sm:$0xff]
        %v4416 = vld [vmem:[#allocation2 + $0x140] sm:$0xff]
        %v4417 = vld [vmem:[#allocation2 + $0x148] sm:$0xff]
        %v4418 = vld [vmem:[#allocation2 + $0x150] sm:$0xff]
        %v4419 = vld [vmem:[#allocation2 + $0x158] sm:$0xff]
        %v4420 = vld [vmem:[#allocation2 + $0x160] sm:$0xff]
        %v4421 = vld [vmem:[#allocation2 + $0x168] sm:$0xff]
        %v4422 = vld [vmem:[#allocation2 + $0x170] sm:$0xff]
        %v4423 = vld [vmem:[#allocation2 + $0x178] sm:$0xff]
        %v4424 = vld [vmem:[#allocation2 + $0x180] sm:$0xff]
        %v4425 = vld [vmem:[#allocation2 + $0x188] sm:$0xff]
        %v4426 = vld [vmem:[#allocation2 + $0x190] sm:$0xff]
        %v4427 = vld [vmem:[#allocation2 + $0x198] sm:$0xff]
        %v4428 = vld [vmem:[#allocation2 + $0x1a0] sm:$0xff]
        %v4429 = vld [vmem:[#allocation2 + $0x1a8] sm:$0xff]
        %v4430 = vld [vmem:[#allocation2 + $0x1b0] sm:$0xff]
        %v4431 = vld [vmem:[#allocation2 + $0x1b8] sm:$0xff]
        %v4432 = vld [vmem:[#allocation2 + $0x1c0] sm:$0xff]
        %v4433 = vld [vmem:[#allocation2 + $0x1c8] sm:$0xff]
        %v4434 = vld [vmem:[#allocation2 + $0x1d0] sm:$0xff]
        %v4435 = vld [vmem:[#allocation2 + $0x1d8] sm:$0xff]
        %v4436 = vld [vmem:[#allocation2 + $0x1e0] sm:$0xff]
        %v4437 = vld [vmem:[#allocation2 + $0x1e8] sm:$0xff]
        %v4438 = vld [vmem:[#allocation2 + $0x1f0] sm:$0xff]
        %v4439 = vld [vmem:[#allocation2 + $0x1f8] sm:$0xff]
        %v4440 = vld [vmem:[#allocation2 + $0x200] sm:$0xff]
        %v4441 = vld [vmem:[#allocation2 + $0x208] sm:$0xff]
        %v4442 = vld [vmem:[#allocation2 + $0x210] sm:$0xff]
        %v4443 = vld [vmem:[#allocation2 + $0x218] sm:$0xff]
        %v4444 = vld [vmem:[#allocation2 + $0x220] sm:$0xff]
        %v4445 = vld [vmem:[#allocation2 + $0x228] sm:$0xff]
        %v4446 = vld [vmem:[#allocation2 + $0x230] sm:$0xff]
        %v4447 = vld [vmem:[#allocation2 + $0x238] sm:$0xff]
        %v4448 = vld [vmem:[#allocation2 + $0x240] sm:$0xff]
        %s4449 = scalar_lea.vmem [#allocation9], 224
        %v4450 = vld [vmem:[%s4449] sm:$0xff]
        %v4451 = vld [vmem:[%s4449 + $0x8] sm:$0xff]
        %v4452 = vld [vmem:[%s4449 + $0x10] sm:$0xff]
        %v4453 = vld [vmem:[%s4449 + $0x18] sm:$0xff]
        %v4455 = vsel %vm544, %v4385, 0
        %v4458 = vsel %vm544, %v4386, 0
        %v4461 = vsel %vm544, %v4387, 0
        %v4464 = vsel %vm544, %v4388, 0
        %v4467 = vsel %vm544, %v4389, 0
        %v4470 = vsel %vm544, %v4390, 0
        %v4473 = vsel %vm544, %v4391, 0
        %v4476 = vsel %vm544, %v4392, 0
        %v4479 = vsel %vm544, %v4393, 0
        %v4482 = vsel %vm544, %v4394, 0
        %v4485 = vsel %vm544, %v4395, 0
        %v4488 = vsel %vm544, %v4396, 0
        %v4491 = vsel %vm544, %v4397, 0
        %v4494 = vsel %vm544, %v4398, 0
        %v4497 = vsel %vm544, %v4399, 0
        %v4500 = vsel %vm544, %v4400, 0
        %v4503 = vsel %vm544, %v4401, 0
        %v4506 = vsel %vm544, %v4402, 0
        %v4509 = vsel %vm544, %v4403, 0
        %v4512 = vsel %vm544, %v4404, 0
        %v4515 = vsel %vm544, %v4405, 0
        %v4518 = vsel %vm544, %v4406, 0
        %v4521 = vsel %vm544, %v4407, 0
        %v4524 = vsel %vm544, %v4408, 0
        %v4527 = vsel %vm544, %v4409, 0
        %v4530 = vsel %vm544, %v4410, 0
        %v4533 = vsel %vm544, %v4411, 0
        %v4536 = vsel %vm544, %v4412, 0
        %v4539 = vsel %vm544, %v4413, 0
        %v4542 = vsel %vm544, %v4414, 0
        %v4545 = vsel %vm544, %v4415, 0
        %v4548 = vsel %vm544, %v4416, 0
        %v4551 = vsel %vm544, %v4417, 0
        %v4554 = vsel %vm544, %v4418, 0
        %v4557 = vsel %vm544, %v4419, 0
        %v4560 = vsel %vm544, %v4420, 0
        %v4563 = vsel %vm544, %v4421, 0
        %v4566 = vsel %vm544, %v4422, 0
        %v4569 = vsel %vm544, %v4423, 0
        %v4572 = vsel %vm544, %v4424, 0
        %v4575 = vsel %vm544, %v4425, 0
        %v4578 = vsel %vm544, %v4426, 0
        %v4581 = vsel %vm544, %v4427, 0
        %v4584 = vsel %vm544, %v4428, 0
        %v4587 = vsel %vm544, %v4429, 0
        %v4590 = vsel %vm544, %v4430, 0
        %v4593 = vsel %vm544, %v4431, 0
        %v4596 = vsel %vm544, %v4432, 0
        %v4599 = vsel %vm544, %v4433, 0
        %v4602 = vsel %vm544, %v4434, 0
        %v4605 = vsel %vm544, %v4435, 0
        %v4608 = vsel %vm544, %v4436, 0
        %v4611 = vsel %vm544, %v4437, 0
        %v4614 = vsel %vm544, %v4438, 0
        %v4617 = vsel %vm544, %v4439, 0
        %v4620 = vsel %vm544, %v4440, 0
        %v4623 = vsel %vm544, %v4441, 0
        %v4626 = vsel %vm544, %v4442, 0
        %v4629 = vsel %vm544, %v4443, 0
        %v4632 = vsel %vm544, %v4444, 0
        %v4635 = vsel %vm544, %v4445, 0
        %v4638 = vsel %vm544, %v4446, 0
        %v4641 = vsel %vm544, %v4447, 0
        %v4644 = vsel %vm544, %v4448, 0
        %4646 = vmatpush.msra.mxu0 0.0
        %4647 = vmatpush.msra.mxu0 0.0
        %4648 = vmatpush.msra.mxu0 0.0
        %4649 = vmatpush.msra.mxu0 0.0
        %4650 = vmatpush.msra.mxu0 0.0
        %4651 = vmatpush.msra.mxu0 0.0
        %4652 = vmatpush.msra.mxu0 0.0
        %4653 = vmatpush.msra.mxu0 0.0
        %4654 = vmatpush.msra.mxu0 0.0
        %4655 = vmatpush.msra.mxu0 0.0
        %4656 = vmatpush.msra.mxu0 0.0
        %4657 = vmatpush.msra.mxu0 0.0
        %4658 = vmatpush.msra.mxu0 %v4453
        %4659 = vmatpush.msra.mxu0 %v4452
        %4660 = vmatpush.msra.mxu0 %v4451
        %4661 = vmatpush.msra.mxu0 %v4450
        %4662 = vmatmul.f32.gmra.mxu0 %v4455
        %v4663 = vpop.f32.mrf.mxu0
        %v4664 = vadd.f32 0.0, %v4663
        %4665 = vmatmul.f32.gmra.mxu0 %v4458
        %v4666 = vpop.f32.mrf.mxu0
        %v4667 = vadd.f32 0.0, %v4666
        %4668 = vmatmul.f32.gmra.mxu0 %v4461
        %v4669 = vpop.f32.mrf.mxu0
        %v4670 = vadd.f32 0.0, %v4669
        %4671 = vmatmul.f32.gmra.mxu0 %v4464
        %v4672 = vpop.f32.mrf.mxu0
        %v4673 = vadd.f32 0.0, %v4672
        %4674 = vmatmul.f32.gmra.mxu0 %v4467
        %v4675 = vpop.f32.mrf.mxu0
        %v4676 = vadd.f32 0.0, %v4675
        %4677 = vmatmul.f32.gmra.mxu0 %v4470
        %v4678 = vpop.f32.mrf.mxu0
        %v4679 = vadd.f32 0.0, %v4678
        %4680 = vmatmul.f32.gmra.mxu0 %v4473
        %v4681 = vpop.f32.mrf.mxu0
        %v4682 = vadd.f32 0.0, %v4681
        %4683 = vmatmul.f32.gmra.mxu0 %v4476
        %v4684 = vpop.f32.mrf.mxu0
        %v4685 = vadd.f32 0.0, %v4684
        %4686 = vmatmul.f32.gmra.mxu0 %v4479
        %v4687 = vpop.f32.mrf.mxu0
        %v4688 = vadd.f32 0.0, %v4687
        %4689 = vmatmul.f32.gmra.mxu0 %v4482
        %v4690 = vpop.f32.mrf.mxu0
        %v4691 = vadd.f32 0.0, %v4690
        %4692 = vmatmul.f32.gmra.mxu0 %v4485
        %v4693 = vpop.f32.mrf.mxu0
        %v4694 = vadd.f32 0.0, %v4693
        %4695 = vmatmul.f32.gmra.mxu0 %v4488
        %v4696 = vpop.f32.mrf.mxu0
        %v4697 = vadd.f32 0.0, %v4696
        %4698 = vmatmul.f32.gmra.mxu0 %v4491
        %v4699 = vpop.f32.mrf.mxu0
        %v4700 = vadd.f32 0.0, %v4699
        %4701 = vmatmul.f32.gmra.mxu0 %v4494
        %v4702 = vpop.f32.mrf.mxu0
        %v4703 = vadd.f32 0.0, %v4702
        %4704 = vmatmul.f32.gmra.mxu0 %v4497
        %v4705 = vpop.f32.mrf.mxu0
        %v4706 = vadd.f32 0.0, %v4705
        %4707 = vmatmul.f32.gmra.mxu0 %v4500
        %v4708 = vpop.f32.mrf.mxu0
        %v4709 = vadd.f32 0.0, %v4708
        %4710 = vmatmul.f32.gmra.mxu0 %v4503
        %v4711 = vpop.f32.mrf.mxu0
        %v4712 = vadd.f32 0.0, %v4711
        %4713 = vmatmul.f32.gmra.mxu0 %v4506
        %v4714 = vpop.f32.mrf.mxu0
        %v4715 = vadd.f32 0.0, %v4714
        %4716 = vmatmul.f32.gmra.mxu0 %v4509
        %v4717 = vpop.f32.mrf.mxu0
        %v4718 = vadd.f32 0.0, %v4717
        %4719 = vmatmul.f32.gmra.mxu0 %v4512
        %v4720 = vpop.f32.mrf.mxu0
        %v4721 = vadd.f32 0.0, %v4720
        %4722 = vmatmul.f32.gmra.mxu0 %v4515
        %v4723 = vpop.f32.mrf.mxu0
        %v4724 = vadd.f32 0.0, %v4723
        %4725 = vmatmul.f32.gmra.mxu0 %v4518
        %v4726 = vpop.f32.mrf.mxu0
        %v4727 = vadd.f32 0.0, %v4726
        %4728 = vmatmul.f32.gmra.mxu0 %v4521
        %v4729 = vpop.f32.mrf.mxu0
        %v4730 = vadd.f32 0.0, %v4729
        %4731 = vmatmul.f32.gmra.mxu0 %v4524
        %v4732 = vpop.f32.mrf.mxu0
        %v4733 = vadd.f32 0.0, %v4732
        %4734 = vmatmul.f32.gmra.mxu0 %v4527
        %v4735 = vpop.f32.mrf.mxu0
        %v4736 = vadd.f32 0.0, %v4735
        %4737 = vmatmul.f32.gmra.mxu0 %v4530
        %v4738 = vpop.f32.mrf.mxu0
        %v4739 = vadd.f32 0.0, %v4738
        %4740 = vmatmul.f32.gmra.mxu0 %v4533
        %v4741 = vpop.f32.mrf.mxu0
        %v4742 = vadd.f32 0.0, %v4741
        %4743 = vmatmul.f32.gmra.mxu0 %v4536
        %v4744 = vpop.f32.mrf.mxu0
        %v4745 = vadd.f32 0.0, %v4744
        %4746 = vmatmul.f32.gmra.mxu0 %v4539
        %v4747 = vpop.f32.mrf.mxu0
        %v4748 = vadd.f32 0.0, %v4747
        %4749 = vmatmul.f32.gmra.mxu0 %v4542
        %v4750 = vpop.f32.mrf.mxu0
        %v4751 = vadd.f32 0.0, %v4750
        %4752 = vmatmul.f32.gmra.mxu0 %v4545
        %v4753 = vpop.f32.mrf.mxu0
        %v4754 = vadd.f32 0.0, %v4753
        %4755 = vmatmul.f32.gmra.mxu0 %v4548
        %v4756 = vpop.f32.mrf.mxu0
        %v4757 = vadd.f32 0.0, %v4756
        %4758 = vmatmul.f32.gmra.mxu0 %v4551
        %v4759 = vpop.f32.mrf.mxu0
        %v4760 = vadd.f32 0.0, %v4759
        %4761 = vmatmul.f32.gmra.mxu0 %v4554
        %v4762 = vpop.f32.mrf.mxu0
        %v4763 = vadd.f32 0.0, %v4762
        %4764 = vmatmul.f32.gmra.mxu0 %v4557
        %v4765 = vpop.f32.mrf.mxu0
        %v4766 = vadd.f32 0.0, %v4765
        %4767 = vmatmul.f32.gmra.mxu0 %v4560
        %v4768 = vpop.f32.mrf.mxu0
        %v4769 = vadd.f32 0.0, %v4768
        %4770 = vmatmul.f32.gmra.mxu0 %v4563
        %v4771 = vpop.f32.mrf.mxu0
        %v4772 = vadd.f32 0.0, %v4771
        %4773 = vmatmul.f32.gmra.mxu0 %v4566
        %v4774 = vpop.f32.mrf.mxu0
        %v4775 = vadd.f32 0.0, %v4774
        %4776 = vmatmul.f32.gmra.mxu0 %v4569
        %v4777 = vpop.f32.mrf.mxu0
        %v4778 = vadd.f32 0.0, %v4777
        %4779 = vmatmul.f32.gmra.mxu0 %v4572
        %v4780 = vpop.f32.mrf.mxu0
        %v4781 = vadd.f32 0.0, %v4780
        %4782 = vmatmul.f32.gmra.mxu0 %v4575
        %v4783 = vpop.f32.mrf.mxu0
        %v4784 = vadd.f32 0.0, %v4783
        %4785 = vmatmul.f32.gmra.mxu0 %v4578
        %v4786 = vpop.f32.mrf.mxu0
        %v4787 = vadd.f32 0.0, %v4786
        %4788 = vmatmul.f32.gmra.mxu0 %v4581
        %v4789 = vpop.f32.mrf.mxu0
        %v4790 = vadd.f32 0.0, %v4789
        %4791 = vmatmul.f32.gmra.mxu0 %v4584
        %v4792 = vpop.f32.mrf.mxu0
        %v4793 = vadd.f32 0.0, %v4792
        %4794 = vmatmul.f32.gmra.mxu0 %v4587
        %v4795 = vpop.f32.mrf.mxu0
        %v4796 = vadd.f32 0.0, %v4795
        %4797 = vmatmul.f32.gmra.mxu0 %v4590
        %v4798 = vpop.f32.mrf.mxu0
        %v4799 = vadd.f32 0.0, %v4798
        %4800 = vmatmul.f32.gmra.mxu0 %v4593
        %v4801 = vpop.f32.mrf.mxu0
        %v4802 = vadd.f32 0.0, %v4801
        %4803 = vmatmul.f32.gmra.mxu0 %v4596
        %v4804 = vpop.f32.mrf.mxu0
        %v4805 = vadd.f32 0.0, %v4804
        %4806 = vmatmul.f32.gmra.mxu0 %v4599
        %v4807 = vpop.f32.mrf.mxu0
        %v4808 = vadd.f32 0.0, %v4807
        %4809 = vmatmul.f32.gmra.mxu0 %v4602
        %v4810 = vpop.f32.mrf.mxu0
        %v4811 = vadd.f32 0.0, %v4810
        %4812 = vmatmul.f32.gmra.mxu0 %v4605
        %v4813 = vpop.f32.mrf.mxu0
        %v4814 = vadd.f32 0.0, %v4813
        %4815 = vmatmul.f32.gmra.mxu0 %v4608
        %v4816 = vpop.f32.mrf.mxu0
        %v4817 = vadd.f32 0.0, %v4816
        %4818 = vmatmul.f32.gmra.mxu0 %v4611
        %v4819 = vpop.f32.mrf.mxu0
        %v4820 = vadd.f32 0.0, %v4819
        %4821 = vmatmul.f32.gmra.mxu0 %v4614
        %v4822 = vpop.f32.mrf.mxu0
        %v4823 = vadd.f32 0.0, %v4822
        %4824 = vmatmul.f32.gmra.mxu0 %v4617
        %v4825 = vpop.f32.mrf.mxu0
        %v4826 = vadd.f32 0.0, %v4825
        %4827 = vmatmul.f32.gmra.mxu0 %v4620
        %v4828 = vpop.f32.mrf.mxu0
        %v4829 = vadd.f32 0.0, %v4828
        %4830 = vmatmul.f32.gmra.mxu0 %v4623
        %v4831 = vpop.f32.mrf.mxu0
        %v4832 = vadd.f32 0.0, %v4831
        %4833 = vmatmul.f32.gmra.mxu0 %v4626
        %v4834 = vpop.f32.mrf.mxu0
        %v4835 = vadd.f32 0.0, %v4834
        %4836 = vmatmul.f32.gmra.mxu0 %v4629
        %v4837 = vpop.f32.mrf.mxu0
        %v4838 = vadd.f32 0.0, %v4837
        %4839 = vmatmul.f32.gmra.mxu0 %v4632
        %v4840 = vpop.f32.mrf.mxu0
        %v4841 = vadd.f32 0.0, %v4840
        %4842 = vmatmul.f32.gmra.mxu0 %v4635
        %v4843 = vpop.f32.mrf.mxu0
        %v4844 = vadd.f32 0.0, %v4843
        %4845 = vmatmul.f32.gmra.mxu0 %v4638
        %v4846 = vpop.f32.mrf.mxu0
        %v4847 = vadd.f32 0.0, %v4846
        %4848 = vmatmul.f32.gmra.mxu0 %v4641
        %v4849 = vpop.f32.mrf.mxu0
        %v4850 = vadd.f32 0.0, %v4849
        %4851 = vmatmul.f32.gmra.mxu0 %v4644
        %v4852 = vpop.f32.mrf.mxu0
        %v4853 = vadd.f32 0.0, %v4852
        %4854 = vdwg.mxu0
        %v4855 = vadd.f32 %v4321, %v4664
        %v4856 = vadd.f32 %v4322, %v4667
        %v4857 = vadd.f32 %v4323, %v4670
        %v4858 = vadd.f32 %v4324, %v4673
        %v4859 = vadd.f32 %v4325, %v4676
        %v4860 = vadd.f32 %v4326, %v4679
        %v4861 = vadd.f32 %v4327, %v4682
        %v4862 = vadd.f32 %v4328, %v4685
        %v4863 = vadd.f32 %v4329, %v4688
        %v4864 = vadd.f32 %v4330, %v4691
        %v4865 = vadd.f32 %v4331, %v4694
        %v4866 = vadd.f32 %v4332, %v4697
        %v4867 = vadd.f32 %v4333, %v4700
        %v4868 = vadd.f32 %v4334, %v4703
        %v4869 = vadd.f32 %v4335, %v4706
        %v4870 = vadd.f32 %v4336, %v4709
        %v4871 = vadd.f32 %v4337, %v4712
        %v4872 = vadd.f32 %v4338, %v4715
        %v4873 = vadd.f32 %v4339, %v4718
        %v4874 = vadd.f32 %v4340, %v4721
        %v4875 = vadd.f32 %v4341, %v4724
        %v4876 = vadd.f32 %v4342, %v4727
        %v4877 = vadd.f32 %v4343, %v4730
        %v4878 = vadd.f32 %v4344, %v4733
        %v4879 = vadd.f32 %v4345, %v4736
        %v4880 = vadd.f32 %v4346, %v4739
        %v4881 = vadd.f32 %v4347, %v4742
        %v4882 = vadd.f32 %v4348, %v4745
        %v4883 = vadd.f32 %v4349, %v4748
        %v4884 = vadd.f32 %v4350, %v4751
        %v4885 = vadd.f32 %v4351, %v4754
        %v4886 = vadd.f32 %v4352, %v4757
        %v4887 = vadd.f32 %v4353, %v4760
        %v4888 = vadd.f32 %v4354, %v4763
        %v4889 = vadd.f32 %v4355, %v4766
        %v4890 = vadd.f32 %v4356, %v4769
        %v4891 = vadd.f32 %v4357, %v4772
        %v4892 = vadd.f32 %v4358, %v4775
        %v4893 = vadd.f32 %v4359, %v4778
        %v4894 = vadd.f32 %v4360, %v4781
        %v4895 = vadd.f32 %v4361, %v4784
        %v4896 = vadd.f32 %v4362, %v4787
        %v4897 = vadd.f32 %v4363, %v4790
        %v4898 = vadd.f32 %v4364, %v4793
        %v4899 = vadd.f32 %v4365, %v4796
        %v4900 = vadd.f32 %v4366, %v4799
        %v4901 = vadd.f32 %v4367, %v4802
        %v4902 = vadd.f32 %v4368, %v4805
        %v4903 = vadd.f32 %v4369, %v4808
        %v4904 = vadd.f32 %v4370, %v4811
        %v4905 = vadd.f32 %v4371, %v4814
        %v4906 = vadd.f32 %v4372, %v4817
        %v4907 = vadd.f32 %v4373, %v4820
        %v4908 = vadd.f32 %v4374, %v4823
        %v4909 = vadd.f32 %v4375, %v4826
        %v4910 = vadd.f32 %v4376, %v4829
        %v4911 = vadd.f32 %v4377, %v4832
        %v4912 = vadd.f32 %v4378, %v4835
        %v4913 = vadd.f32 %v4379, %v4838
        %v4914 = vadd.f32 %v4380, %v4841
        %v4915 = vadd.f32 %v4381, %v4844
        %v4916 = vadd.f32 %v4382, %v4847
        %v4917 = vadd.f32 %v4383, %v4850
        %v4918 = vadd.f32 %v4384, %v4853
        %v4919 = vld [vmem:[#allocation2 + $0x49] sm:$0xff]
        %v4920 = vld [vmem:[#allocation2 + $0x51] sm:$0xff]
        %v4921 = vld [vmem:[#allocation2 + $0x59] sm:$0xff]
        %v4922 = vld [vmem:[#allocation2 + $0x61] sm:$0xff]
        %v4923 = vld [vmem:[#allocation2 + $0x69] sm:$0xff]
        %v4924 = vld [vmem:[#allocation2 + $0x71] sm:$0xff]
        %v4925 = vld [vmem:[#allocation2 + $0x79] sm:$0xff]
        %v4926 = vld [vmem:[#allocation2 + $0x81] sm:$0xff]
        %v4927 = vld [vmem:[#allocation2 + $0x89] sm:$0xff]
        %v4928 = vld [vmem:[#allocation2 + $0x91] sm:$0xff]
        %v4929 = vld [vmem:[#allocation2 + $0x99] sm:$0xff]
        %v4930 = vld [vmem:[#allocation2 + $0xa1] sm:$0xff]
        %v4931 = vld [vmem:[#allocation2 + $0xa9] sm:$0xff]
        %v4932 = vld [vmem:[#allocation2 + $0xb1] sm:$0xff]
        %v4933 = vld [vmem:[#allocation2 + $0xb9] sm:$0xff]
        %v4934 = vld [vmem:[#allocation2 + $0xc1] sm:$0xff]
        %v4935 = vld [vmem:[#allocation2 + $0xc9] sm:$0xff]
        %v4936 = vld [vmem:[#allocation2 + $0xd1] sm:$0xff]
        %v4937 = vld [vmem:[#allocation2 + $0xd9] sm:$0xff]
        %v4938 = vld [vmem:[#allocation2 + $0xe1] sm:$0xff]
        %v4939 = vld [vmem:[#allocation2 + $0xe9] sm:$0xff]
        %v4940 = vld [vmem:[#allocation2 + $0xf1] sm:$0xff]
        %v4941 = vld [vmem:[#allocation2 + $0xf9] sm:$0xff]
        %v4942 = vld [vmem:[#allocation2 + $0x101] sm:$0xff]
        %v4943 = vld [vmem:[#allocation2 + $0x109] sm:$0xff]
        %v4944 = vld [vmem:[#allocation2 + $0x111] sm:$0xff]
        %v4945 = vld [vmem:[#allocation2 + $0x119] sm:$0xff]
        %v4946 = vld [vmem:[#allocation2 + $0x121] sm:$0xff]
        %v4947 = vld [vmem:[#allocation2 + $0x129] sm:$0xff]
        %v4948 = vld [vmem:[#allocation2 + $0x131] sm:$0xff]
        %v4949 = vld [vmem:[#allocation2 + $0x139] sm:$0xff]
        %v4950 = vld [vmem:[#allocation2 + $0x141] sm:$0xff]
        %v4951 = vld [vmem:[#allocation2 + $0x149] sm:$0xff]
        %v4952 = vld [vmem:[#allocation2 + $0x151] sm:$0xff]
        %v4953 = vld [vmem:[#allocation2 + $0x159] sm:$0xff]
        %v4954 = vld [vmem:[#allocation2 + $0x161] sm:$0xff]
        %v4955 = vld [vmem:[#allocation2 + $0x169] sm:$0xff]
        %v4956 = vld [vmem:[#allocation2 + $0x171] sm:$0xff]
        %v4957 = vld [vmem:[#allocation2 + $0x179] sm:$0xff]
        %v4958 = vld [vmem:[#allocation2 + $0x181] sm:$0xff]
        %v4959 = vld [vmem:[#allocation2 + $0x189] sm:$0xff]
        %v4960 = vld [vmem:[#allocation2 + $0x191] sm:$0xff]
        %v4961 = vld [vmem:[#allocation2 + $0x199] sm:$0xff]
        %v4962 = vld [vmem:[#allocation2 + $0x1a1] sm:$0xff]
        %v4963 = vld [vmem:[#allocation2 + $0x1a9] sm:$0xff]
        %v4964 = vld [vmem:[#allocation2 + $0x1b1] sm:$0xff]
        %v4965 = vld [vmem:[#allocation2 + $0x1b9] sm:$0xff]
        %v4966 = vld [vmem:[#allocation2 + $0x1c1] sm:$0xff]
        %v4967 = vld [vmem:[#allocation2 + $0x1c9] sm:$0xff]
        %v4968 = vld [vmem:[#allocation2 + $0x1d1] sm:$0xff]
        %v4969 = vld [vmem:[#allocation2 + $0x1d9] sm:$0xff]
        %v4970 = vld [vmem:[#allocation2 + $0x1e1] sm:$0xff]
        %v4971 = vld [vmem:[#allocation2 + $0x1e9] sm:$0xff]
        %v4972 = vld [vmem:[#allocation2 + $0x1f1] sm:$0xff]
        %v4973 = vld [vmem:[#allocation2 + $0x1f9] sm:$0xff]
        %v4974 = vld [vmem:[#allocation2 + $0x201] sm:$0xff]
        %v4975 = vld [vmem:[#allocation2 + $0x209] sm:$0xff]
        %v4976 = vld [vmem:[#allocation2 + $0x211] sm:$0xff]
        %v4977 = vld [vmem:[#allocation2 + $0x219] sm:$0xff]
        %v4978 = vld [vmem:[#allocation2 + $0x221] sm:$0xff]
        %v4979 = vld [vmem:[#allocation2 + $0x229] sm:$0xff]
        %v4980 = vld [vmem:[#allocation2 + $0x231] sm:$0xff]
        %v4981 = vld [vmem:[#allocation2 + $0x239] sm:$0xff]
        %v4982 = vld [vmem:[#allocation2 + $0x241] sm:$0xff]
        %s4983 = scalar_lea.vmem [#allocation9], 256
        %v4984 = vld [vmem:[%s4983] sm:$0xff]
        %v4985 = vld [vmem:[%s4983 + $0x8] sm:$0xff]
        %v4986 = vld [vmem:[%s4983 + $0x10] sm:$0xff]
        %v4987 = vld [vmem:[%s4983 + $0x18] sm:$0xff]
        %v4989 = vsel %vm544, %v4919, 0
        %v4992 = vsel %vm544, %v4920, 0
        %v4995 = vsel %vm544, %v4921, 0
        %v4998 = vsel %vm544, %v4922, 0
        %v5001 = vsel %vm544, %v4923, 0
        %v5004 = vsel %vm544, %v4924, 0
        %v5007 = vsel %vm544, %v4925, 0
        %v5010 = vsel %vm544, %v4926, 0
        %v5013 = vsel %vm544, %v4927, 0
        %v5016 = vsel %vm544, %v4928, 0
        %v5019 = vsel %vm544, %v4929, 0
        %v5022 = vsel %vm544, %v4930, 0
        %v5025 = vsel %vm544, %v4931, 0
        %v5028 = vsel %vm544, %v4932, 0
        %v5031 = vsel %vm544, %v4933, 0
        %v5034 = vsel %vm544, %v4934, 0
        %v5037 = vsel %vm544, %v4935, 0
        %v5040 = vsel %vm544, %v4936, 0
        %v5043 = vsel %vm544, %v4937, 0
        %v5046 = vsel %vm544, %v4938, 0
        %v5049 = vsel %vm544, %v4939, 0
        %v5052 = vsel %vm544, %v4940, 0
        %v5055 = vsel %vm544, %v4941, 0
        %v5058 = vsel %vm544, %v4942, 0
        %v5061 = vsel %vm544, %v4943, 0
        %v5064 = vsel %vm544, %v4944, 0
        %v5067 = vsel %vm544, %v4945, 0
        %v5070 = vsel %vm544, %v4946, 0
        %v5073 = vsel %vm544, %v4947, 0
        %v5076 = vsel %vm544, %v4948, 0
        %v5079 = vsel %vm544, %v4949, 0
        %v5082 = vsel %vm544, %v4950, 0
        %v5085 = vsel %vm544, %v4951, 0
        %v5088 = vsel %vm544, %v4952, 0
        %v5091 = vsel %vm544, %v4953, 0
        %v5094 = vsel %vm544, %v4954, 0
        %v5097 = vsel %vm544, %v4955, 0
        %v5100 = vsel %vm544, %v4956, 0
        %v5103 = vsel %vm544, %v4957, 0
        %v5106 = vsel %vm544, %v4958, 0
        %v5109 = vsel %vm544, %v4959, 0
        %v5112 = vsel %vm544, %v4960, 0
        %v5115 = vsel %vm544, %v4961, 0
        %v5118 = vsel %vm544, %v4962, 0
        %v5121 = vsel %vm544, %v4963, 0
        %v5124 = vsel %vm544, %v4964, 0
        %v5127 = vsel %vm544, %v4965, 0
        %v5130 = vsel %vm544, %v4966, 0
        %v5133 = vsel %vm544, %v4967, 0
        %v5136 = vsel %vm544, %v4968, 0
        %v5139 = vsel %vm544, %v4969, 0
        %v5142 = vsel %vm544, %v4970, 0
        %v5145 = vsel %vm544, %v4971, 0
        %v5148 = vsel %vm544, %v4972, 0
        %v5151 = vsel %vm544, %v4973, 0
        %v5154 = vsel %vm544, %v4974, 0
        %v5157 = vsel %vm544, %v4975, 0
        %v5160 = vsel %vm544, %v4976, 0
        %v5163 = vsel %vm544, %v4977, 0
        %v5166 = vsel %vm544, %v4978, 0
        %v5169 = vsel %vm544, %v4979, 0
        %v5172 = vsel %vm544, %v4980, 0
        %v5175 = vsel %vm544, %v4981, 0
        %v5178 = vsel %vm544, %v4982, 0
        %5180 = vmatpush.msra.mxu0 0.0
        %5181 = vmatpush.msra.mxu0 0.0
        %5182 = vmatpush.msra.mxu0 0.0
        %5183 = vmatpush.msra.mxu0 0.0
        %5184 = vmatpush.msra.mxu0 0.0
        %5185 = vmatpush.msra.mxu0 0.0
        %5186 = vmatpush.msra.mxu0 0.0
        %5187 = vmatpush.msra.mxu0 0.0
        %5188 = vmatpush.msra.mxu0 0.0
        %5189 = vmatpush.msra.mxu0 0.0
        %5190 = vmatpush.msra.mxu0 0.0
        %5191 = vmatpush.msra.mxu0 0.0
        %5192 = vmatpush.msra.mxu0 %v4987
        %5193 = vmatpush.msra.mxu0 %v4986
        %5194 = vmatpush.msra.mxu0 %v4985
        %5195 = vmatpush.msra.mxu0 %v4984
        %5196 = vmatmul.f32.gmra.mxu0 %v4989
        %v5197 = vpop.f32.mrf.mxu0
        %v5198 = vadd.f32 0.0, %v5197
        %5199 = vmatmul.f32.gmra.mxu0 %v4992
        %v5200 = vpop.f32.mrf.mxu0
        %v5201 = vadd.f32 0.0, %v5200
        %5202 = vmatmul.f32.gmra.mxu0 %v4995
        %v5203 = vpop.f32.mrf.mxu0
        %v5204 = vadd.f32 0.0, %v5203
        %5205 = vmatmul.f32.gmra.mxu0 %v4998
        %v5206 = vpop.f32.mrf.mxu0
        %v5207 = vadd.f32 0.0, %v5206
        %5208 = vmatmul.f32.gmra.mxu0 %v5001
        %v5209 = vpop.f32.mrf.mxu0
        %v5210 = vadd.f32 0.0, %v5209
        %5211 = vmatmul.f32.gmra.mxu0 %v5004
        %v5212 = vpop.f32.mrf.mxu0
        %v5213 = vadd.f32 0.0, %v5212
        %5214 = vmatmul.f32.gmra.mxu0 %v5007
        %v5215 = vpop.f32.mrf.mxu0
        %v5216 = vadd.f32 0.0, %v5215
        %5217 = vmatmul.f32.gmra.mxu0 %v5010
        %v5218 = vpop.f32.mrf.mxu0
        %v5219 = vadd.f32 0.0, %v5218
        %5220 = vmatmul.f32.gmra.mxu0 %v5013
        %v5221 = vpop.f32.mrf.mxu0
        %v5222 = vadd.f32 0.0, %v5221
        %5223 = vmatmul.f32.gmra.mxu0 %v5016
        %v5224 = vpop.f32.mrf.mxu0
        %v5225 = vadd.f32 0.0, %v5224
        %5226 = vmatmul.f32.gmra.mxu0 %v5019
        %v5227 = vpop.f32.mrf.mxu0
        %v5228 = vadd.f32 0.0, %v5227
        %5229 = vmatmul.f32.gmra.mxu0 %v5022
        %v5230 = vpop.f32.mrf.mxu0
        %v5231 = vadd.f32 0.0, %v5230
        %5232 = vmatmul.f32.gmra.mxu0 %v5025
        %v5233 = vpop.f32.mrf.mxu0
        %v5234 = vadd.f32 0.0, %v5233
        %5235 = vmatmul.f32.gmra.mxu0 %v5028
        %v5236 = vpop.f32.mrf.mxu0
        %v5237 = vadd.f32 0.0, %v5236
        %5238 = vmatmul.f32.gmra.mxu0 %v5031
        %v5239 = vpop.f32.mrf.mxu0
        %v5240 = vadd.f32 0.0, %v5239
        %5241 = vmatmul.f32.gmra.mxu0 %v5034
        %v5242 = vpop.f32.mrf.mxu0
        %v5243 = vadd.f32 0.0, %v5242
        %5244 = vmatmul.f32.gmra.mxu0 %v5037
        %v5245 = vpop.f32.mrf.mxu0
        %v5246 = vadd.f32 0.0, %v5245
        %5247 = vmatmul.f32.gmra.mxu0 %v5040
        %v5248 = vpop.f32.mrf.mxu0
        %v5249 = vadd.f32 0.0, %v5248
        %5250 = vmatmul.f32.gmra.mxu0 %v5043
        %v5251 = vpop.f32.mrf.mxu0
        %v5252 = vadd.f32 0.0, %v5251
        %5253 = vmatmul.f32.gmra.mxu0 %v5046
        %v5254 = vpop.f32.mrf.mxu0
        %v5255 = vadd.f32 0.0, %v5254
        %5256 = vmatmul.f32.gmra.mxu0 %v5049
        %v5257 = vpop.f32.mrf.mxu0
        %v5258 = vadd.f32 0.0, %v5257
        %5259 = vmatmul.f32.gmra.mxu0 %v5052
        %v5260 = vpop.f32.mrf.mxu0
        %v5261 = vadd.f32 0.0, %v5260
        %5262 = vmatmul.f32.gmra.mxu0 %v5055
        %v5263 = vpop.f32.mrf.mxu0
        %v5264 = vadd.f32 0.0, %v5263
        %5265 = vmatmul.f32.gmra.mxu0 %v5058
        %v5266 = vpop.f32.mrf.mxu0
        %v5267 = vadd.f32 0.0, %v5266
        %5268 = vmatmul.f32.gmra.mxu0 %v5061
        %v5269 = vpop.f32.mrf.mxu0
        %v5270 = vadd.f32 0.0, %v5269
        %5271 = vmatmul.f32.gmra.mxu0 %v5064
        %v5272 = vpop.f32.mrf.mxu0
        %v5273 = vadd.f32 0.0, %v5272
        %5274 = vmatmul.f32.gmra.mxu0 %v5067
        %v5275 = vpop.f32.mrf.mxu0
        %v5276 = vadd.f32 0.0, %v5275
        %5277 = vmatmul.f32.gmra.mxu0 %v5070
        %v5278 = vpop.f32.mrf.mxu0
        %v5279 = vadd.f32 0.0, %v5278
        %5280 = vmatmul.f32.gmra.mxu0 %v5073
        %v5281 = vpop.f32.mrf.mxu0
        %v5282 = vadd.f32 0.0, %v5281
        %5283 = vmatmul.f32.gmra.mxu0 %v5076
        %v5284 = vpop.f32.mrf.mxu0
        %v5285 = vadd.f32 0.0, %v5284
        %5286 = vmatmul.f32.gmra.mxu0 %v5079
        %v5287 = vpop.f32.mrf.mxu0
        %v5288 = vadd.f32 0.0, %v5287
        %5289 = vmatmul.f32.gmra.mxu0 %v5082
        %v5290 = vpop.f32.mrf.mxu0
        %v5291 = vadd.f32 0.0, %v5290
        %5292 = vmatmul.f32.gmra.mxu0 %v5085
        %v5293 = vpop.f32.mrf.mxu0
        %v5294 = vadd.f32 0.0, %v5293
        %5295 = vmatmul.f32.gmra.mxu0 %v5088
        %v5296 = vpop.f32.mrf.mxu0
        %v5297 = vadd.f32 0.0, %v5296
        %5298 = vmatmul.f32.gmra.mxu0 %v5091
        %v5299 = vpop.f32.mrf.mxu0
        %v5300 = vadd.f32 0.0, %v5299
        %5301 = vmatmul.f32.gmra.mxu0 %v5094
        %v5302 = vpop.f32.mrf.mxu0
        %v5303 = vadd.f32 0.0, %v5302
        %5304 = vmatmul.f32.gmra.mxu0 %v5097
        %v5305 = vpop.f32.mrf.mxu0
        %v5306 = vadd.f32 0.0, %v5305
        %5307 = vmatmul.f32.gmra.mxu0 %v5100
        %v5308 = vpop.f32.mrf.mxu0
        %v5309 = vadd.f32 0.0, %v5308
        %5310 = vmatmul.f32.gmra.mxu0 %v5103
        %v5311 = vpop.f32.mrf.mxu0
        %v5312 = vadd.f32 0.0, %v5311
        %5313 = vmatmul.f32.gmra.mxu0 %v5106
        %v5314 = vpop.f32.mrf.mxu0
        %v5315 = vadd.f32 0.0, %v5314
        %5316 = vmatmul.f32.gmra.mxu0 %v5109
        %v5317 = vpop.f32.mrf.mxu0
        %v5318 = vadd.f32 0.0, %v5317
        %5319 = vmatmul.f32.gmra.mxu0 %v5112
        %v5320 = vpop.f32.mrf.mxu0
        %v5321 = vadd.f32 0.0, %v5320
        %5322 = vmatmul.f32.gmra.mxu0 %v5115
        %v5323 = vpop.f32.mrf.mxu0
        %v5324 = vadd.f32 0.0, %v5323
        %5325 = vmatmul.f32.gmra.mxu0 %v5118
        %v5326 = vpop.f32.mrf.mxu0
        %v5327 = vadd.f32 0.0, %v5326
        %5328 = vmatmul.f32.gmra.mxu0 %v5121
        %v5329 = vpop.f32.mrf.mxu0
        %v5330 = vadd.f32 0.0, %v5329
        %5331 = vmatmul.f32.gmra.mxu0 %v5124
        %v5332 = vpop.f32.mrf.mxu0
        %v5333 = vadd.f32 0.0, %v5332
        %5334 = vmatmul.f32.gmra.mxu0 %v5127
        %v5335 = vpop.f32.mrf.mxu0
        %v5336 = vadd.f32 0.0, %v5335
        %5337 = vmatmul.f32.gmra.mxu0 %v5130
        %v5338 = vpop.f32.mrf.mxu0
        %v5339 = vadd.f32 0.0, %v5338
        %5340 = vmatmul.f32.gmra.mxu0 %v5133
        %v5341 = vpop.f32.mrf.mxu0
        %v5342 = vadd.f32 0.0, %v5341
        %5343 = vmatmul.f32.gmra.mxu0 %v5136
        %v5344 = vpop.f32.mrf.mxu0
        %v5345 = vadd.f32 0.0, %v5344
        %5346 = vmatmul.f32.gmra.mxu0 %v5139
        %v5347 = vpop.f32.mrf.mxu0
        %v5348 = vadd.f32 0.0, %v5347
        %5349 = vmatmul.f32.gmra.mxu0 %v5142
        %v5350 = vpop.f32.mrf.mxu0
        %v5351 = vadd.f32 0.0, %v5350
        %5352 = vmatmul.f32.gmra.mxu0 %v5145
        %v5353 = vpop.f32.mrf.mxu0
        %v5354 = vadd.f32 0.0, %v5353
        %5355 = vmatmul.f32.gmra.mxu0 %v5148
        %v5356 = vpop.f32.mrf.mxu0
        %v5357 = vadd.f32 0.0, %v5356
        %5358 = vmatmul.f32.gmra.mxu0 %v5151
        %v5359 = vpop.f32.mrf.mxu0
        %v5360 = vadd.f32 0.0, %v5359
        %5361 = vmatmul.f32.gmra.mxu0 %v5154
        %v5362 = vpop.f32.mrf.mxu0
        %v5363 = vadd.f32 0.0, %v5362
        %5364 = vmatmul.f32.gmra.mxu0 %v5157
        %v5365 = vpop.f32.mrf.mxu0
        %v5366 = vadd.f32 0.0, %v5365
        %5367 = vmatmul.f32.gmra.mxu0 %v5160
        %v5368 = vpop.f32.mrf.mxu0
        %v5369 = vadd.f32 0.0, %v5368
        %5370 = vmatmul.f32.gmra.mxu0 %v5163
        %v5371 = vpop.f32.mrf.mxu0
        %v5372 = vadd.f32 0.0, %v5371
        %5373 = vmatmul.f32.gmra.mxu0 %v5166
        %v5374 = vpop.f32.mrf.mxu0
        %v5375 = vadd.f32 0.0, %v5374
        %5376 = vmatmul.f32.gmra.mxu0 %v5169
        %v5377 = vpop.f32.mrf.mxu0
        %v5378 = vadd.f32 0.0, %v5377
        %5379 = vmatmul.f32.gmra.mxu0 %v5172
        %v5380 = vpop.f32.mrf.mxu0
        %v5381 = vadd.f32 0.0, %v5380
        %5382 = vmatmul.f32.gmra.mxu0 %v5175
        %v5383 = vpop.f32.mrf.mxu0
        %v5384 = vadd.f32 0.0, %v5383
        %5385 = vmatmul.f32.gmra.mxu0 %v5178
        %v5386 = vpop.f32.mrf.mxu0
        %v5387 = vadd.f32 0.0, %v5386
        %5388 = vdwg.mxu0
        %v5389 = vadd.f32 %v4855, %v5198
        %v5390 = vadd.f32 %v4856, %v5201
        %v5391 = vadd.f32 %v4857, %v5204
        %v5392 = vadd.f32 %v4858, %v5207
        %v5393 = vadd.f32 %v4859, %v5210
        %v5394 = vadd.f32 %v4860, %v5213
        %v5395 = vadd.f32 %v4861, %v5216
        %v5396 = vadd.f32 %v4862, %v5219
        %v5397 = vadd.f32 %v4863, %v5222
        %v5398 = vadd.f32 %v4864, %v5225
        %v5399 = vadd.f32 %v4865, %v5228
        %v5400 = vadd.f32 %v4866, %v5231
        %v5401 = vadd.f32 %v4867, %v5234
        %v5402 = vadd.f32 %v4868, %v5237
        %v5403 = vadd.f32 %v4869, %v5240
        %v5404 = vadd.f32 %v4870, %v5243
        %v5405 = vadd.f32 %v4871, %v5246
        %v5406 = vadd.f32 %v4872, %v5249
        %v5407 = vadd.f32 %v4873, %v5252
        %v5408 = vadd.f32 %v4874, %v5255
        %v5409 = vadd.f32 %v4875, %v5258
        %v5410 = vadd.f32 %v4876, %v5261
        %v5411 = vadd.f32 %v4877, %v5264
        %v5412 = vadd.f32 %v4878, %v5267
        %v5413 = vadd.f32 %v4879, %v5270
        %v5414 = vadd.f32 %v4880, %v5273
        %v5415 = vadd.f32 %v4881, %v5276
        %v5416 = vadd.f32 %v4882, %v5279
        %v5417 = vadd.f32 %v4883, %v5282
        %v5418 = vadd.f32 %v4884, %v5285
        %v5419 = vadd.f32 %v4885, %v5288
        %v5420 = vadd.f32 %v4886, %v5291
        %v5421 = vadd.f32 %v4887, %v5294
        %v5422 = vadd.f32 %v4888, %v5297
        %v5423 = vadd.f32 %v4889, %v5300
        %v5424 = vadd.f32 %v4890, %v5303
        %v5425 = vadd.f32 %v4891, %v5306
        %v5426 = vadd.f32 %v4892, %v5309
        %v5427 = vadd.f32 %v4893, %v5312
        %v5428 = vadd.f32 %v4894, %v5315
        %v5429 = vadd.f32 %v4895, %v5318
        %v5430 = vadd.f32 %v4896, %v5321
        %v5431 = vadd.f32 %v4897, %v5324
        %v5432 = vadd.f32 %v4898, %v5327
        %v5433 = vadd.f32 %v4899, %v5330
        %v5434 = vadd.f32 %v4900, %v5333
        %v5435 = vadd.f32 %v4901, %v5336
        %v5436 = vadd.f32 %v4902, %v5339
        %v5437 = vadd.f32 %v4903, %v5342
        %v5438 = vadd.f32 %v4904, %v5345
        %v5439 = vadd.f32 %v4905, %v5348
        %v5440 = vadd.f32 %v4906, %v5351
        %v5441 = vadd.f32 %v4907, %v5354
        %v5442 = vadd.f32 %v4908, %v5357
        %v5443 = vadd.f32 %v4909, %v5360
        %v5444 = vadd.f32 %v4910, %v5363
        %v5445 = vadd.f32 %v4911, %v5366
        %v5446 = vadd.f32 %v4912, %v5369
        %v5447 = vadd.f32 %v4913, %v5372
        %v5448 = vadd.f32 %v4914, %v5375
        %v5449 = vadd.f32 %v4915, %v5378
        %v5450 = vadd.f32 %v4916, %v5381
        %v5451 = vadd.f32 %v4917, %v5384
        %v5452 = vadd.f32 %v4918, %v5387
        %v5453 = vld [vmem:[#allocation11] sm:$0x1]
        %v5455 = vperm.slane %v5453, 0
        %v5457 = vadd.f32 %v5389, %v5455
        %v5458 = vadd.f32 %v5390, %v5455
        %v5459 = vadd.f32 %v5391, %v5455
        %v5460 = vadd.f32 %v5392, %v5455
        %v5461 = vadd.f32 %v5393, %v5455
        %v5462 = vadd.f32 %v5394, %v5455
        %v5463 = vadd.f32 %v5395, %v5455
        %v5464 = vadd.f32 %v5396, %v5455
        %v5465 = vadd.f32 %v5397, %v5455
        %v5466 = vadd.f32 %v5398, %v5455
        %v5467 = vadd.f32 %v5399, %v5455
        %v5468 = vadd.f32 %v5400, %v5455
        %v5469 = vadd.f32 %v5401, %v5455
        %v5470 = vadd.f32 %v5402, %v5455
        %v5471 = vadd.f32 %v5403, %v5455
        %v5472 = vadd.f32 %v5404, %v5455
        %v5473 = vadd.f32 %v5405, %v5455
        %v5474 = vadd.f32 %v5406, %v5455
        %v5475 = vadd.f32 %v5407, %v5455
        %v5476 = vadd.f32 %v5408, %v5455
        %v5477 = vadd.f32 %v5409, %v5455
        %v5478 = vadd.f32 %v5410, %v5455
        %v5479 = vadd.f32 %v5411, %v5455
        %v5480 = vadd.f32 %v5412, %v5455
        %v5481 = vadd.f32 %v5413, %v5455
        %v5482 = vadd.f32 %v5414, %v5455
        %v5483 = vadd.f32 %v5415, %v5455
        %v5484 = vadd.f32 %v5416, %v5455
        %v5485 = vadd.f32 %v5417, %v5455
        %v5486 = vadd.f32 %v5418, %v5455
        %v5487 = vadd.f32 %v5419, %v5455
        %v5488 = vadd.f32 %v5420, %v5455
        %v5489 = vadd.f32 %v5421, %v5455
        %v5490 = vadd.f32 %v5422, %v5455
        %v5491 = vadd.f32 %v5423, %v5455
        %v5492 = vadd.f32 %v5424, %v5455
        %v5493 = vadd.f32 %v5425, %v5455
        %v5494 = vadd.f32 %v5426, %v5455
        %v5495 = vadd.f32 %v5427, %v5455
        %v5496 = vadd.f32 %v5428, %v5455
        %v5497 = vadd.f32 %v5429, %v5455
        %v5498 = vadd.f32 %v5430, %v5455
        %v5499 = vadd.f32 %v5431, %v5455
        %v5500 = vadd.f32 %v5432, %v5455
        %v5501 = vadd.f32 %v5433, %v5455
        %v5502 = vadd.f32 %v5434, %v5455
        %v5503 = vadd.f32 %v5435, %v5455
        %v5504 = vadd.f32 %v5436, %v5455
        %v5505 = vadd.f32 %v5437, %v5455
        %v5506 = vadd.f32 %v5438, %v5455
        %v5507 = vadd.f32 %v5439, %v5455
        %v5508 = vadd.f32 %v5440, %v5455
        %v5509 = vadd.f32 %v5441, %v5455
        %v5510 = vadd.f32 %v5442, %v5455
        %v5511 = vadd.f32 %v5443, %v5455
        %v5512 = vadd.f32 %v5444, %v5455
        %v5513 = vadd.f32 %v5445, %v5455
        %v5514 = vadd.f32 %v5446, %v5455
        %v5515 = vadd.f32 %v5447, %v5455
        %v5516 = vadd.f32 %v5448, %v5455
        %v5517 = vadd.f32 %v5449, %v5455
        %v5518 = vadd.f32 %v5450, %v5455
        %v5519 = vadd.f32 %v5451, %v5455
        %v5520 = vadd.f32 %v5452, %v5455
        %v5521 = vmax.f32 %v5457, 0.0
        %v5522 = vmax.f32 %v5458, 0.0
        %v5523 = vmax.f32 %v5459, 0.0
        %v5524 = vmax.f32 %v5460, 0.0
        %v5525 = vmax.f32 %v5461, 0.0
        %v5526 = vmax.f32 %v5462, 0.0
        %v5527 = vmax.f32 %v5463, 0.0
        %v5528 = vmax.f32 %v5464, 0.0
        %v5529 = vmax.f32 %v5465, 0.0
        %v5530 = vmax.f32 %v5466, 0.0
        %v5531 = vmax.f32 %v5467, 0.0
        %v5532 = vmax.f32 %v5468, 0.0
        %v5533 = vmax.f32 %v5469, 0.0
        %v5534 = vmax.f32 %v5470, 0.0
        %v5535 = vmax.f32 %v5471, 0.0
        %v5536 = vmax.f32 %v5472, 0.0
        %v5537 = vmax.f32 %v5473, 0.0
        %v5538 = vmax.f32 %v5474, 0.0
        %v5539 = vmax.f32 %v5475, 0.0
        %v5540 = vmax.f32 %v5476, 0.0
        %v5541 = vmax.f32 %v5477, 0.0
        %v5542 = vmax.f32 %v5478, 0.0
        %v5543 = vmax.f32 %v5479, 0.0
        %v5544 = vmax.f32 %v5480, 0.0
        %v5545 = vmax.f32 %v5481, 0.0
        %v5546 = vmax.f32 %v5482, 0.0
        %v5547 = vmax.f32 %v5483, 0.0
        %v5548 = vmax.f32 %v5484, 0.0
        %v5549 = vmax.f32 %v5485, 0.0
        %v5550 = vmax.f32 %v5486, 0.0
        %v5551 = vmax.f32 %v5487, 0.0
        %v5552 = vmax.f32 %v5488, 0.0
        %v5553 = vmax.f32 %v5489, 0.0
        %v5554 = vmax.f32 %v5490, 0.0
        %v5555 = vmax.f32 %v5491, 0.0
        %v5556 = vmax.f32 %v5492, 0.0
        %v5557 = vmax.f32 %v5493, 0.0
        %v5558 = vmax.f32 %v5494, 0.0
        %v5559 = vmax.f32 %v5495, 0.0
        %v5560 = vmax.f32 %v5496, 0.0
        %v5561 = vmax.f32 %v5497, 0.0
        %v5562 = vmax.f32 %v5498, 0.0
        %v5563 = vmax.f32 %v5499, 0.0
        %v5564 = vmax.f32 %v5500, 0.0
        %v5565 = vmax.f32 %v5501, 0.0
        %v5566 = vmax.f32 %v5502, 0.0
        %v5567 = vmax.f32 %v5503, 0.0
        %v5568 = vmax.f32 %v5504, 0.0
        %v5569 = vmax.f32 %v5505, 0.0
        %v5570 = vmax.f32 %v5506, 0.0
        %v5571 = vmax.f32 %v5507, 0.0
        %v5572 = vmax.f32 %v5508, 0.0
        %v5573 = vmax.f32 %v5509, 0.0
        %v5574 = vmax.f32 %v5510, 0.0
        %v5575 = vmax.f32 %v5511, 0.0
        %v5576 = vmax.f32 %v5512, 0.0
        %v5577 = vmax.f32 %v5513, 0.0
        %v5578 = vmax.f32 %v5514, 0.0
        %v5579 = vmax.f32 %v5515, 0.0
        %v5580 = vmax.f32 %v5516, 0.0
        %v5581 = vmax.f32 %v5517, 0.0
        %v5582 = vmax.f32 %v5518, 0.0
        %v5583 = vmax.f32 %v5519, 0.0
        %v5584 = vmax.f32 %v5520, 0.0
        %5585 = vst.msk [vmem:[#allocation4] sm:$0xff] %vm544, %v5521
        %5586 = vst.msk [vmem:[#allocation4 + $0x8] sm:$0xff] %vm544, %v5522
        %5587 = vst.msk [vmem:[#allocation4 + $0x10] sm:$0xff] %vm544, %v5523
        %5588 = vst.msk [vmem:[#allocation4 + $0x18] sm:$0xff] %vm544, %v5524
        %5589 = vst.msk [vmem:[#allocation4 + $0x20] sm:$0xff] %vm544, %v5525
        %5590 = vst.msk [vmem:[#allocation4 + $0x28] sm:$0xff] %vm544, %v5526
        %5591 = vst.msk [vmem:[#allocation4 + $0x30] sm:$0xff] %vm544, %v5527
        %5592 = vst.msk [vmem:[#allocation4 + $0x38] sm:$0xff] %vm544, %v5528
        %5593 = vst.msk [vmem:[#allocation4 + $0x40] sm:$0xff] %vm544, %v5529
        %5594 = vst.msk [vmem:[#allocation4 + $0x48] sm:$0xff] %vm544, %v5530
        %5595 = vst.msk [vmem:[#allocation4 + $0x50] sm:$0xff] %vm544, %v5531
        %5596 = vst.msk [vmem:[#allocation4 + $0x58] sm:$0xff] %vm544, %v5532
        %5597 = vst.msk [vmem:[#allocation4 + $0x60] sm:$0xff] %vm544, %v5533
        %5598 = vst.msk [vmem:[#allocation4 + $0x68] sm:$0xff] %vm544, %v5534
        %5599 = vst.msk [vmem:[#allocation4 + $0x70] sm:$0xff] %vm544, %v5535
        %5600 = vst.msk [vmem:[#allocation4 + $0x78] sm:$0xff] %vm544, %v5536
        %5601 = vst.msk [vmem:[#allocation4 + $0x80] sm:$0xff] %vm544, %v5537
        %5602 = vst.msk [vmem:[#allocation4 + $0x88] sm:$0xff] %vm544, %v5538
        %5603 = vst.msk [vmem:[#allocation4 + $0x90] sm:$0xff] %vm544, %v5539
        %5604 = vst.msk [vmem:[#allocation4 + $0x98] sm:$0xff] %vm544, %v5540
        %5605 = vst.msk [vmem:[#allocation4 + $0xa0] sm:$0xff] %vm544, %v5541
        %5606 = vst.msk [vmem:[#allocation4 + $0xa8] sm:$0xff] %vm544, %v5542
        %5607 = vst.msk [vmem:[#allocation4 + $0xb0] sm:$0xff] %vm544, %v5543
        %5608 = vst.msk [vmem:[#allocation4 + $0xb8] sm:$0xff] %vm544, %v5544
        %5609 = vst.msk [vmem:[#allocation4 + $0xc0] sm:$0xff] %vm544, %v5545
        %5610 = vst.msk [vmem:[#allocation4 + $0xc8] sm:$0xff] %vm544, %v5546
        %5611 = vst.msk [vmem:[#allocation4 + $0xd0] sm:$0xff] %vm544, %v5547
        %5612 = vst.msk [vmem:[#allocation4 + $0xd8] sm:$0xff] %vm544, %v5548
        %5613 = vst.msk [vmem:[#allocation4 + $0xe0] sm:$0xff] %vm544, %v5549
        %5614 = vst.msk [vmem:[#allocation4 + $0xe8] sm:$0xff] %vm544, %v5550
        %5615 = vst.msk [vmem:[#allocation4 + $0xf0] sm:$0xff] %vm544, %v5551
        %5616 = vst.msk [vmem:[#allocation4 + $0xf8] sm:$0xff] %vm544, %v5552
        %5617 = vst.msk [vmem:[#allocation4 + $0x100] sm:$0xff] %vm544, %v5553
        %5618 = vst.msk [vmem:[#allocation4 + $0x108] sm:$0xff] %vm544, %v5554
        %5619 = vst.msk [vmem:[#allocation4 + $0x110] sm:$0xff] %vm544, %v5555
        %5620 = vst.msk [vmem:[#allocation4 + $0x118] sm:$0xff] %vm544, %v5556
        %5621 = vst.msk [vmem:[#allocation4 + $0x120] sm:$0xff] %vm544, %v5557
        %5622 = vst.msk [vmem:[#allocation4 + $0x128] sm:$0xff] %vm544, %v5558
        %5623 = vst.msk [vmem:[#allocation4 + $0x130] sm:$0xff] %vm544, %v5559
        %5624 = vst.msk [vmem:[#allocation4 + $0x138] sm:$0xff] %vm544, %v5560
        %5625 = vst.msk [vmem:[#allocation4 + $0x140] sm:$0xff] %vm544, %v5561
        %5626 = vst.msk [vmem:[#allocation4 + $0x148] sm:$0xff] %vm544, %v5562
        %5627 = vst.msk [vmem:[#allocation4 + $0x150] sm:$0xff] %vm544, %v5563
        %5628 = vst.msk [vmem:[#allocation4 + $0x158] sm:$0xff] %vm544, %v5564
        %5629 = vst.msk [vmem:[#allocation4 + $0x160] sm:$0xff] %vm544, %v5565
        %5630 = vst.msk [vmem:[#allocation4 + $0x168] sm:$0xff] %vm544, %v5566
        %5631 = vst.msk [vmem:[#allocation4 + $0x170] sm:$0xff] %vm544, %v5567
        %5632 = vst.msk [vmem:[#allocation4 + $0x178] sm:$0xff] %vm544, %v5568
        %5633 = vst.msk [vmem:[#allocation4 + $0x180] sm:$0xff] %vm544, %v5569
        %5634 = vst.msk [vmem:[#allocation4 + $0x188] sm:$0xff] %vm544, %v5570
        %5635 = vst.msk [vmem:[#allocation4 + $0x190] sm:$0xff] %vm544, %v5571
        %5636 = vst.msk [vmem:[#allocation4 + $0x198] sm:$0xff] %vm544, %v5572
        %5637 = vst.msk [vmem:[#allocation4 + $0x1a0] sm:$0xff] %vm544, %v5573
        %5638 = vst.msk [vmem:[#allocation4 + $0x1a8] sm:$0xff] %vm544, %v5574
        %5639 = vst.msk [vmem:[#allocation4 + $0x1b0] sm:$0xff] %vm544, %v5575
        %5640 = vst.msk [vmem:[#allocation4 + $0x1b8] sm:$0xff] %vm544, %v5576
        %5641 = vst.msk [vmem:[#allocation4 + $0x1c0] sm:$0xff] %vm544, %v5577
        %5642 = vst.msk [vmem:[#allocation4 + $0x1c8] sm:$0xff] %vm544, %v5578
        %5643 = vst.msk [vmem:[#allocation4 + $0x1d0] sm:$0xff] %vm544, %v5579
        %5644 = vst.msk [vmem:[#allocation4 + $0x1d8] sm:$0xff] %vm544, %v5580
        %5645 = vst.msk [vmem:[#allocation4 + $0x1e0] sm:$0xff] %vm544, %v5581
        %5646 = vst.msk [vmem:[#allocation4 + $0x1e8] sm:$0xff] %vm544, %v5582
        %5647 = vst.msk [vmem:[#allocation4 + $0x1f0] sm:$0xff] %vm544, %v5583
        %5648 = vst.msk [vmem:[#allocation4 + $0x1f8] sm:$0xff] %vm544, %v5584
        %v5649 = vld [vmem:[#allocation4] sm:$0xff]
        %v5650 = vld [vmem:[#allocation4 + $0x8] sm:$0xff]
        %5651 = vst.msk [vmem:[#allocation3 + $0x28] sm:$0xff] %vm544, %v5649
        %5652 = vst.msk [vmem:[#allocation3 + $0x30] sm:$0xff] %vm544, %v5650
        %v5653 = vld [vmem:[#allocation4 + $0x20] sm:$0xff]
        %v5654 = vld [vmem:[#allocation4 + $0x28] sm:$0xff]
        %5655 = vst.msk [vmem:[#allocation3 + $0x48] sm:$0xff] %vm544, %v5653
        %5656 = vst.msk [vmem:[#allocation3 + $0x50] sm:$0xff] %vm544, %v5654
        %v5657 = vld [vmem:[#allocation4 + $0x40] sm:$0xff]
        %v5658 = vld [vmem:[#allocation4 + $0x48] sm:$0xff]
        %5659 = vst.msk [vmem:[#allocation3 + $0x68] sm:$0xff] %vm544, %v5657
        %5660 = vst.msk [vmem:[#allocation3 + $0x70] sm:$0xff] %vm544, %v5658
        %v5661 = vld [vmem:[#allocation4 + $0x60] sm:$0xff]
        %v5662 = vld [vmem:[#allocation4 + $0x68] sm:$0xff]
        %5663 = vst.msk [vmem:[#allocation3 + $0x88] sm:$0xff] %vm544, %v5661
        %5664 = vst.msk [vmem:[#allocation3 + $0x90] sm:$0xff] %vm544, %v5662
        %v5665 = vld [vmem:[#allocation4 + $0x80] sm:$0xff]
        %v5666 = vld [vmem:[#allocation4 + $0x88] sm:$0xff]
        %5667 = vst.msk [vmem:[#allocation3 + $0xa8] sm:$0xff] %vm544, %v5665
        %5668 = vst.msk [vmem:[#allocation3 + $0xb0] sm:$0xff] %vm544, %v5666
        %v5669 = vld [vmem:[#allocation4 + $0xa0] sm:$0xff]
        %v5670 = vld [vmem:[#allocation4 + $0xa8] sm:$0xff]
        %5671 = vst.msk [vmem:[#allocation3 + $0xc8] sm:$0xff] %vm544, %v5669
        %5672 = vst.msk [vmem:[#allocation3 + $0xd0] sm:$0xff] %vm544, %v5670
        %v5673 = vld [vmem:[#allocation4 + $0xc0] sm:$0xff]
        %v5674 = vld [vmem:[#allocation4 + $0xc8] sm:$0xff]
        %5675 = vst.msk [vmem:[#allocation3 + $0xe8] sm:$0xff] %vm544, %v5673
        %5676 = vst.msk [vmem:[#allocation3 + $0xf0] sm:$0xff] %vm544, %v5674
        %v5677 = vld [vmem:[#allocation4 + $0xe0] sm:$0xff]
        %v5678 = vld [vmem:[#allocation4 + $0xe8] sm:$0xff]
        %5679 = vst.msk [vmem:[#allocation3 + $0x108] sm:$0xff] %vm544, %v5677
        %5680 = vst.msk [vmem:[#allocation3 + $0x110] sm:$0xff] %vm544, %v5678
        %v5681 = vld [vmem:[#allocation4 + $0x100] sm:$0xff]
        %v5682 = vld [vmem:[#allocation4 + $0x108] sm:$0xff]
        %5683 = vst.msk [vmem:[#allocation3 + $0x128] sm:$0xff] %vm544, %v5681
        %5684 = vst.msk [vmem:[#allocation3 + $0x130] sm:$0xff] %vm544, %v5682
        %v5685 = vld [vmem:[#allocation4 + $0x120] sm:$0xff]
        %v5686 = vld [vmem:[#allocation4 + $0x128] sm:$0xff]
        %5687 = vst.msk [vmem:[#allocation3 + $0x148] sm:$0xff] %vm544, %v5685
        %5688 = vst.msk [vmem:[#allocation3 + $0x150] sm:$0xff] %vm544, %v5686
        %v5689 = vld [vmem:[#allocation4 + $0x140] sm:$0xff]
        %v5690 = vld [vmem:[#allocation4 + $0x148] sm:$0xff]
        %5691 = vst.msk [vmem:[#allocation3 + $0x168] sm:$0xff] %vm544, %v5689
        %5692 = vst.msk [vmem:[#allocation3 + $0x170] sm:$0xff] %vm544, %v5690
        %v5693 = vld [vmem:[#allocation4 + $0x160] sm:$0xff]
        %v5694 = vld [vmem:[#allocation4 + $0x168] sm:$0xff]
        %5695 = vst.msk [vmem:[#allocation3 + $0x188] sm:$0xff] %vm544, %v5693
        %5696 = vst.msk [vmem:[#allocation3 + $0x190] sm:$0xff] %vm544, %v5694
        %v5697 = vld [vmem:[#allocation4 + $0x180] sm:$0xff]
        %v5698 = vld [vmem:[#allocation4 + $0x188] sm:$0xff]
        %5699 = vst.msk [vmem:[#allocation3 + $0x1a8] sm:$0xff] %vm544, %v5697
        %5700 = vst.msk [vmem:[#allocation3 + $0x1b0] sm:$0xff] %vm544, %v5698
        %v5701 = vld [vmem:[#allocation4 + $0x1a0] sm:$0xff]
        %v5702 = vld [vmem:[#allocation4 + $0x1a8] sm:$0xff]
        %5703 = vst.msk [vmem:[#allocation3 + $0x1c8] sm:$0xff] %vm544, %v5701
        %5704 = vst.msk [vmem:[#allocation3 + $0x1d0] sm:$0xff] %vm544, %v5702
        %v5705 = vld [vmem:[#allocation4 + $0x1c0] sm:$0xff]
        %v5706 = vld [vmem:[#allocation4 + $0x1c8] sm:$0xff]
        %5707 = vst.msk [vmem:[#allocation3 + $0x1e8] sm:$0xff] %vm544, %v5705
        %5708 = vst.msk [vmem:[#allocation3 + $0x1f0] sm:$0xff] %vm544, %v5706
        %v5709 = vld [vmem:[#allocation4 + $0x1e0] sm:$0xff]
        %v5710 = vld [vmem:[#allocation4 + $0x1e8] sm:$0xff]
        %5711 = vst.msk [vmem:[#allocation3 + $0x208] sm:$0xff] %vm544, %v5709
        %5712 = vst.msk [vmem:[#allocation3 + $0x210] sm:$0xff] %vm544, %v5710
        %v5713 = vld [vmem:[#allocation3 + $0x7] sm:$0xff]
        %v5714 = vld [vmem:[#allocation3 + $0xf] sm:$0xff]
        %v5715 = vld [vmem:[#allocation3 + $0x17] sm:$0xff]
        %v5716 = vld [vmem:[#allocation3 + $0x1f] sm:$0xff]
        %v5717 = vld [vmem:[#allocation3 + $0x27] sm:$0xff]
        %v5718 = vld [vmem:[#allocation3 + $0x2f] sm:$0xff]
        %v5719 = vld [vmem:[#allocation3 + $0x37] sm:$0xff]
        %v5720 = vld [vmem:[#allocation3 + $0x3f] sm:$0xff]
        %v5721 = vld [vmem:[#allocation3 + $0x47] sm:$0xff]
        %v5722 = vld [vmem:[#allocation3 + $0x4f] sm:$0xff]
        %v5723 = vld [vmem:[#allocation3 + $0x57] sm:$0xff]
        %v5724 = vld [vmem:[#allocation3 + $0x5f] sm:$0xff]
        %v5725 = vld [vmem:[#allocation3 + $0x67] sm:$0xff]
        %v5726 = vld [vmem:[#allocation3 + $0x6f] sm:$0xff]
        %v5727 = vld [vmem:[#allocation3 + $0x77] sm:$0xff]
        %v5728 = vld [vmem:[#allocation3 + $0x7f] sm:$0xff]
        %v5729 = vld [vmem:[#allocation3 + $0x87] sm:$0xff]
        %v5730 = vld [vmem:[#allocation3 + $0x8f] sm:$0xff]
        %v5731 = vld [vmem:[#allocation3 + $0x97] sm:$0xff]
        %v5732 = vld [vmem:[#allocation3 + $0x9f] sm:$0xff]
        %v5733 = vld [vmem:[#allocation3 + $0xa7] sm:$0xff]
        %v5734 = vld [vmem:[#allocation3 + $0xaf] sm:$0xff]
        %v5735 = vld [vmem:[#allocation3 + $0xb7] sm:$0xff]
        %v5736 = vld [vmem:[#allocation3 + $0xbf] sm:$0xff]
        %v5737 = vld [vmem:[#allocation3 + $0xc7] sm:$0xff]
        %v5738 = vld [vmem:[#allocation3 + $0xcf] sm:$0xff]
        %v5739 = vld [vmem:[#allocation3 + $0xd7] sm:$0xff]
        %v5740 = vld [vmem:[#allocation3 + $0xdf] sm:$0xff]
        %v5741 = vld [vmem:[#allocation3 + $0xe7] sm:$0xff]
        %v5742 = vld [vmem:[#allocation3 + $0xef] sm:$0xff]
        %v5743 = vld [vmem:[#allocation3 + $0xf7] sm:$0xff]
        %v5744 = vld [vmem:[#allocation3 + $0xff] sm:$0xff]
        %v5745 = vld [vmem:[#allocation3 + $0x107] sm:$0xff]
        %v5746 = vld [vmem:[#allocation3 + $0x10f] sm:$0xff]
        %v5747 = vld [vmem:[#allocation3 + $0x117] sm:$0xff]
        %v5748 = vld [vmem:[#allocation3 + $0x11f] sm:$0xff]
        %v5749 = vld [vmem:[#allocation3 + $0x127] sm:$0xff]
        %v5750 = vld [vmem:[#allocation3 + $0x12f] sm:$0xff]
        %v5751 = vld [vmem:[#allocation3 + $0x137] sm:$0xff]
        %v5752 = vld [vmem:[#allocation3 + $0x13f] sm:$0xff]
        %v5753 = vld [vmem:[#allocation3 + $0x147] sm:$0xff]
        %v5754 = vld [vmem:[#allocation3 + $0x14f] sm:$0xff]
        %v5755 = vld [vmem:[#allocation3 + $0x157] sm:$0xff]
        %v5756 = vld [vmem:[#allocation3 + $0x15f] sm:$0xff]
        %v5757 = vld [vmem:[#allocation3 + $0x167] sm:$0xff]
        %v5758 = vld [vmem:[#allocation3 + $0x16f] sm:$0xff]
        %v5759 = vld [vmem:[#allocation3 + $0x177] sm:$0xff]
        %v5760 = vld [vmem:[#allocation3 + $0x17f] sm:$0xff]
        %v5761 = vld [vmem:[#allocation3 + $0x187] sm:$0xff]
        %v5762 = vld [vmem:[#allocation3 + $0x18f] sm:$0xff]
        %v5763 = vld [vmem:[#allocation3 + $0x197] sm:$0xff]
        %v5764 = vld [vmem:[#allocation3 + $0x19f] sm:$0xff]
        %v5765 = vld [vmem:[#allocation3 + $0x1a7] sm:$0xff]
        %v5766 = vld [vmem:[#allocation3 + $0x1af] sm:$0xff]
        %v5767 = vld [vmem:[#allocation3 + $0x1b7] sm:$0xff]
        %v5768 = vld [vmem:[#allocation3 + $0x1bf] sm:$0xff]
        %v5769 = vld [vmem:[#allocation3 + $0x1c7] sm:$0xff]
        %v5770 = vld [vmem:[#allocation3 + $0x1cf] sm:$0xff]
        %v5771 = vld [vmem:[#allocation3 + $0x1d7] sm:$0xff]
        %v5772 = vld [vmem:[#allocation3 + $0x1df] sm:$0xff]
        %v5773 = vld [vmem:[#allocation3 + $0x1e7] sm:$0xff]
        %v5774 = vld [vmem:[#allocation3 + $0x1ef] sm:$0xff]
        %v5775 = vld [vmem:[#allocation3 + $0x1f7] sm:$0xff]
        %v5776 = vld [vmem:[#allocation3 + $0x1ff] sm:$0xff]
        %v5777 = vld [vmem:[#allocation12] sm:$0xff]
        %v5778 = vld [vmem:[#allocation12 + $0x8] sm:$0xff]
        %v5779 = vld [vmem:[#allocation12 + $0x10] sm:$0xff]
        %v5780 = vld [vmem:[#allocation12 + $0x18] sm:$0xff]
        %v5781 = vld [vmem:[#allocation3 + $0x8] sm:$0xff]
        %v5782 = vld [vmem:[#allocation3 + $0x10] sm:$0xff]
        %v5783 = vld [vmem:[#allocation3 + $0x18] sm:$0xff]
        %v5784 = vld [vmem:[#allocation3 + $0x20] sm:$0xff]
        %v5785 = vld [vmem:[#allocation3 + $0x28] sm:$0xff]
        %v5786 = vld [vmem:[#allocation3 + $0x30] sm:$0xff]
        %v5787 = vld [vmem:[#allocation3 + $0x38] sm:$0xff]
        %v5788 = vld [vmem:[#allocation3 + $0x40] sm:$0xff]
        %v5789 = vld [vmem:[#allocation3 + $0x48] sm:$0xff]
        %v5790 = vld [vmem:[#allocation3 + $0x50] sm:$0xff]
        %v5791 = vld [vmem:[#allocation3 + $0x58] sm:$0xff]
        %v5792 = vld [vmem:[#allocation3 + $0x60] sm:$0xff]
        %v5793 = vld [vmem:[#allocation3 + $0x68] sm:$0xff]
        %v5794 = vld [vmem:[#allocation3 + $0x70] sm:$0xff]
        %v5795 = vld [vmem:[#allocation3 + $0x78] sm:$0xff]
        %v5796 = vld [vmem:[#allocation3 + $0x80] sm:$0xff]
        %v5797 = vld [vmem:[#allocation3 + $0x88] sm:$0xff]
        %v5798 = vld [vmem:[#allocation3 + $0x90] sm:$0xff]
        %v5799 = vld [vmem:[#allocation3 + $0x98] sm:$0xff]
        %v5800 = vld [vmem:[#allocation3 + $0xa0] sm:$0xff]
        %v5801 = vld [vmem:[#allocation3 + $0xa8] sm:$0xff]
        %v5802 = vld [vmem:[#allocation3 + $0xb0] sm:$0xff]
        %v5803 = vld [vmem:[#allocation3 + $0xb8] sm:$0xff]
        %v5804 = vld [vmem:[#allocation3 + $0xc0] sm:$0xff]
        %v5805 = vld [vmem:[#allocation3 + $0xc8] sm:$0xff]
        %v5806 = vld [vmem:[#allocation3 + $0xd0] sm:$0xff]
        %v5807 = vld [vmem:[#allocation3 + $0xd8] sm:$0xff]
        %v5808 = vld [vmem:[#allocation3 + $0xe0] sm:$0xff]
        %v5809 = vld [vmem:[#allocation3 + $0xe8] sm:$0xff]
        %v5810 = vld [vmem:[#allocation3 + $0xf0] sm:$0xff]
        %v5811 = vld [vmem:[#allocation3 + $0xf8] sm:$0xff]
        %v5812 = vld [vmem:[#allocation3 + $0x100] sm:$0xff]
        %v5813 = vld [vmem:[#allocation3 + $0x108] sm:$0xff]
        %v5814 = vld [vmem:[#allocation3 + $0x110] sm:$0xff]
        %v5815 = vld [vmem:[#allocation3 + $0x118] sm:$0xff]
        %v5816 = vld [vmem:[#allocation3 + $0x120] sm:$0xff]
        %v5817 = vld [vmem:[#allocation3 + $0x128] sm:$0xff]
        %v5818 = vld [vmem:[#allocation3 + $0x130] sm:$0xff]
        %v5819 = vld [vmem:[#allocation3 + $0x138] sm:$0xff]
        %v5820 = vld [vmem:[#allocation3 + $0x140] sm:$0xff]
        %v5821 = vld [vmem:[#allocation3 + $0x148] sm:$0xff]
        %v5822 = vld [vmem:[#allocation3 + $0x150] sm:$0xff]
        %v5823 = vld [vmem:[#allocation3 + $0x158] sm:$0xff]
        %v5824 = vld [vmem:[#allocation3 + $0x160] sm:$0xff]
        %v5825 = vld [vmem:[#allocation3 + $0x168] sm:$0xff]
        %v5826 = vld [vmem:[#allocation3 + $0x170] sm:$0xff]
        %v5827 = vld [vmem:[#allocation3 + $0x178] sm:$0xff]
        %v5828 = vld [vmem:[#allocation3 + $0x180] sm:$0xff]
        %v5829 = vld [vmem:[#allocation3 + $0x188] sm:$0xff]
        %v5830 = vld [vmem:[#allocation3 + $0x190] sm:$0xff]
        %v5831 = vld [vmem:[#allocation3 + $0x198] sm:$0xff]
        %v5832 = vld [vmem:[#allocation3 + $0x1a0] sm:$0xff]
        %v5833 = vld [vmem:[#allocation3 + $0x1a8] sm:$0xff]
        %v5834 = vld [vmem:[#allocation3 + $0x1b0] sm:$0xff]
        %v5835 = vld [vmem:[#allocation3 + $0x1b8] sm:$0xff]
        %v5836 = vld [vmem:[#allocation3 + $0x1c0] sm:$0xff]
        %v5837 = vld [vmem:[#allocation3 + $0x1c8] sm:$0xff]
        %v5838 = vld [vmem:[#allocation3 + $0x1d0] sm:$0xff]
        %v5839 = vld [vmem:[#allocation3 + $0x1d8] sm:$0xff]
        %v5840 = vld [vmem:[#allocation3 + $0x1e0] sm:$0xff]
        %v5841 = vld [vmem:[#allocation3 + $0x1e8] sm:$0xff]
        %v5842 = vld [vmem:[#allocation3 + $0x1f0] sm:$0xff]
        %v5843 = vld [vmem:[#allocation3 + $0x1f8] sm:$0xff]
        %v5844 = vld [vmem:[#allocation3 + $0x200] sm:$0xff]
        %s5845 = scalar_lea.vmem [#allocation12], 32
        %v5846 = vld [vmem:[%s5845] sm:$0xff]
        %v5847 = vld [vmem:[%s5845 + $0x8] sm:$0xff]
        %v5848 = vld [vmem:[%s5845 + $0x10] sm:$0xff]
        %v5849 = vld [vmem:[%s5845 + $0x18] sm:$0xff]
        %v5851 = vsel %vm544, %v5781, 0
        %v5854 = vsel %vm544, %v5782, 0
        %v5857 = vsel %vm544, %v5783, 0
        %v5860 = vsel %vm544, %v5784, 0
        %v5863 = vsel %vm544, %v5785, 0
        %v5866 = vsel %vm544, %v5786, 0
        %v5869 = vsel %vm544, %v5787, 0
        %v5872 = vsel %vm544, %v5788, 0
        %v5875 = vsel %vm544, %v5789, 0
        %v5878 = vsel %vm544, %v5790, 0
        %v5881 = vsel %vm544, %v5791, 0
        %v5884 = vsel %vm544, %v5792, 0
        %v5887 = vsel %vm544, %v5793, 0
        %v5890 = vsel %vm544, %v5794, 0
        %v5893 = vsel %vm544, %v5795, 0
        %v5896 = vsel %vm544, %v5796, 0
        %v5899 = vsel %vm544, %v5797, 0
        %v5902 = vsel %vm544, %v5798, 0
        %v5905 = vsel %vm544, %v5799, 0
        %v5908 = vsel %vm544, %v5800, 0
        %v5911 = vsel %vm544, %v5801, 0
        %v5914 = vsel %vm544, %v5802, 0
        %v5917 = vsel %vm544, %v5803, 0
        %v5920 = vsel %vm544, %v5804, 0
        %v5923 = vsel %vm544, %v5805, 0
        %v5926 = vsel %vm544, %v5806, 0
        %v5929 = vsel %vm544, %v5807, 0
        %v5932 = vsel %vm544, %v5808, 0
        %v5935 = vsel %vm544, %v5809, 0
        %v5938 = vsel %vm544, %v5810, 0
        %v5941 = vsel %vm544, %v5811, 0
        %v5944 = vsel %vm544, %v5812, 0
        %v5947 = vsel %vm544, %v5813, 0
        %v5950 = vsel %vm544, %v5814, 0
        %v5953 = vsel %vm544, %v5815, 0
        %v5956 = vsel %vm544, %v5816, 0
        %v5959 = vsel %vm544, %v5817, 0
        %v5962 = vsel %vm544, %v5818, 0
        %v5965 = vsel %vm544, %v5819, 0
        %v5968 = vsel %vm544, %v5820, 0
        %v5971 = vsel %vm544, %v5821, 0
        %v5974 = vsel %vm544, %v5822, 0
        %v5977 = vsel %vm544, %v5823, 0
        %v5980 = vsel %vm544, %v5824, 0
        %v5983 = vsel %vm544, %v5825, 0
        %v5986 = vsel %vm544, %v5826, 0
        %v5989 = vsel %vm544, %v5827, 0
        %v5992 = vsel %vm544, %v5828, 0
        %v5995 = vsel %vm544, %v5829, 0
        %v5998 = vsel %vm544, %v5830, 0
        %v6001 = vsel %vm544, %v5831, 0
        %v6004 = vsel %vm544, %v5832, 0
        %v6007 = vsel %vm544, %v5833, 0
        %v6010 = vsel %vm544, %v5834, 0
        %v6013 = vsel %vm544, %v5835, 0
        %v6016 = vsel %vm544, %v5836, 0
        %v6019 = vsel %vm544, %v5837, 0
        %v6022 = vsel %vm544, %v5838, 0
        %v6025 = vsel %vm544, %v5839, 0
        %v6028 = vsel %vm544, %v5840, 0
        %v6031 = vsel %vm544, %v5841, 0
        %v6034 = vsel %vm544, %v5842, 0
        %v6037 = vsel %vm544, %v5843, 0
        %v6040 = vsel %vm544, %v5844, 0
        %6042 = vmatpush.msra.mxu0 0.0
        %6043 = vmatpush.msra.mxu0 0.0
        %6044 = vmatpush.msra.mxu0 0.0
        %6045 = vmatpush.msra.mxu0 0.0
        %6046 = vmatpush.msra.mxu0 0.0
        %6047 = vmatpush.msra.mxu0 0.0
        %6048 = vmatpush.msra.mxu0 0.0
        %6049 = vmatpush.msra.mxu0 0.0
        %6050 = vmatpush.msra.mxu0 0.0
        %6051 = vmatpush.msra.mxu0 0.0
        %6052 = vmatpush.msra.mxu0 0.0
        %6053 = vmatpush.msra.mxu0 0.0
        %6054 = vmatpush.msra.mxu0 %v5849
        %6055 = vmatpush.msra.mxu0 %v5848
        %6056 = vmatpush.msra.mxu0 %v5847
        %6057 = vmatpush.msra.mxu0 %v5846
        %6058 = vmatmul.f32.gmra.mxu0 %v5851
        %v6059 = vpop.f32.mrf.mxu0
        %v6060 = vadd.f32 0.0, %v6059
        %6061 = vmatmul.f32.gmra.mxu0 %v5854
        %v6062 = vpop.f32.mrf.mxu0
        %v6063 = vadd.f32 0.0, %v6062
        %6064 = vmatmul.f32.gmra.mxu0 %v5857
        %v6065 = vpop.f32.mrf.mxu0
        %v6066 = vadd.f32 0.0, %v6065
        %6067 = vmatmul.f32.gmra.mxu0 %v5860
        %v6068 = vpop.f32.mrf.mxu0
        %v6069 = vadd.f32 0.0, %v6068
        %6070 = vmatmul.f32.gmra.mxu0 %v5863
        %v6071 = vpop.f32.mrf.mxu0
        %v6072 = vadd.f32 0.0, %v6071
        %6073 = vmatmul.f32.gmra.mxu0 %v5866
        %v6074 = vpop.f32.mrf.mxu0
        %v6075 = vadd.f32 0.0, %v6074
        %6076 = vmatmul.f32.gmra.mxu0 %v5869
        %v6077 = vpop.f32.mrf.mxu0
        %v6078 = vadd.f32 0.0, %v6077
        %6079 = vmatmul.f32.gmra.mxu0 %v5872
        %v6080 = vpop.f32.mrf.mxu0
        %v6081 = vadd.f32 0.0, %v6080
        %6082 = vmatmul.f32.gmra.mxu0 %v5875
        %v6083 = vpop.f32.mrf.mxu0
        %v6084 = vadd.f32 0.0, %v6083
        %6085 = vmatmul.f32.gmra.mxu0 %v5878
        %v6086 = vpop.f32.mrf.mxu0
        %v6087 = vadd.f32 0.0, %v6086
        %6088 = vmatmul.f32.gmra.mxu0 %v5881
        %v6089 = vpop.f32.mrf.mxu0
        %v6090 = vadd.f32 0.0, %v6089
        %6091 = vmatmul.f32.gmra.mxu0 %v5884
        %v6092 = vpop.f32.mrf.mxu0
        %v6093 = vadd.f32 0.0, %v6092
        %6094 = vmatmul.f32.gmra.mxu0 %v5887
        %v6095 = vpop.f32.mrf.mxu0
        %v6096 = vadd.f32 0.0, %v6095
        %6097 = vmatmul.f32.gmra.mxu0 %v5890
        %v6098 = vpop.f32.mrf.mxu0
        %v6099 = vadd.f32 0.0, %v6098
        %6100 = vmatmul.f32.gmra.mxu0 %v5893
        %v6101 = vpop.f32.mrf.mxu0
        %v6102 = vadd.f32 0.0, %v6101
        %6103 = vmatmul.f32.gmra.mxu0 %v5896
        %v6104 = vpop.f32.mrf.mxu0
        %v6105 = vadd.f32 0.0, %v6104
        %6106 = vmatmul.f32.gmra.mxu0 %v5899
        %v6107 = vpop.f32.mrf.mxu0
        %v6108 = vadd.f32 0.0, %v6107
        %6109 = vmatmul.f32.gmra.mxu0 %v5902
        %v6110 = vpop.f32.mrf.mxu0
        %v6111 = vadd.f32 0.0, %v6110
        %6112 = vmatmul.f32.gmra.mxu0 %v5905
        %v6113 = vpop.f32.mrf.mxu0
        %v6114 = vadd.f32 0.0, %v6113
        %6115 = vmatmul.f32.gmra.mxu0 %v5908
        %v6116 = vpop.f32.mrf.mxu0
        %v6117 = vadd.f32 0.0, %v6116
        %6118 = vmatmul.f32.gmra.mxu0 %v5911
        %v6119 = vpop.f32.mrf.mxu0
        %v6120 = vadd.f32 0.0, %v6119
        %6121 = vmatmul.f32.gmra.mxu0 %v5914
        %v6122 = vpop.f32.mrf.mxu0
        %v6123 = vadd.f32 0.0, %v6122
        %6124 = vmatmul.f32.gmra.mxu0 %v5917
        %v6125 = vpop.f32.mrf.mxu0
        %v6126 = vadd.f32 0.0, %v6125
        %6127 = vmatmul.f32.gmra.mxu0 %v5920
        %v6128 = vpop.f32.mrf.mxu0
        %v6129 = vadd.f32 0.0, %v6128
        %6130 = vmatmul.f32.gmra.mxu0 %v5923
        %v6131 = vpop.f32.mrf.mxu0
        %v6132 = vadd.f32 0.0, %v6131
        %6133 = vmatmul.f32.gmra.mxu0 %v5926
        %v6134 = vpop.f32.mrf.mxu0
        %v6135 = vadd.f32 0.0, %v6134
        %6136 = vmatmul.f32.gmra.mxu0 %v5929
        %v6137 = vpop.f32.mrf.mxu0
        %v6138 = vadd.f32 0.0, %v6137
        %6139 = vmatmul.f32.gmra.mxu0 %v5932
        %v6140 = vpop.f32.mrf.mxu0
        %v6141 = vadd.f32 0.0, %v6140
        %6142 = vmatmul.f32.gmra.mxu0 %v5935
        %v6143 = vpop.f32.mrf.mxu0
        %v6144 = vadd.f32 0.0, %v6143
        %6145 = vmatmul.f32.gmra.mxu0 %v5938
        %v6146 = vpop.f32.mrf.mxu0
        %v6147 = vadd.f32 0.0, %v6146
        %6148 = vmatmul.f32.gmra.mxu0 %v5941
        %v6149 = vpop.f32.mrf.mxu0
        %v6150 = vadd.f32 0.0, %v6149
        %6151 = vmatmul.f32.gmra.mxu0 %v5944
        %v6152 = vpop.f32.mrf.mxu0
        %v6153 = vadd.f32 0.0, %v6152
        %6154 = vmatmul.f32.gmra.mxu0 %v5947
        %v6155 = vpop.f32.mrf.mxu0
        %v6156 = vadd.f32 0.0, %v6155
        %6157 = vmatmul.f32.gmra.mxu0 %v5950
        %v6158 = vpop.f32.mrf.mxu0
        %v6159 = vadd.f32 0.0, %v6158
        %6160 = vmatmul.f32.gmra.mxu0 %v5953
        %v6161 = vpop.f32.mrf.mxu0
        %v6162 = vadd.f32 0.0, %v6161
        %6163 = vmatmul.f32.gmra.mxu0 %v5956
        %v6164 = vpop.f32.mrf.mxu0
        %v6165 = vadd.f32 0.0, %v6164
        %6166 = vmatmul.f32.gmra.mxu0 %v5959
        %v6167 = vpop.f32.mrf.mxu0
        %v6168 = vadd.f32 0.0, %v6167
        %6169 = vmatmul.f32.gmra.mxu0 %v5962
        %v6170 = vpop.f32.mrf.mxu0
        %v6171 = vadd.f32 0.0, %v6170
        %6172 = vmatmul.f32.gmra.mxu0 %v5965
        %v6173 = vpop.f32.mrf.mxu0
        %v6174 = vadd.f32 0.0, %v6173
        %6175 = vmatmul.f32.gmra.mxu0 %v5968
        %v6176 = vpop.f32.mrf.mxu0
        %v6177 = vadd.f32 0.0, %v6176
        %6178 = vmatmul.f32.gmra.mxu0 %v5971
        %v6179 = vpop.f32.mrf.mxu0
        %v6180 = vadd.f32 0.0, %v6179
        %6181 = vmatmul.f32.gmra.mxu0 %v5974
        %v6182 = vpop.f32.mrf.mxu0
        %v6183 = vadd.f32 0.0, %v6182
        %6184 = vmatmul.f32.gmra.mxu0 %v5977
        %v6185 = vpop.f32.mrf.mxu0
        %v6186 = vadd.f32 0.0, %v6185
        %6187 = vmatmul.f32.gmra.mxu0 %v5980
        %v6188 = vpop.f32.mrf.mxu0
        %v6189 = vadd.f32 0.0, %v6188
        %6190 = vmatmul.f32.gmra.mxu0 %v5983
        %v6191 = vpop.f32.mrf.mxu0
        %v6192 = vadd.f32 0.0, %v6191
        %6193 = vmatmul.f32.gmra.mxu0 %v5986
        %v6194 = vpop.f32.mrf.mxu0
        %v6195 = vadd.f32 0.0, %v6194
        %6196 = vmatmul.f32.gmra.mxu0 %v5989
        %v6197 = vpop.f32.mrf.mxu0
        %v6198 = vadd.f32 0.0, %v6197
        %6199 = vmatmul.f32.gmra.mxu0 %v5992
        %v6200 = vpop.f32.mrf.mxu0
        %v6201 = vadd.f32 0.0, %v6200
        %6202 = vmatmul.f32.gmra.mxu0 %v5995
        %v6203 = vpop.f32.mrf.mxu0
        %v6204 = vadd.f32 0.0, %v6203
        %6205 = vmatmul.f32.gmra.mxu0 %v5998
        %v6206 = vpop.f32.mrf.mxu0
        %v6207 = vadd.f32 0.0, %v6206
        %6208 = vmatmul.f32.gmra.mxu0 %v6001
        %v6209 = vpop.f32.mrf.mxu0
        %v6210 = vadd.f32 0.0, %v6209
        %6211 = vmatmul.f32.gmra.mxu0 %v6004
        %v6212 = vpop.f32.mrf.mxu0
        %v6213 = vadd.f32 0.0, %v6212
        %6214 = vmatmul.f32.gmra.mxu0 %v6007
        %v6215 = vpop.f32.mrf.mxu0
        %v6216 = vadd.f32 0.0, %v6215
        %6217 = vmatmul.f32.gmra.mxu0 %v6010
        %v6218 = vpop.f32.mrf.mxu0
        %v6219 = vadd.f32 0.0, %v6218
        %6220 = vmatmul.f32.gmra.mxu0 %v6013
        %v6221 = vpop.f32.mrf.mxu0
        %v6222 = vadd.f32 0.0, %v6221
        %6223 = vmatmul.f32.gmra.mxu0 %v6016
        %v6224 = vpop.f32.mrf.mxu0
        %v6225 = vadd.f32 0.0, %v6224
        %6226 = vmatmul.f32.gmra.mxu0 %v6019
        %v6227 = vpop.f32.mrf.mxu0
        %v6228 = vadd.f32 0.0, %v6227
        %6229 = vmatmul.f32.gmra.mxu0 %v6022
        %v6230 = vpop.f32.mrf.mxu0
        %v6231 = vadd.f32 0.0, %v6230
        %6232 = vmatmul.f32.gmra.mxu0 %v6025
        %v6233 = vpop.f32.mrf.mxu0
        %v6234 = vadd.f32 0.0, %v6233
        %6235 = vmatmul.f32.gmra.mxu0 %v6028
        %v6236 = vpop.f32.mrf.mxu0
        %v6237 = vadd.f32 0.0, %v6236
        %6238 = vmatmul.f32.gmra.mxu0 %v6031
        %v6239 = vpop.f32.mrf.mxu0
        %v6240 = vadd.f32 0.0, %v6239
        %6241 = vmatmul.f32.gmra.mxu0 %v6034
        %v6242 = vpop.f32.mrf.mxu0
        %v6243 = vadd.f32 0.0, %v6242
        %6244 = vmatmul.f32.gmra.mxu0 %v6037
        %v6245 = vpop.f32.mrf.mxu0
        %v6246 = vadd.f32 0.0, %v6245
        %6247 = vmatmul.f32.gmra.mxu0 %v6040
        %v6248 = vpop.f32.mrf.mxu0
        %v6249 = vadd.f32 0.0, %v6248
        %6250 = vdwg.mxu0
        %v6252 = vsel %vm544, %v5713, 0
        %v6255 = vsel %vm544, %v5714, 0
        %v6258 = vsel %vm544, %v5715, 0
        %v6261 = vsel %vm544, %v5716, 0
        %v6264 = vsel %vm544, %v5717, 0
        %v6267 = vsel %vm544, %v5718, 0
        %v6270 = vsel %vm544, %v5719, 0
        %v6273 = vsel %vm544, %v5720, 0
        %v6276 = vsel %vm544, %v5721, 0
        %v6279 = vsel %vm544, %v5722, 0
        %v6282 = vsel %vm544, %v5723, 0
        %v6285 = vsel %vm544, %v5724, 0
        %v6288 = vsel %vm544, %v5725, 0
        %v6291 = vsel %vm544, %v5726, 0
        %v6294 = vsel %vm544, %v5727, 0
        %v6297 = vsel %vm544, %v5728, 0
        %v6300 = vsel %vm544, %v5729, 0
        %v6303 = vsel %vm544, %v5730, 0
        %v6306 = vsel %vm544, %v5731, 0
        %v6309 = vsel %vm544, %v5732, 0
        %v6312 = vsel %vm544, %v5733, 0
        %v6315 = vsel %vm544, %v5734, 0
        %v6318 = vsel %vm544, %v5735, 0
        %v6321 = vsel %vm544, %v5736, 0
        %v6324 = vsel %vm544, %v5737, 0
        %v6327 = vsel %vm544, %v5738, 0
        %v6330 = vsel %vm544, %v5739, 0
        %v6333 = vsel %vm544, %v5740, 0
        %v6336 = vsel %vm544, %v5741, 0
        %v6339 = vsel %vm544, %v5742, 0
        %v6342 = vsel %vm544, %v5743, 0
        %v6345 = vsel %vm544, %v5744, 0
        %v6348 = vsel %vm544, %v5745, 0
        %v6351 = vsel %vm544, %v5746, 0
        %v6354 = vsel %vm544, %v5747, 0
        %v6357 = vsel %vm544, %v5748, 0
        %v6360 = vsel %vm544, %v5749, 0
        %v6363 = vsel %vm544, %v5750, 0
        %v6366 = vsel %vm544, %v5751, 0
        %v6369 = vsel %vm544, %v5752, 0
        %v6372 = vsel %vm544, %v5753, 0
        %v6375 = vsel %vm544, %v5754, 0
        %v6378 = vsel %vm544, %v5755, 0
        %v6381 = vsel %vm544, %v5756, 0
        %v6384 = vsel %vm544, %v5757, 0
        %v6387 = vsel %vm544, %v5758, 0
        %v6390 = vsel %vm544, %v5759, 0
        %v6393 = vsel %vm544, %v5760, 0
        %v6396 = vsel %vm544, %v5761, 0
        %v6399 = vsel %vm544, %v5762, 0
        %v6402 = vsel %vm544, %v5763, 0
        %v6405 = vsel %vm544, %v5764, 0
        %v6408 = vsel %vm544, %v5765, 0
        %v6411 = vsel %vm544, %v5766, 0
        %v6414 = vsel %vm544, %v5767, 0
        %v6417 = vsel %vm544, %v5768, 0
        %v6420 = vsel %vm544, %v5769, 0
        %v6423 = vsel %vm544, %v5770, 0
        %v6426 = vsel %vm544, %v5771, 0
        %v6429 = vsel %vm544, %v5772, 0
        %v6432 = vsel %vm544, %v5773, 0
        %v6435 = vsel %vm544, %v5774, 0
        %v6438 = vsel %vm544, %v5775, 0
        %v6441 = vsel %vm544, %v5776, 0
        %6443 = vmatpush.msra.mxu0 0.0
        %6444 = vmatpush.msra.mxu0 0.0
        %6445 = vmatpush.msra.mxu0 0.0
        %6446 = vmatpush.msra.mxu0 0.0
        %6447 = vmatpush.msra.mxu0 0.0
        %6448 = vmatpush.msra.mxu0 0.0
        %6449 = vmatpush.msra.mxu0 0.0
        %6450 = vmatpush.msra.mxu0 0.0
        %6451 = vmatpush.msra.mxu0 0.0
        %6452 = vmatpush.msra.mxu0 0.0
        %6453 = vmatpush.msra.mxu0 0.0
        %6454 = vmatpush.msra.mxu0 0.0
        %6455 = vmatpush.msra.mxu0 %v5780
        %6456 = vmatpush.msra.mxu0 %v5779
        %6457 = vmatpush.msra.mxu0 %v5778
        %6458 = vmatpush.msra.mxu0 %v5777
        %6459 = vmatmul.f32.gmra.mxu0 %v6252
        %v6460 = vpop.f32.mrf.mxu0
        %v6461 = vadd.f32 %v6060, %v6460
        %6462 = vmatmul.f32.gmra.mxu0 %v6255
        %v6463 = vpop.f32.mrf.mxu0
        %v6464 = vadd.f32 %v6063, %v6463
        %6465 = vmatmul.f32.gmra.mxu0 %v6258
        %v6466 = vpop.f32.mrf.mxu0
        %v6467 = vadd.f32 %v6066, %v6466
        %6468 = vmatmul.f32.gmra.mxu0 %v6261
        %v6469 = vpop.f32.mrf.mxu0
        %v6470 = vadd.f32 %v6069, %v6469
        %6471 = vmatmul.f32.gmra.mxu0 %v6264
        %v6472 = vpop.f32.mrf.mxu0
        %v6473 = vadd.f32 %v6072, %v6472
        %6474 = vmatmul.f32.gmra.mxu0 %v6267
        %v6475 = vpop.f32.mrf.mxu0
        %v6476 = vadd.f32 %v6075, %v6475
        %6477 = vmatmul.f32.gmra.mxu0 %v6270
        %v6478 = vpop.f32.mrf.mxu0
        %v6479 = vadd.f32 %v6078, %v6478
        %6480 = vmatmul.f32.gmra.mxu0 %v6273
        %v6481 = vpop.f32.mrf.mxu0
        %v6482 = vadd.f32 %v6081, %v6481
        %6483 = vmatmul.f32.gmra.mxu0 %v6276
        %v6484 = vpop.f32.mrf.mxu0
        %v6485 = vadd.f32 %v6084, %v6484
        %6486 = vmatmul.f32.gmra.mxu0 %v6279
        %v6487 = vpop.f32.mrf.mxu0
        %v6488 = vadd.f32 %v6087, %v6487
        %6489 = vmatmul.f32.gmra.mxu0 %v6282
        %v6490 = vpop.f32.mrf.mxu0
        %v6491 = vadd.f32 %v6090, %v6490
        %6492 = vmatmul.f32.gmra.mxu0 %v6285
        %v6493 = vpop.f32.mrf.mxu0
        %v6494 = vadd.f32 %v6093, %v6493
        %6495 = vmatmul.f32.gmra.mxu0 %v6288
        %v6496 = vpop.f32.mrf.mxu0
        %v6497 = vadd.f32 %v6096, %v6496
        %6498 = vmatmul.f32.gmra.mxu0 %v6291
        %v6499 = vpop.f32.mrf.mxu0
        %v6500 = vadd.f32 %v6099, %v6499
        %6501 = vmatmul.f32.gmra.mxu0 %v6294
        %v6502 = vpop.f32.mrf.mxu0
        %v6503 = vadd.f32 %v6102, %v6502
        %6504 = vmatmul.f32.gmra.mxu0 %v6297
        %v6505 = vpop.f32.mrf.mxu0
        %v6506 = vadd.f32 %v6105, %v6505
        %6507 = vmatmul.f32.gmra.mxu0 %v6300
        %v6508 = vpop.f32.mrf.mxu0
        %v6509 = vadd.f32 %v6108, %v6508
        %6510 = vmatmul.f32.gmra.mxu0 %v6303
        %v6511 = vpop.f32.mrf.mxu0
        %v6512 = vadd.f32 %v6111, %v6511
        %6513 = vmatmul.f32.gmra.mxu0 %v6306
        %v6514 = vpop.f32.mrf.mxu0
        %v6515 = vadd.f32 %v6114, %v6514
        %6516 = vmatmul.f32.gmra.mxu0 %v6309
        %v6517 = vpop.f32.mrf.mxu0
        %v6518 = vadd.f32 %v6117, %v6517
        %6519 = vmatmul.f32.gmra.mxu0 %v6312
        %v6520 = vpop.f32.mrf.mxu0
        %v6521 = vadd.f32 %v6120, %v6520
        %6522 = vmatmul.f32.gmra.mxu0 %v6315
        %v6523 = vpop.f32.mrf.mxu0
        %v6524 = vadd.f32 %v6123, %v6523
        %6525 = vmatmul.f32.gmra.mxu0 %v6318
        %v6526 = vpop.f32.mrf.mxu0
        %v6527 = vadd.f32 %v6126, %v6526
        %6528 = vmatmul.f32.gmra.mxu0 %v6321
        %v6529 = vpop.f32.mrf.mxu0
        %v6530 = vadd.f32 %v6129, %v6529
        %6531 = vmatmul.f32.gmra.mxu0 %v6324
        %v6532 = vpop.f32.mrf.mxu0
        %v6533 = vadd.f32 %v6132, %v6532
        %6534 = vmatmul.f32.gmra.mxu0 %v6327
        %v6535 = vpop.f32.mrf.mxu0
        %v6536 = vadd.f32 %v6135, %v6535
        %6537 = vmatmul.f32.gmra.mxu0 %v6330
        %v6538 = vpop.f32.mrf.mxu0
        %v6539 = vadd.f32 %v6138, %v6538
        %6540 = vmatmul.f32.gmra.mxu0 %v6333
        %v6541 = vpop.f32.mrf.mxu0
        %v6542 = vadd.f32 %v6141, %v6541
        %6543 = vmatmul.f32.gmra.mxu0 %v6336
        %v6544 = vpop.f32.mrf.mxu0
        %v6545 = vadd.f32 %v6144, %v6544
        %6546 = vmatmul.f32.gmra.mxu0 %v6339
        %v6547 = vpop.f32.mrf.mxu0
        %v6548 = vadd.f32 %v6147, %v6547
        %6549 = vmatmul.f32.gmra.mxu0 %v6342
        %v6550 = vpop.f32.mrf.mxu0
        %v6551 = vadd.f32 %v6150, %v6550
        %6552 = vmatmul.f32.gmra.mxu0 %v6345
        %v6553 = vpop.f32.mrf.mxu0
        %v6554 = vadd.f32 %v6153, %v6553
        %6555 = vmatmul.f32.gmra.mxu0 %v6348
        %v6556 = vpop.f32.mrf.mxu0
        %v6557 = vadd.f32 %v6156, %v6556
        %6558 = vmatmul.f32.gmra.mxu0 %v6351
        %v6559 = vpop.f32.mrf.mxu0
        %v6560 = vadd.f32 %v6159, %v6559
        %6561 = vmatmul.f32.gmra.mxu0 %v6354
        %v6562 = vpop.f32.mrf.mxu0
        %v6563 = vadd.f32 %v6162, %v6562
        %6564 = vmatmul.f32.gmra.mxu0 %v6357
        %v6565 = vpop.f32.mrf.mxu0
        %v6566 = vadd.f32 %v6165, %v6565
        %6567 = vmatmul.f32.gmra.mxu0 %v6360
        %v6568 = vpop.f32.mrf.mxu0
        %v6569 = vadd.f32 %v6168, %v6568
        %6570 = vmatmul.f32.gmra.mxu0 %v6363
        %v6571 = vpop.f32.mrf.mxu0
        %v6572 = vadd.f32 %v6171, %v6571
        %6573 = vmatmul.f32.gmra.mxu0 %v6366
        %v6574 = vpop.f32.mrf.mxu0
        %v6575 = vadd.f32 %v6174, %v6574
        %6576 = vmatmul.f32.gmra.mxu0 %v6369
        %v6577 = vpop.f32.mrf.mxu0
        %v6578 = vadd.f32 %v6177, %v6577
        %6579 = vmatmul.f32.gmra.mxu0 %v6372
        %v6580 = vpop.f32.mrf.mxu0
        %v6581 = vadd.f32 %v6180, %v6580
        %6582 = vmatmul.f32.gmra.mxu0 %v6375
        %v6583 = vpop.f32.mrf.mxu0
        %v6584 = vadd.f32 %v6183, %v6583
        %6585 = vmatmul.f32.gmra.mxu0 %v6378
        %v6586 = vpop.f32.mrf.mxu0
        %v6587 = vadd.f32 %v6186, %v6586
        %6588 = vmatmul.f32.gmra.mxu0 %v6381
        %v6589 = vpop.f32.mrf.mxu0
        %v6590 = vadd.f32 %v6189, %v6589
        %6591 = vmatmul.f32.gmra.mxu0 %v6384
        %v6592 = vpop.f32.mrf.mxu0
        %v6593 = vadd.f32 %v6192, %v6592
        %6594 = vmatmul.f32.gmra.mxu0 %v6387
        %v6595 = vpop.f32.mrf.mxu0
        %v6596 = vadd.f32 %v6195, %v6595
        %6597 = vmatmul.f32.gmra.mxu0 %v6390
        %v6598 = vpop.f32.mrf.mxu0
        %v6599 = vadd.f32 %v6198, %v6598
        %6600 = vmatmul.f32.gmra.mxu0 %v6393
        %v6601 = vpop.f32.mrf.mxu0
        %v6602 = vadd.f32 %v6201, %v6601
        %6603 = vmatmul.f32.gmra.mxu0 %v6396
        %v6604 = vpop.f32.mrf.mxu0
        %v6605 = vadd.f32 %v6204, %v6604
        %6606 = vmatmul.f32.gmra.mxu0 %v6399
        %v6607 = vpop.f32.mrf.mxu0
        %v6608 = vadd.f32 %v6207, %v6607
        %6609 = vmatmul.f32.gmra.mxu0 %v6402
        %v6610 = vpop.f32.mrf.mxu0
        %v6611 = vadd.f32 %v6210, %v6610
        %6612 = vmatmul.f32.gmra.mxu0 %v6405
        %v6613 = vpop.f32.mrf.mxu0
        %v6614 = vadd.f32 %v6213, %v6613
        %6615 = vmatmul.f32.gmra.mxu0 %v6408
        %v6616 = vpop.f32.mrf.mxu0
        %v6617 = vadd.f32 %v6216, %v6616
        %6618 = vmatmul.f32.gmra.mxu0 %v6411
        %v6619 = vpop.f32.mrf.mxu0
        %v6620 = vadd.f32 %v6219, %v6619
        %6621 = vmatmul.f32.gmra.mxu0 %v6414
        %v6622 = vpop.f32.mrf.mxu0
        %v6623 = vadd.f32 %v6222, %v6622
        %6624 = vmatmul.f32.gmra.mxu0 %v6417
        %v6625 = vpop.f32.mrf.mxu0
        %v6626 = vadd.f32 %v6225, %v6625
        %6627 = vmatmul.f32.gmra.mxu0 %v6420
        %v6628 = vpop.f32.mrf.mxu0
        %v6629 = vadd.f32 %v6228, %v6628
        %6630 = vmatmul.f32.gmra.mxu0 %v6423
        %v6631 = vpop.f32.mrf.mxu0
        %v6632 = vadd.f32 %v6231, %v6631
        %6633 = vmatmul.f32.gmra.mxu0 %v6426
        %v6634 = vpop.f32.mrf.mxu0
        %v6635 = vadd.f32 %v6234, %v6634
        %6636 = vmatmul.f32.gmra.mxu0 %v6429
        %v6637 = vpop.f32.mrf.mxu0
        %v6638 = vadd.f32 %v6237, %v6637
        %6639 = vmatmul.f32.gmra.mxu0 %v6432
        %v6640 = vpop.f32.mrf.mxu0
        %v6641 = vadd.f32 %v6240, %v6640
        %6642 = vmatmul.f32.gmra.mxu0 %v6435
        %v6643 = vpop.f32.mrf.mxu0
        %v6644 = vadd.f32 %v6243, %v6643
        %6645 = vmatmul.f32.gmra.mxu0 %v6438
        %v6646 = vpop.f32.mrf.mxu0
        %v6647 = vadd.f32 %v6246, %v6646
        %6648 = vmatmul.f32.gmra.mxu0 %v6441
        %v6649 = vpop.f32.mrf.mxu0
        %v6650 = vadd.f32 %v6249, %v6649
        %6651 = vdwg.mxu0
        %v6652 = vld [vmem:[#allocation3 + $0x9] sm:$0xff]
        %v6653 = vld [vmem:[#allocation3 + $0x11] sm:$0xff]
        %v6654 = vld [vmem:[#allocation3 + $0x19] sm:$0xff]
        %v6655 = vld [vmem:[#allocation3 + $0x21] sm:$0xff]
        %v6656 = vld [vmem:[#allocation3 + $0x29] sm:$0xff]
        %v6657 = vld [vmem:[#allocation3 + $0x31] sm:$0xff]
        %v6658 = vld [vmem:[#allocation3 + $0x39] sm:$0xff]
        %v6659 = vld [vmem:[#allocation3 + $0x41] sm:$0xff]
        %v6660 = vld [vmem:[#allocation3 + $0x49] sm:$0xff]
        %v6661 = vld [vmem:[#allocation3 + $0x51] sm:$0xff]
        %v6662 = vld [vmem:[#allocation3 + $0x59] sm:$0xff]
        %v6663 = vld [vmem:[#allocation3 + $0x61] sm:$0xff]
        %v6664 = vld [vmem:[#allocation3 + $0x69] sm:$0xff]
        %v6665 = vld [vmem:[#allocation3 + $0x71] sm:$0xff]
        %v6666 = vld [vmem:[#allocation3 + $0x79] sm:$0xff]
        %v6667 = vld [vmem:[#allocation3 + $0x81] sm:$0xff]
        %v6668 = vld [vmem:[#allocation3 + $0x89] sm:$0xff]
        %v6669 = vld [vmem:[#allocation3 + $0x91] sm:$0xff]
        %v6670 = vld [vmem:[#allocation3 + $0x99] sm:$0xff]
        %v6671 = vld [vmem:[#allocation3 + $0xa1] sm:$0xff]
        %v6672 = vld [vmem:[#allocation3 + $0xa9] sm:$0xff]
        %v6673 = vld [vmem:[#allocation3 + $0xb1] sm:$0xff]
        %v6674 = vld [vmem:[#allocation3 + $0xb9] sm:$0xff]
        %v6675 = vld [vmem:[#allocation3 + $0xc1] sm:$0xff]
        %v6676 = vld [vmem:[#allocation3 + $0xc9] sm:$0xff]
        %v6677 = vld [vmem:[#allocation3 + $0xd1] sm:$0xff]
        %v6678 = vld [vmem:[#allocation3 + $0xd9] sm:$0xff]
        %v6679 = vld [vmem:[#allocation3 + $0xe1] sm:$0xff]
        %v6680 = vld [vmem:[#allocation3 + $0xe9] sm:$0xff]
        %v6681 = vld [vmem:[#allocation3 + $0xf1] sm:$0xff]
        %v6682 = vld [vmem:[#allocation3 + $0xf9] sm:$0xff]
        %v6683 = vld [vmem:[#allocation3 + $0x101] sm:$0xff]
        %v6684 = vld [vmem:[#allocation3 + $0x109] sm:$0xff]
        %v6685 = vld [vmem:[#allocation3 + $0x111] sm:$0xff]
        %v6686 = vld [vmem:[#allocation3 + $0x119] sm:$0xff]
        %v6687 = vld [vmem:[#allocation3 + $0x121] sm:$0xff]
        %v6688 = vld [vmem:[#allocation3 + $0x129] sm:$0xff]
        %v6689 = vld [vmem:[#allocation3 + $0x131] sm:$0xff]
        %v6690 = vld [vmem:[#allocation3 + $0x139] sm:$0xff]
        %v6691 = vld [vmem:[#allocation3 + $0x141] sm:$0xff]
        %v6692 = vld [vmem:[#allocation3 + $0x149] sm:$0xff]
        %v6693 = vld [vmem:[#allocation3 + $0x151] sm:$0xff]
        %v6694 = vld [vmem:[#allocation3 + $0x159] sm:$0xff]
        %v6695 = vld [vmem:[#allocation3 + $0x161] sm:$0xff]
        %v6696 = vld [vmem:[#allocation3 + $0x169] sm:$0xff]
        %v6697 = vld [vmem:[#allocation3 + $0x171] sm:$0xff]
        %v6698 = vld [vmem:[#allocation3 + $0x179] sm:$0xff]
        %v6699 = vld [vmem:[#allocation3 + $0x181] sm:$0xff]
        %v6700 = vld [vmem:[#allocation3 + $0x189] sm:$0xff]
        %v6701 = vld [vmem:[#allocation3 + $0x191] sm:$0xff]
        %v6702 = vld [vmem:[#allocation3 + $0x199] sm:$0xff]
        %v6703 = vld [vmem:[#allocation3 + $0x1a1] sm:$0xff]
        %v6704 = vld [vmem:[#allocation3 + $0x1a9] sm:$0xff]
        %v6705 = vld [vmem:[#allocation3 + $0x1b1] sm:$0xff]
        %v6706 = vld [vmem:[#allocation3 + $0x1b9] sm:$0xff]
        %v6707 = vld [vmem:[#allocation3 + $0x1c1] sm:$0xff]
        %v6708 = vld [vmem:[#allocation3 + $0x1c9] sm:$0xff]
        %v6709 = vld [vmem:[#allocation3 + $0x1d1] sm:$0xff]
        %v6710 = vld [vmem:[#allocation3 + $0x1d9] sm:$0xff]
        %v6711 = vld [vmem:[#allocation3 + $0x1e1] sm:$0xff]
        %v6712 = vld [vmem:[#allocation3 + $0x1e9] sm:$0xff]
        %v6713 = vld [vmem:[#allocation3 + $0x1f1] sm:$0xff]
        %v6714 = vld [vmem:[#allocation3 + $0x1f9] sm:$0xff]
        %v6715 = vld [vmem:[#allocation3 + $0x201] sm:$0xff]
        %s6716 = scalar_lea.vmem [#allocation12], 64
        %v6717 = vld [vmem:[%s6716] sm:$0xff]
        %v6718 = vld [vmem:[%s6716 + $0x8] sm:$0xff]
        %v6719 = vld [vmem:[%s6716 + $0x10] sm:$0xff]
        %v6720 = vld [vmem:[%s6716 + $0x18] sm:$0xff]
        %v6722 = vsel %vm544, %v6652, 0
        %v6725 = vsel %vm544, %v6653, 0
        %v6728 = vsel %vm544, %v6654, 0
        %v6731 = vsel %vm544, %v6655, 0
        %v6734 = vsel %vm544, %v6656, 0
        %v6737 = vsel %vm544, %v6657, 0
        %v6740 = vsel %vm544, %v6658, 0
        %v6743 = vsel %vm544, %v6659, 0
        %v6746 = vsel %vm544, %v6660, 0
        %v6749 = vsel %vm544, %v6661, 0
        %v6752 = vsel %vm544, %v6662, 0
        %v6755 = vsel %vm544, %v6663, 0
        %v6758 = vsel %vm544, %v6664, 0
        %v6761 = vsel %vm544, %v6665, 0
        %v6764 = vsel %vm544, %v6666, 0
        %v6767 = vsel %vm544, %v6667, 0
        %v6770 = vsel %vm544, %v6668, 0
        %v6773 = vsel %vm544, %v6669, 0
        %v6776 = vsel %vm544, %v6670, 0
        %v6779 = vsel %vm544, %v6671, 0
        %v6782 = vsel %vm544, %v6672, 0
        %v6785 = vsel %vm544, %v6673, 0
        %v6788 = vsel %vm544, %v6674, 0
        %v6791 = vsel %vm544, %v6675, 0
        %v6794 = vsel %vm544, %v6676, 0
        %v6797 = vsel %vm544, %v6677, 0
        %v6800 = vsel %vm544, %v6678, 0
        %v6803 = vsel %vm544, %v6679, 0
        %v6806 = vsel %vm544, %v6680, 0
        %v6809 = vsel %vm544, %v6681, 0
        %v6812 = vsel %vm544, %v6682, 0
        %v6815 = vsel %vm544, %v6683, 0
        %v6818 = vsel %vm544, %v6684, 0
        %v6821 = vsel %vm544, %v6685, 0
        %v6824 = vsel %vm544, %v6686, 0
        %v6827 = vsel %vm544, %v6687, 0
        %v6830 = vsel %vm544, %v6688, 0
        %v6833 = vsel %vm544, %v6689, 0
        %v6836 = vsel %vm544, %v6690, 0
        %v6839 = vsel %vm544, %v6691, 0
        %v6842 = vsel %vm544, %v6692, 0
        %v6845 = vsel %vm544, %v6693, 0
        %v6848 = vsel %vm544, %v6694, 0
        %v6851 = vsel %vm544, %v6695, 0
        %v6854 = vsel %vm544, %v6696, 0
        %v6857 = vsel %vm544, %v6697, 0
        %v6860 = vsel %vm544, %v6698, 0
        %v6863 = vsel %vm544, %v6699, 0
        %v6866 = vsel %vm544, %v6700, 0
        %v6869 = vsel %vm544, %v6701, 0
        %v6872 = vsel %vm544, %v6702, 0
        %v6875 = vsel %vm544, %v6703, 0
        %v6878 = vsel %vm544, %v6704, 0
        %v6881 = vsel %vm544, %v6705, 0
        %v6884 = vsel %vm544, %v6706, 0
        %v6887 = vsel %vm544, %v6707, 0
        %v6890 = vsel %vm544, %v6708, 0
        %v6893 = vsel %vm544, %v6709, 0
        %v6896 = vsel %vm544, %v6710, 0
        %v6899 = vsel %vm544, %v6711, 0
        %v6902 = vsel %vm544, %v6712, 0
        %v6905 = vsel %vm544, %v6713, 0
        %v6908 = vsel %vm544, %v6714, 0
        %v6911 = vsel %vm544, %v6715, 0
        %6913 = vmatpush.msra.mxu0 0.0
        %6914 = vmatpush.msra.mxu0 0.0
        %6915 = vmatpush.msra.mxu0 0.0
        %6916 = vmatpush.msra.mxu0 0.0
        %6917 = vmatpush.msra.mxu0 0.0
        %6918 = vmatpush.msra.mxu0 0.0
        %6919 = vmatpush.msra.mxu0 0.0
        %6920 = vmatpush.msra.mxu0 0.0
        %6921 = vmatpush.msra.mxu0 0.0
        %6922 = vmatpush.msra.mxu0 0.0
        %6923 = vmatpush.msra.mxu0 0.0
        %6924 = vmatpush.msra.mxu0 0.0
        %6925 = vmatpush.msra.mxu0 %v6720
        %6926 = vmatpush.msra.mxu0 %v6719
        %6927 = vmatpush.msra.mxu0 %v6718
        %6928 = vmatpush.msra.mxu0 %v6717
        %6929 = vmatmul.f32.gmra.mxu0 %v6722
        %v6930 = vpop.f32.mrf.mxu0
        %v6931 = vadd.f32 0.0, %v6930
        %6932 = vmatmul.f32.gmra.mxu0 %v6725
        %v6933 = vpop.f32.mrf.mxu0
        %v6934 = vadd.f32 0.0, %v6933
        %6935 = vmatmul.f32.gmra.mxu0 %v6728
        %v6936 = vpop.f32.mrf.mxu0
        %v6937 = vadd.f32 0.0, %v6936
        %6938 = vmatmul.f32.gmra.mxu0 %v6731
        %v6939 = vpop.f32.mrf.mxu0
        %v6940 = vadd.f32 0.0, %v6939
        %6941 = vmatmul.f32.gmra.mxu0 %v6734
        %v6942 = vpop.f32.mrf.mxu0
        %v6943 = vadd.f32 0.0, %v6942
        %6944 = vmatmul.f32.gmra.mxu0 %v6737
        %v6945 = vpop.f32.mrf.mxu0
        %v6946 = vadd.f32 0.0, %v6945
        %6947 = vmatmul.f32.gmra.mxu0 %v6740
        %v6948 = vpop.f32.mrf.mxu0
        %v6949 = vadd.f32 0.0, %v6948
        %6950 = vmatmul.f32.gmra.mxu0 %v6743
        %v6951 = vpop.f32.mrf.mxu0
        %v6952 = vadd.f32 0.0, %v6951
        %6953 = vmatmul.f32.gmra.mxu0 %v6746
        %v6954 = vpop.f32.mrf.mxu0
        %v6955 = vadd.f32 0.0, %v6954
        %6956 = vmatmul.f32.gmra.mxu0 %v6749
        %v6957 = vpop.f32.mrf.mxu0
        %v6958 = vadd.f32 0.0, %v6957
        %6959 = vmatmul.f32.gmra.mxu0 %v6752
        %v6960 = vpop.f32.mrf.mxu0
        %v6961 = vadd.f32 0.0, %v6960
        %6962 = vmatmul.f32.gmra.mxu0 %v6755
        %v6963 = vpop.f32.mrf.mxu0
        %v6964 = vadd.f32 0.0, %v6963
        %6965 = vmatmul.f32.gmra.mxu0 %v6758
        %v6966 = vpop.f32.mrf.mxu0
        %v6967 = vadd.f32 0.0, %v6966
        %6968 = vmatmul.f32.gmra.mxu0 %v6761
        %v6969 = vpop.f32.mrf.mxu0
        %v6970 = vadd.f32 0.0, %v6969
        %6971 = vmatmul.f32.gmra.mxu0 %v6764
        %v6972 = vpop.f32.mrf.mxu0
        %v6973 = vadd.f32 0.0, %v6972
        %6974 = vmatmul.f32.gmra.mxu0 %v6767
        %v6975 = vpop.f32.mrf.mxu0
        %v6976 = vadd.f32 0.0, %v6975
        %6977 = vmatmul.f32.gmra.mxu0 %v6770
        %v6978 = vpop.f32.mrf.mxu0
        %v6979 = vadd.f32 0.0, %v6978
        %6980 = vmatmul.f32.gmra.mxu0 %v6773
        %v6981 = vpop.f32.mrf.mxu0
        %v6982 = vadd.f32 0.0, %v6981
        %6983 = vmatmul.f32.gmra.mxu0 %v6776
        %v6984 = vpop.f32.mrf.mxu0
        %v6985 = vadd.f32 0.0, %v6984
        %6986 = vmatmul.f32.gmra.mxu0 %v6779
        %v6987 = vpop.f32.mrf.mxu0
        %v6988 = vadd.f32 0.0, %v6987
        %6989 = vmatmul.f32.gmra.mxu0 %v6782
        %v6990 = vpop.f32.mrf.mxu0
        %v6991 = vadd.f32 0.0, %v6990
        %6992 = vmatmul.f32.gmra.mxu0 %v6785
        %v6993 = vpop.f32.mrf.mxu0
        %v6994 = vadd.f32 0.0, %v6993
        %6995 = vmatmul.f32.gmra.mxu0 %v6788
        %v6996 = vpop.f32.mrf.mxu0
        %v6997 = vadd.f32 0.0, %v6996
        %6998 = vmatmul.f32.gmra.mxu0 %v6791
        %v6999 = vpop.f32.mrf.mxu0
        %v7000 = vadd.f32 0.0, %v6999
        %7001 = vmatmul.f32.gmra.mxu0 %v6794
        %v7002 = vpop.f32.mrf.mxu0
        %v7003 = vadd.f32 0.0, %v7002
        %7004 = vmatmul.f32.gmra.mxu0 %v6797
        %v7005 = vpop.f32.mrf.mxu0
        %v7006 = vadd.f32 0.0, %v7005
        %7007 = vmatmul.f32.gmra.mxu0 %v6800
        %v7008 = vpop.f32.mrf.mxu0
        %v7009 = vadd.f32 0.0, %v7008
        %7010 = vmatmul.f32.gmra.mxu0 %v6803
        %v7011 = vpop.f32.mrf.mxu0
        %v7012 = vadd.f32 0.0, %v7011
        %7013 = vmatmul.f32.gmra.mxu0 %v6806
        %v7014 = vpop.f32.mrf.mxu0
        %v7015 = vadd.f32 0.0, %v7014
        %7016 = vmatmul.f32.gmra.mxu0 %v6809
        %v7017 = vpop.f32.mrf.mxu0
        %v7018 = vadd.f32 0.0, %v7017
        %7019 = vmatmul.f32.gmra.mxu0 %v6812
        %v7020 = vpop.f32.mrf.mxu0
        %v7021 = vadd.f32 0.0, %v7020
        %7022 = vmatmul.f32.gmra.mxu0 %v6815
        %v7023 = vpop.f32.mrf.mxu0
        %v7024 = vadd.f32 0.0, %v7023
        %7025 = vmatmul.f32.gmra.mxu0 %v6818
        %v7026 = vpop.f32.mrf.mxu0
        %v7027 = vadd.f32 0.0, %v7026
        %7028 = vmatmul.f32.gmra.mxu0 %v6821
        %v7029 = vpop.f32.mrf.mxu0
        %v7030 = vadd.f32 0.0, %v7029
        %7031 = vmatmul.f32.gmra.mxu0 %v6824
        %v7032 = vpop.f32.mrf.mxu0
        %v7033 = vadd.f32 0.0, %v7032
        %7034 = vmatmul.f32.gmra.mxu0 %v6827
        %v7035 = vpop.f32.mrf.mxu0
        %v7036 = vadd.f32 0.0, %v7035
        %7037 = vmatmul.f32.gmra.mxu0 %v6830
        %v7038 = vpop.f32.mrf.mxu0
        %v7039 = vadd.f32 0.0, %v7038
        %7040 = vmatmul.f32.gmra.mxu0 %v6833
        %v7041 = vpop.f32.mrf.mxu0
        %v7042 = vadd.f32 0.0, %v7041
        %7043 = vmatmul.f32.gmra.mxu0 %v6836
        %v7044 = vpop.f32.mrf.mxu0
        %v7045 = vadd.f32 0.0, %v7044
        %7046 = vmatmul.f32.gmra.mxu0 %v6839
        %v7047 = vpop.f32.mrf.mxu0
        %v7048 = vadd.f32 0.0, %v7047
        %7049 = vmatmul.f32.gmra.mxu0 %v6842
        %v7050 = vpop.f32.mrf.mxu0
        %v7051 = vadd.f32 0.0, %v7050
        %7052 = vmatmul.f32.gmra.mxu0 %v6845
        %v7053 = vpop.f32.mrf.mxu0
        %v7054 = vadd.f32 0.0, %v7053
        %7055 = vmatmul.f32.gmra.mxu0 %v6848
        %v7056 = vpop.f32.mrf.mxu0
        %v7057 = vadd.f32 0.0, %v7056
        %7058 = vmatmul.f32.gmra.mxu0 %v6851
        %v7059 = vpop.f32.mrf.mxu0
        %v7060 = vadd.f32 0.0, %v7059
        %7061 = vmatmul.f32.gmra.mxu0 %v6854
        %v7062 = vpop.f32.mrf.mxu0
        %v7063 = vadd.f32 0.0, %v7062
        %7064 = vmatmul.f32.gmra.mxu0 %v6857
        %v7065 = vpop.f32.mrf.mxu0
        %v7066 = vadd.f32 0.0, %v7065
        %7067 = vmatmul.f32.gmra.mxu0 %v6860
        %v7068 = vpop.f32.mrf.mxu0
        %v7069 = vadd.f32 0.0, %v7068
        %7070 = vmatmul.f32.gmra.mxu0 %v6863
        %v7071 = vpop.f32.mrf.mxu0
        %v7072 = vadd.f32 0.0, %v7071
        %7073 = vmatmul.f32.gmra.mxu0 %v6866
        %v7074 = vpop.f32.mrf.mxu0
        %v7075 = vadd.f32 0.0, %v7074
        %7076 = vmatmul.f32.gmra.mxu0 %v6869
        %v7077 = vpop.f32.mrf.mxu0
        %v7078 = vadd.f32 0.0, %v7077
        %7079 = vmatmul.f32.gmra.mxu0 %v6872
        %v7080 = vpop.f32.mrf.mxu0
        %v7081 = vadd.f32 0.0, %v7080
        %7082 = vmatmul.f32.gmra.mxu0 %v6875
        %v7083 = vpop.f32.mrf.mxu0
        %v7084 = vadd.f32 0.0, %v7083
        %7085 = vmatmul.f32.gmra.mxu0 %v6878
        %v7086 = vpop.f32.mrf.mxu0
        %v7087 = vadd.f32 0.0, %v7086
        %7088 = vmatmul.f32.gmra.mxu0 %v6881
        %v7089 = vpop.f32.mrf.mxu0
        %v7090 = vadd.f32 0.0, %v7089
        %7091 = vmatmul.f32.gmra.mxu0 %v6884
        %v7092 = vpop.f32.mrf.mxu0
        %v7093 = vadd.f32 0.0, %v7092
        %7094 = vmatmul.f32.gmra.mxu0 %v6887
        %v7095 = vpop.f32.mrf.mxu0
        %v7096 = vadd.f32 0.0, %v7095
        %7097 = vmatmul.f32.gmra.mxu0 %v6890
        %v7098 = vpop.f32.mrf.mxu0
        %v7099 = vadd.f32 0.0, %v7098
        %7100 = vmatmul.f32.gmra.mxu0 %v6893
        %v7101 = vpop.f32.mrf.mxu0
        %v7102 = vadd.f32 0.0, %v7101
        %7103 = vmatmul.f32.gmra.mxu0 %v6896
        %v7104 = vpop.f32.mrf.mxu0
        %v7105 = vadd.f32 0.0, %v7104
        %7106 = vmatmul.f32.gmra.mxu0 %v6899
        %v7107 = vpop.f32.mrf.mxu0
        %v7108 = vadd.f32 0.0, %v7107
        %7109 = vmatmul.f32.gmra.mxu0 %v6902
        %v7110 = vpop.f32.mrf.mxu0
        %v7111 = vadd.f32 0.0, %v7110
        %7112 = vmatmul.f32.gmra.mxu0 %v6905
        %v7113 = vpop.f32.mrf.mxu0
        %v7114 = vadd.f32 0.0, %v7113
        %7115 = vmatmul.f32.gmra.mxu0 %v6908
        %v7116 = vpop.f32.mrf.mxu0
        %v7117 = vadd.f32 0.0, %v7116
        %7118 = vmatmul.f32.gmra.mxu0 %v6911
        %v7119 = vpop.f32.mrf.mxu0
        %v7120 = vadd.f32 0.0, %v7119
        %7121 = vdwg.mxu0
        %v7122 = vadd.f32 %v6461, %v6931
        %v7123 = vadd.f32 %v6464, %v6934
        %v7124 = vadd.f32 %v6467, %v6937
        %v7125 = vadd.f32 %v6470, %v6940
        %v7126 = vadd.f32 %v6473, %v6943
        %v7127 = vadd.f32 %v6476, %v6946
        %v7128 = vadd.f32 %v6479, %v6949
        %v7129 = vadd.f32 %v6482, %v6952
        %v7130 = vadd.f32 %v6485, %v6955
        %v7131 = vadd.f32 %v6488, %v6958
        %v7132 = vadd.f32 %v6491, %v6961
        %v7133 = vadd.f32 %v6494, %v6964
        %v7134 = vadd.f32 %v6497, %v6967
        %v7135 = vadd.f32 %v6500, %v6970
        %v7136 = vadd.f32 %v6503, %v6973
        %v7137 = vadd.f32 %v6506, %v6976
        %v7138 = vadd.f32 %v6509, %v6979
        %v7139 = vadd.f32 %v6512, %v6982
        %v7140 = vadd.f32 %v6515, %v6985
        %v7141 = vadd.f32 %v6518, %v6988
        %v7142 = vadd.f32 %v6521, %v6991
        %v7143 = vadd.f32 %v6524, %v6994
        %v7144 = vadd.f32 %v6527, %v6997
        %v7145 = vadd.f32 %v6530, %v7000
        %v7146 = vadd.f32 %v6533, %v7003
        %v7147 = vadd.f32 %v6536, %v7006
        %v7148 = vadd.f32 %v6539, %v7009
        %v7149 = vadd.f32 %v6542, %v7012
        %v7150 = vadd.f32 %v6545, %v7015
        %v7151 = vadd.f32 %v6548, %v7018
        %v7152 = vadd.f32 %v6551, %v7021
        %v7153 = vadd.f32 %v6554, %v7024
        %v7154 = vadd.f32 %v6557, %v7027
        %v7155 = vadd.f32 %v6560, %v7030
        %v7156 = vadd.f32 %v6563, %v7033
        %v7157 = vadd.f32 %v6566, %v7036
        %v7158 = vadd.f32 %v6569, %v7039
        %v7159 = vadd.f32 %v6572, %v7042
        %v7160 = vadd.f32 %v6575, %v7045
        %v7161 = vadd.f32 %v6578, %v7048
        %v7162 = vadd.f32 %v6581, %v7051
        %v7163 = vadd.f32 %v6584, %v7054
        %v7164 = vadd.f32 %v6587, %v7057
        %v7165 = vadd.f32 %v6590, %v7060
        %v7166 = vadd.f32 %v6593, %v7063
        %v7167 = vadd.f32 %v6596, %v7066
        %v7168 = vadd.f32 %v6599, %v7069
        %v7169 = vadd.f32 %v6602, %v7072
        %v7170 = vadd.f32 %v6605, %v7075
        %v7171 = vadd.f32 %v6608, %v7078
        %v7172 = vadd.f32 %v6611, %v7081
        %v7173 = vadd.f32 %v6614, %v7084
        %v7174 = vadd.f32 %v6617, %v7087
        %v7175 = vadd.f32 %v6620, %v7090
        %v7176 = vadd.f32 %v6623, %v7093
        %v7177 = vadd.f32 %v6626, %v7096
        %v7178 = vadd.f32 %v6629, %v7099
        %v7179 = vadd.f32 %v6632, %v7102
        %v7180 = vadd.f32 %v6635, %v7105
        %v7181 = vadd.f32 %v6638, %v7108
        %v7182 = vadd.f32 %v6641, %v7111
        %v7183 = vadd.f32 %v6644, %v7114
        %v7184 = vadd.f32 %v6647, %v7117
        %v7185 = vadd.f32 %v6650, %v7120
        %v7186 = vld [vmem:[#allocation3 + $0x27] sm:$0xff]
        %v7187 = vld [vmem:[#allocation3 + $0x2f] sm:$0xff]
        %v7188 = vld [vmem:[#allocation3 + $0x37] sm:$0xff]
        %v7189 = vld [vmem:[#allocation3 + $0x3f] sm:$0xff]
        %v7190 = vld [vmem:[#allocation3 + $0x47] sm:$0xff]
        %v7191 = vld [vmem:[#allocation3 + $0x4f] sm:$0xff]
        %v7192 = vld [vmem:[#allocation3 + $0x57] sm:$0xff]
        %v7193 = vld [vmem:[#allocation3 + $0x5f] sm:$0xff]
        %v7194 = vld [vmem:[#allocation3 + $0x67] sm:$0xff]
        %v7195 = vld [vmem:[#allocation3 + $0x6f] sm:$0xff]
        %v7196 = vld [vmem:[#allocation3 + $0x77] sm:$0xff]
        %v7197 = vld [vmem:[#allocation3 + $0x7f] sm:$0xff]
        %v7198 = vld [vmem:[#allocation3 + $0x87] sm:$0xff]
        %v7199 = vld [vmem:[#allocation3 + $0x8f] sm:$0xff]
        %v7200 = vld [vmem:[#allocation3 + $0x97] sm:$0xff]
        %v7201 = vld [vmem:[#allocation3 + $0x9f] sm:$0xff]
        %v7202 = vld [vmem:[#allocation3 + $0xa7] sm:$0xff]
        %v7203 = vld [vmem:[#allocation3 + $0xaf] sm:$0xff]
        %v7204 = vld [vmem:[#allocation3 + $0xb7] sm:$0xff]
        %v7205 = vld [vmem:[#allocation3 + $0xbf] sm:$0xff]
        %v7206 = vld [vmem:[#allocation3 + $0xc7] sm:$0xff]
        %v7207 = vld [vmem:[#allocation3 + $0xcf] sm:$0xff]
        %v7208 = vld [vmem:[#allocation3 + $0xd7] sm:$0xff]
        %v7209 = vld [vmem:[#allocation3 + $0xdf] sm:$0xff]
        %v7210 = vld [vmem:[#allocation3 + $0xe7] sm:$0xff]
        %v7211 = vld [vmem:[#allocation3 + $0xef] sm:$0xff]
        %v7212 = vld [vmem:[#allocation3 + $0xf7] sm:$0xff]
        %v7213 = vld [vmem:[#allocation3 + $0xff] sm:$0xff]
        %v7214 = vld [vmem:[#allocation3 + $0x107] sm:$0xff]
        %v7215 = vld [vmem:[#allocation3 + $0x10f] sm:$0xff]
        %v7216 = vld [vmem:[#allocation3 + $0x117] sm:$0xff]
        %v7217 = vld [vmem:[#allocation3 + $0x11f] sm:$0xff]
        %v7218 = vld [vmem:[#allocation3 + $0x127] sm:$0xff]
        %v7219 = vld [vmem:[#allocation3 + $0x12f] sm:$0xff]
        %v7220 = vld [vmem:[#allocation3 + $0x137] sm:$0xff]
        %v7221 = vld [vmem:[#allocation3 + $0x13f] sm:$0xff]
        %v7222 = vld [vmem:[#allocation3 + $0x147] sm:$0xff]
        %v7223 = vld [vmem:[#allocation3 + $0x14f] sm:$0xff]
        %v7224 = vld [vmem:[#allocation3 + $0x157] sm:$0xff]
        %v7225 = vld [vmem:[#allocation3 + $0x15f] sm:$0xff]
        %v7226 = vld [vmem:[#allocation3 + $0x167] sm:$0xff]
        %v7227 = vld [vmem:[#allocation3 + $0x16f] sm:$0xff]
        %v7228 = vld [vmem:[#allocation3 + $0x177] sm:$0xff]
        %v7229 = vld [vmem:[#allocation3 + $0x17f] sm:$0xff]
        %v7230 = vld [vmem:[#allocation3 + $0x187] sm:$0xff]
        %v7231 = vld [vmem:[#allocation3 + $0x18f] sm:$0xff]
        %v7232 = vld [vmem:[#allocation3 + $0x197] sm:$0xff]
        %v7233 = vld [vmem:[#allocation3 + $0x19f] sm:$0xff]
        %v7234 = vld [vmem:[#allocation3 + $0x1a7] sm:$0xff]
        %v7235 = vld [vmem:[#allocation3 + $0x1af] sm:$0xff]
        %v7236 = vld [vmem:[#allocation3 + $0x1b7] sm:$0xff]
        %v7237 = vld [vmem:[#allocation3 + $0x1bf] sm:$0xff]
        %v7238 = vld [vmem:[#allocation3 + $0x1c7] sm:$0xff]
        %v7239 = vld [vmem:[#allocation3 + $0x1cf] sm:$0xff]
        %v7240 = vld [vmem:[#allocation3 + $0x1d7] sm:$0xff]
        %v7241 = vld [vmem:[#allocation3 + $0x1df] sm:$0xff]
        %v7242 = vld [vmem:[#allocation3 + $0x1e7] sm:$0xff]
        %v7243 = vld [vmem:[#allocation3 + $0x1ef] sm:$0xff]
        %v7244 = vld [vmem:[#allocation3 + $0x1f7] sm:$0xff]
        %v7245 = vld [vmem:[#allocation3 + $0x1ff] sm:$0xff]
        %v7246 = vld [vmem:[#allocation3 + $0x207] sm:$0xff]
        %v7247 = vld [vmem:[#allocation3 + $0x20f] sm:$0xff]
        %v7248 = vld [vmem:[#allocation3 + $0x217] sm:$0xff]
        %v7249 = vld [vmem:[#allocation3 + $0x21f] sm:$0xff]
        %s7250 = scalar_lea.vmem [#allocation12], 96
        %v7251 = vld [vmem:[%s7250] sm:$0xff]
        %v7252 = vld [vmem:[%s7250 + $0x8] sm:$0xff]
        %v7253 = vld [vmem:[%s7250 + $0x10] sm:$0xff]
        %v7254 = vld [vmem:[%s7250 + $0x18] sm:$0xff]
        %v7256 = vsel %vm544, %v7186, 0
        %v7259 = vsel %vm544, %v7187, 0
        %v7262 = vsel %vm544, %v7188, 0
        %v7265 = vsel %vm544, %v7189, 0
        %v7268 = vsel %vm544, %v7190, 0
        %v7271 = vsel %vm544, %v7191, 0
        %v7274 = vsel %vm544, %v7192, 0
        %v7277 = vsel %vm544, %v7193, 0
        %v7280 = vsel %vm544, %v7194, 0
        %v7283 = vsel %vm544, %v7195, 0
        %v7286 = vsel %vm544, %v7196, 0
        %v7289 = vsel %vm544, %v7197, 0
        %v7292 = vsel %vm544, %v7198, 0
        %v7295 = vsel %vm544, %v7199, 0
        %v7298 = vsel %vm544, %v7200, 0
        %v7301 = vsel %vm544, %v7201, 0
        %v7304 = vsel %vm544, %v7202, 0
        %v7307 = vsel %vm544, %v7203, 0
        %v7310 = vsel %vm544, %v7204, 0
        %v7313 = vsel %vm544, %v7205, 0
        %v7316 = vsel %vm544, %v7206, 0
        %v7319 = vsel %vm544, %v7207, 0
        %v7322 = vsel %vm544, %v7208, 0
        %v7325 = vsel %vm544, %v7209, 0
        %v7328 = vsel %vm544, %v7210, 0
        %v7331 = vsel %vm544, %v7211, 0
        %v7334 = vsel %vm544, %v7212, 0
        %v7337 = vsel %vm544, %v7213, 0
        %v7340 = vsel %vm544, %v7214, 0
        %v7343 = vsel %vm544, %v7215, 0
        %v7346 = vsel %vm544, %v7216, 0
        %v7349 = vsel %vm544, %v7217, 0
        %v7352 = vsel %vm544, %v7218, 0
        %v7355 = vsel %vm544, %v7219, 0
        %v7358 = vsel %vm544, %v7220, 0
        %v7361 = vsel %vm544, %v7221, 0
        %v7364 = vsel %vm544, %v7222, 0
        %v7367 = vsel %vm544, %v7223, 0
        %v7370 = vsel %vm544, %v7224, 0
        %v7373 = vsel %vm544, %v7225, 0
        %v7376 = vsel %vm544, %v7226, 0
        %v7379 = vsel %vm544, %v7227, 0
        %v7382 = vsel %vm544, %v7228, 0
        %v7385 = vsel %vm544, %v7229, 0
        %v7388 = vsel %vm544, %v7230, 0
        %v7391 = vsel %vm544, %v7231, 0
        %v7394 = vsel %vm544, %v7232, 0
        %v7397 = vsel %vm544, %v7233, 0
        %v7400 = vsel %vm544, %v7234, 0
        %v7403 = vsel %vm544, %v7235, 0
        %v7406 = vsel %vm544, %v7236, 0
        %v7409 = vsel %vm544, %v7237, 0
        %v7412 = vsel %vm544, %v7238, 0
        %v7415 = vsel %vm544, %v7239, 0
        %v7418 = vsel %vm544, %v7240, 0
        %v7421 = vsel %vm544, %v7241, 0
        %v7424 = vsel %vm544, %v7242, 0
        %v7427 = vsel %vm544, %v7243, 0
        %v7430 = vsel %vm544, %v7244, 0
        %v7433 = vsel %vm544, %v7245, 0
        %v7436 = vsel %vm544, %v7246, 0
        %v7439 = vsel %vm544, %v7247, 0
        %v7442 = vsel %vm544, %v7248, 0
        %v7445 = vsel %vm544, %v7249, 0
        %7447 = vmatpush.msra.mxu0 0.0
        %7448 = vmatpush.msra.mxu0 0.0
        %7449 = vmatpush.msra.mxu0 0.0
        %7450 = vmatpush.msra.mxu0 0.0
        %7451 = vmatpush.msra.mxu0 0.0
        %7452 = vmatpush.msra.mxu0 0.0
        %7453 = vmatpush.msra.mxu0 0.0
        %7454 = vmatpush.msra.mxu0 0.0
        %7455 = vmatpush.msra.mxu0 0.0
        %7456 = vmatpush.msra.mxu0 0.0
        %7457 = vmatpush.msra.mxu0 0.0
        %7458 = vmatpush.msra.mxu0 0.0
        %7459 = vmatpush.msra.mxu0 %v7254
        %7460 = vmatpush.msra.mxu0 %v7253
        %7461 = vmatpush.msra.mxu0 %v7252
        %7462 = vmatpush.msra.mxu0 %v7251
        %7463 = vmatmul.f32.gmra.mxu0 %v7256
        %v7464 = vpop.f32.mrf.mxu0
        %v7465 = vadd.f32 0.0, %v7464
        %7466 = vmatmul.f32.gmra.mxu0 %v7259
        %v7467 = vpop.f32.mrf.mxu0
        %v7468 = vadd.f32 0.0, %v7467
        %7469 = vmatmul.f32.gmra.mxu0 %v7262
        %v7470 = vpop.f32.mrf.mxu0
        %v7471 = vadd.f32 0.0, %v7470
        %7472 = vmatmul.f32.gmra.mxu0 %v7265
        %v7473 = vpop.f32.mrf.mxu0
        %v7474 = vadd.f32 0.0, %v7473
        %7475 = vmatmul.f32.gmra.mxu0 %v7268
        %v7476 = vpop.f32.mrf.mxu0
        %v7477 = vadd.f32 0.0, %v7476
        %7478 = vmatmul.f32.gmra.mxu0 %v7271
        %v7479 = vpop.f32.mrf.mxu0
        %v7480 = vadd.f32 0.0, %v7479
        %7481 = vmatmul.f32.gmra.mxu0 %v7274
        %v7482 = vpop.f32.mrf.mxu0
        %v7483 = vadd.f32 0.0, %v7482
        %7484 = vmatmul.f32.gmra.mxu0 %v7277
        %v7485 = vpop.f32.mrf.mxu0
        %v7486 = vadd.f32 0.0, %v7485
        %7487 = vmatmul.f32.gmra.mxu0 %v7280
        %v7488 = vpop.f32.mrf.mxu0
        %v7489 = vadd.f32 0.0, %v7488
        %7490 = vmatmul.f32.gmra.mxu0 %v7283
        %v7491 = vpop.f32.mrf.mxu0
        %v7492 = vadd.f32 0.0, %v7491
        %7493 = vmatmul.f32.gmra.mxu0 %v7286
        %v7494 = vpop.f32.mrf.mxu0
        %v7495 = vadd.f32 0.0, %v7494
        %7496 = vmatmul.f32.gmra.mxu0 %v7289
        %v7497 = vpop.f32.mrf.mxu0
        %v7498 = vadd.f32 0.0, %v7497
        %7499 = vmatmul.f32.gmra.mxu0 %v7292
        %v7500 = vpop.f32.mrf.mxu0
        %v7501 = vadd.f32 0.0, %v7500
        %7502 = vmatmul.f32.gmra.mxu0 %v7295
        %v7503 = vpop.f32.mrf.mxu0
        %v7504 = vadd.f32 0.0, %v7503
        %7505 = vmatmul.f32.gmra.mxu0 %v7298
        %v7506 = vpop.f32.mrf.mxu0
        %v7507 = vadd.f32 0.0, %v7506
        %7508 = vmatmul.f32.gmra.mxu0 %v7301
        %v7509 = vpop.f32.mrf.mxu0
        %v7510 = vadd.f32 0.0, %v7509
        %7511 = vmatmul.f32.gmra.mxu0 %v7304
        %v7512 = vpop.f32.mrf.mxu0
        %v7513 = vadd.f32 0.0, %v7512
        %7514 = vmatmul.f32.gmra.mxu0 %v7307
        %v7515 = vpop.f32.mrf.mxu0
        %v7516 = vadd.f32 0.0, %v7515
        %7517 = vmatmul.f32.gmra.mxu0 %v7310
        %v7518 = vpop.f32.mrf.mxu0
        %v7519 = vadd.f32 0.0, %v7518
        %7520 = vmatmul.f32.gmra.mxu0 %v7313
        %v7521 = vpop.f32.mrf.mxu0
        %v7522 = vadd.f32 0.0, %v7521
        %7523 = vmatmul.f32.gmra.mxu0 %v7316
        %v7524 = vpop.f32.mrf.mxu0
        %v7525 = vadd.f32 0.0, %v7524
        %7526 = vmatmul.f32.gmra.mxu0 %v7319
        %v7527 = vpop.f32.mrf.mxu0
        %v7528 = vadd.f32 0.0, %v7527
        %7529 = vmatmul.f32.gmra.mxu0 %v7322
        %v7530 = vpop.f32.mrf.mxu0
        %v7531 = vadd.f32 0.0, %v7530
        %7532 = vmatmul.f32.gmra.mxu0 %v7325
        %v7533 = vpop.f32.mrf.mxu0
        %v7534 = vadd.f32 0.0, %v7533
        %7535 = vmatmul.f32.gmra.mxu0 %v7328
        %v7536 = vpop.f32.mrf.mxu0
        %v7537 = vadd.f32 0.0, %v7536
        %7538 = vmatmul.f32.gmra.mxu0 %v7331
        %v7539 = vpop.f32.mrf.mxu0
        %v7540 = vadd.f32 0.0, %v7539
        %7541 = vmatmul.f32.gmra.mxu0 %v7334
        %v7542 = vpop.f32.mrf.mxu0
        %v7543 = vadd.f32 0.0, %v7542
        %7544 = vmatmul.f32.gmra.mxu0 %v7337
        %v7545 = vpop.f32.mrf.mxu0
        %v7546 = vadd.f32 0.0, %v7545
        %7547 = vmatmul.f32.gmra.mxu0 %v7340
        %v7548 = vpop.f32.mrf.mxu0
        %v7549 = vadd.f32 0.0, %v7548
        %7550 = vmatmul.f32.gmra.mxu0 %v7343
        %v7551 = vpop.f32.mrf.mxu0
        %v7552 = vadd.f32 0.0, %v7551
        %7553 = vmatmul.f32.gmra.mxu0 %v7346
        %v7554 = vpop.f32.mrf.mxu0
        %v7555 = vadd.f32 0.0, %v7554
        %7556 = vmatmul.f32.gmra.mxu0 %v7349
        %v7557 = vpop.f32.mrf.mxu0
        %v7558 = vadd.f32 0.0, %v7557
        %7559 = vmatmul.f32.gmra.mxu0 %v7352
        %v7560 = vpop.f32.mrf.mxu0
        %v7561 = vadd.f32 0.0, %v7560
        %7562 = vmatmul.f32.gmra.mxu0 %v7355
        %v7563 = vpop.f32.mrf.mxu0
        %v7564 = vadd.f32 0.0, %v7563
        %7565 = vmatmul.f32.gmra.mxu0 %v7358
        %v7566 = vpop.f32.mrf.mxu0
        %v7567 = vadd.f32 0.0, %v7566
        %7568 = vmatmul.f32.gmra.mxu0 %v7361
        %v7569 = vpop.f32.mrf.mxu0
        %v7570 = vadd.f32 0.0, %v7569
        %7571 = vmatmul.f32.gmra.mxu0 %v7364
        %v7572 = vpop.f32.mrf.mxu0
        %v7573 = vadd.f32 0.0, %v7572
        %7574 = vmatmul.f32.gmra.mxu0 %v7367
        %v7575 = vpop.f32.mrf.mxu0
        %v7576 = vadd.f32 0.0, %v7575
        %7577 = vmatmul.f32.gmra.mxu0 %v7370
        %v7578 = vpop.f32.mrf.mxu0
        %v7579 = vadd.f32 0.0, %v7578
        %7580 = vmatmul.f32.gmra.mxu0 %v7373
        %v7581 = vpop.f32.mrf.mxu0
        %v7582 = vadd.f32 0.0, %v7581
        %7583 = vmatmul.f32.gmra.mxu0 %v7376
        %v7584 = vpop.f32.mrf.mxu0
        %v7585 = vadd.f32 0.0, %v7584
        %7586 = vmatmul.f32.gmra.mxu0 %v7379
        %v7587 = vpop.f32.mrf.mxu0
        %v7588 = vadd.f32 0.0, %v7587
        %7589 = vmatmul.f32.gmra.mxu0 %v7382
        %v7590 = vpop.f32.mrf.mxu0
        %v7591 = vadd.f32 0.0, %v7590
        %7592 = vmatmul.f32.gmra.mxu0 %v7385
        %v7593 = vpop.f32.mrf.mxu0
        %v7594 = vadd.f32 0.0, %v7593
        %7595 = vmatmul.f32.gmra.mxu0 %v7388
        %v7596 = vpop.f32.mrf.mxu0
        %v7597 = vadd.f32 0.0, %v7596
        %7598 = vmatmul.f32.gmra.mxu0 %v7391
        %v7599 = vpop.f32.mrf.mxu0
        %v7600 = vadd.f32 0.0, %v7599
        %7601 = vmatmul.f32.gmra.mxu0 %v7394
        %v7602 = vpop.f32.mrf.mxu0
        %v7603 = vadd.f32 0.0, %v7602
        %7604 = vmatmul.f32.gmra.mxu0 %v7397
        %v7605 = vpop.f32.mrf.mxu0
        %v7606 = vadd.f32 0.0, %v7605
        %7607 = vmatmul.f32.gmra.mxu0 %v7400
        %v7608 = vpop.f32.mrf.mxu0
        %v7609 = vadd.f32 0.0, %v7608
        %7610 = vmatmul.f32.gmra.mxu0 %v7403
        %v7611 = vpop.f32.mrf.mxu0
        %v7612 = vadd.f32 0.0, %v7611
        %7613 = vmatmul.f32.gmra.mxu0 %v7406
        %v7614 = vpop.f32.mrf.mxu0
        %v7615 = vadd.f32 0.0, %v7614
        %7616 = vmatmul.f32.gmra.mxu0 %v7409
        %v7617 = vpop.f32.mrf.mxu0
        %v7618 = vadd.f32 0.0, %v7617
        %7619 = vmatmul.f32.gmra.mxu0 %v7412
        %v7620 = vpop.f32.mrf.mxu0
        %v7621 = vadd.f32 0.0, %v7620
        %7622 = vmatmul.f32.gmra.mxu0 %v7415
        %v7623 = vpop.f32.mrf.mxu0
        %v7624 = vadd.f32 0.0, %v7623
        %7625 = vmatmul.f32.gmra.mxu0 %v7418
        %v7626 = vpop.f32.mrf.mxu0
        %v7627 = vadd.f32 0.0, %v7626
        %7628 = vmatmul.f32.gmra.mxu0 %v7421
        %v7629 = vpop.f32.mrf.mxu0
        %v7630 = vadd.f32 0.0, %v7629
        %7631 = vmatmul.f32.gmra.mxu0 %v7424
        %v7632 = vpop.f32.mrf.mxu0
        %v7633 = vadd.f32 0.0, %v7632
        %7634 = vmatmul.f32.gmra.mxu0 %v7427
        %v7635 = vpop.f32.mrf.mxu0
        %v7636 = vadd.f32 0.0, %v7635
        %7637 = vmatmul.f32.gmra.mxu0 %v7430
        %v7638 = vpop.f32.mrf.mxu0
        %v7639 = vadd.f32 0.0, %v7638
        %7640 = vmatmul.f32.gmra.mxu0 %v7433
        %v7641 = vpop.f32.mrf.mxu0
        %v7642 = vadd.f32 0.0, %v7641
        %7643 = vmatmul.f32.gmra.mxu0 %v7436
        %v7644 = vpop.f32.mrf.mxu0
        %v7645 = vadd.f32 0.0, %v7644
        %7646 = vmatmul.f32.gmra.mxu0 %v7439
        %v7647 = vpop.f32.mrf.mxu0
        %v7648 = vadd.f32 0.0, %v7647
        %7649 = vmatmul.f32.gmra.mxu0 %v7442
        %v7650 = vpop.f32.mrf.mxu0
        %v7651 = vadd.f32 0.0, %v7650
        %7652 = vmatmul.f32.gmra.mxu0 %v7445
        %v7653 = vpop.f32.mrf.mxu0
        %v7654 = vadd.f32 0.0, %v7653
        %7655 = vdwg.mxu0
        %v7656 = vadd.f32 %v7122, %v7465
        %v7657 = vadd.f32 %v7123, %v7468
        %v7658 = vadd.f32 %v7124, %v7471
        %v7659 = vadd.f32 %v7125, %v7474
        %v7660 = vadd.f32 %v7126, %v7477
        %v7661 = vadd.f32 %v7127, %v7480
        %v7662 = vadd.f32 %v7128, %v7483
        %v7663 = vadd.f32 %v7129, %v7486
        %v7664 = vadd.f32 %v7130, %v7489
        %v7665 = vadd.f32 %v7131, %v7492
        %v7666 = vadd.f32 %v7132, %v7495
        %v7667 = vadd.f32 %v7133, %v7498
        %v7668 = vadd.f32 %v7134, %v7501
        %v7669 = vadd.f32 %v7135, %v7504
        %v7670 = vadd.f32 %v7136, %v7507
        %v7671 = vadd.f32 %v7137, %v7510
        %v7672 = vadd.f32 %v7138, %v7513
        %v7673 = vadd.f32 %v7139, %v7516
        %v7674 = vadd.f32 %v7140, %v7519
        %v7675 = vadd.f32 %v7141, %v7522
        %v7676 = vadd.f32 %v7142, %v7525
        %v7677 = vadd.f32 %v7143, %v7528
        %v7678 = vadd.f32 %v7144, %v7531
        %v7679 = vadd.f32 %v7145, %v7534
        %v7680 = vadd.f32 %v7146, %v7537
        %v7681 = vadd.f32 %v7147, %v7540
        %v7682 = vadd.f32 %v7148, %v7543
        %v7683 = vadd.f32 %v7149, %v7546
        %v7684 = vadd.f32 %v7150, %v7549
        %v7685 = vadd.f32 %v7151, %v7552
        %v7686 = vadd.f32 %v7152, %v7555
        %v7687 = vadd.f32 %v7153, %v7558
        %v7688 = vadd.f32 %v7154, %v7561
        %v7689 = vadd.f32 %v7155, %v7564
        %v7690 = vadd.f32 %v7156, %v7567
        %v7691 = vadd.f32 %v7157, %v7570
        %v7692 = vadd.f32 %v7158, %v7573
        %v7693 = vadd.f32 %v7159, %v7576
        %v7694 = vadd.f32 %v7160, %v7579
        %v7695 = vadd.f32 %v7161, %v7582
        %v7696 = vadd.f32 %v7162, %v7585
        %v7697 = vadd.f32 %v7163, %v7588
        %v7698 = vadd.f32 %v7164, %v7591
        %v7699 = vadd.f32 %v7165, %v7594
        %v7700 = vadd.f32 %v7166, %v7597
        %v7701 = vadd.f32 %v7167, %v7600
        %v7702 = vadd.f32 %v7168, %v7603
        %v7703 = vadd.f32 %v7169, %v7606
        %v7704 = vadd.f32 %v7170, %v7609
        %v7705 = vadd.f32 %v7171, %v7612
        %v7706 = vadd.f32 %v7172, %v7615
        %v7707 = vadd.f32 %v7173, %v7618
        %v7708 = vadd.f32 %v7174, %v7621
        %v7709 = vadd.f32 %v7175, %v7624
        %v7710 = vadd.f32 %v7176, %v7627
        %v7711 = vadd.f32 %v7177, %v7630
        %v7712 = vadd.f32 %v7178, %v7633
        %v7713 = vadd.f32 %v7179, %v7636
        %v7714 = vadd.f32 %v7180, %v7639
        %v7715 = vadd.f32 %v7181, %v7642
        %v7716 = vadd.f32 %v7182, %v7645
        %v7717 = vadd.f32 %v7183, %v7648
        %v7718 = vadd.f32 %v7184, %v7651
        %v7719 = vadd.f32 %v7185, %v7654
        %v7720 = vld [vmem:[#allocation3 + $0x28] sm:$0xff]
        %v7721 = vld [vmem:[#allocation3 + $0x30] sm:$0xff]
        %v7722 = vld [vmem:[#allocation3 + $0x38] sm:$0xff]
        %v7723 = vld [vmem:[#allocation3 + $0x40] sm:$0xff]
        %v7724 = vld [vmem:[#allocation3 + $0x48] sm:$0xff]
        %v7725 = vld [vmem:[#allocation3 + $0x50] sm:$0xff]
        %v7726 = vld [vmem:[#allocation3 + $0x58] sm:$0xff]
        %v7727 = vld [vmem:[#allocation3 + $0x60] sm:$0xff]
        %v7728 = vld [vmem:[#allocation3 + $0x68] sm:$0xff]
        %v7729 = vld [vmem:[#allocation3 + $0x70] sm:$0xff]
        %v7730 = vld [vmem:[#allocation3 + $0x78] sm:$0xff]
        %v7731 = vld [vmem:[#allocation3 + $0x80] sm:$0xff]
        %v7732 = vld [vmem:[#allocation3 + $0x88] sm:$0xff]
        %v7733 = vld [vmem:[#allocation3 + $0x90] sm:$0xff]
        %v7734 = vld [vmem:[#allocation3 + $0x98] sm:$0xff]
        %v7735 = vld [vmem:[#allocation3 + $0xa0] sm:$0xff]
        %v7736 = vld [vmem:[#allocation3 + $0xa8] sm:$0xff]
        %v7737 = vld [vmem:[#allocation3 + $0xb0] sm:$0xff]
        %v7738 = vld [vmem:[#allocation3 + $0xb8] sm:$0xff]
        %v7739 = vld [vmem:[#allocation3 + $0xc0] sm:$0xff]
        %v7740 = vld [vmem:[#allocation3 + $0xc8] sm:$0xff]
        %v7741 = vld [vmem:[#allocation3 + $0xd0] sm:$0xff]
        %v7742 = vld [vmem:[#allocation3 + $0xd8] sm:$0xff]
        %v7743 = vld [vmem:[#allocation3 + $0xe0] sm:$0xff]
        %v7744 = vld [vmem:[#allocation3 + $0xe8] sm:$0xff]
        %v7745 = vld [vmem:[#allocation3 + $0xf0] sm:$0xff]
        %v7746 = vld [vmem:[#allocation3 + $0xf8] sm:$0xff]
        %v7747 = vld [vmem:[#allocation3 + $0x100] sm:$0xff]
        %v7748 = vld [vmem:[#allocation3 + $0x108] sm:$0xff]
        %v7749 = vld [vmem:[#allocation3 + $0x110] sm:$0xff]
        %v7750 = vld [vmem:[#allocation3 + $0x118] sm:$0xff]
        %v7751 = vld [vmem:[#allocation3 + $0x120] sm:$0xff]
        %v7752 = vld [vmem:[#allocation3 + $0x128] sm:$0xff]
        %v7753 = vld [vmem:[#allocation3 + $0x130] sm:$0xff]
        %v7754 = vld [vmem:[#allocation3 + $0x138] sm:$0xff]
        %v7755 = vld [vmem:[#allocation3 + $0x140] sm:$0xff]
        %v7756 = vld [vmem:[#allocation3 + $0x148] sm:$0xff]
        %v7757 = vld [vmem:[#allocation3 + $0x150] sm:$0xff]
        %v7758 = vld [vmem:[#allocation3 + $0x158] sm:$0xff]
        %v7759 = vld [vmem:[#allocation3 + $0x160] sm:$0xff]
        %v7760 = vld [vmem:[#allocation3 + $0x168] sm:$0xff]
        %v7761 = vld [vmem:[#allocation3 + $0x170] sm:$0xff]
        %v7762 = vld [vmem:[#allocation3 + $0x178] sm:$0xff]
        %v7763 = vld [vmem:[#allocation3 + $0x180] sm:$0xff]
        %v7764 = vld [vmem:[#allocation3 + $0x188] sm:$0xff]
        %v7765 = vld [vmem:[#allocation3 + $0x190] sm:$0xff]
        %v7766 = vld [vmem:[#allocation3 + $0x198] sm:$0xff]
        %v7767 = vld [vmem:[#allocation3 + $0x1a0] sm:$0xff]
        %v7768 = vld [vmem:[#allocation3 + $0x1a8] sm:$0xff]
        %v7769 = vld [vmem:[#allocation3 + $0x1b0] sm:$0xff]
        %v7770 = vld [vmem:[#allocation3 + $0x1b8] sm:$0xff]
        %v7771 = vld [vmem:[#allocation3 + $0x1c0] sm:$0xff]
        %v7772 = vld [vmem:[#allocation3 + $0x1c8] sm:$0xff]
        %v7773 = vld [vmem:[#allocation3 + $0x1d0] sm:$0xff]
        %v7774 = vld [vmem:[#allocation3 + $0x1d8] sm:$0xff]
        %v7775 = vld [vmem:[#allocation3 + $0x1e0] sm:$0xff]
        %v7776 = vld [vmem:[#allocation3 + $0x1e8] sm:$0xff]
        %v7777 = vld [vmem:[#allocation3 + $0x1f0] sm:$0xff]
        %v7778 = vld [vmem:[#allocation3 + $0x1f8] sm:$0xff]
        %v7779 = vld [vmem:[#allocation3 + $0x200] sm:$0xff]
        %v7780 = vld [vmem:[#allocation3 + $0x208] sm:$0xff]
        %v7781 = vld [vmem:[#allocation3 + $0x210] sm:$0xff]
        %v7782 = vld [vmem:[#allocation3 + $0x218] sm:$0xff]
        %v7783 = vld [vmem:[#allocation3 + $0x220] sm:$0xff]
        %s7784 = scalar_lea.vmem [#allocation12], 128
        %v7785 = vld [vmem:[%s7784] sm:$0xff]
        %v7786 = vld [vmem:[%s7784 + $0x8] sm:$0xff]
        %v7787 = vld [vmem:[%s7784 + $0x10] sm:$0xff]
        %v7788 = vld [vmem:[%s7784 + $0x18] sm:$0xff]
        %v7790 = vsel %vm544, %v7720, 0
        %v7793 = vsel %vm544, %v7721, 0
        %v7796 = vsel %vm544, %v7722, 0
        %v7799 = vsel %vm544, %v7723, 0
        %v7802 = vsel %vm544, %v7724, 0
        %v7805 = vsel %vm544, %v7725, 0
        %v7808 = vsel %vm544, %v7726, 0
        %v7811 = vsel %vm544, %v7727, 0
        %v7814 = vsel %vm544, %v7728, 0
        %v7817 = vsel %vm544, %v7729, 0
        %v7820 = vsel %vm544, %v7730, 0
        %v7823 = vsel %vm544, %v7731, 0
        %v7826 = vsel %vm544, %v7732, 0
        %v7829 = vsel %vm544, %v7733, 0
        %v7832 = vsel %vm544, %v7734, 0
        %v7835 = vsel %vm544, %v7735, 0
        %v7838 = vsel %vm544, %v7736, 0
        %v7841 = vsel %vm544, %v7737, 0
        %v7844 = vsel %vm544, %v7738, 0
        %v7847 = vsel %vm544, %v7739, 0
        %v7850 = vsel %vm544, %v7740, 0
        %v7853 = vsel %vm544, %v7741, 0
        %v7856 = vsel %vm544, %v7742, 0
        %v7859 = vsel %vm544, %v7743, 0
        %v7862 = vsel %vm544, %v7744, 0
        %v7865 = vsel %vm544, %v7745, 0
        %v7868 = vsel %vm544, %v7746, 0
        %v7871 = vsel %vm544, %v7747, 0
        %v7874 = vsel %vm544, %v7748, 0
        %v7877 = vsel %vm544, %v7749, 0
        %v7880 = vsel %vm544, %v7750, 0
        %v7883 = vsel %vm544, %v7751, 0
        %v7886 = vsel %vm544, %v7752, 0
        %v7889 = vsel %vm544, %v7753, 0
        %v7892 = vsel %vm544, %v7754, 0
        %v7895 = vsel %vm544, %v7755, 0
        %v7898 = vsel %vm544, %v7756, 0
        %v7901 = vsel %vm544, %v7757, 0
        %v7904 = vsel %vm544, %v7758, 0
        %v7907 = vsel %vm544, %v7759, 0
        %v7910 = vsel %vm544, %v7760, 0
        %v7913 = vsel %vm544, %v7761, 0
        %v7916 = vsel %vm544, %v7762, 0
        %v7919 = vsel %vm544, %v7763, 0
        %v7922 = vsel %vm544, %v7764, 0
        %v7925 = vsel %vm544, %v7765, 0
        %v7928 = vsel %vm544, %v7766, 0
        %v7931 = vsel %vm544, %v7767, 0
        %v7934 = vsel %vm544, %v7768, 0
        %v7937 = vsel %vm544, %v7769, 0
        %v7940 = vsel %vm544, %v7770, 0
        %v7943 = vsel %vm544, %v7771, 0
        %v7946 = vsel %vm544, %v7772, 0
        %v7949 = vsel %vm544, %v7773, 0
        %v7952 = vsel %vm544, %v7774, 0
        %v7955 = vsel %vm544, %v7775, 0
        %v7958 = vsel %vm544, %v7776, 0
        %v7961 = vsel %vm544, %v7777, 0
        %v7964 = vsel %vm544, %v7778, 0
        %v7967 = vsel %vm544, %v7779, 0
        %v7970 = vsel %vm544, %v7780, 0
        %v7973 = vsel %vm544, %v7781, 0
        %v7976 = vsel %vm544, %v7782, 0
        %v7979 = vsel %vm544, %v7783, 0
        %7981 = vmatpush.msra.mxu0 0.0
        %7982 = vmatpush.msra.mxu0 0.0
        %7983 = vmatpush.msra.mxu0 0.0
        %7984 = vmatpush.msra.mxu0 0.0
        %7985 = vmatpush.msra.mxu0 0.0
        %7986 = vmatpush.msra.mxu0 0.0
        %7987 = vmatpush.msra.mxu0 0.0
        %7988 = vmatpush.msra.mxu0 0.0
        %7989 = vmatpush.msra.mxu0 0.0
        %7990 = vmatpush.msra.mxu0 0.0
        %7991 = vmatpush.msra.mxu0 0.0
        %7992 = vmatpush.msra.mxu0 0.0
        %7993 = vmatpush.msra.mxu0 %v7788
        %7994 = vmatpush.msra.mxu0 %v7787
        %7995 = vmatpush.msra.mxu0 %v7786
        %7996 = vmatpush.msra.mxu0 %v7785
        %7997 = vmatmul.f32.gmra.mxu0 %v7790
        %v7998 = vpop.f32.mrf.mxu0
        %v7999 = vadd.f32 0.0, %v7998
        %8000 = vmatmul.f32.gmra.mxu0 %v7793
        %v8001 = vpop.f32.mrf.mxu0
        %v8002 = vadd.f32 0.0, %v8001
        %8003 = vmatmul.f32.gmra.mxu0 %v7796
        %v8004 = vpop.f32.mrf.mxu0
        %v8005 = vadd.f32 0.0, %v8004
        %8006 = vmatmul.f32.gmra.mxu0 %v7799
        %v8007 = vpop.f32.mrf.mxu0
        %v8008 = vadd.f32 0.0, %v8007
        %8009 = vmatmul.f32.gmra.mxu0 %v7802
        %v8010 = vpop.f32.mrf.mxu0
        %v8011 = vadd.f32 0.0, %v8010
        %8012 = vmatmul.f32.gmra.mxu0 %v7805
        %v8013 = vpop.f32.mrf.mxu0
        %v8014 = vadd.f32 0.0, %v8013
        %8015 = vmatmul.f32.gmra.mxu0 %v7808
        %v8016 = vpop.f32.mrf.mxu0
        %v8017 = vadd.f32 0.0, %v8016
        %8018 = vmatmul.f32.gmra.mxu0 %v7811
        %v8019 = vpop.f32.mrf.mxu0
        %v8020 = vadd.f32 0.0, %v8019
        %8021 = vmatmul.f32.gmra.mxu0 %v7814
        %v8022 = vpop.f32.mrf.mxu0
        %v8023 = vadd.f32 0.0, %v8022
        %8024 = vmatmul.f32.gmra.mxu0 %v7817
        %v8025 = vpop.f32.mrf.mxu0
        %v8026 = vadd.f32 0.0, %v8025
        %8027 = vmatmul.f32.gmra.mxu0 %v7820
        %v8028 = vpop.f32.mrf.mxu0
        %v8029 = vadd.f32 0.0, %v8028
        %8030 = vmatmul.f32.gmra.mxu0 %v7823
        %v8031 = vpop.f32.mrf.mxu0
        %v8032 = vadd.f32 0.0, %v8031
        %8033 = vmatmul.f32.gmra.mxu0 %v7826
        %v8034 = vpop.f32.mrf.mxu0
        %v8035 = vadd.f32 0.0, %v8034
        %8036 = vmatmul.f32.gmra.mxu0 %v7829
        %v8037 = vpop.f32.mrf.mxu0
        %v8038 = vadd.f32 0.0, %v8037
        %8039 = vmatmul.f32.gmra.mxu0 %v7832
        %v8040 = vpop.f32.mrf.mxu0
        %v8041 = vadd.f32 0.0, %v8040
        %8042 = vmatmul.f32.gmra.mxu0 %v7835
        %v8043 = vpop.f32.mrf.mxu0
        %v8044 = vadd.f32 0.0, %v8043
        %8045 = vmatmul.f32.gmra.mxu0 %v7838
        %v8046 = vpop.f32.mrf.mxu0
        %v8047 = vadd.f32 0.0, %v8046
        %8048 = vmatmul.f32.gmra.mxu0 %v7841
        %v8049 = vpop.f32.mrf.mxu0
        %v8050 = vadd.f32 0.0, %v8049
        %8051 = vmatmul.f32.gmra.mxu0 %v7844
        %v8052 = vpop.f32.mrf.mxu0
        %v8053 = vadd.f32 0.0, %v8052
        %8054 = vmatmul.f32.gmra.mxu0 %v7847
        %v8055 = vpop.f32.mrf.mxu0
        %v8056 = vadd.f32 0.0, %v8055
        %8057 = vmatmul.f32.gmra.mxu0 %v7850
        %v8058 = vpop.f32.mrf.mxu0
        %v8059 = vadd.f32 0.0, %v8058
        %8060 = vmatmul.f32.gmra.mxu0 %v7853
        %v8061 = vpop.f32.mrf.mxu0
        %v8062 = vadd.f32 0.0, %v8061
        %8063 = vmatmul.f32.gmra.mxu0 %v7856
        %v8064 = vpop.f32.mrf.mxu0
        %v8065 = vadd.f32 0.0, %v8064
        %8066 = vmatmul.f32.gmra.mxu0 %v7859
        %v8067 = vpop.f32.mrf.mxu0
        %v8068 = vadd.f32 0.0, %v8067
        %8069 = vmatmul.f32.gmra.mxu0 %v7862
        %v8070 = vpop.f32.mrf.mxu0
        %v8071 = vadd.f32 0.0, %v8070
        %8072 = vmatmul.f32.gmra.mxu0 %v7865
        %v8073 = vpop.f32.mrf.mxu0
        %v8074 = vadd.f32 0.0, %v8073
        %8075 = vmatmul.f32.gmra.mxu0 %v7868
        %v8076 = vpop.f32.mrf.mxu0
        %v8077 = vadd.f32 0.0, %v8076
        %8078 = vmatmul.f32.gmra.mxu0 %v7871
        %v8079 = vpop.f32.mrf.mxu0
        %v8080 = vadd.f32 0.0, %v8079
        %8081 = vmatmul.f32.gmra.mxu0 %v7874
        %v8082 = vpop.f32.mrf.mxu0
        %v8083 = vadd.f32 0.0, %v8082
        %8084 = vmatmul.f32.gmra.mxu0 %v7877
        %v8085 = vpop.f32.mrf.mxu0
        %v8086 = vadd.f32 0.0, %v8085
        %8087 = vmatmul.f32.gmra.mxu0 %v7880
        %v8088 = vpop.f32.mrf.mxu0
        %v8089 = vadd.f32 0.0, %v8088
        %8090 = vmatmul.f32.gmra.mxu0 %v7883
        %v8091 = vpop.f32.mrf.mxu0
        %v8092 = vadd.f32 0.0, %v8091
        %8093 = vmatmul.f32.gmra.mxu0 %v7886
        %v8094 = vpop.f32.mrf.mxu0
        %v8095 = vadd.f32 0.0, %v8094
        %8096 = vmatmul.f32.gmra.mxu0 %v7889
        %v8097 = vpop.f32.mrf.mxu0
        %v8098 = vadd.f32 0.0, %v8097
        %8099 = vmatmul.f32.gmra.mxu0 %v7892
        %v8100 = vpop.f32.mrf.mxu0
        %v8101 = vadd.f32 0.0, %v8100
        %8102 = vmatmul.f32.gmra.mxu0 %v7895
        %v8103 = vpop.f32.mrf.mxu0
        %v8104 = vadd.f32 0.0, %v8103
        %8105 = vmatmul.f32.gmra.mxu0 %v7898
        %v8106 = vpop.f32.mrf.mxu0
        %v8107 = vadd.f32 0.0, %v8106
        %8108 = vmatmul.f32.gmra.mxu0 %v7901
        %v8109 = vpop.f32.mrf.mxu0
        %v8110 = vadd.f32 0.0, %v8109
        %8111 = vmatmul.f32.gmra.mxu0 %v7904
        %v8112 = vpop.f32.mrf.mxu0
        %v8113 = vadd.f32 0.0, %v8112
        %8114 = vmatmul.f32.gmra.mxu0 %v7907
        %v8115 = vpop.f32.mrf.mxu0
        %v8116 = vadd.f32 0.0, %v8115
        %8117 = vmatmul.f32.gmra.mxu0 %v7910
        %v8118 = vpop.f32.mrf.mxu0
        %v8119 = vadd.f32 0.0, %v8118
        %8120 = vmatmul.f32.gmra.mxu0 %v7913
        %v8121 = vpop.f32.mrf.mxu0
        %v8122 = vadd.f32 0.0, %v8121
        %8123 = vmatmul.f32.gmra.mxu0 %v7916
        %v8124 = vpop.f32.mrf.mxu0
        %v8125 = vadd.f32 0.0, %v8124
        %8126 = vmatmul.f32.gmra.mxu0 %v7919
        %v8127 = vpop.f32.mrf.mxu0
        %v8128 = vadd.f32 0.0, %v8127
        %8129 = vmatmul.f32.gmra.mxu0 %v7922
        %v8130 = vpop.f32.mrf.mxu0
        %v8131 = vadd.f32 0.0, %v8130
        %8132 = vmatmul.f32.gmra.mxu0 %v7925
        %v8133 = vpop.f32.mrf.mxu0
        %v8134 = vadd.f32 0.0, %v8133
        %8135 = vmatmul.f32.gmra.mxu0 %v7928
        %v8136 = vpop.f32.mrf.mxu0
        %v8137 = vadd.f32 0.0, %v8136
        %8138 = vmatmul.f32.gmra.mxu0 %v7931
        %v8139 = vpop.f32.mrf.mxu0
        %v8140 = vadd.f32 0.0, %v8139
        %8141 = vmatmul.f32.gmra.mxu0 %v7934
        %v8142 = vpop.f32.mrf.mxu0
        %v8143 = vadd.f32 0.0, %v8142
        %8144 = vmatmul.f32.gmra.mxu0 %v7937
        %v8145 = vpop.f32.mrf.mxu0
        %v8146 = vadd.f32 0.0, %v8145
        %8147 = vmatmul.f32.gmra.mxu0 %v7940
        %v8148 = vpop.f32.mrf.mxu0
        %v8149 = vadd.f32 0.0, %v8148
        %8150 = vmatmul.f32.gmra.mxu0 %v7943
        %v8151 = vpop.f32.mrf.mxu0
        %v8152 = vadd.f32 0.0, %v8151
        %8153 = vmatmul.f32.gmra.mxu0 %v7946
        %v8154 = vpop.f32.mrf.mxu0
        %v8155 = vadd.f32 0.0, %v8154
        %8156 = vmatmul.f32.gmra.mxu0 %v7949
        %v8157 = vpop.f32.mrf.mxu0
        %v8158 = vadd.f32 0.0, %v8157
        %8159 = vmatmul.f32.gmra.mxu0 %v7952
        %v8160 = vpop.f32.mrf.mxu0
        %v8161 = vadd.f32 0.0, %v8160
        %8162 = vmatmul.f32.gmra.mxu0 %v7955
        %v8163 = vpop.f32.mrf.mxu0
        %v8164 = vadd.f32 0.0, %v8163
        %8165 = vmatmul.f32.gmra.mxu0 %v7958
        %v8166 = vpop.f32.mrf.mxu0
        %v8167 = vadd.f32 0.0, %v8166
        %8168 = vmatmul.f32.gmra.mxu0 %v7961
        %v8169 = vpop.f32.mrf.mxu0
        %v8170 = vadd.f32 0.0, %v8169
        %8171 = vmatmul.f32.gmra.mxu0 %v7964
        %v8172 = vpop.f32.mrf.mxu0
        %v8173 = vadd.f32 0.0, %v8172
        %8174 = vmatmul.f32.gmra.mxu0 %v7967
        %v8175 = vpop.f32.mrf.mxu0
        %v8176 = vadd.f32 0.0, %v8175
        %8177 = vmatmul.f32.gmra.mxu0 %v7970
        %v8178 = vpop.f32.mrf.mxu0
        %v8179 = vadd.f32 0.0, %v8178
        %8180 = vmatmul.f32.gmra.mxu0 %v7973
        %v8181 = vpop.f32.mrf.mxu0
        %v8182 = vadd.f32 0.0, %v8181
        %8183 = vmatmul.f32.gmra.mxu0 %v7976
        %v8184 = vpop.f32.mrf.mxu0
        %v8185 = vadd.f32 0.0, %v8184
        %8186 = vmatmul.f32.gmra.mxu0 %v7979
        %v8187 = vpop.f32.mrf.mxu0
        %v8188 = vadd.f32 0.0, %v8187
        %8189 = vdwg.mxu0
        %v8190 = vadd.f32 %v7656, %v7999
        %v8191 = vadd.f32 %v7657, %v8002
        %v8192 = vadd.f32 %v7658, %v8005
        %v8193 = vadd.f32 %v7659, %v8008
        %v8194 = vadd.f32 %v7660, %v8011
        %v8195 = vadd.f32 %v7661, %v8014
        %v8196 = vadd.f32 %v7662, %v8017
        %v8197 = vadd.f32 %v7663, %v8020
        %v8198 = vadd.f32 %v7664, %v8023
        %v8199 = vadd.f32 %v7665, %v8026
        %v8200 = vadd.f32 %v7666, %v8029
        %v8201 = vadd.f32 %v7667, %v8032
        %v8202 = vadd.f32 %v7668, %v8035
        %v8203 = vadd.f32 %v7669, %v8038
        %v8204 = vadd.f32 %v7670, %v8041
        %v8205 = vadd.f32 %v7671, %v8044
        %v8206 = vadd.f32 %v7672, %v8047
        %v8207 = vadd.f32 %v7673, %v8050
        %v8208 = vadd.f32 %v7674, %v8053
        %v8209 = vadd.f32 %v7675, %v8056
        %v8210 = vadd.f32 %v7676, %v8059
        %v8211 = vadd.f32 %v7677, %v8062
        %v8212 = vadd.f32 %v7678, %v8065
        %v8213 = vadd.f32 %v7679, %v8068
        %v8214 = vadd.f32 %v7680, %v8071
        %v8215 = vadd.f32 %v7681, %v8074
        %v8216 = vadd.f32 %v7682, %v8077
        %v8217 = vadd.f32 %v7683, %v8080
        %v8218 = vadd.f32 %v7684, %v8083
        %v8219 = vadd.f32 %v7685, %v8086
        %v8220 = vadd.f32 %v7686, %v8089
        %v8221 = vadd.f32 %v7687, %v8092
        %v8222 = vadd.f32 %v7688, %v8095
        %v8223 = vadd.f32 %v7689, %v8098
        %v8224 = vadd.f32 %v7690, %v8101
        %v8225 = vadd.f32 %v7691, %v8104
        %v8226 = vadd.f32 %v7692, %v8107
        %v8227 = vadd.f32 %v7693, %v8110
        %v8228 = vadd.f32 %v7694, %v8113
        %v8229 = vadd.f32 %v7695, %v8116
        %v8230 = vadd.f32 %v7696, %v8119
        %v8231 = vadd.f32 %v7697, %v8122
        %v8232 = vadd.f32 %v7698, %v8125
        %v8233 = vadd.f32 %v7699, %v8128
        %v8234 = vadd.f32 %v7700, %v8131
        %v8235 = vadd.f32 %v7701, %v8134
        %v8236 = vadd.f32 %v7702, %v8137
        %v8237 = vadd.f32 %v7703, %v8140
        %v8238 = vadd.f32 %v7704, %v8143
        %v8239 = vadd.f32 %v7705, %v8146
        %v8240 = vadd.f32 %v7706, %v8149
        %v8241 = vadd.f32 %v7707, %v8152
        %v8242 = vadd.f32 %v7708, %v8155
        %v8243 = vadd.f32 %v7709, %v8158
        %v8244 = vadd.f32 %v7710, %v8161
        %v8245 = vadd.f32 %v7711, %v8164
        %v8246 = vadd.f32 %v7712, %v8167
        %v8247 = vadd.f32 %v7713, %v8170
        %v8248 = vadd.f32 %v7714, %v8173
        %v8249 = vadd.f32 %v7715, %v8176
        %v8250 = vadd.f32 %v7716, %v8179
        %v8251 = vadd.f32 %v7717, %v8182
        %v8252 = vadd.f32 %v7718, %v8185
        %v8253 = vadd.f32 %v7719, %v8188
        %v8254 = vld [vmem:[#allocation3 + $0x29] sm:$0xff]
        %v8255 = vld [vmem:[#allocation3 + $0x31] sm:$0xff]
        %v8256 = vld [vmem:[#allocation3 + $0x39] sm:$0xff]
        %v8257 = vld [vmem:[#allocation3 + $0x41] sm:$0xff]
        %v8258 = vld [vmem:[#allocation3 + $0x49] sm:$0xff]
        %v8259 = vld [vmem:[#allocation3 + $0x51] sm:$0xff]
        %v8260 = vld [vmem:[#allocation3 + $0x59] sm:$0xff]
        %v8261 = vld [vmem:[#allocation3 + $0x61] sm:$0xff]
        %v8262 = vld [vmem:[#allocation3 + $0x69] sm:$0xff]
        %v8263 = vld [vmem:[#allocation3 + $0x71] sm:$0xff]
        %v8264 = vld [vmem:[#allocation3 + $0x79] sm:$0xff]
        %v8265 = vld [vmem:[#allocation3 + $0x81] sm:$0xff]
        %v8266 = vld [vmem:[#allocation3 + $0x89] sm:$0xff]
        %v8267 = vld [vmem:[#allocation3 + $0x91] sm:$0xff]
        %v8268 = vld [vmem:[#allocation3 + $0x99] sm:$0xff]
        %v8269 = vld [vmem:[#allocation3 + $0xa1] sm:$0xff]
        %v8270 = vld [vmem:[#allocation3 + $0xa9] sm:$0xff]
        %v8271 = vld [vmem:[#allocation3 + $0xb1] sm:$0xff]
        %v8272 = vld [vmem:[#allocation3 + $0xb9] sm:$0xff]
        %v8273 = vld [vmem:[#allocation3 + $0xc1] sm:$0xff]
        %v8274 = vld [vmem:[#allocation3 + $0xc9] sm:$0xff]
        %v8275 = vld [vmem:[#allocation3 + $0xd1] sm:$0xff]
        %v8276 = vld [vmem:[#allocation3 + $0xd9] sm:$0xff]
        %v8277 = vld [vmem:[#allocation3 + $0xe1] sm:$0xff]
        %v8278 = vld [vmem:[#allocation3 + $0xe9] sm:$0xff]
        %v8279 = vld [vmem:[#allocation3 + $0xf1] sm:$0xff]
        %v8280 = vld [vmem:[#allocation3 + $0xf9] sm:$0xff]
        %v8281 = vld [vmem:[#allocation3 + $0x101] sm:$0xff]
        %v8282 = vld [vmem:[#allocation3 + $0x109] sm:$0xff]
        %v8283 = vld [vmem:[#allocation3 + $0x111] sm:$0xff]
        %v8284 = vld [vmem:[#allocation3 + $0x119] sm:$0xff]
        %v8285 = vld [vmem:[#allocation3 + $0x121] sm:$0xff]
        %v8286 = vld [vmem:[#allocation3 + $0x129] sm:$0xff]
        %v8287 = vld [vmem:[#allocation3 + $0x131] sm:$0xff]
        %v8288 = vld [vmem:[#allocation3 + $0x139] sm:$0xff]
        %v8289 = vld [vmem:[#allocation3 + $0x141] sm:$0xff]
        %v8290 = vld [vmem:[#allocation3 + $0x149] sm:$0xff]
        %v8291 = vld [vmem:[#allocation3 + $0x151] sm:$0xff]
        %v8292 = vld [vmem:[#allocation3 + $0x159] sm:$0xff]
        %v8293 = vld [vmem:[#allocation3 + $0x161] sm:$0xff]
        %v8294 = vld [vmem:[#allocation3 + $0x169] sm:$0xff]
        %v8295 = vld [vmem:[#allocation3 + $0x171] sm:$0xff]
        %v8296 = vld [vmem:[#allocation3 + $0x179] sm:$0xff]
        %v8297 = vld [vmem:[#allocation3 + $0x181] sm:$0xff]
        %v8298 = vld [vmem:[#allocation3 + $0x189] sm:$0xff]
        %v8299 = vld [vmem:[#allocation3 + $0x191] sm:$0xff]
        %v8300 = vld [vmem:[#allocation3 + $0x199] sm:$0xff]
        %v8301 = vld [vmem:[#allocation3 + $0x1a1] sm:$0xff]
        %v8302 = vld [vmem:[#allocation3 + $0x1a9] sm:$0xff]
        %v8303 = vld [vmem:[#allocation3 + $0x1b1] sm:$0xff]
        %v8304 = vld [vmem:[#allocation3 + $0x1b9] sm:$0xff]
        %v8305 = vld [vmem:[#allocation3 + $0x1c1] sm:$0xff]
        %v8306 = vld [vmem:[#allocation3 + $0x1c9] sm:$0xff]
        %v8307 = vld [vmem:[#allocation3 + $0x1d1] sm:$0xff]
        %v8308 = vld [vmem:[#allocation3 + $0x1d9] sm:$0xff]
        %v8309 = vld [vmem:[#allocation3 + $0x1e1] sm:$0xff]
        %v8310 = vld [vmem:[#allocation3 + $0x1e9] sm:$0xff]
        %v8311 = vld [vmem:[#allocation3 + $0x1f1] sm:$0xff]
        %v8312 = vld [vmem:[#allocation3 + $0x1f9] sm:$0xff]
        %v8313 = vld [vmem:[#allocation3 + $0x201] sm:$0xff]
        %v8314 = vld [vmem:[#allocation3 + $0x209] sm:$0xff]
        %v8315 = vld [vmem:[#allocation3 + $0x211] sm:$0xff]
        %v8316 = vld [vmem:[#allocation3 + $0x219] sm:$0xff]
        %v8317 = vld [vmem:[#allocation3 + $0x221] sm:$0xff]
        %s8318 = scalar_lea.vmem [#allocation12], 160
        %v8319 = vld [vmem:[%s8318] sm:$0xff]
        %v8320 = vld [vmem:[%s8318 + $0x8] sm:$0xff]
        %v8321 = vld [vmem:[%s8318 + $0x10] sm:$0xff]
        %v8322 = vld [vmem:[%s8318 + $0x18] sm:$0xff]
        %v8324 = vsel %vm544, %v8254, 0
        %v8327 = vsel %vm544, %v8255, 0
        %v8330 = vsel %vm544, %v8256, 0
        %v8333 = vsel %vm544, %v8257, 0
        %v8336 = vsel %vm544, %v8258, 0
        %v8339 = vsel %vm544, %v8259, 0
        %v8342 = vsel %vm544, %v8260, 0
        %v8345 = vsel %vm544, %v8261, 0
        %v8348 = vsel %vm544, %v8262, 0
        %v8351 = vsel %vm544, %v8263, 0
        %v8354 = vsel %vm544, %v8264, 0
        %v8357 = vsel %vm544, %v8265, 0
        %v8360 = vsel %vm544, %v8266, 0
        %v8363 = vsel %vm544, %v8267, 0
        %v8366 = vsel %vm544, %v8268, 0
        %v8369 = vsel %vm544, %v8269, 0
        %v8372 = vsel %vm544, %v8270, 0
        %v8375 = vsel %vm544, %v8271, 0
        %v8378 = vsel %vm544, %v8272, 0
        %v8381 = vsel %vm544, %v8273, 0
        %v8384 = vsel %vm544, %v8274, 0
        %v8387 = vsel %vm544, %v8275, 0
        %v8390 = vsel %vm544, %v8276, 0
        %v8393 = vsel %vm544, %v8277, 0
        %v8396 = vsel %vm544, %v8278, 0
        %v8399 = vsel %vm544, %v8279, 0
        %v8402 = vsel %vm544, %v8280, 0
        %v8405 = vsel %vm544, %v8281, 0
        %v8408 = vsel %vm544, %v8282, 0
        %v8411 = vsel %vm544, %v8283, 0
        %v8414 = vsel %vm544, %v8284, 0
        %v8417 = vsel %vm544, %v8285, 0
        %v8420 = vsel %vm544, %v8286, 0
        %v8423 = vsel %vm544, %v8287, 0
        %v8426 = vsel %vm544, %v8288, 0
        %v8429 = vsel %vm544, %v8289, 0
        %v8432 = vsel %vm544, %v8290, 0
        %v8435 = vsel %vm544, %v8291, 0
        %v8438 = vsel %vm544, %v8292, 0
        %v8441 = vsel %vm544, %v8293, 0
        %v8444 = vsel %vm544, %v8294, 0
        %v8447 = vsel %vm544, %v8295, 0
        %v8450 = vsel %vm544, %v8296, 0
        %v8453 = vsel %vm544, %v8297, 0
        %v8456 = vsel %vm544, %v8298, 0
        %v8459 = vsel %vm544, %v8299, 0
        %v8462 = vsel %vm544, %v8300, 0
        %v8465 = vsel %vm544, %v8301, 0
        %v8468 = vsel %vm544, %v8302, 0
        %v8471 = vsel %vm544, %v8303, 0
        %v8474 = vsel %vm544, %v8304, 0
        %v8477 = vsel %vm544, %v8305, 0
        %v8480 = vsel %vm544, %v8306, 0
        %v8483 = vsel %vm544, %v8307, 0
        %v8486 = vsel %vm544, %v8308, 0
        %v8489 = vsel %vm544, %v8309, 0
        %v8492 = vsel %vm544, %v8310, 0
        %v8495 = vsel %vm544, %v8311, 0
        %v8498 = vsel %vm544, %v8312, 0
        %v8501 = vsel %vm544, %v8313, 0
        %v8504 = vsel %vm544, %v8314, 0
        %v8507 = vsel %vm544, %v8315, 0
        %v8510 = vsel %vm544, %v8316, 0
        %v8513 = vsel %vm544, %v8317, 0
        %8515 = vmatpush.msra.mxu0 0.0
        %8516 = vmatpush.msra.mxu0 0.0
        %8517 = vmatpush.msra.mxu0 0.0
        %8518 = vmatpush.msra.mxu0 0.0
        %8519 = vmatpush.msra.mxu0 0.0
        %8520 = vmatpush.msra.mxu0 0.0
        %8521 = vmatpush.msra.mxu0 0.0
        %8522 = vmatpush.msra.mxu0 0.0
        %8523 = vmatpush.msra.mxu0 0.0
        %8524 = vmatpush.msra.mxu0 0.0
        %8525 = vmatpush.msra.mxu0 0.0
        %8526 = vmatpush.msra.mxu0 0.0
        %8527 = vmatpush.msra.mxu0 %v8322
        %8528 = vmatpush.msra.mxu0 %v8321
        %8529 = vmatpush.msra.mxu0 %v8320
        %8530 = vmatpush.msra.mxu0 %v8319
        %8531 = vmatmul.f32.gmra.mxu0 %v8324
        %v8532 = vpop.f32.mrf.mxu0
        %v8533 = vadd.f32 0.0, %v8532
        %8534 = vmatmul.f32.gmra.mxu0 %v8327
        %v8535 = vpop.f32.mrf.mxu0
        %v8536 = vadd.f32 0.0, %v8535
        %8537 = vmatmul.f32.gmra.mxu0 %v8330
        %v8538 = vpop.f32.mrf.mxu0
        %v8539 = vadd.f32 0.0, %v8538
        %8540 = vmatmul.f32.gmra.mxu0 %v8333
        %v8541 = vpop.f32.mrf.mxu0
        %v8542 = vadd.f32 0.0, %v8541
        %8543 = vmatmul.f32.gmra.mxu0 %v8336
        %v8544 = vpop.f32.mrf.mxu0
        %v8545 = vadd.f32 0.0, %v8544
        %8546 = vmatmul.f32.gmra.mxu0 %v8339
        %v8547 = vpop.f32.mrf.mxu0
        %v8548 = vadd.f32 0.0, %v8547
        %8549 = vmatmul.f32.gmra.mxu0 %v8342
        %v8550 = vpop.f32.mrf.mxu0
        %v8551 = vadd.f32 0.0, %v8550
        %8552 = vmatmul.f32.gmra.mxu0 %v8345
        %v8553 = vpop.f32.mrf.mxu0
        %v8554 = vadd.f32 0.0, %v8553
        %8555 = vmatmul.f32.gmra.mxu0 %v8348
        %v8556 = vpop.f32.mrf.mxu0
        %v8557 = vadd.f32 0.0, %v8556
        %8558 = vmatmul.f32.gmra.mxu0 %v8351
        %v8559 = vpop.f32.mrf.mxu0
        %v8560 = vadd.f32 0.0, %v8559
        %8561 = vmatmul.f32.gmra.mxu0 %v8354
        %v8562 = vpop.f32.mrf.mxu0
        %v8563 = vadd.f32 0.0, %v8562
        %8564 = vmatmul.f32.gmra.mxu0 %v8357
        %v8565 = vpop.f32.mrf.mxu0
        %v8566 = vadd.f32 0.0, %v8565
        %8567 = vmatmul.f32.gmra.mxu0 %v8360
        %v8568 = vpop.f32.mrf.mxu0
        %v8569 = vadd.f32 0.0, %v8568
        %8570 = vmatmul.f32.gmra.mxu0 %v8363
        %v8571 = vpop.f32.mrf.mxu0
        %v8572 = vadd.f32 0.0, %v8571
        %8573 = vmatmul.f32.gmra.mxu0 %v8366
        %v8574 = vpop.f32.mrf.mxu0
        %v8575 = vadd.f32 0.0, %v8574
        %8576 = vmatmul.f32.gmra.mxu0 %v8369
        %v8577 = vpop.f32.mrf.mxu0
        %v8578 = vadd.f32 0.0, %v8577
        %8579 = vmatmul.f32.gmra.mxu0 %v8372
        %v8580 = vpop.f32.mrf.mxu0
        %v8581 = vadd.f32 0.0, %v8580
        %8582 = vmatmul.f32.gmra.mxu0 %v8375
        %v8583 = vpop.f32.mrf.mxu0
        %v8584 = vadd.f32 0.0, %v8583
        %8585 = vmatmul.f32.gmra.mxu0 %v8378
        %v8586 = vpop.f32.mrf.mxu0
        %v8587 = vadd.f32 0.0, %v8586
        %8588 = vmatmul.f32.gmra.mxu0 %v8381
        %v8589 = vpop.f32.mrf.mxu0
        %v8590 = vadd.f32 0.0, %v8589
        %8591 = vmatmul.f32.gmra.mxu0 %v8384
        %v8592 = vpop.f32.mrf.mxu0
        %v8593 = vadd.f32 0.0, %v8592
        %8594 = vmatmul.f32.gmra.mxu0 %v8387
        %v8595 = vpop.f32.mrf.mxu0
        %v8596 = vadd.f32 0.0, %v8595
        %8597 = vmatmul.f32.gmra.mxu0 %v8390
        %v8598 = vpop.f32.mrf.mxu0
        %v8599 = vadd.f32 0.0, %v8598
        %8600 = vmatmul.f32.gmra.mxu0 %v8393
        %v8601 = vpop.f32.mrf.mxu0
        %v8602 = vadd.f32 0.0, %v8601
        %8603 = vmatmul.f32.gmra.mxu0 %v8396
        %v8604 = vpop.f32.mrf.mxu0
        %v8605 = vadd.f32 0.0, %v8604
        %8606 = vmatmul.f32.gmra.mxu0 %v8399
        %v8607 = vpop.f32.mrf.mxu0
        %v8608 = vadd.f32 0.0, %v8607
        %8609 = vmatmul.f32.gmra.mxu0 %v8402
        %v8610 = vpop.f32.mrf.mxu0
        %v8611 = vadd.f32 0.0, %v8610
        %8612 = vmatmul.f32.gmra.mxu0 %v8405
        %v8613 = vpop.f32.mrf.mxu0
        %v8614 = vadd.f32 0.0, %v8613
        %8615 = vmatmul.f32.gmra.mxu0 %v8408
        %v8616 = vpop.f32.mrf.mxu0
        %v8617 = vadd.f32 0.0, %v8616
        %8618 = vmatmul.f32.gmra.mxu0 %v8411
        %v8619 = vpop.f32.mrf.mxu0
        %v8620 = vadd.f32 0.0, %v8619
        %8621 = vmatmul.f32.gmra.mxu0 %v8414
        %v8622 = vpop.f32.mrf.mxu0
        %v8623 = vadd.f32 0.0, %v8622
        %8624 = vmatmul.f32.gmra.mxu0 %v8417
        %v8625 = vpop.f32.mrf.mxu0
        %v8626 = vadd.f32 0.0, %v8625
        %8627 = vmatmul.f32.gmra.mxu0 %v8420
        %v8628 = vpop.f32.mrf.mxu0
        %v8629 = vadd.f32 0.0, %v8628
        %8630 = vmatmul.f32.gmra.mxu0 %v8423
        %v8631 = vpop.f32.mrf.mxu0
        %v8632 = vadd.f32 0.0, %v8631
        %8633 = vmatmul.f32.gmra.mxu0 %v8426
        %v8634 = vpop.f32.mrf.mxu0
        %v8635 = vadd.f32 0.0, %v8634
        %8636 = vmatmul.f32.gmra.mxu0 %v8429
        %v8637 = vpop.f32.mrf.mxu0
        %v8638 = vadd.f32 0.0, %v8637
        %8639 = vmatmul.f32.gmra.mxu0 %v8432
        %v8640 = vpop.f32.mrf.mxu0
        %v8641 = vadd.f32 0.0, %v8640
        %8642 = vmatmul.f32.gmra.mxu0 %v8435
        %v8643 = vpop.f32.mrf.mxu0
        %v8644 = vadd.f32 0.0, %v8643
        %8645 = vmatmul.f32.gmra.mxu0 %v8438
        %v8646 = vpop.f32.mrf.mxu0
        %v8647 = vadd.f32 0.0, %v8646
        %8648 = vmatmul.f32.gmra.mxu0 %v8441
        %v8649 = vpop.f32.mrf.mxu0
        %v8650 = vadd.f32 0.0, %v8649
        %8651 = vmatmul.f32.gmra.mxu0 %v8444
        %v8652 = vpop.f32.mrf.mxu0
        %v8653 = vadd.f32 0.0, %v8652
        %8654 = vmatmul.f32.gmra.mxu0 %v8447
        %v8655 = vpop.f32.mrf.mxu0
        %v8656 = vadd.f32 0.0, %v8655
        %8657 = vmatmul.f32.gmra.mxu0 %v8450
        %v8658 = vpop.f32.mrf.mxu0
        %v8659 = vadd.f32 0.0, %v8658
        %8660 = vmatmul.f32.gmra.mxu0 %v8453
        %v8661 = vpop.f32.mrf.mxu0
        %v8662 = vadd.f32 0.0, %v8661
        %8663 = vmatmul.f32.gmra.mxu0 %v8456
        %v8664 = vpop.f32.mrf.mxu0
        %v8665 = vadd.f32 0.0, %v8664
        %8666 = vmatmul.f32.gmra.mxu0 %v8459
        %v8667 = vpop.f32.mrf.mxu0
        %v8668 = vadd.f32 0.0, %v8667
        %8669 = vmatmul.f32.gmra.mxu0 %v8462
        %v8670 = vpop.f32.mrf.mxu0
        %v8671 = vadd.f32 0.0, %v8670
        %8672 = vmatmul.f32.gmra.mxu0 %v8465
        %v8673 = vpop.f32.mrf.mxu0
        %v8674 = vadd.f32 0.0, %v8673
        %8675 = vmatmul.f32.gmra.mxu0 %v8468
        %v8676 = vpop.f32.mrf.mxu0
        %v8677 = vadd.f32 0.0, %v8676
        %8678 = vmatmul.f32.gmra.mxu0 %v8471
        %v8679 = vpop.f32.mrf.mxu0
        %v8680 = vadd.f32 0.0, %v8679
        %8681 = vmatmul.f32.gmra.mxu0 %v8474
        %v8682 = vpop.f32.mrf.mxu0
        %v8683 = vadd.f32 0.0, %v8682
        %8684 = vmatmul.f32.gmra.mxu0 %v8477
        %v8685 = vpop.f32.mrf.mxu0
        %v8686 = vadd.f32 0.0, %v8685
        %8687 = vmatmul.f32.gmra.mxu0 %v8480
        %v8688 = vpop.f32.mrf.mxu0
        %v8689 = vadd.f32 0.0, %v8688
        %8690 = vmatmul.f32.gmra.mxu0 %v8483
        %v8691 = vpop.f32.mrf.mxu0
        %v8692 = vadd.f32 0.0, %v8691
        %8693 = vmatmul.f32.gmra.mxu0 %v8486
        %v8694 = vpop.f32.mrf.mxu0
        %v8695 = vadd.f32 0.0, %v8694
        %8696 = vmatmul.f32.gmra.mxu0 %v8489
        %v8697 = vpop.f32.mrf.mxu0
        %v8698 = vadd.f32 0.0, %v8697
        %8699 = vmatmul.f32.gmra.mxu0 %v8492
        %v8700 = vpop.f32.mrf.mxu0
        %v8701 = vadd.f32 0.0, %v8700
        %8702 = vmatmul.f32.gmra.mxu0 %v8495
        %v8703 = vpop.f32.mrf.mxu0
        %v8704 = vadd.f32 0.0, %v8703
        %8705 = vmatmul.f32.gmra.mxu0 %v8498
        %v8706 = vpop.f32.mrf.mxu0
        %v8707 = vadd.f32 0.0, %v8706
        %8708 = vmatmul.f32.gmra.mxu0 %v8501
        %v8709 = vpop.f32.mrf.mxu0
        %v8710 = vadd.f32 0.0, %v8709
        %8711 = vmatmul.f32.gmra.mxu0 %v8504
        %v8712 = vpop.f32.mrf.mxu0
        %v8713 = vadd.f32 0.0, %v8712
        %8714 = vmatmul.f32.gmra.mxu0 %v8507
        %v8715 = vpop.f32.mrf.mxu0
        %v8716 = vadd.f32 0.0, %v8715
        %8717 = vmatmul.f32.gmra.mxu0 %v8510
        %v8718 = vpop.f32.mrf.mxu0
        %v8719 = vadd.f32 0.0, %v8718
        %8720 = vmatmul.f32.gmra.mxu0 %v8513
        %v8721 = vpop.f32.mrf.mxu0
        %v8722 = vadd.f32 0.0, %v8721
        %8723 = vdwg.mxu0
        %v8724 = vadd.f32 %v8190, %v8533
        %v8725 = vadd.f32 %v8191, %v8536
        %v8726 = vadd.f32 %v8192, %v8539
        %v8727 = vadd.f32 %v8193, %v8542
        %v8728 = vadd.f32 %v8194, %v8545
        %v8729 = vadd.f32 %v8195, %v8548
        %v8730 = vadd.f32 %v8196, %v8551
        %v8731 = vadd.f32 %v8197, %v8554
        %v8732 = vadd.f32 %v8198, %v8557
        %v8733 = vadd.f32 %v8199, %v8560
        %v8734 = vadd.f32 %v8200, %v8563
        %v8735 = vadd.f32 %v8201, %v8566
        %v8736 = vadd.f32 %v8202, %v8569
        %v8737 = vadd.f32 %v8203, %v8572
        %v8738 = vadd.f32 %v8204, %v8575
        %v8739 = vadd.f32 %v8205, %v8578
        %v8740 = vadd.f32 %v8206, %v8581
        %v8741 = vadd.f32 %v8207, %v8584
        %v8742 = vadd.f32 %v8208, %v8587
        %v8743 = vadd.f32 %v8209, %v8590
        %v8744 = vadd.f32 %v8210, %v8593
        %v8745 = vadd.f32 %v8211, %v8596
        %v8746 = vadd.f32 %v8212, %v8599
        %v8747 = vadd.f32 %v8213, %v8602
        %v8748 = vadd.f32 %v8214, %v8605
        %v8749 = vadd.f32 %v8215, %v8608
        %v8750 = vadd.f32 %v8216, %v8611
        %v8751 = vadd.f32 %v8217, %v8614
        %v8752 = vadd.f32 %v8218, %v8617
        %v8753 = vadd.f32 %v8219, %v8620
        %v8754 = vadd.f32 %v8220, %v8623
        %v8755 = vadd.f32 %v8221, %v8626
        %v8756 = vadd.f32 %v8222, %v8629
        %v8757 = vadd.f32 %v8223, %v8632
        %v8758 = vadd.f32 %v8224, %v8635
        %v8759 = vadd.f32 %v8225, %v8638
        %v8760 = vadd.f32 %v8226, %v8641
        %v8761 = vadd.f32 %v8227, %v8644
        %v8762 = vadd.f32 %v8228, %v8647
        %v8763 = vadd.f32 %v8229, %v8650
        %v8764 = vadd.f32 %v8230, %v8653
        %v8765 = vadd.f32 %v8231, %v8656
        %v8766 = vadd.f32 %v8232, %v8659
        %v8767 = vadd.f32 %v8233, %v8662
        %v8768 = vadd.f32 %v8234, %v8665
        %v8769 = vadd.f32 %v8235, %v8668
        %v8770 = vadd.f32 %v8236, %v8671
        %v8771 = vadd.f32 %v8237, %v8674
        %v8772 = vadd.f32 %v8238, %v8677
        %v8773 = vadd.f32 %v8239, %v8680
        %v8774 = vadd.f32 %v8240, %v8683
        %v8775 = vadd.f32 %v8241, %v8686
        %v8776 = vadd.f32 %v8242, %v8689
        %v8777 = vadd.f32 %v8243, %v8692
        %v8778 = vadd.f32 %v8244, %v8695
        %v8779 = vadd.f32 %v8245, %v8698
        %v8780 = vadd.f32 %v8246, %v8701
        %v8781 = vadd.f32 %v8247, %v8704
        %v8782 = vadd.f32 %v8248, %v8707
        %v8783 = vadd.f32 %v8249, %v8710
        %v8784 = vadd.f32 %v8250, %v8713
        %v8785 = vadd.f32 %v8251, %v8716
        %v8786 = vadd.f32 %v8252, %v8719
        %v8787 = vadd.f32 %v8253, %v8722
        %v8788 = vld [vmem:[#allocation3 + $0x47] sm:$0xff]
        %v8789 = vld [vmem:[#allocation3 + $0x4f] sm:$0xff]
        %v8790 = vld [vmem:[#allocation3 + $0x57] sm:$0xff]
        %v8791 = vld [vmem:[#allocation3 + $0x5f] sm:$0xff]
        %v8792 = vld [vmem:[#allocation3 + $0x67] sm:$0xff]
        %v8793 = vld [vmem:[#allocation3 + $0x6f] sm:$0xff]
        %v8794 = vld [vmem:[#allocation3 + $0x77] sm:$0xff]
        %v8795 = vld [vmem:[#allocation3 + $0x7f] sm:$0xff]
        %v8796 = vld [vmem:[#allocation3 + $0x87] sm:$0xff]
        %v8797 = vld [vmem:[#allocation3 + $0x8f] sm:$0xff]
        %v8798 = vld [vmem:[#allocation3 + $0x97] sm:$0xff]
        %v8799 = vld [vmem:[#allocation3 + $0x9f] sm:$0xff]
        %v8800 = vld [vmem:[#allocation3 + $0xa7] sm:$0xff]
        %v8801 = vld [vmem:[#allocation3 + $0xaf] sm:$0xff]
        %v8802 = vld [vmem:[#allocation3 + $0xb7] sm:$0xff]
        %v8803 = vld [vmem:[#allocation3 + $0xbf] sm:$0xff]
        %v8804 = vld [vmem:[#allocation3 + $0xc7] sm:$0xff]
        %v8805 = vld [vmem:[#allocation3 + $0xcf] sm:$0xff]
        %v8806 = vld [vmem:[#allocation3 + $0xd7] sm:$0xff]
        %v8807 = vld [vmem:[#allocation3 + $0xdf] sm:$0xff]
        %v8808 = vld [vmem:[#allocation3 + $0xe7] sm:$0xff]
        %v8809 = vld [vmem:[#allocation3 + $0xef] sm:$0xff]
        %v8810 = vld [vmem:[#allocation3 + $0xf7] sm:$0xff]
        %v8811 = vld [vmem:[#allocation3 + $0xff] sm:$0xff]
        %v8812 = vld [vmem:[#allocation3 + $0x107] sm:$0xff]
        %v8813 = vld [vmem:[#allocation3 + $0x10f] sm:$0xff]
        %v8814 = vld [vmem:[#allocation3 + $0x117] sm:$0xff]
        %v8815 = vld [vmem:[#allocation3 + $0x11f] sm:$0xff]
        %v8816 = vld [vmem:[#allocation3 + $0x127] sm:$0xff]
        %v8817 = vld [vmem:[#allocation3 + $0x12f] sm:$0xff]
        %v8818 = vld [vmem:[#allocation3 + $0x137] sm:$0xff]
        %v8819 = vld [vmem:[#allocation3 + $0x13f] sm:$0xff]
        %v8820 = vld [vmem:[#allocation3 + $0x147] sm:$0xff]
        %v8821 = vld [vmem:[#allocation3 + $0x14f] sm:$0xff]
        %v8822 = vld [vmem:[#allocation3 + $0x157] sm:$0xff]
        %v8823 = vld [vmem:[#allocation3 + $0x15f] sm:$0xff]
        %v8824 = vld [vmem:[#allocation3 + $0x167] sm:$0xff]
        %v8825 = vld [vmem:[#allocation3 + $0x16f] sm:$0xff]
        %v8826 = vld [vmem:[#allocation3 + $0x177] sm:$0xff]
        %v8827 = vld [vmem:[#allocation3 + $0x17f] sm:$0xff]
        %v8828 = vld [vmem:[#allocation3 + $0x187] sm:$0xff]
        %v8829 = vld [vmem:[#allocation3 + $0x18f] sm:$0xff]
        %v8830 = vld [vmem:[#allocation3 + $0x197] sm:$0xff]
        %v8831 = vld [vmem:[#allocation3 + $0x19f] sm:$0xff]
        %v8832 = vld [vmem:[#allocation3 + $0x1a7] sm:$0xff]
        %v8833 = vld [vmem:[#allocation3 + $0x1af] sm:$0xff]
        %v8834 = vld [vmem:[#allocation3 + $0x1b7] sm:$0xff]
        %v8835 = vld [vmem:[#allocation3 + $0x1bf] sm:$0xff]
        %v8836 = vld [vmem:[#allocation3 + $0x1c7] sm:$0xff]
        %v8837 = vld [vmem:[#allocation3 + $0x1cf] sm:$0xff]
        %v8838 = vld [vmem:[#allocation3 + $0x1d7] sm:$0xff]
        %v8839 = vld [vmem:[#allocation3 + $0x1df] sm:$0xff]
        %v8840 = vld [vmem:[#allocation3 + $0x1e7] sm:$0xff]
        %v8841 = vld [vmem:[#allocation3 + $0x1ef] sm:$0xff]
        %v8842 = vld [vmem:[#allocation3 + $0x1f7] sm:$0xff]
        %v8843 = vld [vmem:[#allocation3 + $0x1ff] sm:$0xff]
        %v8844 = vld [vmem:[#allocation3 + $0x207] sm:$0xff]
        %v8845 = vld [vmem:[#allocation3 + $0x20f] sm:$0xff]
        %v8846 = vld [vmem:[#allocation3 + $0x217] sm:$0xff]
        %v8847 = vld [vmem:[#allocation3 + $0x21f] sm:$0xff]
        %v8848 = vld [vmem:[#allocation3 + $0x227] sm:$0xff]
        %v8849 = vld [vmem:[#allocation3 + $0x22f] sm:$0xff]
        %v8850 = vld [vmem:[#allocation3 + $0x237] sm:$0xff]
        %v8851 = vld [vmem:[#allocation3 + $0x23f] sm:$0xff]
        %s8852 = scalar_lea.vmem [#allocation12], 192
        %v8853 = vld [vmem:[%s8852] sm:$0xff]
        %v8854 = vld [vmem:[%s8852 + $0x8] sm:$0xff]
        %v8855 = vld [vmem:[%s8852 + $0x10] sm:$0xff]
        %v8856 = vld [vmem:[%s8852 + $0x18] sm:$0xff]
        %v8858 = vsel %vm544, %v8788, 0
        %v8861 = vsel %vm544, %v8789, 0
        %v8864 = vsel %vm544, %v8790, 0
        %v8867 = vsel %vm544, %v8791, 0
        %v8870 = vsel %vm544, %v8792, 0
        %v8873 = vsel %vm544, %v8793, 0
        %v8876 = vsel %vm544, %v8794, 0
        %v8879 = vsel %vm544, %v8795, 0
        %v8882 = vsel %vm544, %v8796, 0
        %v8885 = vsel %vm544, %v8797, 0
        %v8888 = vsel %vm544, %v8798, 0
        %v8891 = vsel %vm544, %v8799, 0
        %v8894 = vsel %vm544, %v8800, 0
        %v8897 = vsel %vm544, %v8801, 0
        %v8900 = vsel %vm544, %v8802, 0
        %v8903 = vsel %vm544, %v8803, 0
        %v8906 = vsel %vm544, %v8804, 0
        %v8909 = vsel %vm544, %v8805, 0
        %v8912 = vsel %vm544, %v8806, 0
        %v8915 = vsel %vm544, %v8807, 0
        %v8918 = vsel %vm544, %v8808, 0
        %v8921 = vsel %vm544, %v8809, 0
        %v8924 = vsel %vm544, %v8810, 0
        %v8927 = vsel %vm544, %v8811, 0
        %v8930 = vsel %vm544, %v8812, 0
        %v8933 = vsel %vm544, %v8813, 0
        %v8936 = vsel %vm544, %v8814, 0
        %v8939 = vsel %vm544, %v8815, 0
        %v8942 = vsel %vm544, %v8816, 0
        %v8945 = vsel %vm544, %v8817, 0
        %v8948 = vsel %vm544, %v8818, 0
        %v8951 = vsel %vm544, %v8819, 0
        %v8954 = vsel %vm544, %v8820, 0
        %v8957 = vsel %vm544, %v8821, 0
        %v8960 = vsel %vm544, %v8822, 0
        %v8963 = vsel %vm544, %v8823, 0
        %v8966 = vsel %vm544, %v8824, 0
        %v8969 = vsel %vm544, %v8825, 0
        %v8972 = vsel %vm544, %v8826, 0
        %v8975 = vsel %vm544, %v8827, 0
        %v8978 = vsel %vm544, %v8828, 0
        %v8981 = vsel %vm544, %v8829, 0
        %v8984 = vsel %vm544, %v8830, 0
        %v8987 = vsel %vm544, %v8831, 0
        %v8990 = vsel %vm544, %v8832, 0
        %v8993 = vsel %vm544, %v8833, 0
        %v8996 = vsel %vm544, %v8834, 0
        %v8999 = vsel %vm544, %v8835, 0
        %v9002 = vsel %vm544, %v8836, 0
        %v9005 = vsel %vm544, %v8837, 0
        %v9008 = vsel %vm544, %v8838, 0
        %v9011 = vsel %vm544, %v8839, 0
        %v9014 = vsel %vm544, %v8840, 0
        %v9017 = vsel %vm544, %v8841, 0
        %v9020 = vsel %vm544, %v8842, 0
        %v9023 = vsel %vm544, %v8843, 0
        %v9026 = vsel %vm544, %v8844, 0
        %v9029 = vsel %vm544, %v8845, 0
        %v9032 = vsel %vm544, %v8846, 0
        %v9035 = vsel %vm544, %v8847, 0
        %v9038 = vsel %vm544, %v8848, 0
        %v9041 = vsel %vm544, %v8849, 0
        %v9044 = vsel %vm544, %v8850, 0
        %v9047 = vsel %vm544, %v8851, 0
        %9049 = vmatpush.msra.mxu0 0.0
        %9050 = vmatpush.msra.mxu0 0.0
        %9051 = vmatpush.msra.mxu0 0.0
        %9052 = vmatpush.msra.mxu0 0.0
        %9053 = vmatpush.msra.mxu0 0.0
        %9054 = vmatpush.msra.mxu0 0.0
        %9055 = vmatpush.msra.mxu0 0.0
        %9056 = vmatpush.msra.mxu0 0.0
        %9057 = vmatpush.msra.mxu0 0.0
        %9058 = vmatpush.msra.mxu0 0.0
        %9059 = vmatpush.msra.mxu0 0.0
        %9060 = vmatpush.msra.mxu0 0.0
        %9061 = vmatpush.msra.mxu0 %v8856
        %9062 = vmatpush.msra.mxu0 %v8855
        %9063 = vmatpush.msra.mxu0 %v8854
        %9064 = vmatpush.msra.mxu0 %v8853
        %9065 = vmatmul.f32.gmra.mxu0 %v8858
        %v9066 = vpop.f32.mrf.mxu0
        %v9067 = vadd.f32 0.0, %v9066
        %9068 = vmatmul.f32.gmra.mxu0 %v8861
        %v9069 = vpop.f32.mrf.mxu0
        %v9070 = vadd.f32 0.0, %v9069
        %9071 = vmatmul.f32.gmra.mxu0 %v8864
        %v9072 = vpop.f32.mrf.mxu0
        %v9073 = vadd.f32 0.0, %v9072
        %9074 = vmatmul.f32.gmra.mxu0 %v8867
        %v9075 = vpop.f32.mrf.mxu0
        %v9076 = vadd.f32 0.0, %v9075
        %9077 = vmatmul.f32.gmra.mxu0 %v8870
        %v9078 = vpop.f32.mrf.mxu0
        %v9079 = vadd.f32 0.0, %v9078
        %9080 = vmatmul.f32.gmra.mxu0 %v8873
        %v9081 = vpop.f32.mrf.mxu0
        %v9082 = vadd.f32 0.0, %v9081
        %9083 = vmatmul.f32.gmra.mxu0 %v8876
        %v9084 = vpop.f32.mrf.mxu0
        %v9085 = vadd.f32 0.0, %v9084
        %9086 = vmatmul.f32.gmra.mxu0 %v8879
        %v9087 = vpop.f32.mrf.mxu0
        %v9088 = vadd.f32 0.0, %v9087
        %9089 = vmatmul.f32.gmra.mxu0 %v8882
        %v9090 = vpop.f32.mrf.mxu0
        %v9091 = vadd.f32 0.0, %v9090
        %9092 = vmatmul.f32.gmra.mxu0 %v8885
        %v9093 = vpop.f32.mrf.mxu0
        %v9094 = vadd.f32 0.0, %v9093
        %9095 = vmatmul.f32.gmra.mxu0 %v8888
        %v9096 = vpop.f32.mrf.mxu0
        %v9097 = vadd.f32 0.0, %v9096
        %9098 = vmatmul.f32.gmra.mxu0 %v8891
        %v9099 = vpop.f32.mrf.mxu0
        %v9100 = vadd.f32 0.0, %v9099
        %9101 = vmatmul.f32.gmra.mxu0 %v8894
        %v9102 = vpop.f32.mrf.mxu0
        %v9103 = vadd.f32 0.0, %v9102
        %9104 = vmatmul.f32.gmra.mxu0 %v8897
        %v9105 = vpop.f32.mrf.mxu0
        %v9106 = vadd.f32 0.0, %v9105
        %9107 = vmatmul.f32.gmra.mxu0 %v8900
        %v9108 = vpop.f32.mrf.mxu0
        %v9109 = vadd.f32 0.0, %v9108
        %9110 = vmatmul.f32.gmra.mxu0 %v8903
        %v9111 = vpop.f32.mrf.mxu0
        %v9112 = vadd.f32 0.0, %v9111
        %9113 = vmatmul.f32.gmra.mxu0 %v8906
        %v9114 = vpop.f32.mrf.mxu0
        %v9115 = vadd.f32 0.0, %v9114
        %9116 = vmatmul.f32.gmra.mxu0 %v8909
        %v9117 = vpop.f32.mrf.mxu0
        %v9118 = vadd.f32 0.0, %v9117
        %9119 = vmatmul.f32.gmra.mxu0 %v8912
        %v9120 = vpop.f32.mrf.mxu0
        %v9121 = vadd.f32 0.0, %v9120
        %9122 = vmatmul.f32.gmra.mxu0 %v8915
        %v9123 = vpop.f32.mrf.mxu0
        %v9124 = vadd.f32 0.0, %v9123
        %9125 = vmatmul.f32.gmra.mxu0 %v8918
        %v9126 = vpop.f32.mrf.mxu0
        %v9127 = vadd.f32 0.0, %v9126
        %9128 = vmatmul.f32.gmra.mxu0 %v8921
        %v9129 = vpop.f32.mrf.mxu0
        %v9130 = vadd.f32 0.0, %v9129
        %9131 = vmatmul.f32.gmra.mxu0 %v8924
        %v9132 = vpop.f32.mrf.mxu0
        %v9133 = vadd.f32 0.0, %v9132
        %9134 = vmatmul.f32.gmra.mxu0 %v8927
        %v9135 = vpop.f32.mrf.mxu0
        %v9136 = vadd.f32 0.0, %v9135
        %9137 = vmatmul.f32.gmra.mxu0 %v8930
        %v9138 = vpop.f32.mrf.mxu0
        %v9139 = vadd.f32 0.0, %v9138
        %9140 = vmatmul.f32.gmra.mxu0 %v8933
        %v9141 = vpop.f32.mrf.mxu0
        %v9142 = vadd.f32 0.0, %v9141
        %9143 = vmatmul.f32.gmra.mxu0 %v8936
        %v9144 = vpop.f32.mrf.mxu0
        %v9145 = vadd.f32 0.0, %v9144
        %9146 = vmatmul.f32.gmra.mxu0 %v8939
        %v9147 = vpop.f32.mrf.mxu0
        %v9148 = vadd.f32 0.0, %v9147
        %9149 = vmatmul.f32.gmra.mxu0 %v8942
        %v9150 = vpop.f32.mrf.mxu0
        %v9151 = vadd.f32 0.0, %v9150
        %9152 = vmatmul.f32.gmra.mxu0 %v8945
        %v9153 = vpop.f32.mrf.mxu0
        %v9154 = vadd.f32 0.0, %v9153
        %9155 = vmatmul.f32.gmra.mxu0 %v8948
        %v9156 = vpop.f32.mrf.mxu0
        %v9157 = vadd.f32 0.0, %v9156
        %9158 = vmatmul.f32.gmra.mxu0 %v8951
        %v9159 = vpop.f32.mrf.mxu0
        %v9160 = vadd.f32 0.0, %v9159
        %9161 = vmatmul.f32.gmra.mxu0 %v8954
        %v9162 = vpop.f32.mrf.mxu0
        %v9163 = vadd.f32 0.0, %v9162
        %9164 = vmatmul.f32.gmra.mxu0 %v8957
        %v9165 = vpop.f32.mrf.mxu0
        %v9166 = vadd.f32 0.0, %v9165
        %9167 = vmatmul.f32.gmra.mxu0 %v8960
        %v9168 = vpop.f32.mrf.mxu0
        %v9169 = vadd.f32 0.0, %v9168
        %9170 = vmatmul.f32.gmra.mxu0 %v8963
        %v9171 = vpop.f32.mrf.mxu0
        %v9172 = vadd.f32 0.0, %v9171
        %9173 = vmatmul.f32.gmra.mxu0 %v8966
        %v9174 = vpop.f32.mrf.mxu0
        %v9175 = vadd.f32 0.0, %v9174
        %9176 = vmatmul.f32.gmra.mxu0 %v8969
        %v9177 = vpop.f32.mrf.mxu0
        %v9178 = vadd.f32 0.0, %v9177
        %9179 = vmatmul.f32.gmra.mxu0 %v8972
        %v9180 = vpop.f32.mrf.mxu0
        %v9181 = vadd.f32 0.0, %v9180
        %9182 = vmatmul.f32.gmra.mxu0 %v8975
        %v9183 = vpop.f32.mrf.mxu0
        %v9184 = vadd.f32 0.0, %v9183
        %9185 = vmatmul.f32.gmra.mxu0 %v8978
        %v9186 = vpop.f32.mrf.mxu0
        %v9187 = vadd.f32 0.0, %v9186
        %9188 = vmatmul.f32.gmra.mxu0 %v8981
        %v9189 = vpop.f32.mrf.mxu0
        %v9190 = vadd.f32 0.0, %v9189
        %9191 = vmatmul.f32.gmra.mxu0 %v8984
        %v9192 = vpop.f32.mrf.mxu0
        %v9193 = vadd.f32 0.0, %v9192
        %9194 = vmatmul.f32.gmra.mxu0 %v8987
        %v9195 = vpop.f32.mrf.mxu0
        %v9196 = vadd.f32 0.0, %v9195
        %9197 = vmatmul.f32.gmra.mxu0 %v8990
        %v9198 = vpop.f32.mrf.mxu0
        %v9199 = vadd.f32 0.0, %v9198
        %9200 = vmatmul.f32.gmra.mxu0 %v8993
        %v9201 = vpop.f32.mrf.mxu0
        %v9202 = vadd.f32 0.0, %v9201
        %9203 = vmatmul.f32.gmra.mxu0 %v8996
        %v9204 = vpop.f32.mrf.mxu0
        %v9205 = vadd.f32 0.0, %v9204
        %9206 = vmatmul.f32.gmra.mxu0 %v8999
        %v9207 = vpop.f32.mrf.mxu0
        %v9208 = vadd.f32 0.0, %v9207
        %9209 = vmatmul.f32.gmra.mxu0 %v9002
        %v9210 = vpop.f32.mrf.mxu0
        %v9211 = vadd.f32 0.0, %v9210
        %9212 = vmatmul.f32.gmra.mxu0 %v9005
        %v9213 = vpop.f32.mrf.mxu0
        %v9214 = vadd.f32 0.0, %v9213
        %9215 = vmatmul.f32.gmra.mxu0 %v9008
        %v9216 = vpop.f32.mrf.mxu0
        %v9217 = vadd.f32 0.0, %v9216
        %9218 = vmatmul.f32.gmra.mxu0 %v9011
        %v9219 = vpop.f32.mrf.mxu0
        %v9220 = vadd.f32 0.0, %v9219
        %9221 = vmatmul.f32.gmra.mxu0 %v9014
        %v9222 = vpop.f32.mrf.mxu0
        %v9223 = vadd.f32 0.0, %v9222
        %9224 = vmatmul.f32.gmra.mxu0 %v9017
        %v9225 = vpop.f32.mrf.mxu0
        %v9226 = vadd.f32 0.0, %v9225
        %9227 = vmatmul.f32.gmra.mxu0 %v9020
        %v9228 = vpop.f32.mrf.mxu0
        %v9229 = vadd.f32 0.0, %v9228
        %9230 = vmatmul.f32.gmra.mxu0 %v9023
        %v9231 = vpop.f32.mrf.mxu0
        %v9232 = vadd.f32 0.0, %v9231
        %9233 = vmatmul.f32.gmra.mxu0 %v9026
        %v9234 = vpop.f32.mrf.mxu0
        %v9235 = vadd.f32 0.0, %v9234
        %9236 = vmatmul.f32.gmra.mxu0 %v9029
        %v9237 = vpop.f32.mrf.mxu0
        %v9238 = vadd.f32 0.0, %v9237
        %9239 = vmatmul.f32.gmra.mxu0 %v9032
        %v9240 = vpop.f32.mrf.mxu0
        %v9241 = vadd.f32 0.0, %v9240
        %9242 = vmatmul.f32.gmra.mxu0 %v9035
        %v9243 = vpop.f32.mrf.mxu0
        %v9244 = vadd.f32 0.0, %v9243
        %9245 = vmatmul.f32.gmra.mxu0 %v9038
        %v9246 = vpop.f32.mrf.mxu0
        %v9247 = vadd.f32 0.0, %v9246
        %9248 = vmatmul.f32.gmra.mxu0 %v9041
        %v9249 = vpop.f32.mrf.mxu0
        %v9250 = vadd.f32 0.0, %v9249
        %9251 = vmatmul.f32.gmra.mxu0 %v9044
        %v9252 = vpop.f32.mrf.mxu0
        %v9253 = vadd.f32 0.0, %v9252
        %9254 = vmatmul.f32.gmra.mxu0 %v9047
        %v9255 = vpop.f32.mrf.mxu0
        %v9256 = vadd.f32 0.0, %v9255
        %9257 = vdwg.mxu0
        %v9258 = vadd.f32 %v8724, %v9067
        %v9259 = vadd.f32 %v8725, %v9070
        %v9260 = vadd.f32 %v8726, %v9073
        %v9261 = vadd.f32 %v8727, %v9076
        %v9262 = vadd.f32 %v8728, %v9079
        %v9263 = vadd.f32 %v8729, %v9082
        %v9264 = vadd.f32 %v8730, %v9085
        %v9265 = vadd.f32 %v8731, %v9088
        %v9266 = vadd.f32 %v8732, %v9091
        %v9267 = vadd.f32 %v8733, %v9094
        %v9268 = vadd.f32 %v8734, %v9097
        %v9269 = vadd.f32 %v8735, %v9100
        %v9270 = vadd.f32 %v8736, %v9103
        %v9271 = vadd.f32 %v8737, %v9106
        %v9272 = vadd.f32 %v8738, %v9109
        %v9273 = vadd.f32 %v8739, %v9112
        %v9274 = vadd.f32 %v8740, %v9115
        %v9275 = vadd.f32 %v8741, %v9118
        %v9276 = vadd.f32 %v8742, %v9121
        %v9277 = vadd.f32 %v8743, %v9124
        %v9278 = vadd.f32 %v8744, %v9127
        %v9279 = vadd.f32 %v8745, %v9130
        %v9280 = vadd.f32 %v8746, %v9133
        %v9281 = vadd.f32 %v8747, %v9136
        %v9282 = vadd.f32 %v8748, %v9139
        %v9283 = vadd.f32 %v8749, %v9142
        %v9284 = vadd.f32 %v8750, %v9145
        %v9285 = vadd.f32 %v8751, %v9148
        %v9286 = vadd.f32 %v8752, %v9151
        %v9287 = vadd.f32 %v8753, %v9154
        %v9288 = vadd.f32 %v8754, %v9157
        %v9289 = vadd.f32 %v8755, %v9160
        %v9290 = vadd.f32 %v8756, %v9163
        %v9291 = vadd.f32 %v8757, %v9166
        %v9292 = vadd.f32 %v8758, %v9169
        %v9293 = vadd.f32 %v8759, %v9172
        %v9294 = vadd.f32 %v8760, %v9175
        %v9295 = vadd.f32 %v8761, %v9178
        %v9296 = vadd.f32 %v8762, %v9181
        %v9297 = vadd.f32 %v8763, %v9184
        %v9298 = vadd.f32 %v8764, %v9187
        %v9299 = vadd.f32 %v8765, %v9190
        %v9300 = vadd.f32 %v8766, %v9193
        %v9301 = vadd.f32 %v8767, %v9196
        %v9302 = vadd.f32 %v8768, %v9199
        %v9303 = vadd.f32 %v8769, %v9202
        %v9304 = vadd.f32 %v8770, %v9205
        %v9305 = vadd.f32 %v8771, %v9208
        %v9306 = vadd.f32 %v8772, %v9211
        %v9307 = vadd.f32 %v8773, %v9214
        %v9308 = vadd.f32 %v8774, %v9217
        %v9309 = vadd.f32 %v8775, %v9220
        %v9310 = vadd.f32 %v8776, %v9223
        %v9311 = vadd.f32 %v8777, %v9226
        %v9312 = vadd.f32 %v8778, %v9229
        %v9313 = vadd.f32 %v8779, %v9232
        %v9314 = vadd.f32 %v8780, %v9235
        %v9315 = vadd.f32 %v8781, %v9238
        %v9316 = vadd.f32 %v8782, %v9241
        %v9317 = vadd.f32 %v8783, %v9244
        %v9318 = vadd.f32 %v8784, %v9247
        %v9319 = vadd.f32 %v8785, %v9250
        %v9320 = vadd.f32 %v8786, %v9253
        %v9321 = vadd.f32 %v8787, %v9256
        %v9322 = vld [vmem:[#allocation3 + $0x48] sm:$0xff]
        %v9323 = vld [vmem:[#allocation3 + $0x50] sm:$0xff]
        %v9324 = vld [vmem:[#allocation3 + $0x58] sm:$0xff]
        %v9325 = vld [vmem:[#allocation3 + $0x60] sm:$0xff]
        %v9326 = vld [vmem:[#allocation3 + $0x68] sm:$0xff]
        %v9327 = vld [vmem:[#allocation3 + $0x70] sm:$0xff]
        %v9328 = vld [vmem:[#allocation3 + $0x78] sm:$0xff]
        %v9329 = vld [vmem:[#allocation3 + $0x80] sm:$0xff]
        %v9330 = vld [vmem:[#allocation3 + $0x88] sm:$0xff]
        %v9331 = vld [vmem:[#allocation3 + $0x90] sm:$0xff]
        %v9332 = vld [vmem:[#allocation3 + $0x98] sm:$0xff]
        %v9333 = vld [vmem:[#allocation3 + $0xa0] sm:$0xff]
        %v9334 = vld [vmem:[#allocation3 + $0xa8] sm:$0xff]
        %v9335 = vld [vmem:[#allocation3 + $0xb0] sm:$0xff]
        %v9336 = vld [vmem:[#allocation3 + $0xb8] sm:$0xff]
        %v9337 = vld [vmem:[#allocation3 + $0xc0] sm:$0xff]
        %v9338 = vld [vmem:[#allocation3 + $0xc8] sm:$0xff]
        %v9339 = vld [vmem:[#allocation3 + $0xd0] sm:$0xff]
        %v9340 = vld [vmem:[#allocation3 + $0xd8] sm:$0xff]
        %v9341 = vld [vmem:[#allocation3 + $0xe0] sm:$0xff]
        %v9342 = vld [vmem:[#allocation3 + $0xe8] sm:$0xff]
        %v9343 = vld [vmem:[#allocation3 + $0xf0] sm:$0xff]
        %v9344 = vld [vmem:[#allocation3 + $0xf8] sm:$0xff]
        %v9345 = vld [vmem:[#allocation3 + $0x100] sm:$0xff]
        %v9346 = vld [vmem:[#allocation3 + $0x108] sm:$0xff]
        %v9347 = vld [vmem:[#allocation3 + $0x110] sm:$0xff]
        %v9348 = vld [vmem:[#allocation3 + $0x118] sm:$0xff]
        %v9349 = vld [vmem:[#allocation3 + $0x120] sm:$0xff]
        %v9350 = vld [vmem:[#allocation3 + $0x128] sm:$0xff]
        %v9351 = vld [vmem:[#allocation3 + $0x130] sm:$0xff]
        %v9352 = vld [vmem:[#allocation3 + $0x138] sm:$0xff]
        %v9353 = vld [vmem:[#allocation3 + $0x140] sm:$0xff]
        %v9354 = vld [vmem:[#allocation3 + $0x148] sm:$0xff]
        %v9355 = vld [vmem:[#allocation3 + $0x150] sm:$0xff]
        %v9356 = vld [vmem:[#allocation3 + $0x158] sm:$0xff]
        %v9357 = vld [vmem:[#allocation3 + $0x160] sm:$0xff]
        %v9358 = vld [vmem:[#allocation3 + $0x168] sm:$0xff]
        %v9359 = vld [vmem:[#allocation3 + $0x170] sm:$0xff]
        %v9360 = vld [vmem:[#allocation3 + $0x178] sm:$0xff]
        %v9361 = vld [vmem:[#allocation3 + $0x180] sm:$0xff]
        %v9362 = vld [vmem:[#allocation3 + $0x188] sm:$0xff]
        %v9363 = vld [vmem:[#allocation3 + $0x190] sm:$0xff]
        %v9364 = vld [vmem:[#allocation3 + $0x198] sm:$0xff]
        %v9365 = vld [vmem:[#allocation3 + $0x1a0] sm:$0xff]
        %v9366 = vld [vmem:[#allocation3 + $0x1a8] sm:$0xff]
        %v9367 = vld [vmem:[#allocation3 + $0x1b0] sm:$0xff]
        %v9368 = vld [vmem:[#allocation3 + $0x1b8] sm:$0xff]
        %v9369 = vld [vmem:[#allocation3 + $0x1c0] sm:$0xff]
        %v9370 = vld [vmem:[#allocation3 + $0x1c8] sm:$0xff]
        %v9371 = vld [vmem:[#allocation3 + $0x1d0] sm:$0xff]
        %v9372 = vld [vmem:[#allocation3 + $0x1d8] sm:$0xff]
        %v9373 = vld [vmem:[#allocation3 + $0x1e0] sm:$0xff]
        %v9374 = vld [vmem:[#allocation3 + $0x1e8] sm:$0xff]
        %v9375 = vld [vmem:[#allocation3 + $0x1f0] sm:$0xff]
        %v9376 = vld [vmem:[#allocation3 + $0x1f8] sm:$0xff]
        %v9377 = vld [vmem:[#allocation3 + $0x200] sm:$0xff]
        %v9378 = vld [vmem:[#allocation3 + $0x208] sm:$0xff]
        %v9379 = vld [vmem:[#allocation3 + $0x210] sm:$0xff]
        %v9380 = vld [vmem:[#allocation3 + $0x218] sm:$0xff]
        %v9381 = vld [vmem:[#allocation3 + $0x220] sm:$0xff]
        %v9382 = vld [vmem:[#allocation3 + $0x228] sm:$0xff]
        %v9383 = vld [vmem:[#allocation3 + $0x230] sm:$0xff]
        %v9384 = vld [vmem:[#allocation3 + $0x238] sm:$0xff]
        %v9385 = vld [vmem:[#allocation3 + $0x240] sm:$0xff]
        %s9386 = scalar_lea.vmem [#allocation12], 224
        %v9387 = vld [vmem:[%s9386] sm:$0xff]
        %v9388 = vld [vmem:[%s9386 + $0x8] sm:$0xff]
        %v9389 = vld [vmem:[%s9386 + $0x10] sm:$0xff]
        %v9390 = vld [vmem:[%s9386 + $0x18] sm:$0xff]
        %v9392 = vsel %vm544, %v9322, 0
        %v9395 = vsel %vm544, %v9323, 0
        %v9398 = vsel %vm544, %v9324, 0
        %v9401 = vsel %vm544, %v9325, 0
        %v9404 = vsel %vm544, %v9326, 0
        %v9407 = vsel %vm544, %v9327, 0
        %v9410 = vsel %vm544, %v9328, 0
        %v9413 = vsel %vm544, %v9329, 0
        %v9416 = vsel %vm544, %v9330, 0
        %v9419 = vsel %vm544, %v9331, 0
        %v9422 = vsel %vm544, %v9332, 0
        %v9425 = vsel %vm544, %v9333, 0
        %v9428 = vsel %vm544, %v9334, 0
        %v9431 = vsel %vm544, %v9335, 0
        %v9434 = vsel %vm544, %v9336, 0
        %v9437 = vsel %vm544, %v9337, 0
        %v9440 = vsel %vm544, %v9338, 0
        %v9443 = vsel %vm544, %v9339, 0
        %v9446 = vsel %vm544, %v9340, 0
        %v9449 = vsel %vm544, %v9341, 0
        %v9452 = vsel %vm544, %v9342, 0
        %v9455 = vsel %vm544, %v9343, 0
        %v9458 = vsel %vm544, %v9344, 0
        %v9461 = vsel %vm544, %v9345, 0
        %v9464 = vsel %vm544, %v9346, 0
        %v9467 = vsel %vm544, %v9347, 0
        %v9470 = vsel %vm544, %v9348, 0
        %v9473 = vsel %vm544, %v9349, 0
        %v9476 = vsel %vm544, %v9350, 0
        %v9479 = vsel %vm544, %v9351, 0
        %v9482 = vsel %vm544, %v9352, 0
        %v9485 = vsel %vm544, %v9353, 0
        %v9488 = vsel %vm544, %v9354, 0
        %v9491 = vsel %vm544, %v9355, 0
        %v9494 = vsel %vm544, %v9356, 0
        %v9497 = vsel %vm544, %v9357, 0
        %v9500 = vsel %vm544, %v9358, 0
        %v9503 = vsel %vm544, %v9359, 0
        %v9506 = vsel %vm544, %v9360, 0
        %v9509 = vsel %vm544, %v9361, 0
        %v9512 = vsel %vm544, %v9362, 0
        %v9515 = vsel %vm544, %v9363, 0
        %v9518 = vsel %vm544, %v9364, 0
        %v9521 = vsel %vm544, %v9365, 0
        %v9524 = vsel %vm544, %v9366, 0
        %v9527 = vsel %vm544, %v9367, 0
        %v9530 = vsel %vm544, %v9368, 0
        %v9533 = vsel %vm544, %v9369, 0
        %v9536 = vsel %vm544, %v9370, 0
        %v9539 = vsel %vm544, %v9371, 0
        %v9542 = vsel %vm544, %v9372, 0
        %v9545 = vsel %vm544, %v9373, 0
        %v9548 = vsel %vm544, %v9374, 0
        %v9551 = vsel %vm544, %v9375, 0
        %v9554 = vsel %vm544, %v9376, 0
        %v9557 = vsel %vm544, %v9377, 0
        %v9560 = vsel %vm544, %v9378, 0
        %v9563 = vsel %vm544, %v9379, 0
        %v9566 = vsel %vm544, %v9380, 0
        %v9569 = vsel %vm544, %v9381, 0
        %v9572 = vsel %vm544, %v9382, 0
        %v9575 = vsel %vm544, %v9383, 0
        %v9578 = vsel %vm544, %v9384, 0
        %v9581 = vsel %vm544, %v9385, 0
        %9583 = vmatpush.msra.mxu0 0.0
        %9584 = vmatpush.msra.mxu0 0.0
        %9585 = vmatpush.msra.mxu0 0.0
        %9586 = vmatpush.msra.mxu0 0.0
        %9587 = vmatpush.msra.mxu0 0.0
        %9588 = vmatpush.msra.mxu0 0.0
        %9589 = vmatpush.msra.mxu0 0.0
        %9590 = vmatpush.msra.mxu0 0.0
        %9591 = vmatpush.msra.mxu0 0.0
        %9592 = vmatpush.msra.mxu0 0.0
        %9593 = vmatpush.msra.mxu0 0.0
        %9594 = vmatpush.msra.mxu0 0.0
        %9595 = vmatpush.msra.mxu0 %v9390
        %9596 = vmatpush.msra.mxu0 %v9389
        %9597 = vmatpush.msra.mxu0 %v9388
        %9598 = vmatpush.msra.mxu0 %v9387
        %9599 = vmatmul.f32.gmra.mxu0 %v9392
        %v9600 = vpop.f32.mrf.mxu0
        %v9601 = vadd.f32 0.0, %v9600
        %9602 = vmatmul.f32.gmra.mxu0 %v9395
        %v9603 = vpop.f32.mrf.mxu0
        %v9604 = vadd.f32 0.0, %v9603
        %9605 = vmatmul.f32.gmra.mxu0 %v9398
        %v9606 = vpop.f32.mrf.mxu0
        %v9607 = vadd.f32 0.0, %v9606
        %9608 = vmatmul.f32.gmra.mxu0 %v9401
        %v9609 = vpop.f32.mrf.mxu0
        %v9610 = vadd.f32 0.0, %v9609
        %9611 = vmatmul.f32.gmra.mxu0 %v9404
        %v9612 = vpop.f32.mrf.mxu0
        %v9613 = vadd.f32 0.0, %v9612
        %9614 = vmatmul.f32.gmra.mxu0 %v9407
        %v9615 = vpop.f32.mrf.mxu0
        %v9616 = vadd.f32 0.0, %v9615
        %9617 = vmatmul.f32.gmra.mxu0 %v9410
        %v9618 = vpop.f32.mrf.mxu0
        %v9619 = vadd.f32 0.0, %v9618
        %9620 = vmatmul.f32.gmra.mxu0 %v9413
        %v9621 = vpop.f32.mrf.mxu0
        %v9622 = vadd.f32 0.0, %v9621
        %9623 = vmatmul.f32.gmra.mxu0 %v9416
        %v9624 = vpop.f32.mrf.mxu0
        %v9625 = vadd.f32 0.0, %v9624
        %9626 = vmatmul.f32.gmra.mxu0 %v9419
        %v9627 = vpop.f32.mrf.mxu0
        %v9628 = vadd.f32 0.0, %v9627
        %9629 = vmatmul.f32.gmra.mxu0 %v9422
        %v9630 = vpop.f32.mrf.mxu0
        %v9631 = vadd.f32 0.0, %v9630
        %9632 = vmatmul.f32.gmra.mxu0 %v9425
        %v9633 = vpop.f32.mrf.mxu0
        %v9634 = vadd.f32 0.0, %v9633
        %9635 = vmatmul.f32.gmra.mxu0 %v9428
        %v9636 = vpop.f32.mrf.mxu0
        %v9637 = vadd.f32 0.0, %v9636
        %9638 = vmatmul.f32.gmra.mxu0 %v9431
        %v9639 = vpop.f32.mrf.mxu0
        %v9640 = vadd.f32 0.0, %v9639
        %9641 = vmatmul.f32.gmra.mxu0 %v9434
        %v9642 = vpop.f32.mrf.mxu0
        %v9643 = vadd.f32 0.0, %v9642
        %9644 = vmatmul.f32.gmra.mxu0 %v9437
        %v9645 = vpop.f32.mrf.mxu0
        %v9646 = vadd.f32 0.0, %v9645
        %9647 = vmatmul.f32.gmra.mxu0 %v9440
        %v9648 = vpop.f32.mrf.mxu0
        %v9649 = vadd.f32 0.0, %v9648
        %9650 = vmatmul.f32.gmra.mxu0 %v9443
        %v9651 = vpop.f32.mrf.mxu0
        %v9652 = vadd.f32 0.0, %v9651
        %9653 = vmatmul.f32.gmra.mxu0 %v9446
        %v9654 = vpop.f32.mrf.mxu0
        %v9655 = vadd.f32 0.0, %v9654
        %9656 = vmatmul.f32.gmra.mxu0 %v9449
        %v9657 = vpop.f32.mrf.mxu0
        %v9658 = vadd.f32 0.0, %v9657
        %9659 = vmatmul.f32.gmra.mxu0 %v9452
        %v9660 = vpop.f32.mrf.mxu0
        %v9661 = vadd.f32 0.0, %v9660
        %9662 = vmatmul.f32.gmra.mxu0 %v9455
        %v9663 = vpop.f32.mrf.mxu0
        %v9664 = vadd.f32 0.0, %v9663
        %9665 = vmatmul.f32.gmra.mxu0 %v9458
        %v9666 = vpop.f32.mrf.mxu0
        %v9667 = vadd.f32 0.0, %v9666
        %9668 = vmatmul.f32.gmra.mxu0 %v9461
        %v9669 = vpop.f32.mrf.mxu0
        %v9670 = vadd.f32 0.0, %v9669
        %9671 = vmatmul.f32.gmra.mxu0 %v9464
        %v9672 = vpop.f32.mrf.mxu0
        %v9673 = vadd.f32 0.0, %v9672
        %9674 = vmatmul.f32.gmra.mxu0 %v9467
        %v9675 = vpop.f32.mrf.mxu0
        %v9676 = vadd.f32 0.0, %v9675
        %9677 = vmatmul.f32.gmra.mxu0 %v9470
        %v9678 = vpop.f32.mrf.mxu0
        %v9679 = vadd.f32 0.0, %v9678
        %9680 = vmatmul.f32.gmra.mxu0 %v9473
        %v9681 = vpop.f32.mrf.mxu0
        %v9682 = vadd.f32 0.0, %v9681
        %9683 = vmatmul.f32.gmra.mxu0 %v9476
        %v9684 = vpop.f32.mrf.mxu0
        %v9685 = vadd.f32 0.0, %v9684
        %9686 = vmatmul.f32.gmra.mxu0 %v9479
        %v9687 = vpop.f32.mrf.mxu0
        %v9688 = vadd.f32 0.0, %v9687
        %9689 = vmatmul.f32.gmra.mxu0 %v9482
        %v9690 = vpop.f32.mrf.mxu0
        %v9691 = vadd.f32 0.0, %v9690
        %9692 = vmatmul.f32.gmra.mxu0 %v9485
        %v9693 = vpop.f32.mrf.mxu0
        %v9694 = vadd.f32 0.0, %v9693
        %9695 = vmatmul.f32.gmra.mxu0 %v9488
        %v9696 = vpop.f32.mrf.mxu0
        %v9697 = vadd.f32 0.0, %v9696
        %9698 = vmatmul.f32.gmra.mxu0 %v9491
        %v9699 = vpop.f32.mrf.mxu0
        %v9700 = vadd.f32 0.0, %v9699
        %9701 = vmatmul.f32.gmra.mxu0 %v9494
        %v9702 = vpop.f32.mrf.mxu0
        %v9703 = vadd.f32 0.0, %v9702
        %9704 = vmatmul.f32.gmra.mxu0 %v9497
        %v9705 = vpop.f32.mrf.mxu0
        %v9706 = vadd.f32 0.0, %v9705
        %9707 = vmatmul.f32.gmra.mxu0 %v9500
        %v9708 = vpop.f32.mrf.mxu0
        %v9709 = vadd.f32 0.0, %v9708
        %9710 = vmatmul.f32.gmra.mxu0 %v9503
        %v9711 = vpop.f32.mrf.mxu0
        %v9712 = vadd.f32 0.0, %v9711
        %9713 = vmatmul.f32.gmra.mxu0 %v9506
        %v9714 = vpop.f32.mrf.mxu0
        %v9715 = vadd.f32 0.0, %v9714
        %9716 = vmatmul.f32.gmra.mxu0 %v9509
        %v9717 = vpop.f32.mrf.mxu0
        %v9718 = vadd.f32 0.0, %v9717
        %9719 = vmatmul.f32.gmra.mxu0 %v9512
        %v9720 = vpop.f32.mrf.mxu0
        %v9721 = vadd.f32 0.0, %v9720
        %9722 = vmatmul.f32.gmra.mxu0 %v9515
        %v9723 = vpop.f32.mrf.mxu0
        %v9724 = vadd.f32 0.0, %v9723
        %9725 = vmatmul.f32.gmra.mxu0 %v9518
        %v9726 = vpop.f32.mrf.mxu0
        %v9727 = vadd.f32 0.0, %v9726
        %9728 = vmatmul.f32.gmra.mxu0 %v9521
        %v9729 = vpop.f32.mrf.mxu0
        %v9730 = vadd.f32 0.0, %v9729
        %9731 = vmatmul.f32.gmra.mxu0 %v9524
        %v9732 = vpop.f32.mrf.mxu0
        %v9733 = vadd.f32 0.0, %v9732
        %9734 = vmatmul.f32.gmra.mxu0 %v9527
        %v9735 = vpop.f32.mrf.mxu0
        %v9736 = vadd.f32 0.0, %v9735
        %9737 = vmatmul.f32.gmra.mxu0 %v9530
        %v9738 = vpop.f32.mrf.mxu0
        %v9739 = vadd.f32 0.0, %v9738
        %9740 = vmatmul.f32.gmra.mxu0 %v9533
        %v9741 = vpop.f32.mrf.mxu0
        %v9742 = vadd.f32 0.0, %v9741
        %9743 = vmatmul.f32.gmra.mxu0 %v9536
        %v9744 = vpop.f32.mrf.mxu0
        %v9745 = vadd.f32 0.0, %v9744
        %9746 = vmatmul.f32.gmra.mxu0 %v9539
        %v9747 = vpop.f32.mrf.mxu0
        %v9748 = vadd.f32 0.0, %v9747
        %9749 = vmatmul.f32.gmra.mxu0 %v9542
        %v9750 = vpop.f32.mrf.mxu0
        %v9751 = vadd.f32 0.0, %v9750
        %9752 = vmatmul.f32.gmra.mxu0 %v9545
        %v9753 = vpop.f32.mrf.mxu0
        %v9754 = vadd.f32 0.0, %v9753
        %9755 = vmatmul.f32.gmra.mxu0 %v9548
        %v9756 = vpop.f32.mrf.mxu0
        %v9757 = vadd.f32 0.0, %v9756
        %9758 = vmatmul.f32.gmra.mxu0 %v9551
        %v9759 = vpop.f32.mrf.mxu0
        %v9760 = vadd.f32 0.0, %v9759
        %9761 = vmatmul.f32.gmra.mxu0 %v9554
        %v9762 = vpop.f32.mrf.mxu0
        %v9763 = vadd.f32 0.0, %v9762
        %9764 = vmatmul.f32.gmra.mxu0 %v9557
        %v9765 = vpop.f32.mrf.mxu0
        %v9766 = vadd.f32 0.0, %v9765
        %9767 = vmatmul.f32.gmra.mxu0 %v9560
        %v9768 = vpop.f32.mrf.mxu0
        %v9769 = vadd.f32 0.0, %v9768
        %9770 = vmatmul.f32.gmra.mxu0 %v9563
        %v9771 = vpop.f32.mrf.mxu0
        %v9772 = vadd.f32 0.0, %v9771
        %9773 = vmatmul.f32.gmra.mxu0 %v9566
        %v9774 = vpop.f32.mrf.mxu0
        %v9775 = vadd.f32 0.0, %v9774
        %9776 = vmatmul.f32.gmra.mxu0 %v9569
        %v9777 = vpop.f32.mrf.mxu0
        %v9778 = vadd.f32 0.0, %v9777
        %9779 = vmatmul.f32.gmra.mxu0 %v9572
        %v9780 = vpop.f32.mrf.mxu0
        %v9781 = vadd.f32 0.0, %v9780
        %9782 = vmatmul.f32.gmra.mxu0 %v9575
        %v9783 = vpop.f32.mrf.mxu0
        %v9784 = vadd.f32 0.0, %v9783
        %9785 = vmatmul.f32.gmra.mxu0 %v9578
        %v9786 = vpop.f32.mrf.mxu0
        %v9787 = vadd.f32 0.0, %v9786
        %9788 = vmatmul.f32.gmra.mxu0 %v9581
        %v9789 = vpop.f32.mrf.mxu0
        %v9790 = vadd.f32 0.0, %v9789
        %9791 = vdwg.mxu0
        %v9792 = vadd.f32 %v9258, %v9601
        %v9793 = vadd.f32 %v9259, %v9604
        %v9794 = vadd.f32 %v9260, %v9607
        %v9795 = vadd.f32 %v9261, %v9610
        %v9796 = vadd.f32 %v9262, %v9613
        %v9797 = vadd.f32 %v9263, %v9616
        %v9798 = vadd.f32 %v9264, %v9619
        %v9799 = vadd.f32 %v9265, %v9622
        %v9800 = vadd.f32 %v9266, %v9625
        %v9801 = vadd.f32 %v9267, %v9628
        %v9802 = vadd.f32 %v9268, %v9631
        %v9803 = vadd.f32 %v9269, %v9634
        %v9804 = vadd.f32 %v9270, %v9637
        %v9805 = vadd.f32 %v9271, %v9640
        %v9806 = vadd.f32 %v9272, %v9643
        %v9807 = vadd.f32 %v9273, %v9646
        %v9808 = vadd.f32 %v9274, %v9649
        %v9809 = vadd.f32 %v9275, %v9652
        %v9810 = vadd.f32 %v9276, %v9655
        %v9811 = vadd.f32 %v9277, %v9658
        %v9812 = vadd.f32 %v9278, %v9661
        %v9813 = vadd.f32 %v9279, %v9664
        %v9814 = vadd.f32 %v9280, %v9667
        %v9815 = vadd.f32 %v9281, %v9670
        %v9816 = vadd.f32 %v9282, %v9673
        %v9817 = vadd.f32 %v9283, %v9676
        %v9818 = vadd.f32 %v9284, %v9679
        %v9819 = vadd.f32 %v9285, %v9682
        %v9820 = vadd.f32 %v9286, %v9685
        %v9821 = vadd.f32 %v9287, %v9688
        %v9822 = vadd.f32 %v9288, %v9691
        %v9823 = vadd.f32 %v9289, %v9694
        %v9824 = vadd.f32 %v9290, %v9697
        %v9825 = vadd.f32 %v9291, %v9700
        %v9826 = vadd.f32 %v9292, %v9703
        %v9827 = vadd.f32 %v9293, %v9706
        %v9828 = vadd.f32 %v9294, %v9709
        %v9829 = vadd.f32 %v9295, %v9712
        %v9830 = vadd.f32 %v9296, %v9715
        %v9831 = vadd.f32 %v9297, %v9718
        %v9832 = vadd.f32 %v9298, %v9721
        %v9833 = vadd.f32 %v9299, %v9724
        %v9834 = vadd.f32 %v9300, %v9727
        %v9835 = vadd.f32 %v9301, %v9730
        %v9836 = vadd.f32 %v9302, %v9733
        %v9837 = vadd.f32 %v9303, %v9736
        %v9838 = vadd.f32 %v9304, %v9739
        %v9839 = vadd.f32 %v9305, %v9742
        %v9840 = vadd.f32 %v9306, %v9745
        %v9841 = vadd.f32 %v9307, %v9748
        %v9842 = vadd.f32 %v9308, %v9751
        %v9843 = vadd.f32 %v9309, %v9754
        %v9844 = vadd.f32 %v9310, %v9757
        %v9845 = vadd.f32 %v9311, %v9760
        %v9846 = vadd.f32 %v9312, %v9763
        %v9847 = vadd.f32 %v9313, %v9766
        %v9848 = vadd.f32 %v9314, %v9769
        %v9849 = vadd.f32 %v9315, %v9772
        %v9850 = vadd.f32 %v9316, %v9775
        %v9851 = vadd.f32 %v9317, %v9778
        %v9852 = vadd.f32 %v9318, %v9781
        %v9853 = vadd.f32 %v9319, %v9784
        %v9854 = vadd.f32 %v9320, %v9787
        %v9855 = vadd.f32 %v9321, %v9790
        %v9856 = vld [vmem:[#allocation3 + $0x49] sm:$0xff]
        %v9857 = vld [vmem:[#allocation3 + $0x51] sm:$0xff]
        %v9858 = vld [vmem:[#allocation3 + $0x59] sm:$0xff]
        %v9859 = vld [vmem:[#allocation3 + $0x61] sm:$0xff]
        %v9860 = vld [vmem:[#allocation3 + $0x69] sm:$0xff]
        %v9861 = vld [vmem:[#allocation3 + $0x71] sm:$0xff]
        %v9862 = vld [vmem:[#allocation3 + $0x79] sm:$0xff]
        %v9863 = vld [vmem:[#allocation3 + $0x81] sm:$0xff]
        %v9864 = vld [vmem:[#allocation3 + $0x89] sm:$0xff]
        %v9865 = vld [vmem:[#allocation3 + $0x91] sm:$0xff]
        %v9866 = vld [vmem:[#allocation3 + $0x99] sm:$0xff]
        %v9867 = vld [vmem:[#allocation3 + $0xa1] sm:$0xff]
        %v9868 = vld [vmem:[#allocation3 + $0xa9] sm:$0xff]
        %v9869 = vld [vmem:[#allocation3 + $0xb1] sm:$0xff]
        %v9870 = vld [vmem:[#allocation3 + $0xb9] sm:$0xff]
        %v9871 = vld [vmem:[#allocation3 + $0xc1] sm:$0xff]
        %v9872 = vld [vmem:[#allocation3 + $0xc9] sm:$0xff]
        %v9873 = vld [vmem:[#allocation3 + $0xd1] sm:$0xff]
        %v9874 = vld [vmem:[#allocation3 + $0xd9] sm:$0xff]
        %v9875 = vld [vmem:[#allocation3 + $0xe1] sm:$0xff]
        %v9876 = vld [vmem:[#allocation3 + $0xe9] sm:$0xff]
        %v9877 = vld [vmem:[#allocation3 + $0xf1] sm:$0xff]
        %v9878 = vld [vmem:[#allocation3 + $0xf9] sm:$0xff]
        %v9879 = vld [vmem:[#allocation3 + $0x101] sm:$0xff]
        %v9880 = vld [vmem:[#allocation3 + $0x109] sm:$0xff]
        %v9881 = vld [vmem:[#allocation3 + $0x111] sm:$0xff]
        %v9882 = vld [vmem:[#allocation3 + $0x119] sm:$0xff]
        %v9883 = vld [vmem:[#allocation3 + $0x121] sm:$0xff]
        %v9884 = vld [vmem:[#allocation3 + $0x129] sm:$0xff]
        %v9885 = vld [vmem:[#allocation3 + $0x131] sm:$0xff]
        %v9886 = vld [vmem:[#allocation3 + $0x139] sm:$0xff]
        %v9887 = vld [vmem:[#allocation3 + $0x141] sm:$0xff]
        %v9888 = vld [vmem:[#allocation3 + $0x149] sm:$0xff]
        %v9889 = vld [vmem:[#allocation3 + $0x151] sm:$0xff]
        %v9890 = vld [vmem:[#allocation3 + $0x159] sm:$0xff]
        %v9891 = vld [vmem:[#allocation3 + $0x161] sm:$0xff]
        %v9892 = vld [vmem:[#allocation3 + $0x169] sm:$0xff]
        %v9893 = vld [vmem:[#allocation3 + $0x171] sm:$0xff]
        %v9894 = vld [vmem:[#allocation3 + $0x179] sm:$0xff]
        %v9895 = vld [vmem:[#allocation3 + $0x181] sm:$0xff]
        %v9896 = vld [vmem:[#allocation3 + $0x189] sm:$0xff]
        %v9897 = vld [vmem:[#allocation3 + $0x191] sm:$0xff]
        %v9898 = vld [vmem:[#allocation3 + $0x199] sm:$0xff]
        %v9899 = vld [vmem:[#allocation3 + $0x1a1] sm:$0xff]
        %v9900 = vld [vmem:[#allocation3 + $0x1a9] sm:$0xff]
        %v9901 = vld [vmem:[#allocation3 + $0x1b1] sm:$0xff]
        %v9902 = vld [vmem:[#allocation3 + $0x1b9] sm:$0xff]
        %v9903 = vld [vmem:[#allocation3 + $0x1c1] sm:$0xff]
        %v9904 = vld [vmem:[#allocation3 + $0x1c9] sm:$0xff]
        %v9905 = vld [vmem:[#allocation3 + $0x1d1] sm:$0xff]
        %v9906 = vld [vmem:[#allocation3 + $0x1d9] sm:$0xff]
        %v9907 = vld [vmem:[#allocation3 + $0x1e1] sm:$0xff]
        %v9908 = vld [vmem:[#allocation3 + $0x1e9] sm:$0xff]
        %v9909 = vld [vmem:[#allocation3 + $0x1f1] sm:$0xff]
        %v9910 = vld [vmem:[#allocation3 + $0x1f9] sm:$0xff]
        %v9911 = vld [vmem:[#allocation3 + $0x201] sm:$0xff]
        %v9912 = vld [vmem:[#allocation3 + $0x209] sm:$0xff]
        %v9913 = vld [vmem:[#allocation3 + $0x211] sm:$0xff]
        %v9914 = vld [vmem:[#allocation3 + $0x219] sm:$0xff]
        %v9915 = vld [vmem:[#allocation3 + $0x221] sm:$0xff]
        %v9916 = vld [vmem:[#allocation3 + $0x229] sm:$0xff]
        %v9917 = vld [vmem:[#allocation3 + $0x231] sm:$0xff]
        %v9918 = vld [vmem:[#allocation3 + $0x239] sm:$0xff]
        %v9919 = vld [vmem:[#allocation3 + $0x241] sm:$0xff]
        %s9920 = scalar_lea.vmem [#allocation12], 256
        %v9921 = vld [vmem:[%s9920] sm:$0xff]
        %v9922 = vld [vmem:[%s9920 + $0x8] sm:$0xff]
        %v9923 = vld [vmem:[%s9920 + $0x10] sm:$0xff]
        %v9924 = vld [vmem:[%s9920 + $0x18] sm:$0xff]
        %v9926 = vsel %vm544, %v9856, 0
        %v9929 = vsel %vm544, %v9857, 0
        %v9932 = vsel %vm544, %v9858, 0
        %v9935 = vsel %vm544, %v9859, 0
        %v9938 = vsel %vm544, %v9860, 0
        %v9941 = vsel %vm544, %v9861, 0
        %v9944 = vsel %vm544, %v9862, 0
        %v9947 = vsel %vm544, %v9863, 0
        %v9950 = vsel %vm544, %v9864, 0
        %v9953 = vsel %vm544, %v9865, 0
        %v9956 = vsel %vm544, %v9866, 0
        %v9959 = vsel %vm544, %v9867, 0
        %v9962 = vsel %vm544, %v9868, 0
        %v9965 = vsel %vm544, %v9869, 0
        %v9968 = vsel %vm544, %v9870, 0
        %v9971 = vsel %vm544, %v9871, 0
        %v9974 = vsel %vm544, %v9872, 0
        %v9977 = vsel %vm544, %v9873, 0
        %v9980 = vsel %vm544, %v9874, 0
        %v9983 = vsel %vm544, %v9875, 0
        %v9986 = vsel %vm544, %v9876, 0
        %v9989 = vsel %vm544, %v9877, 0
        %v9992 = vsel %vm544, %v9878, 0
        %v9995 = vsel %vm544, %v9879, 0
        %v9998 = vsel %vm544, %v9880, 0
        %v10001 = vsel %vm544, %v9881, 0
        %v10004 = vsel %vm544, %v9882, 0
        %v10007 = vsel %vm544, %v9883, 0
        %v10010 = vsel %vm544, %v9884, 0
        %v10013 = vsel %vm544, %v9885, 0
        %v10016 = vsel %vm544, %v9886, 0
        %v10019 = vsel %vm544, %v9887, 0
        %v10022 = vsel %vm544, %v9888, 0
        %v10025 = vsel %vm544, %v9889, 0
        %v10028 = vsel %vm544, %v9890, 0
        %v10031 = vsel %vm544, %v9891, 0
        %v10034 = vsel %vm544, %v9892, 0
        %v10037 = vsel %vm544, %v9893, 0
        %v10040 = vsel %vm544, %v9894, 0
        %v10043 = vsel %vm544, %v9895, 0
        %v10046 = vsel %vm544, %v9896, 0
        %v10049 = vsel %vm544, %v9897, 0
        %v10052 = vsel %vm544, %v9898, 0
        %v10055 = vsel %vm544, %v9899, 0
        %v10058 = vsel %vm544, %v9900, 0
        %v10061 = vsel %vm544, %v9901, 0
        %v10064 = vsel %vm544, %v9902, 0
        %v10067 = vsel %vm544, %v9903, 0
        %v10070 = vsel %vm544, %v9904, 0
        %v10073 = vsel %vm544, %v9905, 0
        %v10076 = vsel %vm544, %v9906, 0
        %v10079 = vsel %vm544, %v9907, 0
        %v10082 = vsel %vm544, %v9908, 0
        %v10085 = vsel %vm544, %v9909, 0
        %v10088 = vsel %vm544, %v9910, 0
        %v10091 = vsel %vm544, %v9911, 0
        %v10094 = vsel %vm544, %v9912, 0
        %v10097 = vsel %vm544, %v9913, 0
        %v10100 = vsel %vm544, %v9914, 0
        %v10103 = vsel %vm544, %v9915, 0
        %v10106 = vsel %vm544, %v9916, 0
        %v10109 = vsel %vm544, %v9917, 0
        %v10112 = vsel %vm544, %v9918, 0
        %v10115 = vsel %vm544, %v9919, 0
        %10117 = vmatpush.msra.mxu0 0.0
        %10118 = vmatpush.msra.mxu0 0.0
        %10119 = vmatpush.msra.mxu0 0.0
        %10120 = vmatpush.msra.mxu0 0.0
        %10121 = vmatpush.msra.mxu0 0.0
        %10122 = vmatpush.msra.mxu0 0.0
        %10123 = vmatpush.msra.mxu0 0.0
        %10124 = vmatpush.msra.mxu0 0.0
        %10125 = vmatpush.msra.mxu0 0.0
        %10126 = vmatpush.msra.mxu0 0.0
        %10127 = vmatpush.msra.mxu0 0.0
        %10128 = vmatpush.msra.mxu0 0.0
        %10129 = vmatpush.msra.mxu0 %v9924
        %10130 = vmatpush.msra.mxu0 %v9923
        %10131 = vmatpush.msra.mxu0 %v9922
        %10132 = vmatpush.msra.mxu0 %v9921
        %10133 = vmatmul.f32.gmra.mxu0 %v9926
        %v10134 = vpop.f32.mrf.mxu0
        %v10135 = vadd.f32 0.0, %v10134
        %10136 = vmatmul.f32.gmra.mxu0 %v9929
        %v10137 = vpop.f32.mrf.mxu0
        %v10138 = vadd.f32 0.0, %v10137
        %10139 = vmatmul.f32.gmra.mxu0 %v9932
        %v10140 = vpop.f32.mrf.mxu0
        %v10141 = vadd.f32 0.0, %v10140
        %10142 = vmatmul.f32.gmra.mxu0 %v9935
        %v10143 = vpop.f32.mrf.mxu0
        %v10144 = vadd.f32 0.0, %v10143
        %10145 = vmatmul.f32.gmra.mxu0 %v9938
        %v10146 = vpop.f32.mrf.mxu0
        %v10147 = vadd.f32 0.0, %v10146
        %10148 = vmatmul.f32.gmra.mxu0 %v9941
        %v10149 = vpop.f32.mrf.mxu0
        %v10150 = vadd.f32 0.0, %v10149
        %10151 = vmatmul.f32.gmra.mxu0 %v9944
        %v10152 = vpop.f32.mrf.mxu0
        %v10153 = vadd.f32 0.0, %v10152
        %10154 = vmatmul.f32.gmra.mxu0 %v9947
        %v10155 = vpop.f32.mrf.mxu0
        %v10156 = vadd.f32 0.0, %v10155
        %10157 = vmatmul.f32.gmra.mxu0 %v9950
        %v10158 = vpop.f32.mrf.mxu0
        %v10159 = vadd.f32 0.0, %v10158
        %10160 = vmatmul.f32.gmra.mxu0 %v9953
        %v10161 = vpop.f32.mrf.mxu0
        %v10162 = vadd.f32 0.0, %v10161
        %10163 = vmatmul.f32.gmra.mxu0 %v9956
        %v10164 = vpop.f32.mrf.mxu0
        %v10165 = vadd.f32 0.0, %v10164
        %10166 = vmatmul.f32.gmra.mxu0 %v9959
        %v10167 = vpop.f32.mrf.mxu0
        %v10168 = vadd.f32 0.0, %v10167
        %10169 = vmatmul.f32.gmra.mxu0 %v9962
        %v10170 = vpop.f32.mrf.mxu0
        %v10171 = vadd.f32 0.0, %v10170
        %10172 = vmatmul.f32.gmra.mxu0 %v9965
        %v10173 = vpop.f32.mrf.mxu0
        %v10174 = vadd.f32 0.0, %v10173
        %10175 = vmatmul.f32.gmra.mxu0 %v9968
        %v10176 = vpop.f32.mrf.mxu0
        %v10177 = vadd.f32 0.0, %v10176
        %10178 = vmatmul.f32.gmra.mxu0 %v9971
        %v10179 = vpop.f32.mrf.mxu0
        %v10180 = vadd.f32 0.0, %v10179
        %10181 = vmatmul.f32.gmra.mxu0 %v9974
        %v10182 = vpop.f32.mrf.mxu0
        %v10183 = vadd.f32 0.0, %v10182
        %10184 = vmatmul.f32.gmra.mxu0 %v9977
        %v10185 = vpop.f32.mrf.mxu0
        %v10186 = vadd.f32 0.0, %v10185
        %10187 = vmatmul.f32.gmra.mxu0 %v9980
        %v10188 = vpop.f32.mrf.mxu0
        %v10189 = vadd.f32 0.0, %v10188
        %10190 = vmatmul.f32.gmra.mxu0 %v9983
        %v10191 = vpop.f32.mrf.mxu0
        %v10192 = vadd.f32 0.0, %v10191
        %10193 = vmatmul.f32.gmra.mxu0 %v9986
        %v10194 = vpop.f32.mrf.mxu0
        %v10195 = vadd.f32 0.0, %v10194
        %10196 = vmatmul.f32.gmra.mxu0 %v9989
        %v10197 = vpop.f32.mrf.mxu0
        %v10198 = vadd.f32 0.0, %v10197
        %10199 = vmatmul.f32.gmra.mxu0 %v9992
        %v10200 = vpop.f32.mrf.mxu0
        %v10201 = vadd.f32 0.0, %v10200
        %10202 = vmatmul.f32.gmra.mxu0 %v9995
        %v10203 = vpop.f32.mrf.mxu0
        %v10204 = vadd.f32 0.0, %v10203
        %10205 = vmatmul.f32.gmra.mxu0 %v9998
        %v10206 = vpop.f32.mrf.mxu0
        %v10207 = vadd.f32 0.0, %v10206
        %10208 = vmatmul.f32.gmra.mxu0 %v10001
        %v10209 = vpop.f32.mrf.mxu0
        %v10210 = vadd.f32 0.0, %v10209
        %10211 = vmatmul.f32.gmra.mxu0 %v10004
        %v10212 = vpop.f32.mrf.mxu0
        %v10213 = vadd.f32 0.0, %v10212
        %10214 = vmatmul.f32.gmra.mxu0 %v10007
        %v10215 = vpop.f32.mrf.mxu0
        %v10216 = vadd.f32 0.0, %v10215
        %10217 = vmatmul.f32.gmra.mxu0 %v10010
        %v10218 = vpop.f32.mrf.mxu0
        %v10219 = vadd.f32 0.0, %v10218
        %10220 = vmatmul.f32.gmra.mxu0 %v10013
        %v10221 = vpop.f32.mrf.mxu0
        %v10222 = vadd.f32 0.0, %v10221
        %10223 = vmatmul.f32.gmra.mxu0 %v10016
        %v10224 = vpop.f32.mrf.mxu0
        %v10225 = vadd.f32 0.0, %v10224
        %10226 = vmatmul.f32.gmra.mxu0 %v10019
        %v10227 = vpop.f32.mrf.mxu0
        %v10228 = vadd.f32 0.0, %v10227
        %10229 = vmatmul.f32.gmra.mxu0 %v10022
        %v10230 = vpop.f32.mrf.mxu0
        %v10231 = vadd.f32 0.0, %v10230
        %10232 = vmatmul.f32.gmra.mxu0 %v10025
        %v10233 = vpop.f32.mrf.mxu0
        %v10234 = vadd.f32 0.0, %v10233
        %10235 = vmatmul.f32.gmra.mxu0 %v10028
        %v10236 = vpop.f32.mrf.mxu0
        %v10237 = vadd.f32 0.0, %v10236
        %10238 = vmatmul.f32.gmra.mxu0 %v10031
        %v10239 = vpop.f32.mrf.mxu0
        %v10240 = vadd.f32 0.0, %v10239
        %10241 = vmatmul.f32.gmra.mxu0 %v10034
        %v10242 = vpop.f32.mrf.mxu0
        %v10243 = vadd.f32 0.0, %v10242
        %10244 = vmatmul.f32.gmra.mxu0 %v10037
        %v10245 = vpop.f32.mrf.mxu0
        %v10246 = vadd.f32 0.0, %v10245
        %10247 = vmatmul.f32.gmra.mxu0 %v10040
        %v10248 = vpop.f32.mrf.mxu0
        %v10249 = vadd.f32 0.0, %v10248
        %10250 = vmatmul.f32.gmra.mxu0 %v10043
        %v10251 = vpop.f32.mrf.mxu0
        %v10252 = vadd.f32 0.0, %v10251
        %10253 = vmatmul.f32.gmra.mxu0 %v10046
        %v10254 = vpop.f32.mrf.mxu0
        %v10255 = vadd.f32 0.0, %v10254
        %10256 = vmatmul.f32.gmra.mxu0 %v10049
        %v10257 = vpop.f32.mrf.mxu0
        %v10258 = vadd.f32 0.0, %v10257
        %10259 = vmatmul.f32.gmra.mxu0 %v10052
        %v10260 = vpop.f32.mrf.mxu0
        %v10261 = vadd.f32 0.0, %v10260
        %10262 = vmatmul.f32.gmra.mxu0 %v10055
        %v10263 = vpop.f32.mrf.mxu0
        %v10264 = vadd.f32 0.0, %v10263
        %10265 = vmatmul.f32.gmra.mxu0 %v10058
        %v10266 = vpop.f32.mrf.mxu0
        %v10267 = vadd.f32 0.0, %v10266
        %10268 = vmatmul.f32.gmra.mxu0 %v10061
        %v10269 = vpop.f32.mrf.mxu0
        %v10270 = vadd.f32 0.0, %v10269
        %10271 = vmatmul.f32.gmra.mxu0 %v10064
        %v10272 = vpop.f32.mrf.mxu0
        %v10273 = vadd.f32 0.0, %v10272
        %10274 = vmatmul.f32.gmra.mxu0 %v10067
        %v10275 = vpop.f32.mrf.mxu0
        %v10276 = vadd.f32 0.0, %v10275
        %10277 = vmatmul.f32.gmra.mxu0 %v10070
        %v10278 = vpop.f32.mrf.mxu0
        %v10279 = vadd.f32 0.0, %v10278
        %10280 = vmatmul.f32.gmra.mxu0 %v10073
        %v10281 = vpop.f32.mrf.mxu0
        %v10282 = vadd.f32 0.0, %v10281
        %10283 = vmatmul.f32.gmra.mxu0 %v10076
        %v10284 = vpop.f32.mrf.mxu0
        %v10285 = vadd.f32 0.0, %v10284
        %10286 = vmatmul.f32.gmra.mxu0 %v10079
        %v10287 = vpop.f32.mrf.mxu0
        %v10288 = vadd.f32 0.0, %v10287
        %10289 = vmatmul.f32.gmra.mxu0 %v10082
        %v10290 = vpop.f32.mrf.mxu0
        %v10291 = vadd.f32 0.0, %v10290
        %10292 = vmatmul.f32.gmra.mxu0 %v10085
        %v10293 = vpop.f32.mrf.mxu0
        %v10294 = vadd.f32 0.0, %v10293
        %10295 = vmatmul.f32.gmra.mxu0 %v10088
        %v10296 = vpop.f32.mrf.mxu0
        %v10297 = vadd.f32 0.0, %v10296
        %10298 = vmatmul.f32.gmra.mxu0 %v10091
        %v10299 = vpop.f32.mrf.mxu0
        %v10300 = vadd.f32 0.0, %v10299
        %10301 = vmatmul.f32.gmra.mxu0 %v10094
        %v10302 = vpop.f32.mrf.mxu0
        %v10303 = vadd.f32 0.0, %v10302
        %10304 = vmatmul.f32.gmra.mxu0 %v10097
        %v10305 = vpop.f32.mrf.mxu0
        %v10306 = vadd.f32 0.0, %v10305
        %10307 = vmatmul.f32.gmra.mxu0 %v10100
        %v10308 = vpop.f32.mrf.mxu0
        %v10309 = vadd.f32 0.0, %v10308
        %10310 = vmatmul.f32.gmra.mxu0 %v10103
        %v10311 = vpop.f32.mrf.mxu0
        %v10312 = vadd.f32 0.0, %v10311
        %10313 = vmatmul.f32.gmra.mxu0 %v10106
        %v10314 = vpop.f32.mrf.mxu0
        %v10315 = vadd.f32 0.0, %v10314
        %10316 = vmatmul.f32.gmra.mxu0 %v10109
        %v10317 = vpop.f32.mrf.mxu0
        %v10318 = vadd.f32 0.0, %v10317
        %10319 = vmatmul.f32.gmra.mxu0 %v10112
        %v10320 = vpop.f32.mrf.mxu0
        %v10321 = vadd.f32 0.0, %v10320
        %10322 = vmatmul.f32.gmra.mxu0 %v10115
        %v10323 = vpop.f32.mrf.mxu0
        %v10324 = vadd.f32 0.0, %v10323
        %10325 = vdwg.mxu0
        %v10326 = vadd.f32 %v9792, %v10135
        %v10327 = vadd.f32 %v9793, %v10138
        %v10328 = vadd.f32 %v9794, %v10141
        %v10329 = vadd.f32 %v9795, %v10144
        %v10330 = vadd.f32 %v9796, %v10147
        %v10331 = vadd.f32 %v9797, %v10150
        %v10332 = vadd.f32 %v9798, %v10153
        %v10333 = vadd.f32 %v9799, %v10156
        %v10334 = vadd.f32 %v9800, %v10159
        %v10335 = vadd.f32 %v9801, %v10162
        %v10336 = vadd.f32 %v9802, %v10165
        %v10337 = vadd.f32 %v9803, %v10168
        %v10338 = vadd.f32 %v9804, %v10171
        %v10339 = vadd.f32 %v9805, %v10174
        %v10340 = vadd.f32 %v9806, %v10177
        %v10341 = vadd.f32 %v9807, %v10180
        %v10342 = vadd.f32 %v9808, %v10183
        %v10343 = vadd.f32 %v9809, %v10186
        %v10344 = vadd.f32 %v9810, %v10189
        %v10345 = vadd.f32 %v9811, %v10192
        %v10346 = vadd.f32 %v9812, %v10195
        %v10347 = vadd.f32 %v9813, %v10198
        %v10348 = vadd.f32 %v9814, %v10201
        %v10349 = vadd.f32 %v9815, %v10204
        %v10350 = vadd.f32 %v9816, %v10207
        %v10351 = vadd.f32 %v9817, %v10210
        %v10352 = vadd.f32 %v9818, %v10213
        %v10353 = vadd.f32 %v9819, %v10216
        %v10354 = vadd.f32 %v9820, %v10219
        %v10355 = vadd.f32 %v9821, %v10222
        %v10356 = vadd.f32 %v9822, %v10225
        %v10357 = vadd.f32 %v9823, %v10228
        %v10358 = vadd.f32 %v9824, %v10231
        %v10359 = vadd.f32 %v9825, %v10234
        %v10360 = vadd.f32 %v9826, %v10237
        %v10361 = vadd.f32 %v9827, %v10240
        %v10362 = vadd.f32 %v9828, %v10243
        %v10363 = vadd.f32 %v9829, %v10246
        %v10364 = vadd.f32 %v9830, %v10249
        %v10365 = vadd.f32 %v9831, %v10252
        %v10366 = vadd.f32 %v9832, %v10255
        %v10367 = vadd.f32 %v9833, %v10258
        %v10368 = vadd.f32 %v9834, %v10261
        %v10369 = vadd.f32 %v9835, %v10264
        %v10370 = vadd.f32 %v9836, %v10267
        %v10371 = vadd.f32 %v9837, %v10270
        %v10372 = vadd.f32 %v9838, %v10273
        %v10373 = vadd.f32 %v9839, %v10276
        %v10374 = vadd.f32 %v9840, %v10279
        %v10375 = vadd.f32 %v9841, %v10282
        %v10376 = vadd.f32 %v9842, %v10285
        %v10377 = vadd.f32 %v9843, %v10288
        %v10378 = vadd.f32 %v9844, %v10291
        %v10379 = vadd.f32 %v9845, %v10294
        %v10380 = vadd.f32 %v9846, %v10297
        %v10381 = vadd.f32 %v9847, %v10300
        %v10382 = vadd.f32 %v9848, %v10303
        %v10383 = vadd.f32 %v9849, %v10306
        %v10384 = vadd.f32 %v9850, %v10309
        %v10385 = vadd.f32 %v9851, %v10312
        %v10386 = vadd.f32 %v9852, %v10315
        %v10387 = vadd.f32 %v9853, %v10318
        %v10388 = vadd.f32 %v9854, %v10321
        %v10389 = vadd.f32 %v9855, %v10324
        %v10390 = vld [vmem:[%s4] sm:$0x1]
        %v10392 = vperm.slane %v10390, 0
        %v10394 = vadd.f32 %v10326, %v10392
        %v10395 = vadd.f32 %v10327, %v10392
        %v10396 = vadd.f32 %v10328, %v10392
        %v10397 = vadd.f32 %v10329, %v10392
        %v10398 = vadd.f32 %v10330, %v10392
        %v10399 = vadd.f32 %v10331, %v10392
        %v10400 = vadd.f32 %v10332, %v10392
        %v10401 = vadd.f32 %v10333, %v10392
        %v10402 = vadd.f32 %v10334, %v10392
        %v10403 = vadd.f32 %v10335, %v10392
        %v10404 = vadd.f32 %v10336, %v10392
        %v10405 = vadd.f32 %v10337, %v10392
        %v10406 = vadd.f32 %v10338, %v10392
        %v10407 = vadd.f32 %v10339, %v10392
        %v10408 = vadd.f32 %v10340, %v10392
        %v10409 = vadd.f32 %v10341, %v10392
        %v10410 = vadd.f32 %v10342, %v10392
        %v10411 = vadd.f32 %v10343, %v10392
        %v10412 = vadd.f32 %v10344, %v10392
        %v10413 = vadd.f32 %v10345, %v10392
        %v10414 = vadd.f32 %v10346, %v10392
        %v10415 = vadd.f32 %v10347, %v10392
        %v10416 = vadd.f32 %v10348, %v10392
        %v10417 = vadd.f32 %v10349, %v10392
        %v10418 = vadd.f32 %v10350, %v10392
        %v10419 = vadd.f32 %v10351, %v10392
        %v10420 = vadd.f32 %v10352, %v10392
        %v10421 = vadd.f32 %v10353, %v10392
        %v10422 = vadd.f32 %v10354, %v10392
        %v10423 = vadd.f32 %v10355, %v10392
        %v10424 = vadd.f32 %v10356, %v10392
        %v10425 = vadd.f32 %v10357, %v10392
        %v10426 = vadd.f32 %v10358, %v10392
        %v10427 = vadd.f32 %v10359, %v10392
        %v10428 = vadd.f32 %v10360, %v10392
        %v10429 = vadd.f32 %v10361, %v10392
        %v10430 = vadd.f32 %v10362, %v10392
        %v10431 = vadd.f32 %v10363, %v10392
        %v10432 = vadd.f32 %v10364, %v10392
        %v10433 = vadd.f32 %v10365, %v10392
        %v10434 = vadd.f32 %v10366, %v10392
        %v10435 = vadd.f32 %v10367, %v10392
        %v10436 = vadd.f32 %v10368, %v10392
        %v10437 = vadd.f32 %v10369, %v10392
        %v10438 = vadd.f32 %v10370, %v10392
        %v10439 = vadd.f32 %v10371, %v10392
        %v10440 = vadd.f32 %v10372, %v10392
        %v10441 = vadd.f32 %v10373, %v10392
        %v10442 = vadd.f32 %v10374, %v10392
        %v10443 = vadd.f32 %v10375, %v10392
        %v10444 = vadd.f32 %v10376, %v10392
        %v10445 = vadd.f32 %v10377, %v10392
        %v10446 = vadd.f32 %v10378, %v10392
        %v10447 = vadd.f32 %v10379, %v10392
        %v10448 = vadd.f32 %v10380, %v10392
        %v10449 = vadd.f32 %v10381, %v10392
        %v10450 = vadd.f32 %v10382, %v10392
        %v10451 = vadd.f32 %v10383, %v10392
        %v10452 = vadd.f32 %v10384, %v10392
        %v10453 = vadd.f32 %v10385, %v10392
        %v10454 = vadd.f32 %v10386, %v10392
        %v10455 = vadd.f32 %v10387, %v10392
        %v10456 = vadd.f32 %v10388, %v10392
        %v10457 = vadd.f32 %v10389, %v10392
        %10458 = vst.msk [vmem:[#allocation5] sm:$0xff] %vm544, %v10394
        %10459 = vst.msk [vmem:[#allocation5 + $0x8] sm:$0xff] %vm544, %v10395
        %10460 = vst.msk [vmem:[#allocation5 + $0x10] sm:$0xff] %vm544, %v10396
        %10461 = vst.msk [vmem:[#allocation5 + $0x18] sm:$0xff] %vm544, %v10397
        %10462 = vst.msk [vmem:[#allocation5 + $0x20] sm:$0xff] %vm544, %v10398
        %10463 = vst.msk [vmem:[#allocation5 + $0x28] sm:$0xff] %vm544, %v10399
        %10464 = vst.msk [vmem:[#allocation5 + $0x30] sm:$0xff] %vm544, %v10400
        %10465 = vst.msk [vmem:[#allocation5 + $0x38] sm:$0xff] %vm544, %v10401
        %10466 = vst.msk [vmem:[#allocation5 + $0x40] sm:$0xff] %vm544, %v10402
        %10467 = vst.msk [vmem:[#allocation5 + $0x48] sm:$0xff] %vm544, %v10403
        %10468 = vst.msk [vmem:[#allocation5 + $0x50] sm:$0xff] %vm544, %v10404
        %10469 = vst.msk [vmem:[#allocation5 + $0x58] sm:$0xff] %vm544, %v10405
        %10470 = vst.msk [vmem:[#allocation5 + $0x60] sm:$0xff] %vm544, %v10406
        %10471 = vst.msk [vmem:[#allocation5 + $0x68] sm:$0xff] %vm544, %v10407
        %10472 = vst.msk [vmem:[#allocation5 + $0x70] sm:$0xff] %vm544, %v10408
        %10473 = vst.msk [vmem:[#allocation5 + $0x78] sm:$0xff] %vm544, %v10409
        %10474 = vst.msk [vmem:[#allocation5 + $0x80] sm:$0xff] %vm544, %v10410
        %10475 = vst.msk [vmem:[#allocation5 + $0x88] sm:$0xff] %vm544, %v10411
        %10476 = vst.msk [vmem:[#allocation5 + $0x90] sm:$0xff] %vm544, %v10412
        %10477 = vst.msk [vmem:[#allocation5 + $0x98] sm:$0xff] %vm544, %v10413
        %10478 = vst.msk [vmem:[#allocation5 + $0xa0] sm:$0xff] %vm544, %v10414
        %10479 = vst.msk [vmem:[#allocation5 + $0xa8] sm:$0xff] %vm544, %v10415
        %10480 = vst.msk [vmem:[#allocation5 + $0xb0] sm:$0xff] %vm544, %v10416
        %10481 = vst.msk [vmem:[#allocation5 + $0xb8] sm:$0xff] %vm544, %v10417
        %10482 = vst.msk [vmem:[#allocation5 + $0xc0] sm:$0xff] %vm544, %v10418
        %10483 = vst.msk [vmem:[#allocation5 + $0xc8] sm:$0xff] %vm544, %v10419
        %10484 = vst.msk [vmem:[#allocation5 + $0xd0] sm:$0xff] %vm544, %v10420
        %10485 = vst.msk [vmem:[#allocation5 + $0xd8] sm:$0xff] %vm544, %v10421
        %10486 = vst.msk [vmem:[#allocation5 + $0xe0] sm:$0xff] %vm544, %v10422
        %10487 = vst.msk [vmem:[#allocation5 + $0xe8] sm:$0xff] %vm544, %v10423
        %10488 = vst.msk [vmem:[#allocation5 + $0xf0] sm:$0xff] %vm544, %v10424
        %10489 = vst.msk [vmem:[#allocation5 + $0xf8] sm:$0xff] %vm544, %v10425
        %10490 = vst.msk [vmem:[#allocation5 + $0x100] sm:$0xff] %vm544, %v10426
        %10491 = vst.msk [vmem:[#allocation5 + $0x108] sm:$0xff] %vm544, %v10427
        %10492 = vst.msk [vmem:[#allocation5 + $0x110] sm:$0xff] %vm544, %v10428
        %10493 = vst.msk [vmem:[#allocation5 + $0x118] sm:$0xff] %vm544, %v10429
        %10494 = vst.msk [vmem:[#allocation5 + $0x120] sm:$0xff] %vm544, %v10430
        %10495 = vst.msk [vmem:[#allocation5 + $0x128] sm:$0xff] %vm544, %v10431
        %10496 = vst.msk [vmem:[#allocation5 + $0x130] sm:$0xff] %vm544, %v10432
        %10497 = vst.msk [vmem:[#allocation5 + $0x138] sm:$0xff] %vm544, %v10433
        %10498 = vst.msk [vmem:[#allocation5 + $0x140] sm:$0xff] %vm544, %v10434
        %10499 = vst.msk [vmem:[#allocation5 + $0x148] sm:$0xff] %vm544, %v10435
        %10500 = vst.msk [vmem:[#allocation5 + $0x150] sm:$0xff] %vm544, %v10436
        %10501 = vst.msk [vmem:[#allocation5 + $0x158] sm:$0xff] %vm544, %v10437
        %10502 = vst.msk [vmem:[#allocation5 + $0x160] sm:$0xff] %vm544, %v10438
        %10503 = vst.msk [vmem:[#allocation5 + $0x168] sm:$0xff] %vm544, %v10439
        %10504 = vst.msk [vmem:[#allocation5 + $0x170] sm:$0xff] %vm544, %v10440
        %10505 = vst.msk [vmem:[#allocation5 + $0x178] sm:$0xff] %vm544, %v10441
        %10506 = vst.msk [vmem:[#allocation5 + $0x180] sm:$0xff] %vm544, %v10442
        %10507 = vst.msk [vmem:[#allocation5 + $0x188] sm:$0xff] %vm544, %v10443
        %10508 = vst.msk [vmem:[#allocation5 + $0x190] sm:$0xff] %vm544, %v10444
        %10509 = vst.msk [vmem:[#allocation5 + $0x198] sm:$0xff] %vm544, %v10445
        %10510 = vst.msk [vmem:[#allocation5 + $0x1a0] sm:$0xff] %vm544, %v10446
        %10511 = vst.msk [vmem:[#allocation5 + $0x1a8] sm:$0xff] %vm544, %v10447
        %10512 = vst.msk [vmem:[#allocation5 + $0x1b0] sm:$0xff] %vm544, %v10448
        %10513 = vst.msk [vmem:[#allocation5 + $0x1b8] sm:$0xff] %vm544, %v10449
        %10514 = vst.msk [vmem:[#allocation5 + $0x1c0] sm:$0xff] %vm544, %v10450
        %10515 = vst.msk [vmem:[#allocation5 + $0x1c8] sm:$0xff] %vm544, %v10451
        %10516 = vst.msk [vmem:[#allocation5 + $0x1d0] sm:$0xff] %vm544, %v10452
        %10517 = vst.msk [vmem:[#allocation5 + $0x1d8] sm:$0xff] %vm544, %v10453
        %10518 = vst.msk [vmem:[#allocation5 + $0x1e0] sm:$0xff] %vm544, %v10454
        %10519 = vst.msk [vmem:[#allocation5 + $0x1e8] sm:$0xff] %vm544, %v10455
        %10520 = vst.msk [vmem:[#allocation5 + $0x1f0] sm:$0xff] %vm544, %v10456
        %10521 = vst.msk [vmem:[#allocation5 + $0x1f8] sm:$0xff] %vm544, %v10457
        %v10522 = vld [vmem:[%s470] sm:$0xff]
        %v10523 = vld [vmem:[%s470 + $0x8] sm:$0xff]
        %v10524 = vld [vmem:[#allocation5] sm:$0xff]
        %v10525 = vld [vmem:[#allocation5 + $0x8] sm:$0xff]
        %v10526 = vmul.f32 %v10524, 0.1
        %v10527 = vmul.f32 %v10525, 0.1
        %v10528 = vadd.f32 %v10522, %v10526
        %v10529 = vadd.f32 %v10523, %v10527
        %10530 = vst.msk [vmem:[#allocation6] sm:$0xff] %vm544, %v10528
        %10531 = vst.msk [vmem:[#allocation6 + $0x8] sm:$0xff] %vm544, %v10529
        %v10532 = vld [vmem:[%s701] sm:$0xff]
        %v10533 = vld [vmem:[%s701 + $0x8] sm:$0xff]
        %v10534 = vld [vmem:[#allocation5 + $0x20] sm:$0xff]
        %v10535 = vld [vmem:[#allocation5 + $0x28] sm:$0xff]
        %v10536 = vmul.f32 %v10534, 0.1
        %v10537 = vmul.f32 %v10535, 0.1
        %v10538 = vadd.f32 %v10532, %v10536
        %v10539 = vadd.f32 %v10533, %v10537
        %10540 = vst.msk [vmem:[#allocation6 + $0x10] sm:$0xff] %vm544, %v10538
        %10541 = vst.msk [vmem:[#allocation6 + $0x18] sm:$0xff] %vm544, %v10539
        %v10542 = vld [vmem:[%s706] sm:$0xff]
        %v10543 = vld [vmem:[%s706 + $0x8] sm:$0xff]
        %v10544 = vld [vmem:[#allocation5 + $0x40] sm:$0xff]
        %v10545 = vld [vmem:[#allocation5 + $0x48] sm:$0xff]
        %v10546 = vmul.f32 %v10544, 0.1
        %v10547 = vmul.f32 %v10545, 0.1
        %v10548 = vadd.f32 %v10542, %v10546
        %v10549 = vadd.f32 %v10543, %v10547
        %10550 = vst.msk [vmem:[#allocation6 + $0x20] sm:$0xff] %vm544, %v10548
        %10551 = vst.msk [vmem:[#allocation6 + $0x28] sm:$0xff] %vm544, %v10549
        %v10552 = vld [vmem:[%s711] sm:$0xff]
        %v10553 = vld [vmem:[%s711 + $0x8] sm:$0xff]
        %v10554 = vld [vmem:[#allocation5 + $0x60] sm:$0xff]
        %v10555 = vld [vmem:[#allocation5 + $0x68] sm:$0xff]
        %v10556 = vmul.f32 %v10554, 0.1
        %v10557 = vmul.f32 %v10555, 0.1
        %v10558 = vadd.f32 %v10552, %v10556
        %v10559 = vadd.f32 %v10553, %v10557
        %10560 = vst.msk [vmem:[#allocation6 + $0x30] sm:$0xff] %vm544, %v10558
        %10561 = vst.msk [vmem:[#allocation6 + $0x38] sm:$0xff] %vm544, %v10559
        %v10562 = vld [vmem:[%s716] sm:$0xff]
        %v10563 = vld [vmem:[%s716 + $0x8] sm:$0xff]
        %v10564 = vld [vmem:[#allocation5 + $0x80] sm:$0xff]
        %v10565 = vld [vmem:[#allocation5 + $0x88] sm:$0xff]
        %v10566 = vmul.f32 %v10564, 0.1
        %v10567 = vmul.f32 %v10565, 0.1
        %v10568 = vadd.f32 %v10562, %v10566
        %v10569 = vadd.f32 %v10563, %v10567
        %10570 = vst.msk [vmem:[#allocation6 + $0x40] sm:$0xff] %vm544, %v10568
        %10571 = vst.msk [vmem:[#allocation6 + $0x48] sm:$0xff] %vm544, %v10569
        %v10572 = vld [vmem:[%s721] sm:$0xff]
        %v10573 = vld [vmem:[%s721 + $0x8] sm:$0xff]
        %v10574 = vld [vmem:[#allocation5 + $0xa0] sm:$0xff]
        %v10575 = vld [vmem:[#allocation5 + $0xa8] sm:$0xff]
        %v10576 = vmul.f32 %v10574, 0.1
        %v10577 = vmul.f32 %v10575, 0.1
        %v10578 = vadd.f32 %v10572, %v10576
        %v10579 = vadd.f32 %v10573, %v10577
        %10580 = vst.msk [vmem:[#allocation6 + $0x50] sm:$0xff] %vm544, %v10578
        %10581 = vst.msk [vmem:[#allocation6 + $0x58] sm:$0xff] %vm544, %v10579
        %v10582 = vld [vmem:[%s726] sm:$0xff]
        %v10583 = vld [vmem:[%s726 + $0x8] sm:$0xff]
        %v10584 = vld [vmem:[#allocation5 + $0xc0] sm:$0xff]
        %v10585 = vld [vmem:[#allocation5 + $0xc8] sm:$0xff]
        %v10586 = vmul.f32 %v10584, 0.1
        %v10587 = vmul.f32 %v10585, 0.1
        %v10588 = vadd.f32 %v10582, %v10586
        %v10589 = vadd.f32 %v10583, %v10587
        %10590 = vst.msk [vmem:[#allocation6 + $0x60] sm:$0xff] %vm544, %v10588
        %10591 = vst.msk [vmem:[#allocation6 + $0x68] sm:$0xff] %vm544, %v10589
        %v10592 = vld [vmem:[%s731] sm:$0xff]
        %v10593 = vld [vmem:[%s731 + $0x8] sm:$0xff]
        %v10594 = vld [vmem:[#allocation5 + $0xe0] sm:$0xff]
        %v10595 = vld [vmem:[#allocation5 + $0xe8] sm:$0xff]
        %v10596 = vmul.f32 %v10594, 0.1
        %v10597 = vmul.f32 %v10595, 0.1
        %v10598 = vadd.f32 %v10592, %v10596
        %v10599 = vadd.f32 %v10593, %v10597
        %10600 = vst.msk [vmem:[#allocation6 + $0x70] sm:$0xff] %vm544, %v10598
        %10601 = vst.msk [vmem:[#allocation6 + $0x78] sm:$0xff] %vm544, %v10599
        %v10602 = vld [vmem:[%s736] sm:$0xff]
        %v10603 = vld [vmem:[%s736 + $0x8] sm:$0xff]
        %v10604 = vld [vmem:[#allocation5 + $0x100] sm:$0xff]
        %v10605 = vld [vmem:[#allocation5 + $0x108] sm:$0xff]
        %v10606 = vmul.f32 %v10604, 0.1
        %v10607 = vmul.f32 %v10605, 0.1
        %v10608 = vadd.f32 %v10602, %v10606
        %v10609 = vadd.f32 %v10603, %v10607
        %10610 = vst.msk [vmem:[#allocation6 + $0x80] sm:$0xff] %vm544, %v10608
        %10611 = vst.msk [vmem:[#allocation6 + $0x88] sm:$0xff] %vm544, %v10609
        %v10612 = vld [vmem:[%s741] sm:$0xff]
        %v10613 = vld [vmem:[%s741 + $0x8] sm:$0xff]
        %v10614 = vld [vmem:[#allocation5 + $0x120] sm:$0xff]
        %v10615 = vld [vmem:[#allocation5 + $0x128] sm:$0xff]
        %v10616 = vmul.f32 %v10614, 0.1
        %v10617 = vmul.f32 %v10615, 0.1
        %v10618 = vadd.f32 %v10612, %v10616
        %v10619 = vadd.f32 %v10613, %v10617
        %10620 = vst.msk [vmem:[#allocation6 + $0x90] sm:$0xff] %vm544, %v10618
        %10621 = vst.msk [vmem:[#allocation6 + $0x98] sm:$0xff] %vm544, %v10619
        %v10622 = vld [vmem:[%s746] sm:$0xff]
        %v10623 = vld [vmem:[%s746 + $0x8] sm:$0xff]
        %v10624 = vld [vmem:[#allocation5 + $0x140] sm:$0xff]
        %v10625 = vld [vmem:[#allocation5 + $0x148] sm:$0xff]
        %v10626 = vmul.f32 %v10624, 0.1
        %v10627 = vmul.f32 %v10625, 0.1
        %v10628 = vadd.f32 %v10622, %v10626
        %v10629 = vadd.f32 %v10623, %v10627
        %10630 = vst.msk [vmem:[#allocation6 + $0xa0] sm:$0xff] %vm544, %v10628
        %10631 = vst.msk [vmem:[#allocation6 + $0xa8] sm:$0xff] %vm544, %v10629
        %v10632 = vld [vmem:[%s751] sm:$0xff]
        %v10633 = vld [vmem:[%s751 + $0x8] sm:$0xff]
        %v10634 = vld [vmem:[#allocation5 + $0x160] sm:$0xff]
        %v10635 = vld [vmem:[#allocation5 + $0x168] sm:$0xff]
        %v10636 = vmul.f32 %v10634, 0.1
        %v10637 = vmul.f32 %v10635, 0.1
        %v10638 = vadd.f32 %v10632, %v10636
        %v10639 = vadd.f32 %v10633, %v10637
        %10640 = vst.msk [vmem:[#allocation6 + $0xb0] sm:$0xff] %vm544, %v10638
        %10641 = vst.msk [vmem:[#allocation6 + $0xb8] sm:$0xff] %vm544, %v10639
        %v10642 = vld [vmem:[%s756] sm:$0xff]
        %v10643 = vld [vmem:[%s756 + $0x8] sm:$0xff]
        %v10644 = vld [vmem:[#allocation5 + $0x180] sm:$0xff]
        %v10645 = vld [vmem:[#allocation5 + $0x188] sm:$0xff]
        %v10646 = vmul.f32 %v10644, 0.1
        %v10647 = vmul.f32 %v10645, 0.1
        %v10648 = vadd.f32 %v10642, %v10646
        %v10649 = vadd.f32 %v10643, %v10647
        %10650 = vst.msk [vmem:[#allocation6 + $0xc0] sm:$0xff] %vm544, %v10648
        %10651 = vst.msk [vmem:[#allocation6 + $0xc8] sm:$0xff] %vm544, %v10649
        %v10652 = vld [vmem:[%s761] sm:$0xff]
        %v10653 = vld [vmem:[%s761 + $0x8] sm:$0xff]
        %v10654 = vld [vmem:[#allocation5 + $0x1a0] sm:$0xff]
        %v10655 = vld [vmem:[#allocation5 + $0x1a8] sm:$0xff]
        %v10656 = vmul.f32 %v10654, 0.1
        %v10657 = vmul.f32 %v10655, 0.1
        %v10658 = vadd.f32 %v10652, %v10656
        %v10659 = vadd.f32 %v10653, %v10657
        %10660 = vst.msk [vmem:[#allocation6 + $0xd0] sm:$0xff] %vm544, %v10658
        %10661 = vst.msk [vmem:[#allocation6 + $0xd8] sm:$0xff] %vm544, %v10659
        %v10662 = vld [vmem:[%s766] sm:$0xff]
        %v10663 = vld [vmem:[%s766 + $0x8] sm:$0xff]
        %v10664 = vld [vmem:[#allocation5 + $0x1c0] sm:$0xff]
        %v10665 = vld [vmem:[#allocation5 + $0x1c8] sm:$0xff]
        %v10666 = vmul.f32 %v10664, 0.1
        %v10667 = vmul.f32 %v10665, 0.1
        %v10668 = vadd.f32 %v10662, %v10666
        %v10669 = vadd.f32 %v10663, %v10667
        %10670 = vst.msk [vmem:[#allocation6 + $0xe0] sm:$0xff] %vm544, %v10668
        %10671 = vst.msk [vmem:[#allocation6 + $0xe8] sm:$0xff] %vm544, %v10669
        %v10672 = vld [vmem:[%s771] sm:$0xff]
        %v10673 = vld [vmem:[%s771 + $0x8] sm:$0xff]
        %v10674 = vld [vmem:[#allocation5 + $0x1e0] sm:$0xff]
        %v10675 = vld [vmem:[#allocation5 + $0x1e8] sm:$0xff]
        %v10676 = vmul.f32 %v10674, 0.1
        %v10677 = vmul.f32 %v10675, 0.1
        %v10678 = vadd.f32 %v10672, %v10676
        %v10679 = vadd.f32 %v10673, %v10677
        %10680 = vst.msk [vmem:[#allocation6 + $0xf0] sm:$0xff] %vm544, %v10678
        %10681 = vst.msk [vmem:[#allocation6 + $0xf8] sm:$0xff] %vm544, %v10679
        %v10682 = vld [vmem:[#allocation6] sm:$0xff]
        %v10683 = vld [vmem:[#allocation6 + $0x8] sm:$0xff]
        %v10684 = vld [vmem:[#allocation6 + $0x10] sm:$0xff]
        %v10685 = vld [vmem:[#allocation6 + $0x18] sm:$0xff]
        %v10686 = vld [vmem:[#allocation6 + $0x20] sm:$0xff]
        %v10687 = vld [vmem:[#allocation6 + $0x28] sm:$0xff]
        %v10688 = vld [vmem:[#allocation6 + $0x30] sm:$0xff]
        %v10689 = vld [vmem:[#allocation6 + $0x38] sm:$0xff]
        %v10690 = vld [vmem:[#allocation6 + $0x40] sm:$0xff]
        %v10691 = vld [vmem:[#allocation6 + $0x48] sm:$0xff]
        %v10692 = vld [vmem:[#allocation6 + $0x50] sm:$0xff]
        %v10693 = vld [vmem:[#allocation6 + $0x58] sm:$0xff]
        %v10694 = vld [vmem:[#allocation6 + $0x60] sm:$0xff]
        %v10695 = vld [vmem:[#allocation6 + $0x68] sm:$0xff]
        %v10696 = vld [vmem:[#allocation6 + $0x70] sm:$0xff]
        %v10697 = vld [vmem:[#allocation6 + $0x78] sm:$0xff]
        %v10698 = vld [vmem:[#allocation6 + $0x80] sm:$0xff]
        %v10699 = vld [vmem:[#allocation6 + $0x88] sm:$0xff]
        %v10700 = vld [vmem:[#allocation6 + $0x90] sm:$0xff]
        %v10701 = vld [vmem:[#allocation6 + $0x98] sm:$0xff]
        %v10702 = vld [vmem:[#allocation6 + $0xa0] sm:$0xff]
        %v10703 = vld [vmem:[#allocation6 + $0xa8] sm:$0xff]
        %v10704 = vld [vmem:[#allocation6 + $0xb0] sm:$0xff]
        %v10705 = vld [vmem:[#allocation6 + $0xb8] sm:$0xff]
        %v10706 = vld [vmem:[#allocation6 + $0xc0] sm:$0xff]
        %v10707 = vld [vmem:[#allocation6 + $0xc8] sm:$0xff]
        %v10708 = vld [vmem:[#allocation6 + $0xd0] sm:$0xff]
        %v10709 = vld [vmem:[#allocation6 + $0xd8] sm:$0xff]
        %v10710 = vld [vmem:[#allocation6 + $0xe0] sm:$0xff]
        %v10711 = vld [vmem:[#allocation6 + $0xe8] sm:$0xff]
        %v10712 = vld [vmem:[#allocation6 + $0xf0] sm:$0xff]
        %v10713 = vld [vmem:[#allocation6 + $0xf8] sm:$0xff]
        %v10714 = vld [vmem:[#allocation14] sm:$0xff]
        %v10715 = vld [vmem:[#allocation14 + $0x8] sm:$0xff]
        %v10716 = vld [vmem:[#allocation14 + $0x10] sm:$0xff]
        %v10717 = vld [vmem:[#allocation14 + $0x18] sm:$0xff]
        %v10718 = vld [vmem:[%s6] sm:$0x1]
        %v10720 = vperm.slane %v10718, 0
        %v10723 = vsel %vm544, %v10682, 0
        %v10726 = vsel %vm544, %v10683, 0
        %v10729 = vsel %vm544, %v10684, 0
        %v10732 = vsel %vm544, %v10685, 0
        %v10735 = vsel %vm544, %v10686, 0
        %v10738 = vsel %vm544, %v10687, 0
        %v10741 = vsel %vm544, %v10688, 0
        %v10744 = vsel %vm544, %v10689, 0
        %v10747 = vsel %vm544, %v10690, 0
        %v10750 = vsel %vm544, %v10691, 0
        %v10753 = vsel %vm544, %v10692, 0
        %v10756 = vsel %vm544, %v10693, 0
        %v10759 = vsel %vm544, %v10694, 0
        %v10762 = vsel %vm544, %v10695, 0
        %v10765 = vsel %vm544, %v10696, 0
        %v10768 = vsel %vm544, %v10697, 0
        %v10771 = vsel %vm544, %v10698, 0
        %v10774 = vsel %vm544, %v10699, 0
        %v10777 = vsel %vm544, %v10700, 0
        %v10780 = vsel %vm544, %v10701, 0
        %v10783 = vsel %vm544, %v10702, 0
        %v10786 = vsel %vm544, %v10703, 0
        %v10789 = vsel %vm544, %v10704, 0
        %v10792 = vsel %vm544, %v10705, 0
        %v10795 = vsel %vm544, %v10706, 0
        %v10798 = vsel %vm544, %v10707, 0
        %v10801 = vsel %vm544, %v10708, 0
        %v10804 = vsel %vm544, %v10709, 0
        %v10807 = vsel %vm544, %v10710, 0
        %v10810 = vsel %vm544, %v10711, 0
        %v10813 = vsel %vm544, %v10712, 0
        %v10816 = vsel %vm544, %v10713, 0
        %10818 = vmatpush.msra.mxu0 0.0
        %10819 = vmatpush.msra.mxu0 0.0
        %10820 = vmatpush.msra.mxu0 0.0
        %10821 = vmatpush.msra.mxu0 0.0
        %10822 = vmatpush.msra.mxu0 0.0
        %10823 = vmatpush.msra.mxu0 0.0
        %10824 = vmatpush.msra.mxu0 0.0
        %10825 = vmatpush.msra.mxu0 0.0
        %10826 = vmatpush.msra.mxu0 0.0
        %10827 = vmatpush.msra.mxu0 0.0
        %10828 = vmatpush.msra.mxu0 0.0
        %10829 = vmatpush.msra.mxu0 0.0
        %10830 = vmatpush.msra.mxu0 %v10717
        %10831 = vmatpush.msra.mxu0 %v10716
        %10832 = vmatpush.msra.mxu0 %v10715
        %10833 = vmatpush.msra.mxu0 %v10714
        %10834 = vmatmul.f32.gmra.mxu0 %v10723
        %v10835 = vpop.f32.mrf.mxu0
        %v10836 = vadd.f32 %v10720, %v10835
        %10837 = vmatmul.f32.gmra.mxu0 %v10726
        %v10838 = vpop.f32.mrf.mxu0
        %v10839 = vadd.f32 %v10720, %v10838
        %10840 = vmatmul.f32.gmra.mxu0 %v10729
        %v10841 = vpop.f32.mrf.mxu0
        %v10842 = vadd.f32 %v10720, %v10841
        %10843 = vmatmul.f32.gmra.mxu0 %v10732
        %v10844 = vpop.f32.mrf.mxu0
        %v10845 = vadd.f32 %v10720, %v10844
        %10846 = vmatmul.f32.gmra.mxu0 %v10735
        %v10847 = vpop.f32.mrf.mxu0
        %v10848 = vadd.f32 %v10720, %v10847
        %10849 = vmatmul.f32.gmra.mxu0 %v10738
        %v10850 = vpop.f32.mrf.mxu0
        %v10851 = vadd.f32 %v10720, %v10850
        %10852 = vmatmul.f32.gmra.mxu0 %v10741
        %v10853 = vpop.f32.mrf.mxu0
        %v10854 = vadd.f32 %v10720, %v10853
        %10855 = vmatmul.f32.gmra.mxu0 %v10744
        %v10856 = vpop.f32.mrf.mxu0
        %v10857 = vadd.f32 %v10720, %v10856
        %10858 = vmatmul.f32.gmra.mxu0 %v10747
        %v10859 = vpop.f32.mrf.mxu0
        %v10860 = vadd.f32 %v10720, %v10859
        %10861 = vmatmul.f32.gmra.mxu0 %v10750
        %v10862 = vpop.f32.mrf.mxu0
        %v10863 = vadd.f32 %v10720, %v10862
        %10864 = vmatmul.f32.gmra.mxu0 %v10753
        %v10865 = vpop.f32.mrf.mxu0
        %v10866 = vadd.f32 %v10720, %v10865
        %10867 = vmatmul.f32.gmra.mxu0 %v10756
        %v10868 = vpop.f32.mrf.mxu0
        %v10869 = vadd.f32 %v10720, %v10868
        %10870 = vmatmul.f32.gmra.mxu0 %v10759
        %v10871 = vpop.f32.mrf.mxu0
        %v10872 = vadd.f32 %v10720, %v10871
        %10873 = vmatmul.f32.gmra.mxu0 %v10762
        %v10874 = vpop.f32.mrf.mxu0
        %v10875 = vadd.f32 %v10720, %v10874
        %10876 = vmatmul.f32.gmra.mxu0 %v10765
        %v10877 = vpop.f32.mrf.mxu0
        %v10878 = vadd.f32 %v10720, %v10877
        %10879 = vmatmul.f32.gmra.mxu0 %v10768
        %v10880 = vpop.f32.mrf.mxu0
        %v10881 = vadd.f32 %v10720, %v10880
        %10882 = vmatmul.f32.gmra.mxu0 %v10771
        %v10883 = vpop.f32.mrf.mxu0
        %v10884 = vadd.f32 %v10720, %v10883
        %10885 = vmatmul.f32.gmra.mxu0 %v10774
        %v10886 = vpop.f32.mrf.mxu0
        %v10887 = vadd.f32 %v10720, %v10886
        %10888 = vmatmul.f32.gmra.mxu0 %v10777
        %v10889 = vpop.f32.mrf.mxu0
        %v10890 = vadd.f32 %v10720, %v10889
        %10891 = vmatmul.f32.gmra.mxu0 %v10780
        %v10892 = vpop.f32.mrf.mxu0
        %v10893 = vadd.f32 %v10720, %v10892
        %10894 = vmatmul.f32.gmra.mxu0 %v10783
        %v10895 = vpop.f32.mrf.mxu0
        %v10896 = vadd.f32 %v10720, %v10895
        %10897 = vmatmul.f32.gmra.mxu0 %v10786
        %v10898 = vpop.f32.mrf.mxu0
        %v10899 = vadd.f32 %v10720, %v10898
        %10900 = vmatmul.f32.gmra.mxu0 %v10789
        %v10901 = vpop.f32.mrf.mxu0
        %v10902 = vadd.f32 %v10720, %v10901
        %10903 = vmatmul.f32.gmra.mxu0 %v10792
        %v10904 = vpop.f32.mrf.mxu0
        %v10905 = vadd.f32 %v10720, %v10904
        %10906 = vmatmul.f32.gmra.mxu0 %v10795
        %v10907 = vpop.f32.mrf.mxu0
        %v10908 = vadd.f32 %v10720, %v10907
        %10909 = vmatmul.f32.gmra.mxu0 %v10798
        %v10910 = vpop.f32.mrf.mxu0
        %v10911 = vadd.f32 %v10720, %v10910
        %10912 = vmatmul.f32.gmra.mxu0 %v10801
        %v10913 = vpop.f32.mrf.mxu0
        %v10914 = vadd.f32 %v10720, %v10913
        %10915 = vmatmul.f32.gmra.mxu0 %v10804
        %v10916 = vpop.f32.mrf.mxu0
        %v10917 = vadd.f32 %v10720, %v10916
        %10918 = vmatmul.f32.gmra.mxu0 %v10807
        %v10919 = vpop.f32.mrf.mxu0
        %v10920 = vadd.f32 %v10720, %v10919
        %10921 = vmatmul.f32.gmra.mxu0 %v10810
        %v10922 = vpop.f32.mrf.mxu0
        %v10923 = vadd.f32 %v10720, %v10922
        %10924 = vmatmul.f32.gmra.mxu0 %v10813
        %v10925 = vpop.f32.mrf.mxu0
        %v10926 = vadd.f32 %v10720, %v10925
        %10927 = vmatmul.f32.gmra.mxu0 %v10816
        %v10928 = vpop.f32.mrf.mxu0
        %v10929 = vadd.f32 %v10720, %v10928
        %10930 = vdwg.mxu0
        %v10931 = vmax.f32 %v10836, 0.0
        %v10932 = vmax.f32 %v10839, 0.0
        %v10933 = vmax.f32 %v10842, 0.0
        %v10934 = vmax.f32 %v10845, 0.0
        %v10935 = vmax.f32 %v10848, 0.0
        %v10936 = vmax.f32 %v10851, 0.0
        %v10937 = vmax.f32 %v10854, 0.0
        %v10938 = vmax.f32 %v10857, 0.0
        %v10939 = vmax.f32 %v10860, 0.0
        %v10940 = vmax.f32 %v10863, 0.0
        %v10941 = vmax.f32 %v10866, 0.0
        %v10942 = vmax.f32 %v10869, 0.0
        %v10943 = vmax.f32 %v10872, 0.0
        %v10944 = vmax.f32 %v10875, 0.0
        %v10945 = vmax.f32 %v10878, 0.0
        %v10946 = vmax.f32 %v10881, 0.0
        %v10947 = vmax.f32 %v10884, 0.0
        %v10948 = vmax.f32 %v10887, 0.0
        %v10949 = vmax.f32 %v10890, 0.0
        %v10950 = vmax.f32 %v10893, 0.0
        %v10951 = vmax.f32 %v10896, 0.0
        %v10952 = vmax.f32 %v10899, 0.0
        %v10953 = vmax.f32 %v10902, 0.0
        %v10954 = vmax.f32 %v10905, 0.0
        %v10955 = vmax.f32 %v10908, 0.0
        %v10956 = vmax.f32 %v10911, 0.0
        %v10957 = vmax.f32 %v10914, 0.0
        %v10958 = vmax.f32 %v10917, 0.0
        %v10959 = vmax.f32 %v10920, 0.0
        %v10960 = vmax.f32 %v10923, 0.0
        %v10961 = vmax.f32 %v10926, 0.0
        %v10962 = vmax.f32 %v10929, 0.0
        %v10963 = vld [vmem:[#allocation15] sm:$0xff]
        %v10964 = vld [vmem:[#allocation15 + $0x8] sm:$0xff]
        %v10965 = vld [vmem:[#allocation15 + $0x10] sm:$0xff]
        %v10966 = vld [vmem:[#allocation15 + $0x18] sm:$0xff]
        %v10967 = vld [vmem:[%s8] sm:$0x1]
        %v10969 = vperm.slane %v10967, 0
        %v10972 = vsel %vm544, %v10931, 0
        %v10975 = vsel %vm544, %v10932, 0
        %v10978 = vsel %vm544, %v10933, 0
        %v10981 = vsel %vm544, %v10934, 0
        %v10984 = vsel %vm544, %v10935, 0
        %v10987 = vsel %vm544, %v10936, 0
        %v10990 = vsel %vm544, %v10937, 0
        %v10993 = vsel %vm544, %v10938, 0
        %v10996 = vsel %vm544, %v10939, 0
        %v10999 = vsel %vm544, %v10940, 0
        %v11002 = vsel %vm544, %v10941, 0
        %v11005 = vsel %vm544, %v10942, 0
        %v11008 = vsel %vm544, %v10943, 0
        %v11011 = vsel %vm544, %v10944, 0
        %v11014 = vsel %vm544, %v10945, 0
        %v11017 = vsel %vm544, %v10946, 0
        %v11020 = vsel %vm544, %v10947, 0
        %v11023 = vsel %vm544, %v10948, 0
        %v11026 = vsel %vm544, %v10949, 0
        %v11029 = vsel %vm544, %v10950, 0
        %v11032 = vsel %vm544, %v10951, 0
        %v11035 = vsel %vm544, %v10952, 0
        %v11038 = vsel %vm544, %v10953, 0
        %v11041 = vsel %vm544, %v10954, 0
        %v11044 = vsel %vm544, %v10955, 0
        %v11047 = vsel %vm544, %v10956, 0
        %v11050 = vsel %vm544, %v10957, 0
        %v11053 = vsel %vm544, %v10958, 0
        %v11056 = vsel %vm544, %v10959, 0
        %v11059 = vsel %vm544, %v10960, 0
        %v11062 = vsel %vm544, %v10961, 0
        %v11065 = vsel %vm544, %v10962, 0
        %11067 = vmatpush.msra.mxu0 0.0
        %11068 = vmatpush.msra.mxu0 0.0
        %11069 = vmatpush.msra.mxu0 0.0
        %11070 = vmatpush.msra.mxu0 0.0
        %11071 = vmatpush.msra.mxu0 0.0
        %11072 = vmatpush.msra.mxu0 0.0
        %11073 = vmatpush.msra.mxu0 0.0
        %11074 = vmatpush.msra.mxu0 0.0
        %11075 = vmatpush.msra.mxu0 0.0
        %11076 = vmatpush.msra.mxu0 0.0
        %11077 = vmatpush.msra.mxu0 0.0
        %11078 = vmatpush.msra.mxu0 0.0
        %11079 = vmatpush.msra.mxu0 %v10966
        %11080 = vmatpush.msra.mxu0 %v10965
        %11081 = vmatpush.msra.mxu0 %v10964
        %11082 = vmatpush.msra.mxu0 %v10963
        %11083 = vmatmul.f32.gmra.mxu0 %v10972
        %v11084 = vpop.f32.mrf.mxu0
        %v11085 = vadd.f32 %v10969, %v11084
        %11086 = vmatmul.f32.gmra.mxu0 %v10975
        %v11087 = vpop.f32.mrf.mxu0
        %v11088 = vadd.f32 %v10969, %v11087
        %11089 = vmatmul.f32.gmra.mxu0 %v10978
        %v11090 = vpop.f32.mrf.mxu0
        %v11091 = vadd.f32 %v10969, %v11090
        %11092 = vmatmul.f32.gmra.mxu0 %v10981
        %v11093 = vpop.f32.mrf.mxu0
        %v11094 = vadd.f32 %v10969, %v11093
        %11095 = vmatmul.f32.gmra.mxu0 %v10984
        %v11096 = vpop.f32.mrf.mxu0
        %v11097 = vadd.f32 %v10969, %v11096
        %11098 = vmatmul.f32.gmra.mxu0 %v10987
        %v11099 = vpop.f32.mrf.mxu0
        %v11100 = vadd.f32 %v10969, %v11099
        %11101 = vmatmul.f32.gmra.mxu0 %v10990
        %v11102 = vpop.f32.mrf.mxu0
        %v11103 = vadd.f32 %v10969, %v11102
        %11104 = vmatmul.f32.gmra.mxu0 %v10993
        %v11105 = vpop.f32.mrf.mxu0
        %v11106 = vadd.f32 %v10969, %v11105
        %11107 = vmatmul.f32.gmra.mxu0 %v10996
        %v11108 = vpop.f32.mrf.mxu0
        %v11109 = vadd.f32 %v10969, %v11108
        %11110 = vmatmul.f32.gmra.mxu0 %v10999
        %v11111 = vpop.f32.mrf.mxu0
        %v11112 = vadd.f32 %v10969, %v11111
        %11113 = vmatmul.f32.gmra.mxu0 %v11002
        %v11114 = vpop.f32.mrf.mxu0
        %v11115 = vadd.f32 %v10969, %v11114
        %11116 = vmatmul.f32.gmra.mxu0 %v11005
        %v11117 = vpop.f32.mrf.mxu0
        %v11118 = vadd.f32 %v10969, %v11117
        %11119 = vmatmul.f32.gmra.mxu0 %v11008
        %v11120 = vpop.f32.mrf.mxu0
        %v11121 = vadd.f32 %v10969, %v11120
        %11122 = vmatmul.f32.gmra.mxu0 %v11011
        %v11123 = vpop.f32.mrf.mxu0
        %v11124 = vadd.f32 %v10969, %v11123
        %11125 = vmatmul.f32.gmra.mxu0 %v11014
        %v11126 = vpop.f32.mrf.mxu0
        %v11127 = vadd.f32 %v10969, %v11126
        %11128 = vmatmul.f32.gmra.mxu0 %v11017
        %v11129 = vpop.f32.mrf.mxu0
        %v11130 = vadd.f32 %v10969, %v11129
        %11131 = vmatmul.f32.gmra.mxu0 %v11020
        %v11132 = vpop.f32.mrf.mxu0
        %v11133 = vadd.f32 %v10969, %v11132
        %11134 = vmatmul.f32.gmra.mxu0 %v11023
        %v11135 = vpop.f32.mrf.mxu0
        %v11136 = vadd.f32 %v10969, %v11135
        %11137 = vmatmul.f32.gmra.mxu0 %v11026
        %v11138 = vpop.f32.mrf.mxu0
        %v11139 = vadd.f32 %v10969, %v11138
        %11140 = vmatmul.f32.gmra.mxu0 %v11029
        %v11141 = vpop.f32.mrf.mxu0
        %v11142 = vadd.f32 %v10969, %v11141
        %11143 = vmatmul.f32.gmra.mxu0 %v11032
        %v11144 = vpop.f32.mrf.mxu0
        %v11145 = vadd.f32 %v10969, %v11144
        %11146 = vmatmul.f32.gmra.mxu0 %v11035
        %v11147 = vpop.f32.mrf.mxu0
        %v11148 = vadd.f32 %v10969, %v11147
        %11149 = vmatmul.f32.gmra.mxu0 %v11038
        %v11150 = vpop.f32.mrf.mxu0
        %v11151 = vadd.f32 %v10969, %v11150
        %11152 = vmatmul.f32.gmra.mxu0 %v11041
        %v11153 = vpop.f32.mrf.mxu0
        %v11154 = vadd.f32 %v10969, %v11153
        %11155 = vmatmul.f32.gmra.mxu0 %v11044
        %v11156 = vpop.f32.mrf.mxu0
        %v11157 = vadd.f32 %v10969, %v11156
        %11158 = vmatmul.f32.gmra.mxu0 %v11047
        %v11159 = vpop.f32.mrf.mxu0
        %v11160 = vadd.f32 %v10969, %v11159
        %11161 = vmatmul.f32.gmra.mxu0 %v11050
        %v11162 = vpop.f32.mrf.mxu0
        %v11163 = vadd.f32 %v10969, %v11162
        %11164 = vmatmul.f32.gmra.mxu0 %v11053
        %v11165 = vpop.f32.mrf.mxu0
        %v11166 = vadd.f32 %v10969, %v11165
        %11167 = vmatmul.f32.gmra.mxu0 %v11056
        %v11168 = vpop.f32.mrf.mxu0
        %v11169 = vadd.f32 %v10969, %v11168
        %11170 = vmatmul.f32.gmra.mxu0 %v11059
        %v11171 = vpop.f32.mrf.mxu0
        %v11172 = vadd.f32 %v10969, %v11171
        %11173 = vmatmul.f32.gmra.mxu0 %v11062
        %v11174 = vpop.f32.mrf.mxu0
        %v11175 = vadd.f32 %v10969, %v11174
        %11176 = vmatmul.f32.gmra.mxu0 %v11065
        %v11177 = vpop.f32.mrf.mxu0
        %v11178 = vadd.f32 %v10969, %v11177
        %11179 = vdwg.mxu0
        %v11180 = vsel %vm544, %v11085, 0.0
        %v11181 = vsel %vm544, %v11088, 0.0
        %v11182 = vadd.f32 %v11180, %v11181
        %v11183 = vsel %vm544, %v11091, 0.0
        %v11184 = vadd.f32 %v11182, %v11183
        %v11185 = vsel %vm544, %v11094, 0.0
        %v11186 = vadd.f32 %v11184, %v11185
        %v11187 = vsel %vm544, %v11097, 0.0
        %v11188 = vadd.f32 %v11186, %v11187
        %v11189 = vsel %vm544, %v11100, 0.0
        %v11190 = vadd.f32 %v11188, %v11189
        %v11191 = vsel %vm544, %v11103, 0.0
        %v11192 = vadd.f32 %v11190, %v11191
        %v11193 = vsel %vm544, %v11106, 0.0
        %v11194 = vadd.f32 %v11192, %v11193
        %v11195 = vsel %vm544, %v11109, 0.0
        %v11196 = vadd.f32 %v11194, %v11195
        %v11197 = vsel %vm544, %v11112, 0.0
        %v11198 = vadd.f32 %v11196, %v11197
        %v11199 = vsel %vm544, %v11115, 0.0
        %v11200 = vadd.f32 %v11198, %v11199
        %v11201 = vsel %vm544, %v11118, 0.0
        %v11202 = vadd.f32 %v11200, %v11201
        %v11203 = vsel %vm544, %v11121, 0.0
        %v11204 = vadd.f32 %v11202, %v11203
        %v11205 = vsel %vm544, %v11124, 0.0
        %v11206 = vadd.f32 %v11204, %v11205
        %v11207 = vsel %vm544, %v11127, 0.0
        %v11208 = vadd.f32 %v11206, %v11207
        %v11209 = vsel %vm544, %v11130, 0.0
        %v11210 = vadd.f32 %v11208, %v11209
        %v11211 = vsel %vm544, %v11133, 0.0
        %v11212 = vadd.f32 %v11210, %v11211
        %v11213 = vsel %vm544, %v11136, 0.0
        %v11214 = vadd.f32 %v11212, %v11213
        %v11215 = vsel %vm544, %v11139, 0.0
        %v11216 = vadd.f32 %v11214, %v11215
        %v11217 = vsel %vm544, %v11142, 0.0
        %v11218 = vadd.f32 %v11216, %v11217
        %v11219 = vsel %vm544, %v11145, 0.0
        %v11220 = vadd.f32 %v11218, %v11219
        %v11221 = vsel %vm544, %v11148, 0.0
        %v11222 = vadd.f32 %v11220, %v11221
        %v11223 = vsel %vm544, %v11151, 0.0
        %v11224 = vadd.f32 %v11222, %v11223
        %v11225 = vsel %vm544, %v11154, 0.0
        %v11226 = vadd.f32 %v11224, %v11225
        %v11227 = vsel %vm544, %v11157, 0.0
        %v11228 = vadd.f32 %v11226, %v11227
        %v11229 = vsel %vm544, %v11160, 0.0
        %v11230 = vadd.f32 %v11228, %v11229
        %v11231 = vsel %vm544, %v11163, 0.0
        %v11232 = vadd.f32 %v11230, %v11231
        %v11233 = vsel %vm544, %v11166, 0.0
        %v11234 = vadd.f32 %v11232, %v11233
        %v11235 = vsel %vm544, %v11169, 0.0
        %v11236 = vadd.f32 %v11234, %v11235
        %v11237 = vsel %vm544, %v11172, 0.0
        %v11238 = vadd.f32 %v11236, %v11237
        %v11239 = vsel %vm544, %v11175, 0.0
        %v11240 = vadd.f32 %v11238, %v11239
        %v11241 = vsel %vm544, %v11178, 0.0
        %v11242 = vadd.f32 %v11240, %v11241
        %v11243 = vrot.slane %v11242, 4
        %v11244 = vadd.f32 %v11242, %v11243
        %v11245 = vrot.slane %v11244, 2
        %v11246 = vadd.f32 %v11244, %v11245
        %v11247 = vrot.slane %v11246, 1
        %v11248 = vadd.f32 %v11246, %v11247
        %v11249 = vrcp.pop 256.0
        %v11250 = vmul.f32 256.0, %v11249
        %v11251 = vsub.f32 1.0, %v11250
        %v11252 = vmul.f32 %v11249, %v11251
        %v11253 = vadd.f32 %v11249, %v11252
        %vm11254 = vweird.f32 %v11249
        %v11255 = vsel %vm11254, %v11249, %v11253
        %v11256 = vmul.f32 %v11248, %v11255
        %v11257 = vld [vmem:[%s9] sm:$0x3]
        %v11258 = vmul.f32 %v11256, %v11257
        %vm11259 = vcmask 254976
        %v11260 = vsel %vm11259, %v11258, 0.0
        %11261 = vadd.xlane.f32.xlu0 %v11260
        %v11262 = vpop.xlane.xlu0 %11261
        %v11263 = vld [vmem:[%s10] sm:$0x3]
        %v11264 = vadd.f32 %v11262, %v11263
        %v11265 = vmax.f32 %v11264, 0.0
        %v11266 = vld [vmem:[%s11] sm:$0x3]
        %11268 = vset.pattern.permute.xlu0 0
        %11269 = vperm.xlu0 %11268, %v11265
        %v11270 = vpop.permute.xlu0 %11269
        %v11272 = vmul.f32 %v11270, %v11266
        %v11273 = vsel %vm11259, %v11272, 0.0
        %v11274 = vrot.slane %v11273, 4
        %v11275 = vadd.f32 %v11273, %v11274
        %v11276 = vrot.slane %v11275, 2
        %v11277 = vadd.f32 %v11275, %v11276
        %v11278 = vrot.slane %v11277, 1
        %v11279 = vadd.f32 %v11277, %v11278
        %v11280 = vld [vmem:[%s12] sm:$0x1]
        %v11281 = vadd.f32 %v11279, %v11280
        %v11282 = vxor.u32 %v11281, 2147483648
        %v11283 = vmul.f32 %v11282, 1.442695
        %v11284 = vpow.pop %v11283
        %v11285 = vadd.f32 %v11284, 1.0
        %v11286 = vrcp.pop %v11285
        %v11287 = vmul.f32 %v11285, %v11286
        %v11288 = vsub.f32 1.0, %v11287
        %v11289 = vmul.f32 %v11286, %v11288
        %v11290 = vadd.f32 %v11286, %v11289
        %vm11291 = vweird.f32 %v11285
        %vm11292 = vweird.f32 %v11286
        %vm11293 = vmor %vm11291, %vm11292
        %v11294 = vsel %vm11293, %v11286, %v11290
        %v11295 = vand.u32 2147483647, %v11285
        %vm11296 = vcmp.eq.f32.partialorder %v11295, 8.507059e+37
        %v11297 = vand.u32 %v11285, 2147483648
        %v11298 = vor.u32 1.1754944e-38, %v11297
        %v11299 = vsel %vm11296, %v11298, %v11294
        %v11300 = vmul.f32 1.0, %v11299
        %v11301 = vperm.slane %v11300, 0
        %v11302 = vmul.f32 %v11085, %v11301
        %v11303 = vmul.f32 %v11088, %v11301
        %v11304 = vmul.f32 %v11091, %v11301
        %v11305 = vmul.f32 %v11094, %v11301
        %v11306 = vmul.f32 %v11097, %v11301
        %v11307 = vmul.f32 %v11100, %v11301
        %v11308 = vmul.f32 %v11103, %v11301
        %v11309 = vmul.f32 %v11106, %v11301
        %v11310 = vmul.f32 %v11109, %v11301
        %v11311 = vmul.f32 %v11112, %v11301
        %v11312 = vmul.f32 %v11115, %v11301
        %v11313 = vmul.f32 %v11118, %v11301
        %v11314 = vmul.f32 %v11121, %v11301
        %v11315 = vmul.f32 %v11124, %v11301
        %v11316 = vmul.f32 %v11127, %v11301
        %v11317 = vmul.f32 %v11130, %v11301
        %v11318 = vmul.f32 %v11133, %v11301
        %v11319 = vmul.f32 %v11136, %v11301
        %v11320 = vmul.f32 %v11139, %v11301
        %v11321 = vmul.f32 %v11142, %v11301
        %v11322 = vmul.f32 %v11145, %v11301
        %v11323 = vmul.f32 %v11148, %v11301
        %v11324 = vmul.f32 %v11151, %v11301
        %v11325 = vmul.f32 %v11154, %v11301
        %v11326 = vmul.f32 %v11157, %v11301
        %v11327 = vmul.f32 %v11160, %v11301
        %v11328 = vmul.f32 %v11163, %v11301
        %v11329 = vmul.f32 %v11166, %v11301
        %v11330 = vmul.f32 %v11169, %v11301
        %v11331 = vmul.f32 %v11172, %v11301
        %v11332 = vmul.f32 %v11175, %v11301
        %v11333 = vmul.f32 %v11178, %v11301
        %v11334 = vmul.f32 %v11302, 0.1
        %v11335 = vmul.f32 %v11303, 0.1
        %v11336 = vmul.f32 %v11304, 0.1
        %v11337 = vmul.f32 %v11305, 0.1
        %v11338 = vmul.f32 %v11306, 0.1
        %v11339 = vmul.f32 %v11307, 0.1
        %v11340 = vmul.f32 %v11308, 0.1
        %v11341 = vmul.f32 %v11309, 0.1
        %v11342 = vmul.f32 %v11310, 0.1
        %v11343 = vmul.f32 %v11311, 0.1
        %v11344 = vmul.f32 %v11312, 0.1
        %v11345 = vmul.f32 %v11313, 0.1
        %v11346 = vmul.f32 %v11314, 0.1
        %v11347 = vmul.f32 %v11315, 0.1
        %v11348 = vmul.f32 %v11316, 0.1
        %v11349 = vmul.f32 %v11317, 0.1
        %v11350 = vmul.f32 %v11318, 0.1
        %v11351 = vmul.f32 %v11319, 0.1
        %v11352 = vmul.f32 %v11320, 0.1
        %v11353 = vmul.f32 %v11321, 0.1
        %v11354 = vmul.f32 %v11322, 0.1
        %v11355 = vmul.f32 %v11323, 0.1
        %v11356 = vmul.f32 %v11324, 0.1
        %v11357 = vmul.f32 %v11325, 0.1
        %v11358 = vmul.f32 %v11326, 0.1
        %v11359 = vmul.f32 %v11327, 0.1
        %v11360 = vmul.f32 %v11328, 0.1
        %v11361 = vmul.f32 %v11329, 0.1
        %v11362 = vmul.f32 %v11330, 0.1
        %v11363 = vmul.f32 %v11331, 0.1
        %v11364 = vmul.f32 %v11332, 0.1
        %v11365 = vmul.f32 %v11333, 0.1
        %v11366 = vadd.f32 %v10682, %v11334
        %v11367 = vadd.f32 %v10683, %v11335
        %v11368 = vadd.f32 %v10684, %v11336
        %v11369 = vadd.f32 %v10685, %v11337
        %v11370 = vadd.f32 %v10686, %v11338
        %v11371 = vadd.f32 %v10687, %v11339
        %v11372 = vadd.f32 %v10688, %v11340
        %v11373 = vadd.f32 %v10689, %v11341
        %v11374 = vadd.f32 %v10690, %v11342
        %v11375 = vadd.f32 %v10691, %v11343
        %v11376 = vadd.f32 %v10692, %v11344
        %v11377 = vadd.f32 %v10693, %v11345
        %v11378 = vadd.f32 %v10694, %v11346
        %v11379 = vadd.f32 %v10695, %v11347
        %v11380 = vadd.f32 %v10696, %v11348
        %v11381 = vadd.f32 %v10697, %v11349
        %v11382 = vadd.f32 %v10698, %v11350
        %v11383 = vadd.f32 %v10699, %v11351
        %v11384 = vadd.f32 %v10700, %v11352
        %v11385 = vadd.f32 %v10701, %v11353
        %v11386 = vadd.f32 %v10702, %v11354
        %v11387 = vadd.f32 %v10703, %v11355
        %v11388 = vadd.f32 %v10704, %v11356
        %v11389 = vadd.f32 %v10705, %v11357
        %v11390 = vadd.f32 %v10706, %v11358
        %v11391 = vadd.f32 %v10707, %v11359
        %v11392 = vadd.f32 %v10708, %v11360
        %v11393 = vadd.f32 %v10709, %v11361
        %v11394 = vadd.f32 %v10710, %v11362
        %v11395 = vadd.f32 %v10711, %v11363
        %v11396 = vadd.f32 %v10712, %v11364
        %v11397 = vadd.f32 %v10713, %v11365
        %11398 = vst.msk [vmem:[%s543] sm:$0xff] %vm544, %v11366
        %11399 = vst.msk [vmem:[%s543 + $0x8] sm:$0xff] %vm544, %v11367
        %11400 = vst.msk [vmem:[%s543 + $0x10] sm:$0xff] %vm544, %v11368
        %11401 = vst.msk [vmem:[%s543 + $0x18] sm:$0xff] %vm544, %v11369
        %11402 = vst.msk [vmem:[%s543 + $0x20] sm:$0xff] %vm544, %v11370
        %11403 = vst.msk [vmem:[%s543 + $0x28] sm:$0xff] %vm544, %v11371
        %11404 = vst.msk [vmem:[%s543 + $0x30] sm:$0xff] %vm544, %v11372
        %11405 = vst.msk [vmem:[%s543 + $0x38] sm:$0xff] %vm544, %v11373
        %11406 = vst.msk [vmem:[%s543 + $0x40] sm:$0xff] %vm544, %v11374
        %11407 = vst.msk [vmem:[%s543 + $0x48] sm:$0xff] %vm544, %v11375
        %11408 = vst.msk [vmem:[%s543 + $0x50] sm:$0xff] %vm544, %v11376
        %11409 = vst.msk [vmem:[%s543 + $0x58] sm:$0xff] %vm544, %v11377
        %11410 = vst.msk [vmem:[%s543 + $0x60] sm:$0xff] %vm544, %v11378
        %11411 = vst.msk [vmem:[%s543 + $0x68] sm:$0xff] %vm544, %v11379
        %11412 = vst.msk [vmem:[%s543 + $0x70] sm:$0xff] %vm544, %v11380
        %11413 = vst.msk [vmem:[%s543 + $0x78] sm:$0xff] %vm544, %v11381
        %11414 = vst.msk [vmem:[%s543 + $0x80] sm:$0xff] %vm544, %v11382
        %11415 = vst.msk [vmem:[%s543 + $0x88] sm:$0xff] %vm544, %v11383
        %11416 = vst.msk [vmem:[%s543 + $0x90] sm:$0xff] %vm544, %v11384
        %11417 = vst.msk [vmem:[%s543 + $0x98] sm:$0xff] %vm544, %v11385
        %11418 = vst.msk [vmem:[%s543 + $0xa0] sm:$0xff] %vm544, %v11386
        %11419 = vst.msk [vmem:[%s543 + $0xa8] sm:$0xff] %vm544, %v11387
        %11420 = vst.msk [vmem:[%s543 + $0xb0] sm:$0xff] %vm544, %v11388
        %11421 = vst.msk [vmem:[%s543 + $0xb8] sm:$0xff] %vm544, %v11389
        %11422 = vst.msk [vmem:[%s543 + $0xc0] sm:$0xff] %vm544, %v11390
        %11423 = vst.msk [vmem:[%s543 + $0xc8] sm:$0xff] %vm544, %v11391
        %11424 = vst.msk [vmem:[%s543 + $0xd0] sm:$0xff] %vm544, %v11392
        %11425 = vst.msk [vmem:[%s543 + $0xd8] sm:$0xff] %vm544, %v11393
        %11426 = vst.msk [vmem:[%s543 + $0xe0] sm:$0xff] %vm544, %v11394
        %11427 = vst.msk [vmem:[%s543 + $0xe8] sm:$0xff] %vm544, %v11395
        %11428 = vst.msk [vmem:[%s543 + $0xf0] sm:$0xff] %vm544, %v11396
        %11429 = vst.msk [vmem:[%s543 + $0xf8] sm:$0xff] %vm544, %v11397
        %p11430 = scmp.lt.s32.totalorder %s30, 1
        %s11431 = scalar_select %p11430, %s30, 1
        %s11432 = smul.addr %s11431, 32
        %s11433 = smul.addr %s11432, 8
        %s11434 = scalar_lea.vmem %s13, %s11433
        // Predicated region
        $region97: #{tpu_custom_call.1} parent=71 // pred_check
          %p11435 = pneg %p326
        $region98: #{tpu_custom_call.1} parent=71 // pred_check_branch
          %11437 = sbr.rel (%p11435) target = $region100
        $region99: #{tpu_custom_call.1} parent=71 // pred_region
          _
        $region100: #{tpu_custom_call.1} parent=71 // pred_fallthru
          _
      $region72: #{tpu_custom_call.1} parent=5 // pred_fallthru
        _
      %p11438 = scmp.le.s32.totalorder 2, %s25
      // Predicated region
      $region101: #{tpu_custom_call.1} parent=5 // pred_check
        %p11439 = pneg %p11438
      $region102: #{tpu_custom_call.1} parent=5 // pred_check_branch
        %11441 = sbr.rel (%p11439) target = $region104
      $region103: #{tpu_custom_call.1} parent=5 // pred_region
        %s11442 = ssub.s32 %s25, 2
        // Predicated region
        $region105: #{tpu_custom_call.1} parent=103 // pred_check
          %p11443 = pneg %p332
        $region106: #{tpu_custom_call.1} parent=103 // pred_check_branch
          %11445 = sbr.rel (%p11443) target = $region108
        $region107: #{tpu_custom_call.1} parent=103 // pred_region
          %p11446 = scmp.lt.s32.totalorder %s31, 1
          %s11447 = scalar_select %p11446, %s31, 1
          %s11448 = smul.addr %s11447, 32
          %s11449 = smul.addr %s11448, 8
          %s11450 = scalar_lea.vmem %s13, %s11449
        $region108: #{tpu_custom_call.1} parent=103 // pred_fallthru
          _
      $region104: #{tpu_custom_call.1} parent=5 // pred_fallthru
        _
    $region6: #{tpu_custom_call.1} parent=1 // loop_footer
      %s29 = sadd.s32 1, %s25
    $region7: #{tpu_custom_call.1} parent=1 // loop_footer_branch
      %24 = sbr.rel target = $region3
    $region8: #{tpu_custom_call.1} parent=1 // loop_exit
      _
    %11451 = vsyncpa [#allocation8], 1
    %s11452 = scalar_lea.sflag [#allocation8], 1
    %11453 = vsyncpa %s11452, 1
    %11454 = vsyncpa [#allocation10], 1
    %11455 = vsyncpa [#allocation13], 1
    %11456 = vsyncpa [#allocation16], 1

</llo_original>
